<compile_context>
chip_gen: v6e
topology: v6e:2x2x1
jax: 0.10.0
libtpu: 0.0.40
codegen_flags: <defaults>
</compile_context>

<pallas_src>
import functools

import jax
import jax.numpy as jnp
from jax.experimental import pallas as pl
from jax.experimental.pallas import tpu as pltpu


def _round_up(x, m):
    return (x + m - 1) // m * m


# ----------------------------------------------------------------------------
# Pallas kernel: single-block (1-D M grid) matmul + bias + optional ReLU.
# ----------------------------------------------------------------------------
def _matmul_bias_act_kernel(x_ref, w_ref, b_ref, o_ref, *, relu):
    # bf16 operands, f32 MXU accumulation, f32 epilogue, cast on final store.
    acc = jnp.dot(x_ref[...], w_ref[...], preferred_element_type=jnp.float32)
    acc = acc + b_ref[...]
    if relu:
        acc = jnp.maximum(acc, 0.0)
    o_ref[...] = acc.astype(o_ref.dtype)


def pallas_matmul_bias(x, w_pad, b_pad, *, relu, n_valid, out_dtype):
    """out = maybe_relu(x @ w + b)[:M, :n_valid].

    x:     [M, K]  any float dtype (cast to bf16 here, fused by jit)
    w_pad: [Kp, Np] bf16, pre-packed / pre-padded at model init
    b_pad: [1, Np]  f32
    Whole K and N live in one block; M gets a 1-D grid, split in two for the
    large layers so both TensorCores of a v7x chip can run in parallel.
    """
    M, K = x.shape
    Kp, Np = w_pad.shape

    Mp = _round_up(M, 16)           # bf16 sublane-pack friendly
    if Mp > 256:
        tm = 256                    # 2-way "parallel" M split for big layers
        Mp = _round_up(Mp, tm)
    else:
        tm = Mp                     # tiny layers: exact padded M, single block

    xp = jnp.pad(x.astype(jnp.bfloat16), ((0, Mp - M), (0, Kp - K)))

    out_bytes = jnp.dtype(out_dtype).itemsize
    cost = pl.CostEstimate(
        flops=2 * Mp * Kp * Np,
        transcendentals=0,
        bytes_accessed=Mp * Kp * 2 + Kp * Np * 2 + Np * 4 + Mp * Np * out_bytes,
    )

    out = pl.pallas_call(
        functools.partial(_matmul_bias_act_kernel, relu=relu),
        out_shape=jax.ShapeDtypeStruct((Mp, Np), out_dtype),
        grid_spec=pltpu.PrefetchScalarGridSpec(
            num_scalar_prefetch=0,
            grid=(Mp // tm,),
            in_specs=[
                pl.BlockSpec((tm, Kp), lambda i: (i, 0)),
                pl.BlockSpec((Kp, Np), lambda i: (0, 0)),
                pl.BlockSpec((1, Np), lambda i: (0, 0)),
            ],
            out_specs=pl.BlockSpec((tm, Np), lambda i: (i, 0)),
        ),
        compiler_params=pltpu.CompilerParams(
            dimension_semantics=("parallel",)),
        cost_estimate=cost,
    )(xp, w_pad, b_pad)
    return out[:M, :n_valid]


# ----------------------------------------------------------------------------
# Conv2d (PyTorch cross-correlation semantics) = im2col glue + Pallas matmul.
# The im2col slicing/concat lives inside the jitted graph so XLA fuses it.
# ----------------------------------------------------------------------------
def _im2col(x_nhwc, k, stride, pad):
    if pad > 0:
        x_nhwc = jnp.pad(x_nhwc, ((0, 0), (pad, pad), (pad, pad), (0, 0)))
    B, H, W, C = x_nhwc.shape
    Ho = (H - k) // stride + 1
    Wo = (W - k) // stride + 1
    cols = []
    for i in range(k):
        for j in range(k):
            cols.append(x_nhwc[:, i:i + stride * Ho:stride,
                               j:j + stride * Wo:stride, :])
    patches = jnp.concatenate(cols, axis=-1)          # [B, Ho, Wo, k*k*C]
    return patches.reshape(B * Ho * Wo, k * k * C), B, Ho, Wo


def conv2d(x_nhwc, layer_params, meta, *, relu, out_dtype=jnp.bfloat16):
    patches, B, Ho, Wo = _im2col(x_nhwc, meta.k, meta.stride, meta.pad)
    out = pallas_matmul_bias(patches, layer_params["w"], layer_params["b"],
                             relu=relu, n_valid=meta.cout, out_dtype=out_dtype)
    return out.reshape(B, Ho, Wo, meta.cout)


# ----------------------------------------------------------------------------
# Static layer metadata + one-time weight packing (done at __init__).
# ----------------------------------------------------------------------------
class _ConvMeta:
    def __init__(self, cin, cout, k, stride, pad):
        self.cin, self.cout, self.k = cin, cout, k
        self.stride, self.pad = stride, pad
        self.K = k * k * cin
        self.Kp = _round_up(self.K, 128)
        self.Np = _round_up(cout, 128)


class _HeadMeta:
    """Fused loc+conf 3x3 head over one source feature map."""

    def __init__(self, cin, a, num_classes):
        self.cin = cin
        self.k, self.stride, self.pad = 3, 1, 1
        self.cout_loc = a * 4
        self.cout_conf = a * num_classes
        self.cout = self.cout_loc + self.cout_conf
        self.K = 9 * cin
        self.Kp = _round_up(self.K, 128)
        self.Np = _round_up(self.cout, 128)


def _init_torch_conv(key, cin, cout, k):
    kw_key, kb_key = jax.random.split(key)
    fan_in = float(cin * k * k)
    w = jax.random.normal(kw_key, (cout, cin, k, k), jnp.float32) / jnp.sqrt(fan_in)
    b = jax.random.normal(kb_key, (cout,), jnp.float32) * 0.01
    return w, b


def _pack_conv(key, meta):
    w, b = _init_torch_conv(key, meta.cin, meta.cout, meta.k)
    # match im2col flat-K ordering ((kh, kw) outer, cin inner)
    w_mat = jnp.transpose(w, (2, 3, 1, 0)).reshape(meta.K, meta.cout)
    w_mat = jnp.pad(w_mat, ((0, meta.Kp - meta.K),
                            (0, meta.Np - meta.cout))).astype(jnp.bfloat16)
    b_pad = jnp.pad(b.reshape(1, -1),
                    ((0, 0), (0, meta.Np - meta.cout))).astype(jnp.float32)
    return {"w": w_mat, "b": b_pad}


def _pack_fused_head(key, meta):
    k_loc, k_conf = jax.random.split(key)
    w_l, b_l = _init_torch_conv(k_loc, meta.cin, meta.cout_loc, 3)
    w_c, b_c = _init_torch_conv(k_conf, meta.cin, meta.cout_conf, 3)
    wm_l = jnp.transpose(w_l, (2, 3, 1, 0)).reshape(meta.K, meta.cout_loc)
    wm_c = jnp.transpose(w_c, (2, 3, 1, 0)).reshape(meta.K, meta.cout_conf)
    w_mat = jnp.concatenate([wm_l, wm_c], axis=1)      # fuse loc+conf along N
    b = jnp.concatenate([b_l, b_c])
    w_mat = jnp.pad(w_mat, ((0, meta.Kp - meta.K),
                            (0, meta.Np - meta.cout))).astype(jnp.bfloat16)
    b_pad = jnp.pad(b.reshape(1, -1),
                    ((0, 0), (0, meta.Np - meta.cout))).astype(jnp.float32)
    return {"w": w_mat, "b": b_pad}


def make_priors(feature_specs):
    boxes = []
    for idx, (H, W, A) in enumerate(feature_specs):
        s = 0.2 + 0.15 * idx
        for i in range(H):
            for j in range(W):
                cx = (j + 0.5) / W
                cy = (i + 0.5) / H
                for a in range(A):
                    wa = s * (1.0 + 0.2 * a)
                    ha = s / (1.0 + 0.2 * a)
                    boxes.append([cx, cy, wa, ha])
    return jnp.asarray(boxes, jnp.float32)


# ----------------------------------------------------------------------------
# Small synthetic SSD ("train" phase) mirroring the reference forward().
# ----------------------------------------------------------------------------
class SSDPallas:

    def __init__(self, key, in_channels=4, num_classes=5):
        self.num_classes = num_classes
        keys = iter(jax.random.split(key, 64))

        # base "resnet" ModuleList: indices 0..6 -> source 1, 7..8 -> source 2
        base_cfg = [
            (in_channels, 16, 3, 1, 1),
            (16, 16, 3, 1, 1),
            (16, 32, 3, 2, 1),   # 16 -> 8
            (32, 32, 3, 1, 1),
            (32, 32, 3, 1, 1),
            (32, 64, 3, 1, 1),
            (64, 64, 3, 1, 1),   # source 1: 8x8, 64ch
            (64, 128, 3, 2, 1),  # 8 -> 4
            (128, 128, 3, 1, 1), # source 2: 4x4, 128ch
        ]
        self.resnet_meta = [_ConvMeta(*c) for c in base_cfg]
        resnet_params = [_pack_conv(next(keys), m) for m in self.resnet_meta]

        # extras (ReLU applied in forward); every odd-index output is a source
        extras_cfg = [
            (128, 32, 1, 1, 0),
            (32, 64, 3, 2, 1),   # source 3: 2x2, 64ch
            (64, 32, 1, 1, 0),
            (32, 64, 3, 2, 1),   # source 4: 1x1, 64ch
        ]
        self.extras_meta = [_ConvMeta(*c) for c in extras_cfg]
        extras_params = [_pack_conv(next(keys), m) for m in self.extras_meta]

        # multibox heads, loc+conf fused per source (no activation)
        src_channels = [64, 128, 64, 64]
        self.anchors = [4, 6, 6, 4]
        self.head_meta = [_HeadMeta(c, a, num_classes)
                          for c, a in zip(src_channels, self.anchors)]
        head_params = [_pack_fused_head(next(keys), m) for m in self.head_meta]

        self.params = {"resnet": resnet_params,
                       "extras": extras_params,
                       "heads": head_params}

        src_spatial = [(8, 8), (4, 4), (2, 2), (1, 1)]
        self.priors = make_priors(
            [(h, w, a) for (h, w), a in zip(src_spatial, self.anchors)])

        self._forward_jit = jax.jit(self._forward_impl)

    def _forward_impl(self, params, x_nchw):
        B = x_nchw.shape[0]
        x = jnp.transpose(x_nchw, (0, 2, 3, 1)).astype(jnp.bfloat16)  # -> NHWC

        sources = []
        for k in range(0, 7):
            x = conv2d(x, params["resnet"][k], self.resnet_meta[k], relu=True)
        sources.append(x)
        for k in range(7, len(self.resnet_meta)):
            x = conv2d(x, params["resnet"][k], self.resnet_meta[k], relu=True)
        sources.append(x)
        for k in range(len(self.extras_meta)):
            x = conv2d(x, params["extras"][k], self.extras_meta[k], relu=True)
            if k % 2 == 1:
                sources.append(x)

        loc_parts, conf_parts = [], []
        for s, p, m in zip(sources, params["heads"], self.head_meta):
            # fused loc+conf head; output is already NHWC == permute(0,2,3,1)
            fused = conv2d(s, p, m, relu=False, out_dtype=jnp.float32)
            loc_parts.append(fused[..., :m.cout_loc].reshape(B, -1))
            conf_parts.append(fused[..., m.cout_loc:].reshape(B, -1))
        loc = jnp.concatenate(loc_parts, axis=1)
        conf = jnp.concatenate(conf_parts, axis=1)
        return (loc.reshape(B, -1, 4),
                conf.reshape(B, -1, self.num_classes))

    def forward(self, x_nchw):
        loc, conf = self._forward_jit(self.params, x_nchw)
        # TODO(synk): Detect (decode + NMS) for phase == 'test' has no clean
        # single-kernel Pallas equivalent; train-phase output is returned.
        return loc, conf, self.priors


if __name__ == "__main__":
    key = jax.random.PRNGKey(0)
    k_model, k_input = jax.random.split(key)

    model = SSDPallas(k_model, in_channels=4, num_classes=5)
    x = jax.random.normal(k_input, (2, 4, 16, 16), jnp.float32)  # NCHW like torch

    loc, conf, priors = model.forward(x)
    jax.block_until_ready((loc, conf, priors))

    num_priors = priors.shape[0]
    assert loc.shape == (2, num_priors, 4), loc.shape
    assert conf.shape == (2, num_priors, 5), conf.shape
    assert priors.shape == (num_priors, 4), priors.shape
    print("KERNEL_OK")
</pallas_src>

<mosaic_0001>
module attributes {stable_mosaic.version = 11 : i64} {
  func.func @_matmul_bias_act_kernel(%arg0: i32, %arg1: memref<256x128xbf16, #tpu.memory_space<vmem>>, %arg2: memref<128x128xbf16, #tpu.memory_space<vmem>>, %arg3: memref<1x128xf32, #tpu.memory_space<vmem>>, %arg4: memref<256x128xbf16, #tpu.memory_space<vmem>>) attributes {dimension_semantics = [#tpu.dimension_semantics<parallel>], iteration_bounds = array<i64: 2>, scalar_prefetch = 0 : i64, scratch_operands = 0 : i64, tpu.core_type = #tpu.core_type<tc>, window_params = [{transform_indices = @transform_0, window_bounds = array<i64: 256, 128>}, {pipeline_mode = #tpu.pipeline_mode<synchronous>, transform_indices = @transform_1, window_bounds = array<i64: 128, 128>}, {pipeline_mode = #tpu.pipeline_mode<synchronous>, transform_indices = @transform_2, window_bounds = array<i64: 1, 128>}, {transform_indices = @transform_3, window_bounds = array<i64: 256, 128>}]} {
    %c0 = arith.constant 0 : index
    %c0_0 = arith.constant 0 : index
    %0 = vector.load %arg1[%c0, %c0_0] : memref<256x128xbf16, #tpu.memory_space<vmem>>, vector<256x128xbf16>
    %c0_1 = arith.constant 0 : index
    %c0_2 = arith.constant 0 : index
    %1 = vector.load %arg2[%c0_1, %c0_2] : memref<128x128xbf16, #tpu.memory_space<vmem>>, vector<128x128xbf16>
    %cst = arith.constant dense<0.000000e+00> : vector<256x128xf32>
    %2 = tpu.matmul %0, %1, %cst {dimension_numbers = #tpu.dot_dimension_numbers<[1], [0], [0], [1], [0, 0, 1, 1], [], []>} : vector<256x128xbf16>, vector<128x128xbf16>, vector<256x128xf32> -> vector<256x128xf32>
    %c0_3 = arith.constant 0 : index
    %c0_4 = arith.constant 0 : index
    %3 = vector.load %arg3[%c0_3, %c0_4] : memref<1x128xf32, #tpu.memory_space<vmem>>, vector<1x128xf32>
    %4 = vector.broadcast %3 : vector<1x128xf32> to vector<256x128xf32>
    %5 = arith.addf %2, %4 : vector<256x128xf32>
    %cst_5 = arith.constant 0.000000e+00 : f32
    %6 = vector.broadcast %cst_5 : f32 to vector<256x128xf32>
    %7 = arith.maximumf %5, %6 : vector<256x128xf32>
    %8 = arith.truncf %7 : vector<256x128xf32> to vector<256x128xbf16>
    %c0_6 = arith.constant 0 : index
    %c0_7 = arith.constant 0 : index
    %9 = vector.load %arg4[%c0_6, %c0_7] : memref<256x128xbf16, #tpu.memory_space<vmem>>, vector<256x128xbf16>
    tpu.vector_store %arg4[%c0_6, %c0_7], %8 {strides = array<i32>} : memref<256x128xbf16, #tpu.memory_space<vmem>>, vector<256x128xbf16>,
    return
  }
  func.func @transform_0(%arg0: i32) -> (i32, i32) {
    %c0_i32 = arith.constant 0 : i32
    %c0_i32_0 = arith.constant 0 : i32
    return %arg0, %c0_i32 : i32, i32
  }
  func.func @transform_1(%arg0: i32) -> (i32, i32) {
    %c0_i32 = arith.constant 0 : i32
    %c0_i32_0 = arith.constant 0 : i32
    %c0_i32_1 = arith.constant 0 : i32
    return %c0_i32, %c0_i32_0 : i32, i32
  }
  func.func @transform_2(%arg0: i32) -> (i32, i32) {
    %c0_i32 = arith.constant 0 : i32
    %c0_i32_0 = arith.constant 0 : i32
    %c0_i32_1 = arith.constant 0 : i32
    return %c0_i32, %c0_i32_0 : i32, i32
  }
  func.func @transform_3(%arg0: i32) -> (i32, i32) {
    %c0_i32 = arith.constant 0 : i32
    %c0_i32_0 = arith.constant 0 : i32
    return %arg0, %c0_i32 : i32, i32
  }
}

module attributes {stable_mosaic.version = 11 : i64} {
  func.func @_matmul_bias_act_kernel(%arg0: i32, %arg1: memref<256x256xbf16, #tpu.memory_space<vmem>>, %arg2: memref<256x128xbf16, #tpu.memory_space<vmem>>, %arg3: memref<1x128xf32, #tpu.memory_space<vmem>>, %arg4: memref<256x128xbf16, #tpu.memory_space<vmem>>) attributes {dimension_semantics = [#tpu.dimension_semantics<parallel>], iteration_bounds = array<i64: 2>, scalar_prefetch = 0 : i64, scratch_operands = 0 : i64, tpu.core_type = #tpu.core_type<tc>, window_params = [{transform_indices = @transform_0, window_bounds = array<i64: 256, 256>}, {pipeline_mode = #tpu.pipeline_mode<synchronous>, transform_indices = @transform_1, window_bounds = array<i64: 256, 128>}, {pipeline_mode = #tpu.pipeline_mode<synchronous>, transform_indices = @transform_2, window_bounds = array<i64: 1, 128>}, {transform_indices = @transform_3, window_bounds = array<i64: 256, 128>}]} {
    %c0 = arith.constant 0 : index
    %c0_0 = arith.constant 0 : index
    %0 = vector.load %arg1[%c0, %c0_0] : memref<256x256xbf16, #tpu.memory_space<vmem>>, vector<256x256xbf16>
    %c0_1 = arith.constant 0 : index
    %c0_2 = arith.constant 0 : index
    %1 = vector.load %arg2[%c0_1, %c0_2] : memref<256x128xbf16, #tpu.memory_space<vmem>>, vector<256x128xbf16>
    %cst = arith.constant dense<0.000000e+00> : vector<256x128xf32>
    %2 = tpu.matmul %0, %1, %cst {dimension_numbers = #tpu.dot_dimension_numbers<[1], [0], [0], [1], [0, 0, 1, 1], [], []>} : vector<256x256xbf16>, vector<256x128xbf16>, vector<256x128xf32> -> vector<256x128xf32>
    %c0_3 = arith.constant 0 : index
    %c0_4 = arith.constant 0 : index
    %3 = vector.load %arg3[%c0_3, %c0_4] : memref<1x128xf32, #tpu.memory_space<vmem>>, vector<1x128xf32>
    %4 = vector.broadcast %3 : vector<1x128xf32> to vector<256x128xf32>
    %5 = arith.addf %2, %4 : vector<256x128xf32>
    %cst_5 = arith.constant 0.000000e+00 : f32
    %6 = vector.broadcast %cst_5 : f32 to vector<256x128xf32>
    %7 = arith.maximumf %5, %6 : vector<256x128xf32>
    %8 = arith.truncf %7 : vector<256x128xf32> to vector<256x128xbf16>
    %c0_6 = arith.constant 0 : index
    %c0_7 = arith.constant 0 : index
    %9 = vector.load %arg4[%c0_6, %c0_7] : memref<256x128xbf16, #tpu.memory_space<vmem>>, vector<256x128xbf16>
    tpu.vector_store %arg4[%c0_6, %c0_7], %8 {strides = array<i32>} : memref<256x128xbf16, #tpu.memory_space<vmem>>, vector<256x128xbf16>,
    return
  }
  func.func @transform_0(%arg0: i32) -> (i32, i32) {
    %c0_i32 = arith.constant 0 : i32
    %c0_i32_0 = arith.constant 0 : i32
    return %arg0, %c0_i32 : i32, i32
  }
  func.func @transform_1(%arg0: i32) -> (i32, i32) {
    %c0_i32 = arith.constant 0 : i32
    %c0_i32_0 = arith.constant 0 : i32
    %c0_i32_1 = arith.constant 0 : i32
    return %c0_i32, %c0_i32_0 : i32, i32
  }
  func.func @transform_2(%arg0: i32) -> (i32, i32) {
    %c0_i32 = arith.constant 0 : i32
    %c0_i32_0 = arith.constant 0 : i32
    %c0_i32_1 = arith.constant 0 : i32
    return %c0_i32, %c0_i32_0 : i32, i32
  }
  func.func @transform_3(%arg0: i32) -> (i32, i32) {
    %c0_i32 = arith.constant 0 : i32
    %c0_i32_0 = arith.constant 0 : i32
    return %arg0, %c0_i32 : i32, i32
  }
}

module attributes {stable_mosaic.version = 11 : i64} {
  func.func @_matmul_bias_act_kernel(%arg0: i32, %arg1: memref<128x256xbf16, #tpu.memory_space<vmem>>, %arg2: memref<256x128xbf16, #tpu.memory_space<vmem>>, %arg3: memref<1x128xf32, #tpu.memory_space<vmem>>, %arg4: memref<128x128xbf16, #tpu.memory_space<vmem>>) attributes {dimension_semantics = [#tpu.dimension_semantics<parallel>], iteration_bounds = array<i64: 1>, scalar_prefetch = 0 : i64, scratch_operands = 0 : i64, tpu.core_type = #tpu.core_type<tc>, window_params = [{transform_indices = @transform_0, window_bounds = array<i64: 128, 256>}, {pipeline_mode = #tpu.pipeline_mode<synchronous>, transform_indices = @transform_1, window_bounds = array<i64: 256, 128>}, {pipeline_mode = #tpu.pipeline_mode<synchronous>, transform_indices = @transform_2, window_bounds = array<i64: 1, 128>}, {transform_indices = @transform_3, window_bounds = array<i64: 128, 128>}]} {
    %c0 = arith.constant 0 : index
    %c0_0 = arith.constant 0 : index
    %0 = vector.load %arg1[%c0, %c0_0] : memref<128x256xbf16, #tpu.memory_space<vmem>>, vector<128x256xbf16>
    %c0_1 = arith.constant 0 : index
    %c0_2 = arith.constant 0 : index
    %1 = vector.load %arg2[%c0_1, %c0_2] : memref<256x128xbf16, #tpu.memory_space<vmem>>, vector<256x128xbf16>
    %cst = arith.constant dense<0.000000e+00> : vector<128x128xf32>
    %2 = tpu.matmul %0, %1, %cst {dimension_numbers = #tpu.dot_dimension_numbers<[1], [0], [0], [1], [0, 0, 1, 1], [], []>} : vector<128x256xbf16>, vector<256x128xbf16>, vector<128x128xf32> -> vector<128x128xf32>
    %c0_3 = arith.constant 0 : index
    %c0_4 = arith.constant 0 : index
    %3 = vector.load %arg3[%c0_3, %c0_4] : memref<1x128xf32, #tpu.memory_space<vmem>>, vector<1x128xf32>
    %4 = vector.broadcast %3 : vector<1x128xf32> to vector<128x128xf32>
    %5 = arith.addf %2, %4 : vector<128x128xf32>
    %cst_5 = arith.constant 0.000000e+00 : f32
    %6 = vector.broadcast %cst_5 : f32 to vector<128x128xf32>
    %7 = arith.maximumf %5, %6 : vector<128x128xf32>
    %8 = arith.truncf %7 : vector<128x128xf32> to vector<128x128xbf16>
    %c0_6 = arith.constant 0 : index
    %c0_7 = arith.constant 0 : index
    %9 = vector.load %arg4[%c0_6, %c0_7] : memref<128x128xbf16, #tpu.memory_space<vmem>>, vector<128x128xbf16>
    tpu.vector_store %arg4[%c0_6, %c0_7], %8 {strides = array<i32>} : memref<128x128xbf16, #tpu.memory_space<vmem>>, vector<128x128xbf16>,
    return
  }
  func.func @transform_0(%arg0: i32) -> (i32, i32) {
    %c0_i32 = arith.constant 0 : i32
    %c0_i32_0 = arith.constant 0 : i32
    return %arg0, %c0_i32 : i32, i32
  }
  func.func @transform_1(%arg0: i32) -> (i32, i32) {
    %c0_i32 = arith.constant 0 : i32
    %c0_i32_0 = arith.constant 0 : i32
    %c0_i32_1 = arith.constant 0 : i32
    return %c0_i32, %c0_i32_0 : i32, i32
  }
  func.func @transform_2(%arg0: i32) -> (i32, i32) {
    %c0_i32 = arith.constant 0 : i32
    %c0_i32_0 = arith.constant 0 : i32
    %c0_i32_1 = arith.constant 0 : i32
    return %c0_i32, %c0_i32_0 : i32, i32
  }
  func.func @transform_3(%arg0: i32) -> (i32, i32) {
    %c0_i32 = arith.constant 0 : i32
    %c0_i32_0 = arith.constant 0 : i32
    return %arg0, %c0_i32 : i32, i32
  }
}

module attributes {stable_mosaic.version = 11 : i64} {
  func.func @_matmul_bias_act_kernel(%arg0: i32, %arg1: memref<128x384xbf16, #tpu.memory_space<vmem>>, %arg2: memref<384x128xbf16, #tpu.memory_space<vmem>>, %arg3: memref<1x128xf32, #tpu.memory_space<vmem>>, %arg4: memref<128x128xbf16, #tpu.memory_space<vmem>>) attributes {dimension_semantics = [#tpu.dimension_semantics<parallel>], iteration_bounds = array<i64: 1>, scalar_prefetch = 0 : i64, scratch_operands = 0 : i64, tpu.core_type = #tpu.core_type<tc>, window_params = [{transform_indices = @transform_0, window_bounds = array<i64: 128, 384>}, {pipeline_mode = #tpu.pipeline_mode<synchronous>, transform_indices = @transform_1, window_bounds = array<i64: 384, 128>}, {pipeline_mode = #tpu.pipeline_mode<synchronous>, transform_indices = @transform_2, window_bounds = array<i64: 1, 128>}, {transform_indices = @transform_3, window_bounds = array<i64: 128, 128>}]} {
    %c0 = arith.constant 0 : index
    %c0_0 = arith.constant 0 : index
    %0 = vector.load %arg1[%c0, %c0_0] : memref<128x384xbf16, #tpu.memory_space<vmem>>, vector<128x384xbf16>
    %c0_1 = arith.constant 0 : index
    %c0_2 = arith.constant 0 : index
    %1 = vector.load %arg2[%c0_1, %c0_2] : memref<384x128xbf16, #tpu.memory_space<vmem>>, vector<384x128xbf16>
    %cst = arith.constant dense<0.000000e+00> : vector<128x128xf32>
    %2 = tpu.matmul %0, %1, %cst {dimension_numbers = #tpu.dot_dimension_numbers<[1], [0], [0], [1], [0, 0, 1, 1], [], []>} : vector<128x384xbf16>, vector<384x128xbf16>, vector<128x128xf32> -> vector<128x128xf32>
    %c0_3 = arith.constant 0 : index
    %c0_4 = arith.constant 0 : index
    %3 = vector.load %arg3[%c0_3, %c0_4] : memref<1x128xf32, #tpu.memory_space<vmem>>, vector<1x128xf32>
    %4 = vector.broadcast %3 : vector<1x128xf32> to vector<128x128xf32>
    %5 = arith.addf %2, %4 : vector<128x128xf32>
    %cst_5 = arith.constant 0.000000e+00 : f32
    %6 = vector.broadcast %cst_5 : f32 to vector<128x128xf32>
    %7 = arith.maximumf %5, %6 : vector<128x128xf32>
    %8 = arith.truncf %7 : vector<128x128xf32> to vector<128x128xbf16>
    %c0_6 = arith.constant 0 : index
    %c0_7 = arith.constant 0 : index
    %9 = vector.load %arg4[%c0_6, %c0_7] : memref<128x128xbf16, #tpu.memory_space<vmem>>, vector<128x128xbf16>
    tpu.vector_store %arg4[%c0_6, %c0_7], %8 {strides = array<i32>} : memref<128x128xbf16, #tpu.memory_space<vmem>>, vector<128x128xbf16>,
    return
  }
  func.func @transform_0(%arg0: i32) -> (i32, i32) {
    %c0_i32 = arith.constant 0 : i32
    %c0_i32_0 = arith.constant 0 : i32
    return %arg0, %c0_i32 : i32, i32
  }
  func.func @transform_1(%arg0: i32) -> (i32, i32) {
    %c0_i32 = arith.constant 0 : i32
    %c0_i32_0 = arith.constant 0 : i32
    %c0_i32_1 = arith.constant 0 : i32
    return %c0_i32, %c0_i32_0 : i32, i32
  }
  func.func @transform_2(%arg0: i32) -> (i32, i32) {
    %c0_i32 = arith.constant 0 : i32
    %c0_i32_0 = arith.constant 0 : i32
    %c0_i32_1 = arith.constant 0 : i32
    return %c0_i32, %c0_i32_0 : i32, i32
  }
  func.func @transform_3(%arg0: i32) -> (i32, i32) {
    %c0_i32 = arith.constant 0 : i32
    %c0_i32_0 = arith.constant 0 : i32
    return %arg0, %c0_i32 : i32, i32
  }
}

module attributes {stable_mosaic.version = 11 : i64} {
  func.func @_matmul_bias_act_kernel(%arg0: i32, %arg1: memref<128x640xbf16, #tpu.memory_space<vmem>>, %arg2: memref<640x128xbf16, #tpu.memory_space<vmem>>, %arg3: memref<1x128xf32, #tpu.memory_space<vmem>>, %arg4: memref<128x128xbf16, #tpu.memory_space<vmem>>) attributes {dimension_semantics = [#tpu.dimension_semantics<parallel>], iteration_bounds = array<i64: 1>, scalar_prefetch = 0 : i64, scratch_operands = 0 : i64, tpu.core_type = #tpu.core_type<tc>, window_params = [{transform_indices = @transform_0, window_bounds = array<i64: 128, 640>}, {pipeline_mode = #tpu.pipeline_mode<synchronous>, transform_indices = @transform_1, window_bounds = array<i64: 640, 128>}, {pipeline_mode = #tpu.pipeline_mode<synchronous>, transform_indices = @transform_2, window_bounds = array<i64: 1, 128>}, {transform_indices = @transform_3, window_bounds = array<i64: 128, 128>}]} {
    %c0 = arith.constant 0 : index
    %c0_0 = arith.constant 0 : index
    %0 = vector.load %arg1[%c0, %c0_0] : memref<128x640xbf16, #tpu.memory_space<vmem>>, vector<128x640xbf16>
    %c0_1 = arith.constant 0 : index
    %c0_2 = arith.constant 0 : index
    %1 = vector.load %arg2[%c0_1, %c0_2] : memref<640x128xbf16, #tpu.memory_space<vmem>>, vector<640x128xbf16>
    %cst = arith.constant dense<0.000000e+00> : vector<128x128xf32>
    %2 = tpu.matmul %0, %1, %cst {dimension_numbers = #tpu.dot_dimension_numbers<[1], [0], [0], [1], [0, 0, 1, 1], [], []>} : vector<128x640xbf16>, vector<640x128xbf16>, vector<128x128xf32> -> vector<128x128xf32>
    %c0_3 = arith.constant 0 : index
    %c0_4 = arith.constant 0 : index
    %3 = vector.load %arg3[%c0_3, %c0_4] : memref<1x128xf32, #tpu.memory_space<vmem>>, vector<1x128xf32>
    %4 = vector.broadcast %3 : vector<1x128xf32> to vector<128x128xf32>
    %5 = arith.addf %2, %4 : vector<128x128xf32>
    %cst_5 = arith.constant 0.000000e+00 : f32
    %6 = vector.broadcast %cst_5 : f32 to vector<128x128xf32>
    %7 = arith.maximumf %5, %6 : vector<128x128xf32>
    %8 = arith.truncf %7 : vector<128x128xf32> to vector<128x128xbf16>
    %c0_6 = arith.constant 0 : index
    %c0_7 = arith.constant 0 : index
    %9 = vector.load %arg4[%c0_6, %c0_7] : memref<128x128xbf16, #tpu.memory_space<vmem>>, vector<128x128xbf16>
    tpu.vector_store %arg4[%c0_6, %c0_7], %8 {strides = array<i32>} : memref<128x128xbf16, #tpu.memory_space<vmem>>, vector<128x128xbf16>,
    return
  }
  func.func @transform_0(%arg0: i32) -> (i32, i32) {
    %c0_i32 = arith.constant 0 : i32
    %c0_i32_0 = arith.constant 0 : i32
    return %arg0, %c0_i32 : i32, i32
  }
  func.func @transform_1(%arg0: i32) -> (i32, i32) {
    %c0_i32 = arith.constant 0 : i32
    %c0_i32_0 = arith.constant 0 : i32
    %c0_i32_1 = arith.constant 0 : i32
    return %c0_i32, %c0_i32_0 : i32, i32
  }
  func.func @transform_2(%arg0: i32) -> (i32, i32) {
    %c0_i32 = arith.constant 0 : i32
    %c0_i32_0 = arith.constant 0 : i32
    %c0_i32_1 = arith.constant 0 : i32
    return %c0_i32, %c0_i32_0 : i32, i32
  }
  func.func @transform_3(%arg0: i32) -> (i32, i32) {
    %c0_i32 = arith.constant 0 : i32
    %c0_i32_0 = arith.constant 0 : i32
    return %arg0, %c0_i32 : i32, i32
  }
}

module attributes {stable_mosaic.version = 11 : i64} {
  func.func @_matmul_bias_act_kernel(%arg0: i32, %arg1: memref<32x640xbf16, #tpu.memory_space<vmem>>, %arg2: memref<640x128xbf16, #tpu.memory_space<vmem>>, %arg3: memref<1x128xf32, #tpu.memory_space<vmem>>, %arg4: memref<32x128xbf16, #tpu.memory_space<vmem>>) attributes {dimension_semantics = [#tpu.dimension_semantics<parallel>], iteration_bounds = array<i64: 1>, scalar_prefetch = 0 : i64, scratch_operands = 0 : i64, tpu.core_type = #tpu.core_type<tc>, window_params = [{transform_indices = @transform_0, window_bounds = array<i64: 32, 640>}, {pipeline_mode = #tpu.pipeline_mode<synchronous>, transform_indices = @transform_1, window_bounds = array<i64: 640, 128>}, {pipeline_mode = #tpu.pipeline_mode<synchronous>, transform_indices = @transform_2, window_bounds = array<i64: 1, 128>}, {transform_indices = @transform_3, window_bounds = array<i64: 32, 128>}]} {
    %c0 = arith.constant 0 : index
    %c0_0 = arith.constant 0 : index
    %0 = vector.load %arg1[%c0, %c0_0] : memref<32x640xbf16, #tpu.memory_space<vmem>>, vector<32x640xbf16>
    %c0_1 = arith.constant 0 : index
    %c0_2 = arith.constant 0 : index
    %1 = vector.load %arg2[%c0_1, %c0_2] : memref<640x128xbf16, #tpu.memory_space<vmem>>, vector<640x128xbf16>
    %cst = arith.constant dense<0.000000e+00> : vector<32x128xf32>
    %2 = tpu.matmul %0, %1, %cst {dimension_numbers = #tpu.dot_dimension_numbers<[1], [0], [0], [1], [0, 0, 1, 1], [], []>} : vector<32x640xbf16>, vector<640x128xbf16>, vector<32x128xf32> -> vector<32x128xf32>
    %c0_3 = arith.constant 0 : index
    %c0_4 = arith.constant 0 : index
    %3 = vector.load %arg3[%c0_3, %c0_4] : memref<1x128xf32, #tpu.memory_space<vmem>>, vector<1x128xf32>
    %4 = vector.broadcast %3 : vector<1x128xf32> to vector<32x128xf32>
    %5 = arith.addf %2, %4 : vector<32x128xf32>
    %cst_5 = arith.constant 0.000000e+00 : f32
    %6 = vector.broadcast %cst_5 : f32 to vector<32x128xf32>
    %7 = arith.maximumf %5, %6 : vector<32x128xf32>
    %8 = arith.truncf %7 : vector<32x128xf32> to vector<32x128xbf16>
    %c0_6 = arith.constant 0 : index
    %c0_7 = arith.constant 0 : index
    %9 = vector.load %arg4[%c0_6, %c0_7] : memref<32x128xbf16, #tpu.memory_space<vmem>>, vector<32x128xbf16>
    tpu.vector_store %arg4[%c0_6, %c0_7], %8 {strides = array<i32>} : memref<32x128xbf16, #tpu.memory_space<vmem>>, vector<32x128xbf16>,
    return
  }
  func.func @transform_0(%arg0: i32) -> (i32, i32) {
    %c0_i32 = arith.constant 0 : i32
    %c0_i32_0 = arith.constant 0 : i32
    return %arg0, %c0_i32 : i32, i32
  }
  func.func @transform_1(%arg0: i32) -> (i32, i32) {
    %c0_i32 = arith.constant 0 : i32
    %c0_i32_0 = arith.constant 0 : i32
    %c0_i32_1 = arith.constant 0 : i32
    return %c0_i32, %c0_i32_0 : i32, i32
  }
  func.func @transform_2(%arg0: i32) -> (i32, i32) {
    %c0_i32 = arith.constant 0 : i32
    %c0_i32_0 = arith.constant 0 : i32
    %c0_i32_1 = arith.constant 0 : i32
    return %c0_i32, %c0_i32_0 : i32, i32
  }
  func.func @transform_3(%arg0: i32) -> (i32, i32) {
    %c0_i32 = arith.constant 0 : i32
    %c0_i32_0 = arith.constant 0 : i32
    return %arg0, %c0_i32 : i32, i32
  }
}

module attributes {stable_mosaic.version = 11 : i64} {
  func.func @_matmul_bias_act_kernel(%arg0: i32, %arg1: memref<32x1152xbf16, #tpu.memory_space<vmem>>, %arg2: memref<1152x128xbf16, #tpu.memory_space<vmem>>, %arg3: memref<1x128xf32, #tpu.memory_space<vmem>>, %arg4: memref<32x128xbf16, #tpu.memory_space<vmem>>) attributes {dimension_semantics = [#tpu.dimension_semantics<parallel>], iteration_bounds = array<i64: 1>, scalar_prefetch = 0 : i64, scratch_operands = 0 : i64, tpu.core_type = #tpu.core_type<tc>, window_params = [{transform_indices = @transform_0, window_bounds = array<i64: 32, 1152>}, {pipeline_mode = #tpu.pipeline_mode<synchronous>, transform_indices = @transform_1, window_bounds = array<i64: 1152, 128>}, {pipeline_mode = #tpu.pipeline_mode<synchronous>, transform_indices = @transform_2, window_bounds = array<i64: 1, 128>}, {transform_indices = @transform_3, window_bounds = array<i64: 32, 128>}]} {
    %c0 = arith.constant 0 : index
    %c0_0 = arith.constant 0 : index
    %0 = vector.load %arg1[%c0, %c0_0] : memref<32x1152xbf16, #tpu.memory_space<vmem>>, vector<32x1152xbf16>
    %c0_1 = arith.constant 0 : index
    %c0_2 = arith.constant 0 : index
    %1 = vector.load %arg2[%c0_1, %c0_2] : memref<1152x128xbf16, #tpu.memory_space<vmem>>, vector<1152x128xbf16>
    %cst = arith.constant dense<0.000000e+00> : vector<32x128xf32>
    %2 = tpu.matmul %0, %1, %cst {dimension_numbers = #tpu.dot_dimension_numbers<[1], [0], [0], [1], [0, 0, 1, 1], [], []>} : vector<32x1152xbf16>, vector<1152x128xbf16>, vector<32x128xf32> -> vector<32x128xf32>
    %c0_3 = arith.constant 0 : index
    %c0_4 = arith.constant 0 : index
    %3 = vector.load %arg3[%c0_3, %c0_4] : memref<1x128xf32, #tpu.memory_space<vmem>>, vector<1x128xf32>
    %4 = vector.broadcast %3 : vector<1x128xf32> to vector<32x128xf32>
    %5 = arith.addf %2, %4 : vector<32x128xf32>
    %cst_5 = arith.constant 0.000000e+00 : f32
    %6 = vector.broadcast %cst_5 : f32 to vector<32x128xf32>
    %7 = arith.maximumf %5, %6 : vector<32x128xf32>
    %8 = arith.truncf %7 : vector<32x128xf32> to vector<32x128xbf16>
    %c0_6 = arith.constant 0 : index
    %c0_7 = arith.constant 0 : index
    %9 = vector.load %arg4[%c0_6, %c0_7] : memref<32x128xbf16, #tpu.memory_space<vmem>>, vector<32x128xbf16>
    tpu.vector_store %arg4[%c0_6, %c0_7], %8 {strides = array<i32>} : memref<32x128xbf16, #tpu.memory_space<vmem>>, vector<32x128xbf16>,
    return
  }
  func.func @transform_0(%arg0: i32) -> (i32, i32) {
    %c0_i32 = arith.constant 0 : i32
    %c0_i32_0 = arith.constant 0 : i32
    return %arg0, %c0_i32 : i32, i32
  }
  func.func @transform_1(%arg0: i32) -> (i32, i32) {
    %c0_i32 = arith.constant 0 : i32
    %c0_i32_0 = arith.constant 0 : i32
    %c0_i32_1 = arith.constant 0 : i32
    return %c0_i32, %c0_i32_0 : i32, i32
  }
  func.func @transform_2(%arg0: i32) -> (i32, i32) {
    %c0_i32 = arith.constant 0 : i32
    %c0_i32_0 = arith.constant 0 : i32
    %c0_i32_1 = arith.constant 0 : i32
    return %c0_i32, %c0_i32_0 : i32, i32
  }
  func.func @transform_3(%arg0: i32) -> (i32, i32) {
    %c0_i32 = arith.constant 0 : i32
    %c0_i32_0 = arith.constant 0 : i32
    return %arg0, %c0_i32 : i32, i32
  }
}

module attributes {stable_mosaic.version = 11 : i64} {
  func.func @_matmul_bias_act_kernel(%arg0: i32, %arg1: memref<32x128xbf16, #tpu.memory_space<vmem>>, %arg2: memref<128x128xbf16, #tpu.memory_space<vmem>>, %arg3: memref<1x128xf32, #tpu.memory_space<vmem>>, %arg4: memref<32x128xbf16, #tpu.memory_space<vmem>>) attributes {dimension_semantics = [#tpu.dimension_semantics<parallel>], iteration_bounds = array<i64: 1>, scalar_prefetch = 0 : i64, scratch_operands = 0 : i64, tpu.core_type = #tpu.core_type<tc>, window_params = [{transform_indices = @transform_0, window_bounds = array<i64: 32, 128>}, {pipeline_mode = #tpu.pipeline_mode<synchronous>, transform_indices = @transform_1, window_bounds = array<i64: 128, 128>}, {pipeline_mode = #tpu.pipeline_mode<synchronous>, transform_indices = @transform_2, window_bounds = array<i64: 1, 128>}, {transform_indices = @transform_3, window_bounds = array<i64: 32, 128>}]} {
    %c0 = arith.constant 0 : index
    %c0_0 = arith.constant 0 : index
    %0 = vector.load %arg1[%c0, %c0_0] : memref<32x128xbf16, #tpu.memory_space<vmem>>, vector<32x128xbf16>
    %c0_1 = arith.constant 0 : index
    %c0_2 = arith.constant 0 : index
    %1 = vector.load %arg2[%c0_1, %c0_2] : memref<128x128xbf16, #tpu.memory_space<vmem>>, vector<128x128xbf16>
    %cst = arith.constant dense<0.000000e+00> : vector<32x128xf32>
    %2 = tpu.matmul %0, %1, %cst {dimension_numbers = #tpu.dot_dimension_numbers<[1], [0], [0], [1], [0, 0, 1, 1], [], []>} : vector<32x128xbf16>, vector<128x128xbf16>, vector<32x128xf32> -> vector<32x128xf32>
    %c0_3 = arith.constant 0 : index
    %c0_4 = arith.constant 0 : index
    %3 = vector.load %arg3[%c0_3, %c0_4] : memref<1x128xf32, #tpu.memory_space<vmem>>, vector<1x128xf32>
    %4 = vector.broadcast %3 : vector<1x128xf32> to vector<32x128xf32>
    %5 = arith.addf %2, %4 : vector<32x128xf32>
    %cst_5 = arith.constant 0.000000e+00 : f32
    %6 = vector.broadcast %cst_5 : f32 to vector<32x128xf32>
    %7 = arith.maximumf %5, %6 : vector<32x128xf32>
    %8 = arith.truncf %7 : vector<32x128xf32> to vector<32x128xbf16>
    %c0_6 = arith.constant 0 : index
    %c0_7 = arith.constant 0 : index
    %9 = vector.load %arg4[%c0_6, %c0_7] : memref<32x128xbf16, #tpu.memory_space<vmem>>, vector<32x128xbf16>
    tpu.vector_store %arg4[%c0_6, %c0_7], %8 {strides = array<i32>} : memref<32x128xbf16, #tpu.memory_space<vmem>>, vector<32x128xbf16>,
    return
  }
  func.func @transform_0(%arg0: i32) -> (i32, i32) {
    %c0_i32 = arith.constant 0 : i32
    %c0_i32_0 = arith.constant 0 : i32
    return %arg0, %c0_i32 : i32, i32
  }
  func.func @transform_1(%arg0: i32) -> (i32, i32) {
    %c0_i32 = arith.constant 0 : i32
    %c0_i32_0 = arith.constant 0 : i32
    %c0_i32_1 = arith.constant 0 : i32
    return %c0_i32, %c0_i32_0 : i32, i32
  }
  func.func @transform_2(%arg0: i32) -> (i32, i32) {
    %c0_i32 = arith.constant 0 : i32
    %c0_i32_0 = arith.constant 0 : i32
    %c0_i32_1 = arith.constant 0 : i32
    return %c0_i32, %c0_i32_0 : i32, i32
  }
  func.func @transform_3(%arg0: i32) -> (i32, i32) {
    %c0_i32 = arith.constant 0 : i32
    %c0_i32_0 = arith.constant 0 : i32
    return %arg0, %c0_i32 : i32, i32
  }
}

module attributes {stable_mosaic.version = 11 : i64} {
  func.func @_matmul_bias_act_kernel(%arg0: i32, %arg1: memref<16x384xbf16, #tpu.memory_space<vmem>>, %arg2: memref<384x128xbf16, #tpu.memory_space<vmem>>, %arg3: memref<1x128xf32, #tpu.memory_space<vmem>>, %arg4: memref<16x128xbf16, #tpu.memory_space<vmem>>) attributes {dimension_semantics = [#tpu.dimension_semantics<parallel>], iteration_bounds = array<i64: 1>, scalar_prefetch = 0 : i64, scratch_operands = 0 : i64, tpu.core_type = #tpu.core_type<tc>, window_params = [{transform_indices = @transform_0, window_bounds = array<i64: 16, 384>}, {pipeline_mode = #tpu.pipeline_mode<synchronous>, transform_indices = @transform_1, window_bounds = array<i64: 384, 128>}, {pipeline_mode = #tpu.pipeline_mode<synchronous>, transform_indices = @transform_2, window_bounds = array<i64: 1, 128>}, {transform_indices = @transform_3, window_bounds = array<i64: 16, 128>}]} {
    %c0 = arith.constant 0 : index
    %c0_0 = arith.constant 0 : index
    %0 = vector.load %arg1[%c0, %c0_0] : memref<16x384xbf16, #tpu.memory_space<vmem>>, vector<16x384xbf16>
    %c0_1 = arith.constant 0 : index
    %c0_2 = arith.constant 0 : index
    %1 = vector.load %arg2[%c0_1, %c0_2] : memref<384x128xbf16, #tpu.memory_space<vmem>>, vector<384x128xbf16>
    %cst = arith.constant dense<0.000000e+00> : vector<16x128xf32>
    %2 = tpu.matmul %0, %1, %cst {dimension_numbers = #tpu.dot_dimension_numbers<[1], [0], [0], [1], [0, 0, 1, 1], [], []>} : vector<16x384xbf16>, vector<384x128xbf16>, vector<16x128xf32> -> vector<16x128xf32>
    %c0_3 = arith.constant 0 : index
    %c0_4 = arith.constant 0 : index
    %3 = vector.load %arg3[%c0_3, %c0_4] : memref<1x128xf32, #tpu.memory_space<vmem>>, vector<1x128xf32>
    %4 = vector.broadcast %3 : vector<1x128xf32> to vector<16x128xf32>
    %5 = arith.addf %2, %4 : vector<16x128xf32>
    %cst_5 = arith.constant 0.000000e+00 : f32
    %6 = vector.broadcast %cst_5 : f32 to vector<16x128xf32>
    %7 = arith.maximumf %5, %6 : vector<16x128xf32>
    %8 = arith.truncf %7 : vector<16x128xf32> to vector<16x128xbf16>
    %c0_6 = arith.constant 0 : index
    %c0_7 = arith.constant 0 : index
    %9 = vector.load %arg4[%c0_6, %c0_7] : memref<16x128xbf16, #tpu.memory_space<vmem>>, vector<16x128xbf16>
    tpu.vector_store %arg4[%c0_6, %c0_7], %8 {strides = array<i32>} : memref<16x128xbf16, #tpu.memory_space<vmem>>, vector<16x128xbf16>,
    return
  }
  func.func @transform_0(%arg0: i32) -> (i32, i32) {
    %c0_i32 = arith.constant 0 : i32
    %c0_i32_0 = arith.constant 0 : i32
    return %arg0, %c0_i32 : i32, i32
  }
  func.func @transform_1(%arg0: i32) -> (i32, i32) {
    %c0_i32 = arith.constant 0 : i32
    %c0_i32_0 = arith.constant 0 : i32
    %c0_i32_1 = arith.constant 0 : i32
    return %c0_i32, %c0_i32_0 : i32, i32
  }
  func.func @transform_2(%arg0: i32) -> (i32, i32) {
    %c0_i32 = arith.constant 0 : i32
    %c0_i32_0 = arith.constant 0 : i32
    %c0_i32_1 = arith.constant 0 : i32
    return %c0_i32, %c0_i32_0 : i32, i32
  }
  func.func @transform_3(%arg0: i32) -> (i32, i32) {
    %c0_i32 = arith.constant 0 : i32
    %c0_i32_0 = arith.constant 0 : i32
    return %arg0, %c0_i32 : i32, i32
  }
}

module attributes {stable_mosaic.version = 11 : i64} {
  func.func @_matmul_bias_act_kernel(%arg0: i32, %arg1: memref<16x128xbf16, #tpu.memory_space<vmem>>, %arg2: memref<128x128xbf16, #tpu.memory_space<vmem>>, %arg3: memref<1x128xf32, #tpu.memory_space<vmem>>, %arg4: memref<16x128xbf16, #tpu.memory_space<vmem>>) attributes {dimension_semantics = [#tpu.dimension_semantics<parallel>], iteration_bounds = array<i64: 1>, scalar_prefetch = 0 : i64, scratch_operands = 0 : i64, tpu.core_type = #tpu.core_type<tc>, window_params = [{transform_indices = @transform_0, window_bounds = array<i64: 16, 128>}, {pipeline_mode = #tpu.pipeline_mode<synchronous>, transform_indices = @transform_1, window_bounds = array<i64: 128, 128>}, {pipeline_mode = #tpu.pipeline_mode<synchronous>, transform_indices = @transform_2, window_bounds = array<i64: 1, 128>}, {transform_indices = @transform_3, window_bounds = array<i64: 16, 128>}]} {
    %c0 = arith.constant 0 : index
    %c0_0 = arith.constant 0 : index
    %0 = vector.load %arg1[%c0, %c0_0] : memref<16x128xbf16, #tpu.memory_space<vmem>>, vector<16x128xbf16>
    %c0_1 = arith.constant 0 : index
    %c0_2 = arith.constant 0 : index
    %1 = vector.load %arg2[%c0_1, %c0_2] : memref<128x128xbf16, #tpu.memory_space<vmem>>, vector<128x128xbf16>
    %cst = arith.constant dense<0.000000e+00> : vector<16x128xf32>
    %2 = tpu.matmul %0, %1, %cst {dimension_numbers = #tpu.dot_dimension_numbers<[1], [0], [0], [1], [0, 0, 1, 1], [], []>} : vector<16x128xbf16>, vector<128x128xbf16>, vector<16x128xf32> -> vector<16x128xf32>
    %c0_3 = arith.constant 0 : index
    %c0_4 = arith.constant 0 : index
    %3 = vector.load %arg3[%c0_3, %c0_4] : memref<1x128xf32, #tpu.memory_space<vmem>>, vector<1x128xf32>
    %4 = vector.broadcast %3 : vector<1x128xf32> to vector<16x128xf32>
    %5 = arith.addf %2, %4 : vector<16x128xf32>
    %cst_5 = arith.constant 0.000000e+00 : f32
    %6 = vector.broadcast %cst_5 : f32 to vector<16x128xf32>
    %7 = arith.maximumf %5, %6 : vector<16x128xf32>
    %8 = arith.truncf %7 : vector<16x128xf32> to vector<16x128xbf16>
    %c0_6 = arith.constant 0 : index
    %c0_7 = arith.constant 0 : index
    %9 = vector.load %arg4[%c0_6, %c0_7] : memref<16x128xbf16, #tpu.memory_space<vmem>>, vector<16x128xbf16>
    tpu.vector_store %arg4[%c0_6, %c0_7], %8 {strides = array<i32>} : memref<16x128xbf16, #tpu.memory_space<vmem>>, vector<16x128xbf16>,
    return
  }
  func.func @transform_0(%arg0: i32) -> (i32, i32) {
    %c0_i32 = arith.constant 0 : i32
    %c0_i32_0 = arith.constant 0 : i32
    return %arg0, %c0_i32 : i32, i32
  }
  func.func @transform_1(%arg0: i32) -> (i32, i32) {
    %c0_i32 = arith.constant 0 : i32
    %c0_i32_0 = arith.constant 0 : i32
    %c0_i32_1 = arith.constant 0 : i32
    return %c0_i32, %c0_i32_0 : i32, i32
  }
  func.func @transform_2(%arg0: i32) -> (i32, i32) {
    %c0_i32 = arith.constant 0 : i32
    %c0_i32_0 = arith.constant 0 : i32
    %c0_i32_1 = arith.constant 0 : i32
    return %c0_i32, %c0_i32_0 : i32, i32
  }
  func.func @transform_3(%arg0: i32) -> (i32, i32) {
    %c0_i32 = arith.constant 0 : i32
    %c0_i32_0 = arith.constant 0 : i32
    return %arg0, %c0_i32 : i32, i32
  }
}

module attributes {stable_mosaic.version = 11 : i64} {
  func.func @_matmul_bias_act_kernel(%arg0: i32, %arg1: memref<16x640xbf16, #tpu.memory_space<vmem>>, %arg2: memref<640x128xbf16, #tpu.memory_space<vmem>>, %arg3: memref<1x128xf32, #tpu.memory_space<vmem>>, %arg4: memref<16x128xf32, #tpu.memory_space<vmem>>) attributes {dimension_semantics = [#tpu.dimension_semantics<parallel>], iteration_bounds = array<i64: 1>, scalar_prefetch = 0 : i64, scratch_operands = 0 : i64, tpu.core_type = #tpu.core_type<tc>, window_params = [{transform_indices = @transform_0, window_bounds = array<i64: 16, 640>}, {pipeline_mode = #tpu.pipeline_mode<synchronous>, transform_indices = @transform_1, window_bounds = array<i64: 640, 128>}, {pipeline_mode = #tpu.pipeline_mode<synchronous>, transform_indices = @transform_2, window_bounds = array<i64: 1, 128>}, {transform_indices = @transform_3, window_bounds = array<i64: 16, 128>}]} {
    %c0 = arith.constant 0 : index
    %c0_0 = arith.constant 0 : index
    %0 = vector.load %arg1[%c0, %c0_0] : memref<16x640xbf16, #tpu.memory_space<vmem>>, vector<16x640xbf16>
    %c0_1 = arith.constant 0 : index
    %c0_2 = arith.constant 0 : index
    %1 = vector.load %arg2[%c0_1, %c0_2] : memref<640x128xbf16, #tpu.memory_space<vmem>>, vector<640x128xbf16>
    %cst = arith.constant dense<0.000000e+00> : vector<16x128xf32>
    %2 = tpu.matmul %0, %1, %cst {dimension_numbers = #tpu.dot_dimension_numbers<[1], [0], [0], [1], [0, 0, 1, 1], [], []>} : vector<16x640xbf16>, vector<640x128xbf16>, vector<16x128xf32> -> vector<16x128xf32>
    %c0_3 = arith.constant 0 : index
    %c0_4 = arith.constant 0 : index
    %3 = vector.load %arg3[%c0_3, %c0_4] : memref<1x128xf32, #tpu.memory_space<vmem>>, vector<1x128xf32>
    %4 = vector.broadcast %3 : vector<1x128xf32> to vector<16x128xf32>
    %5 = arith.addf %2, %4 : vector<16x128xf32>
    %c0_5 = arith.constant 0 : index
    %c0_6 = arith.constant 0 : index
    %6 = vector.load %arg4[%c0_5, %c0_6] : memref<16x128xf32, #tpu.memory_space<vmem>>, vector<16x128xf32>
    tpu.vector_store %arg4[%c0_5, %c0_6], %5 {strides = array<i32>} : memref<16x128xf32, #tpu.memory_space<vmem>>, vector<16x128xf32>,
    return
  }
  func.func @transform_0(%arg0: i32) -> (i32, i32) {
    %c0_i32 = arith.constant 0 : i32
    %c0_i32_0 = arith.constant 0 : i32
    return %arg0, %c0_i32 : i32, i32
  }
  func.func @transform_1(%arg0: i32) -> (i32, i32) {
    %c0_i32 = arith.constant 0 : i32
    %c0_i32_0 = arith.constant 0 : i32
    %c0_i32_1 = arith.constant 0 : i32
    return %c0_i32, %c0_i32_0 : i32, i32
  }
  func.func @transform_2(%arg0: i32) -> (i32, i32) {
    %c0_i32 = arith.constant 0 : i32
    %c0_i32_0 = arith.constant 0 : i32
    %c0_i32_1 = arith.constant 0 : i32
    return %c0_i32, %c0_i32_0 : i32, i32
  }
  func.func @transform_3(%arg0: i32) -> (i32, i32) {
    %c0_i32 = arith.constant 0 : i32
    %c0_i32_0 = arith.constant 0 : i32
    return %arg0, %c0_i32 : i32, i32
  }
}

module attributes {stable_mosaic.version = 11 : i64} {
  func.func @_matmul_bias_act_kernel(%arg0: i32, %arg1: memref<32x1152xbf16, #tpu.memory_space<vmem>>, %arg2: memref<1152x128xbf16, #tpu.memory_space<vmem>>, %arg3: memref<1x128xf32, #tpu.memory_space<vmem>>, %arg4: memref<32x128xf32, #tpu.memory_space<vmem>>) attributes {dimension_semantics = [#tpu.dimension_semantics<parallel>], iteration_bounds = array<i64: 1>, scalar_prefetch = 0 : i64, scratch_operands = 0 : i64, tpu.core_type = #tpu.core_type<tc>, window_params = [{transform_indices = @transform_0, window_bounds = array<i64: 32, 1152>}, {pipeline_mode = #tpu.pipeline_mode<synchronous>, transform_indices = @transform_1, window_bounds = array<i64: 1152, 128>}, {pipeline_mode = #tpu.pipeline_mode<synchronous>, transform_indices = @transform_2, window_bounds = array<i64: 1, 128>}, {transform_indices = @transform_3, window_bounds = array<i64: 32, 128>}]} {
    %c0 = arith.constant 0 : index
    %c0_0 = arith.constant 0 : index
    %0 = vector.load %arg1[%c0, %c0_0] : memref<32x1152xbf16, #tpu.memory_space<vmem>>, vector<32x1152xbf16>
    %c0_1 = arith.constant 0 : index
    %c0_2 = arith.constant 0 : index
    %1 = vector.load %arg2[%c0_1, %c0_2] : memref<1152x128xbf16, #tpu.memory_space<vmem>>, vector<1152x128xbf16>
    %cst = arith.constant dense<0.000000e+00> : vector<32x128xf32>
    %2 = tpu.matmul %0, %1, %cst {dimension_numbers = #tpu.dot_dimension_numbers<[1], [0], [0], [1], [0, 0, 1, 1], [], []>} : vector<32x1152xbf16>, vector<1152x128xbf16>, vector<32x128xf32> -> vector<32x128xf32>
    %c0_3 = arith.constant 0 : index
    %c0_4 = arith.constant 0 : index
    %3 = vector.load %arg3[%c0_3, %c0_4] : memref<1x128xf32, #tpu.memory_space<vmem>>, vector<1x128xf32>
    %4 = vector.broadcast %3 : vector<1x128xf32> to vector<32x128xf32>
    %5 = arith.addf %2, %4 : vector<32x128xf32>
    %c0_5 = arith.constant 0 : index
    %c0_6 = arith.constant 0 : index
    %6 = vector.load %arg4[%c0_5, %c0_6] : memref<32x128xf32, #tpu.memory_space<vmem>>, vector<32x128xf32>
    tpu.vector_store %arg4[%c0_5, %c0_6], %5 {strides = array<i32>} : memref<32x128xf32, #tpu.memory_space<vmem>>, vector<32x128xf32>,
    return
  }
  func.func @transform_0(%arg0: i32) -> (i32, i32) {
    %c0_i32 = arith.constant 0 : i32
    %c0_i32_0 = arith.constant 0 : i32
    return %arg0, %c0_i32 : i32, i32
  }
  func.func @transform_1(%arg0: i32) -> (i32, i32) {
    %c0_i32 = arith.constant 0 : i32
    %c0_i32_0 = arith.constant 0 : i32
    %c0_i32_1 = arith.constant 0 : i32
    return %c0_i32, %c0_i32_0 : i32, i32
  }
  func.func @transform_2(%arg0: i32) -> (i32, i32) {
    %c0_i32 = arith.constant 0 : i32
    %c0_i32_0 = arith.constant 0 : i32
    %c0_i32_1 = arith.constant 0 : i32
    return %c0_i32, %c0_i32_0 : i32, i32
  }
  func.func @transform_3(%arg0: i32) -> (i32, i32) {
    %c0_i32 = arith.constant 0 : i32
    %c0_i32_0 = arith.constant 0 : i32
    return %arg0, %c0_i32 : i32, i32
  }
}

module attributes {stable_mosaic.version = 11 : i64} {
  func.func @_matmul_bias_act_kernel(%arg0: i32, %arg1: memref<128x640xbf16, #tpu.memory_space<vmem>>, %arg2: memref<640x128xbf16, #tpu.memory_space<vmem>>, %arg3: memref<1x128xf32, #tpu.memory_space<vmem>>, %arg4: memref<128x128xf32, #tpu.memory_space<vmem>>) attributes {dimension_semantics = [#tpu.dimension_semantics<parallel>], iteration_bounds = array<i64: 1>, scalar_prefetch = 0 : i64, scratch_operands = 0 : i64, tpu.core_type = #tpu.core_type<tc>, window_params = [{transform_indices = @transform_0, window_bounds = array<i64: 128, 640>}, {pipeline_mode = #tpu.pipeline_mode<synchronous>, transform_indices = @transform_1, window_bounds = array<i64: 640, 128>}, {pipeline_mode = #tpu.pipeline_mode<synchronous>, transform_indices = @transform_2, window_bounds = array<i64: 1, 128>}, {transform_indices = @transform_3, window_bounds = array<i64: 128, 128>}]} {
    %c0 = arith.constant 0 : index
    %c0_0 = arith.constant 0 : index
    %0 = vector.load %arg1[%c0, %c0_0] : memref<128x640xbf16, #tpu.memory_space<vmem>>, vector<128x640xbf16>
    %c0_1 = arith.constant 0 : index
    %c0_2 = arith.constant 0 : index
    %1 = vector.load %arg2[%c0_1, %c0_2] : memref<640x128xbf16, #tpu.memory_space<vmem>>, vector<640x128xbf16>
    %cst = arith.constant dense<0.000000e+00> : vector<128x128xf32>
    %2 = tpu.matmul %0, %1, %cst {dimension_numbers = #tpu.dot_dimension_numbers<[1], [0], [0], [1], [0, 0, 1, 1], [], []>} : vector<128x640xbf16>, vector<640x128xbf16>, vector<128x128xf32> -> vector<128x128xf32>
    %c0_3 = arith.constant 0 : index
    %c0_4 = arith.constant 0 : index
    %3 = vector.load %arg3[%c0_3, %c0_4] : memref<1x128xf32, #tpu.memory_space<vmem>>, vector<1x128xf32>
    %4 = vector.broadcast %3 : vector<1x128xf32> to vector<128x128xf32>
    %5 = arith.addf %2, %4 : vector<128x128xf32>
    %c0_5 = arith.constant 0 : index
    %c0_6 = arith.constant 0 : index
    %6 = vector.load %arg4[%c0_5, %c0_6] : memref<128x128xf32, #tpu.memory_space<vmem>>, vector<128x128xf32>
    tpu.vector_store %arg4[%c0_5, %c0_6], %5 {strides = array<i32>} : memref<128x128xf32, #tpu.memory_space<vmem>>, vector<128x128xf32>,
    return
  }
  func.func @transform_0(%arg0: i32) -> (i32, i32) {
    %c0_i32 = arith.constant 0 : i32
    %c0_i32_0 = arith.constant 0 : i32
    return %arg0, %c0_i32 : i32, i32
  }
  func.func @transform_1(%arg0: i32) -> (i32, i32) {
    %c0_i32 = arith.constant 0 : i32
    %c0_i32_0 = arith.constant 0 : i32
    %c0_i32_1 = arith.constant 0 : i32
    return %c0_i32, %c0_i32_0 : i32, i32
  }
  func.func @transform_2(%arg0: i32) -> (i32, i32) {
    %c0_i32 = arith.constant 0 : i32
    %c0_i32_0 = arith.constant 0 : i32
    %c0_i32_1 = arith.constant 0 : i32
    return %c0_i32, %c0_i32_0 : i32, i32
  }
  func.func @transform_3(%arg0: i32) -> (i32, i32) {
    %c0_i32 = arith.constant 0 : i32
    %c0_i32_0 = arith.constant 0 : i32
    return %arg0, %c0_i32 : i32, i32
  }
}

</mosaic_0001>

<llo_original>
// kernel: _forward_impl.17
$region0: #{_forward_impl.17}
  #allocation0 [shape = 'u32[]', space=smem, size = 0x4, offset = 0x4, fixed_abs, tag = 'smem constant byte address 0x4 - core index']
  #allocation1 [shape = 'u32[144,128]{1,0:T(1,128)}', space=vmem, size = 0x12000, scoped, tag = 'internal scratch']
  %s0 = inlined_call_operand.vmem [shape: bf16[512,128], index: 0, kind: input, shape index: {}]
  %s1 = inlined_call_operand.vmem [shape: bf16[128,128], index: 1, kind: input, shape index: {}]
  %s2 = inlined_call_operand.vmem [shape: f32[1,128], index: 2, kind: input, shape index: {}]
  %s3 = inlined_call_operand.vmem [shape: bf16[512,128], index: 3, kind: output, shape index: {}]
  %s4 = sld [smem:[#allocation0]]
  $region45: #{_forward_impl.17} parent=0
    _
  %s6 = ssub.s32 1, %s4
  %s7 = scalar_select 0, %s6, %s4
  loop: start=0, step=1, limit=4
  $region2: #{_forward_impl.17} parent=0 // loop_pre_header
    _
  $region3: #{_forward_impl.17} parent=0 // loop_header
    %s9 = sphi 0, %s13
    %p10 = scmp.ge.s32.totalorder %s9, 4
    %s19 = sphi 0, %s21
    %s22 = sphi 0, %s19
    %s23 = sphi 0, %s22
    %s39 = sphi 0, %s23
    %s43 = sphi 0, %s43
    %s45 = sphi 0, %s43
    %s46 = sphi 0, %s45
    %s60 = sphi 0, %s46
    %s64 = sphi 0, %s64
    %s66 = sphi 0, %s64
    %s67 = sphi 0, %s66
    %s81 = sphi 0, %s67
    %s87 = sphi 0, %s89
    %s90 = sphi 0, %s87
    %s91 = sphi 0, %s90
    %s107 = sphi 0, %s91
  $region4: #{_forward_impl.17} parent=0 // loop_header_branch
    %12 = sbr.rel (%p10) target = $region8
  $region5: #{_forward_impl.17} parent=0 // loop_body
    %s14 = ssub.s32 %s9, 1
    %s15 = ssub.s32 %s9, 2
    %s16 = sadd.s32 %s9, 1
    %s17 = ssub.s32 %s9, %s16
    %p18 = scmp.eq.s32.totalorder %s17, 0
    %s20 = sadd.s32 %s19, 1
    %s21 = scalar_select %p18, %s19, %s20
    %p24 = pneg %p18
    %p25 = scmp.eq.s32.totalorder %s9, 1
    %p26 = por %p24, %p25
    %p27 = scmp.ne.s32.totalorder %s19, %s22
    %p28 = scmp.eq.s32.totalorder %s9, 0
    %p29 = por %p27, %p28
    %p30 = scmp.ne.s32.totalorder %s19, %s22
    %p31 = scmp.eq.s32.totalorder %s14, 1
    %p32 = por %p30, %p31
    %p33 = scmp.ne.s32.totalorder %s22, %s23
    %p34 = scmp.eq.s32.totalorder %s14, 0
    %p35 = por %p33, %p34
    %p36 = scmp.ne.s32.totalorder %s22, %s23
    %p37 = scmp.eq.s32.totalorder %s15, 1
    %p38 = por %p36, %p37
    %p40 = scmp.ne.s32.totalorder %s23, %s39
    %p41 = scmp.eq.s32.totalorder %s15, 0
    %p42 = por %p40, %p41
    %s44 = sadd.s32 %s43, 1
    %p47 = scmp.eq.s32.totalorder %s9, 1
    %p48 = scmp.ne.s32.totalorder %s43, %s45
    %p49 = scmp.eq.s32.totalorder %s9, 0
    %p50 = por %p48, %p49
    %p51 = scmp.ne.s32.totalorder %s43, %s45
    %p52 = scmp.eq.s32.totalorder %s14, 1
    %p53 = por %p51, %p52
    %p54 = scmp.ne.s32.totalorder %s45, %s46
    %p55 = scmp.eq.s32.totalorder %s14, 0
    %p56 = por %p54, %p55
    %p57 = scmp.ne.s32.totalorder %s45, %s46
    %p58 = scmp.eq.s32.totalorder %s15, 1
    %p59 = por %p57, %p58
    %p61 = scmp.ne.s32.totalorder %s46, %s60
    %p62 = scmp.eq.s32.totalorder %s15, 0
    %p63 = por %p61, %p62
    %s65 = sadd.s32 %s64, 1
    %p68 = scmp.eq.s32.totalorder %s9, 1
    %p69 = scmp.ne.s32.totalorder %s64, %s66
    %p70 = scmp.eq.s32.totalorder %s9, 0
    %p71 = por %p69, %p70
    %p72 = scmp.ne.s32.totalorder %s64, %s66
    %p73 = scmp.eq.s32.totalorder %s14, 1
    %p74 = por %p72, %p73
    %p75 = scmp.ne.s32.totalorder %s66, %s67
    %p76 = scmp.eq.s32.totalorder %s14, 0
    %p77 = por %p75, %p76
    %p78 = scmp.ne.s32.totalorder %s66, %s67
    %p79 = scmp.eq.s32.totalorder %s15, 1
    %p80 = por %p78, %p79
    %p82 = scmp.ne.s32.totalorder %s67, %s81
    %p83 = scmp.eq.s32.totalorder %s15, 0
    %p84 = por %p82, %p83
    %s85 = ssub.s32 %s9, %s16
    %p86 = scmp.eq.s32.totalorder %s85, 0
    %s88 = sadd.s32 %s87, 1
    %s89 = scalar_select %p86, %s87, %s88
    %p92 = pneg %p86
    %p93 = scmp.eq.s32.totalorder %s9, 1
    %p94 = por %p92, %p93
    %p95 = scmp.ne.s32.totalorder %s87, %s90
    %p96 = scmp.eq.s32.totalorder %s9, 0
    %p97 = por %p95, %p96
    %p98 = scmp.ne.s32.totalorder %s87, %s90
    %p99 = scmp.eq.s32.totalorder %s14, 1
    %p100 = por %p98, %p99
    %p101 = scmp.ne.s32.totalorder %s90, %s91
    %p102 = scmp.eq.s32.totalorder %s14, 0
    %p103 = por %p101, %p102
    %p104 = scmp.ne.s32.totalorder %s90, %s91
    %p105 = scmp.eq.s32.totalorder %s15, 1
    %p106 = por %p104, %p105
    %p108 = scmp.ne.s32.totalorder %s91, %s107
    %p109 = scmp.eq.s32.totalorder %s15, 0
    %p110 = por %p108, %p109
    %p111 = scmp.le.s32.totalorder 1, %s9
    %p112 = scmp.lt.s32.totalorder %s9, 3
    %p113 = pnand %p111, %p112
    %p114 = pneg %p113
    // Predicated region
    $region9: #{_forward_impl.17} parent=5 // pred_check
      _
    $region10: #{_forward_impl.17} parent=5 // pred_check_branch
      %116 = sbr.rel (%p113) target = $region12
    $region11: #{_forward_impl.17} parent=5 // pred_region
      %s117 = ssub.s32 %s9, 1
      // Predicated region
      $region13: #{_forward_impl.17} parent=11 // pred_check
        %p118 = pneg %p56
      $region14: #{_forward_impl.17} parent=11 // pred_check_branch
        %120 = sbr.rel (%p118) target = $region16
      $region15: #{_forward_impl.17} parent=11 // pred_region
        _
      $region16: #{_forward_impl.17} parent=11 // pred_fallthru
        _
      // Predicated region
      $region17: #{_forward_impl.17} parent=11 // pred_check
        %p121 = pneg %p77
      $region18: #{_forward_impl.17} parent=11 // pred_check_branch
        %123 = sbr.rel (%p121) target = $region20
      $region19: #{_forward_impl.17} parent=11 // pred_region
        _
      $region20: #{_forward_impl.17} parent=11 // pred_fallthru
        _
    $region12: #{_forward_impl.17} parent=5 // pred_fallthru
      _
    %p124 = scmp.lt.s32.totalorder %s9, 2
    // Predicated region
    $region21: #{_forward_impl.17} parent=5 // pred_check
      %p125 = pneg %p124
    $region22: #{_forward_impl.17} parent=5 // pred_check_branch
      %127 = sbr.rel (%p125) target = $region24
    $region23: #{_forward_impl.17} parent=5 // pred_region
      // Predicated region
      $region25: #{_forward_impl.17} parent=23 // pred_check
        %p128 = pneg %p29
      $region26: #{_forward_impl.17} parent=23 // pred_check_branch
        %130 = sbr.rel (%p128) target = $region28
      $region27: #{_forward_impl.17} parent=23 // pred_region
        %s131 = smul.u32 32, %s9
        %p132 = scmp.lt.s32.totalorder %s131, 63
        %s133 = scalar_select %p132, %s131, 63
        %s134 = smul.addr %s133, 4
        %s135 = scalar_lea.vmem %s0, %s134
        %s136 = smul.u32 32, %s9
      $region28: #{_forward_impl.17} parent=23 // pred_fallthru
        _
    $region24: #{_forward_impl.17} parent=5 // pred_fallthru
      _
    %p137 = scmp.le.s32.totalorder 1, %s9
    %p138 = scmp.lt.s32.totalorder %s9, 3
    %p139 = pnand %p137, %p138
    %p140 = pneg %p139
    // Predicated region
    $region29: #{_forward_impl.17} parent=5 // pred_check
      _
    $region30: #{_forward_impl.17} parent=5 // pred_check_branch
      %142 = sbr.rel (%p139) target = $region32
    $region31: #{_forward_impl.17} parent=5 // pred_region
      %s143 = ssub.s32 %s9, 1
      %s144 = smul.u32 32, %s14
      %p145 = scmp.lt.s32.totalorder %s144, 63
      %s146 = scalar_select %p145, %s144, 63
      %s147 = smul.addr %s146, 4
      %s148 = scalar_lea.vmem %s0, %s147
      %p149 = pneg %p35
      %p150 = pneg %p32
      %p151 = pneg %p56
      %p152 = pneg %p53
      %p153 = pneg %p77
      %p154 = pneg %p74
      %p155 = pneg %p103
      %p156 = pneg %p100
      %s157 = smul.u32 32, %s14
      %p158 = scmp.lt.s32.totalorder %s157, 63
      %s159 = scalar_select %p158, %s157, 63
      %s160 = smul.addr %s159, 4
      %s161 = scalar_lea.vmem %s3, %s160
      %s162 = smul.u32 32, %s14
      %p163 = scmp.lt.s32.totalorder %s162, 63
      %s164 = scalar_select %p163, %s162, 63
      %s165 = smul.addr %s164, 4
      %s166 = scalar_lea.vmem %s0, %s165
      %s167 = smul.u32 32, %s14
      %s168 = smul.u32 32, %s14
      %p169 = scmp.lt.s32.totalorder %s168, 63
      %s170 = scalar_select %p169, %s168, 63
      %s171 = smul.addr %s170, 4
      %s172 = scalar_lea.vmem %s3, %s171
      %s173 = smul.u32 32, %s14
      %v175 = vld [vmem:[%s166] sm:$0xf]
      %v176 = vld [vmem:[%s166 + $0x4] sm:$0xf]
      %v177 = vld [vmem:[%s166 + $0x8] sm:$0xf]
      %v178 = vld [vmem:[%s166 + $0xc] sm:$0xf]
      %v179 = vld [vmem:[%s166 + $0x10] sm:$0xf]
      %v180 = vld [vmem:[%s166 + $0x14] sm:$0xf]
      %v181 = vld [vmem:[%s166 + $0x18] sm:$0xf]
      %v182 = vld [vmem:[%s166 + $0x1c] sm:$0xf]
      %v183 = vld [vmem:[%s166 + $0x20] sm:$0xf]
      %v184 = vld [vmem:[%s166 + $0x24] sm:$0xf]
      %v185 = vld [vmem:[%s166 + $0x28] sm:$0xf]
      %v186 = vld [vmem:[%s166 + $0x2c] sm:$0xf]
      %v187 = vld [vmem:[%s166 + $0x30] sm:$0xf]
      %v188 = vld [vmem:[%s166 + $0x34] sm:$0xf]
      %v189 = vld [vmem:[%s166 + $0x38] sm:$0xf]
      %v190 = vld [vmem:[%s166 + $0x3c] sm:$0xf]
      %v191 = vld [vmem:[%s166 + $0x40] sm:$0xf]
      %v192 = vld [vmem:[%s166 + $0x44] sm:$0xf]
      %v193 = vld [vmem:[%s166 + $0x48] sm:$0xf]
      %v194 = vld [vmem:[%s166 + $0x4c] sm:$0xf]
      %v195 = vld [vmem:[%s166 + $0x50] sm:$0xf]
      %v196 = vld [vmem:[%s166 + $0x54] sm:$0xf]
      %v197 = vld [vmem:[%s166 + $0x58] sm:$0xf]
      %v198 = vld [vmem:[%s166 + $0x5c] sm:$0xf]
      %v199 = vld [vmem:[%s166 + $0x60] sm:$0xf]
      %v200 = vld [vmem:[%s166 + $0x64] sm:$0xf]
      %v201 = vld [vmem:[%s166 + $0x68] sm:$0xf]
      %v202 = vld [vmem:[%s166 + $0x6c] sm:$0xf]
      %v203 = vld [vmem:[%s166 + $0x70] sm:$0xf]
      %v204 = vld [vmem:[%s166 + $0x74] sm:$0xf]
      %v205 = vld [vmem:[%s166 + $0x78] sm:$0xf]
      %v206 = vld [vmem:[%s166 + $0x7c] sm:$0xf]
      %v207 = vld [vmem:[%s1] sm:$0xf]
      %v208 = vld [vmem:[%s1 + $0x4] sm:$0xf]
      %v209 = vld [vmem:[%s1 + $0x8] sm:$0xf]
      %v210 = vld [vmem:[%s1 + $0xc] sm:$0xf]
      %v211 = vld [vmem:[%s1 + $0x10] sm:$0xf]
      %v212 = vld [vmem:[%s1 + $0x14] sm:$0xf]
      %v213 = vld [vmem:[%s1 + $0x18] sm:$0xf]
      %v214 = vld [vmem:[%s1 + $0x1c] sm:$0xf]
      %v215 = vld [vmem:[%s1 + $0x20] sm:$0xf]
      %v216 = vld [vmem:[%s1 + $0x24] sm:$0xf]
      %v217 = vld [vmem:[%s1 + $0x28] sm:$0xf]
      %v218 = vld [vmem:[%s1 + $0x2c] sm:$0xf]
      %v219 = vld [vmem:[%s1 + $0x30] sm:$0xf]
      %v220 = vld [vmem:[%s1 + $0x34] sm:$0xf]
      %v221 = vld [vmem:[%s1 + $0x38] sm:$0xf]
      %v222 = vld [vmem:[%s1 + $0x3c] sm:$0xf]
      %v223 = vld [vmem:[%s2] sm:$0x1]
      %v225 = vlaneseq
      %v226 = vshrl.u32 %v225, 7
      %v227 = vsub.s32 0, %v226
      %v228 = vrot.slane %v223, %v227
      %v262 = vunpack.c.l.b16 %v175
      %v263 = vunpack.c.l.b16 %v176
      %v264 = vunpack.c.l.b16 %v177
      %v265 = vunpack.c.l.b16 %v178
      %v266 = vunpack.c.l.b16 %v179
      %v267 = vunpack.c.l.b16 %v180
      %v268 = vunpack.c.l.b16 %v181
      %v269 = vunpack.c.l.b16 %v182
      %v270 = vunpack.c.l.b16 %v183
      %v271 = vunpack.c.l.b16 %v184
      %v272 = vunpack.c.l.b16 %v185
      %v273 = vunpack.c.l.b16 %v186
      %v274 = vunpack.c.l.b16 %v187
      %v275 = vunpack.c.l.b16 %v188
      %v276 = vunpack.c.l.b16 %v189
      %v277 = vunpack.c.l.b16 %v190
      %v278 = vunpack.c.l.b16 %v191
      %v279 = vunpack.c.l.b16 %v192
      %v280 = vunpack.c.l.b16 %v193
      %v281 = vunpack.c.l.b16 %v194
      %v282 = vunpack.c.l.b16 %v195
      %v283 = vunpack.c.l.b16 %v196
      %v284 = vunpack.c.l.b16 %v197
      %v285 = vunpack.c.l.b16 %v198
      %v286 = vunpack.c.l.b16 %v199
      %v287 = vunpack.c.l.b16 %v200
      %v288 = vunpack.c.l.b16 %v201
      %v289 = vunpack.c.l.b16 %v202
      %v290 = vunpack.c.l.b16 %v203
      %v291 = vunpack.c.l.b16 %v204
      %v292 = vunpack.c.l.b16 %v205
      %v293 = vunpack.c.l.b16 %v206
      %v294 = vpack.c.b16 %v263, %v262
      %v295 = vpack.c.b16 %v265, %v264
      %v296 = vpack.c.b16 %v267, %v266
      %v297 = vpack.c.b16 %v269, %v268
      %v298 = vpack.c.b16 %v271, %v270
      %v299 = vpack.c.b16 %v273, %v272
      %v300 = vpack.c.b16 %v275, %v274
      %v301 = vpack.c.b16 %v277, %v276
      %v302 = vpack.c.b16 %v279, %v278
      %v303 = vpack.c.b16 %v281, %v280
      %v304 = vpack.c.b16 %v283, %v282
      %v305 = vpack.c.b16 %v285, %v284
      %v306 = vpack.c.b16 %v287, %v286
      %v307 = vpack.c.b16 %v289, %v288
      %v308 = vpack.c.b16 %v291, %v290
      %v309 = vpack.c.b16 %v293, %v292
      %v342 = vunpack.c.l.b16 %v207
      %v343 = vunpack.c.l.b16 %v208
      %v344 = vunpack.c.l.b16 %v209
      %v345 = vunpack.c.l.b16 %v210
      %v346 = vunpack.c.l.b16 %v211
      %v347 = vunpack.c.l.b16 %v212
      %v348 = vunpack.c.l.b16 %v213
      %v349 = vunpack.c.l.b16 %v214
      %v350 = vunpack.c.l.b16 %v215
      %v351 = vunpack.c.l.b16 %v216
      %v352 = vunpack.c.l.b16 %v217
      %v353 = vunpack.c.l.b16 %v218
      %v354 = vunpack.c.l.b16 %v219
      %v355 = vunpack.c.l.b16 %v220
      %v356 = vunpack.c.l.b16 %v221
      %v357 = vunpack.c.l.b16 %v222
      %v358 = vpack.c.b16 %v343, %v342
      %v359 = vpack.c.b16 %v345, %v344
      %v360 = vpack.c.b16 %v347, %v346
      %v361 = vpack.c.b16 %v349, %v348
      %v362 = vpack.c.b16 %v351, %v350
      %v363 = vpack.c.b16 %v353, %v352
      %v364 = vpack.c.b16 %v355, %v354
      %v365 = vpack.c.b16 %v357, %v356
      %374 = vmatprep.subr.bf16.mxu0 0
      %375 = vmatpush1.bf16.msra.mxu0 %v365
      %376 = vmatprep.subr.bf16.mxu0 0
      %377 = vmatpush1.bf16.msra.mxu0 %v364
      %378 = vmatprep.subr.bf16.mxu0 0
      %379 = vmatpush1.bf16.msra.mxu0 %v363
      %380 = vmatprep.subr.bf16.mxu0 0
      %381 = vmatpush1.bf16.msra.mxu0 %v362
      %382 = vmatprep.subr.bf16.mxu0 0
      %383 = vmatpush1.bf16.msra.mxu0 %v361
      %384 = vmatprep.subr.bf16.mxu0 0
      %385 = vmatpush1.bf16.msra.mxu0 %v360
      %386 = vmatprep.subr.bf16.mxu0 0
      %387 = vmatpush1.bf16.msra.mxu0 %v359
      %388 = vmatprep.subr.bf16.mxu0 0
      %389 = vmatpush1.bf16.msra.mxu0 %v358
      %390 = vmatprep.subr.bf16.mxu0 0
      %391 = vmatpush2.bf16.msra.mxu0 0
      %392 = vmatprep.subr.bf16.mxu0 0
      %393 = vmatpush2.bf16.msra.mxu0 0
      %394 = vmatprep.subr.bf16.mxu0 0
      %395 = vmatpush2.bf16.msra.mxu0 0
      %396 = vmatprep.subr.bf16.mxu0 0
      %397 = vmatpush2.bf16.msra.mxu0 0
      %398 = vmatprep.subr.bf16.mxu0 0
      %399 = vmatpush2.bf16.msra.mxu0 0
      %400 = vmatprep.subr.bf16.mxu0 0
      %401 = vmatpush2.bf16.msra.mxu0 0
      %402 = vmatprep.subr.bf16.mxu0 0
      %403 = vmatpush2.bf16.msra.mxu0 0
      %404 = vmatprep.subr.bf16.mxu0 0
      %405 = vmatpush2.bf16.msra.mxu0 0
      %406 = vmatprep.mubr.bf16.mxu0 0
      %407 = vmatmul.mubr.bf16.gmra.mxu0 %v294
      %v408 = vpop.f32.mrf.mxu0
      %v409 = vadd.f32 %v228, %v408
      %v410 = vpop.f32.mrf.mxu0
      %v411 = vpop.f32.mrf.mxu0
      %v412 = vadd.f32 %v228, %v411
      %v413 = vpop.f32.mrf.mxu0
      %414 = vmatprep.mubr.bf16.mxu0 0
      %415 = vmatmul.mubr.bf16.gmra.mxu0 %v295
      %v416 = vpop.f32.mrf.mxu0
      %v417 = vadd.f32 %v228, %v416
      %v418 = vpop.f32.mrf.mxu0
      %v419 = vpop.f32.mrf.mxu0
      %v420 = vadd.f32 %v228, %v419
      %v421 = vpop.f32.mrf.mxu0
      %422 = vmatprep.mubr.bf16.mxu0 0
      %423 = vmatmul.mubr.bf16.gmra.mxu0 %v296
      %v424 = vpop.f32.mrf.mxu0
      %v425 = vadd.f32 %v228, %v424
      %v426 = vpop.f32.mrf.mxu0
      %v427 = vpop.f32.mrf.mxu0
      %v428 = vadd.f32 %v228, %v427
      %v429 = vpop.f32.mrf.mxu0
      %430 = vmatprep.mubr.bf16.mxu0 0
      %431 = vmatmul.mubr.bf16.gmra.mxu0 %v297
      %v432 = vpop.f32.mrf.mxu0
      %v433 = vadd.f32 %v228, %v432
      %v434 = vpop.f32.mrf.mxu0
      %v435 = vpop.f32.mrf.mxu0
      %v436 = vadd.f32 %v228, %v435
      %v437 = vpop.f32.mrf.mxu0
      %438 = vmatprep.mubr.bf16.mxu0 0
      %439 = vmatmul.mubr.bf16.gmra.mxu0 %v298
      %v440 = vpop.f32.mrf.mxu0
      %v441 = vadd.f32 %v228, %v440
      %v442 = vpop.f32.mrf.mxu0
      %v443 = vpop.f32.mrf.mxu0
      %v444 = vadd.f32 %v228, %v443
      %v445 = vpop.f32.mrf.mxu0
      %446 = vmatprep.mubr.bf16.mxu0 0
      %447 = vmatmul.mubr.bf16.gmra.mxu0 %v299
      %v448 = vpop.f32.mrf.mxu0
      %v449 = vadd.f32 %v228, %v448
      %v450 = vpop.f32.mrf.mxu0
      %v451 = vpop.f32.mrf.mxu0
      %v452 = vadd.f32 %v228, %v451
      %v453 = vpop.f32.mrf.mxu0
      %454 = vmatprep.mubr.bf16.mxu0 0
      %455 = vmatmul.mubr.bf16.gmra.mxu0 %v300
      %v456 = vpop.f32.mrf.mxu0
      %v457 = vadd.f32 %v228, %v456
      %v458 = vpop.f32.mrf.mxu0
      %v459 = vpop.f32.mrf.mxu0
      %v460 = vadd.f32 %v228, %v459
      %v461 = vpop.f32.mrf.mxu0
      %462 = vmatprep.mubr.bf16.mxu0 0
      %463 = vmatmul.mubr.bf16.gmra.mxu0 %v301
      %v464 = vpop.f32.mrf.mxu0
      %v465 = vadd.f32 %v228, %v464
      %v466 = vpop.f32.mrf.mxu0
      %v467 = vpop.f32.mrf.mxu0
      %v468 = vadd.f32 %v228, %v467
      %v469 = vpop.f32.mrf.mxu0
      %470 = vmatprep.mubr.bf16.mxu0 0
      %471 = vmatmul.mubr.bf16.gmra.mxu0 %v302
      %v472 = vpop.f32.mrf.mxu0
      %v473 = vadd.f32 %v228, %v472
      %v474 = vpop.f32.mrf.mxu0
      %v475 = vpop.f32.mrf.mxu0
      %v476 = vadd.f32 %v228, %v475
      %v477 = vpop.f32.mrf.mxu0
      %478 = vmatprep.mubr.bf16.mxu0 0
      %479 = vmatmul.mubr.bf16.gmra.mxu0 %v303
      %v480 = vpop.f32.mrf.mxu0
      %v481 = vadd.f32 %v228, %v480
      %v482 = vpop.f32.mrf.mxu0
      %v483 = vpop.f32.mrf.mxu0
      %v484 = vadd.f32 %v228, %v483
      %v485 = vpop.f32.mrf.mxu0
      %486 = vmatprep.mubr.bf16.mxu0 0
      %487 = vmatmul.mubr.bf16.gmra.mxu0 %v304
      %v488 = vpop.f32.mrf.mxu0
      %v489 = vadd.f32 %v228, %v488
      %v490 = vpop.f32.mrf.mxu0
      %v491 = vpop.f32.mrf.mxu0
      %v492 = vadd.f32 %v228, %v491
      %v493 = vpop.f32.mrf.mxu0
      %494 = vmatprep.mubr.bf16.mxu0 0
      %495 = vmatmul.mubr.bf16.gmra.mxu0 %v305
      %v496 = vpop.f32.mrf.mxu0
      %v497 = vadd.f32 %v228, %v496
      %v498 = vpop.f32.mrf.mxu0
      %v499 = vpop.f32.mrf.mxu0
      %v500 = vadd.f32 %v228, %v499
      %v501 = vpop.f32.mrf.mxu0
      %502 = vmatprep.mubr.bf16.mxu0 0
      %503 = vmatmul.mubr.bf16.gmra.mxu0 %v306
      %v504 = vpop.f32.mrf.mxu0
      %v505 = vadd.f32 %v228, %v504
      %v506 = vpop.f32.mrf.mxu0
      %v507 = vpop.f32.mrf.mxu0
      %v508 = vadd.f32 %v228, %v507
      %v509 = vpop.f32.mrf.mxu0
      %510 = vmatprep.mubr.bf16.mxu0 0
      %511 = vmatmul.mubr.bf16.gmra.mxu0 %v307
      %v512 = vpop.f32.mrf.mxu0
      %v513 = vadd.f32 %v228, %v512
      %v514 = vpop.f32.mrf.mxu0
      %v515 = vpop.f32.mrf.mxu0
      %v516 = vadd.f32 %v228, %v515
      %v517 = vpop.f32.mrf.mxu0
      %518 = vmatprep.mubr.bf16.mxu0 0
      %519 = vmatmul.mubr.bf16.gmra.mxu0 %v308
      %v520 = vpop.f32.mrf.mxu0
      %v521 = vadd.f32 %v228, %v520
      %v522 = vpop.f32.mrf.mxu0
      %v523 = vpop.f32.mrf.mxu0
      %v524 = vadd.f32 %v228, %v523
      %v525 = vpop.f32.mrf.mxu0
      %526 = vmatprep.mubr.bf16.mxu0 0
      %527 = vmatmul.mubr.bf16.gmra.mxu0 %v309
      %v528 = vpop.f32.mrf.mxu0
      %v529 = vadd.f32 %v228, %v528
      %v530 = vpop.f32.mrf.mxu0
      %v531 = vpop.f32.mrf.mxu0
      %v532 = vadd.f32 %v228, %v531
      %v533 = vpop.f32.mrf.mxu0
      %534 = vdwg.mxu0
      %v535 = vmax.f32 %v409, 0.0
      %v536 = vmax.f32 %v412, 0.0
      %v537 = vmax.f32 %v417, 0.0
      %v538 = vmax.f32 %v420, 0.0
      %v539 = vmax.f32 %v425, 0.0
      %v540 = vmax.f32 %v428, 0.0
      %v541 = vmax.f32 %v433, 0.0
      %v542 = vmax.f32 %v436, 0.0
      %v543 = vmax.f32 %v441, 0.0
      %v544 = vmax.f32 %v444, 0.0
      %v545 = vmax.f32 %v449, 0.0
      %v546 = vmax.f32 %v452, 0.0
      %v547 = vmax.f32 %v457, 0.0
      %v548 = vmax.f32 %v460, 0.0
      %v549 = vmax.f32 %v465, 0.0
      %v550 = vmax.f32 %v468, 0.0
      %v551 = vmax.f32 %v473, 0.0
      %v552 = vmax.f32 %v476, 0.0
      %v553 = vmax.f32 %v481, 0.0
      %v554 = vmax.f32 %v484, 0.0
      %v555 = vmax.f32 %v489, 0.0
      %v556 = vmax.f32 %v492, 0.0
      %v557 = vmax.f32 %v497, 0.0
      %v558 = vmax.f32 %v500, 0.0
      %v559 = vmax.f32 %v505, 0.0
      %v560 = vmax.f32 %v508, 0.0
      %v561 = vmax.f32 %v513, 0.0
      %v562 = vmax.f32 %v516, 0.0
      %v563 = vmax.f32 %v521, 0.0
      %v564 = vmax.f32 %v524, 0.0
      %v565 = vmax.f32 %v529, 0.0
      %v566 = vmax.f32 %v532, 0.0
      %v567 = vpack.c.bf16 %v536, %v535
      %v568 = vpack.c.bf16 %v538, %v537
      %v569 = vpack.c.bf16 %v540, %v539
      %v570 = vpack.c.bf16 %v542, %v541
      %v571 = vpack.c.bf16 %v544, %v543
      %v572 = vpack.c.bf16 %v546, %v545
      %v573 = vpack.c.bf16 %v548, %v547
      %v574 = vpack.c.bf16 %v550, %v549
      %v575 = vpack.c.bf16 %v552, %v551
      %v576 = vpack.c.bf16 %v554, %v553
      %v577 = vpack.c.bf16 %v556, %v555
      %v578 = vpack.c.bf16 %v558, %v557
      %v579 = vpack.c.bf16 %v560, %v559
      %v580 = vpack.c.bf16 %v562, %v561
      %v581 = vpack.c.bf16 %v564, %v563
      %v582 = vpack.c.bf16 %v566, %v565
      %v599 = vunpack.c.l.b16 %v567
      %v600 = vunpack.c.h.b16 %v567
      %v601 = vunpack.c.l.b16 %v568
      %v602 = vunpack.c.h.b16 %v568
      %v603 = vunpack.c.l.b16 %v569
      %v604 = vunpack.c.h.b16 %v569
      %v605 = vunpack.c.l.b16 %v570
      %v606 = vunpack.c.h.b16 %v570
      %v607 = vunpack.c.l.b16 %v571
      %v608 = vunpack.c.h.b16 %v571
      %v609 = vunpack.c.l.b16 %v572
      %v610 = vunpack.c.h.b16 %v572
      %v611 = vunpack.c.l.b16 %v573
      %v612 = vunpack.c.h.b16 %v573
      %v613 = vunpack.c.l.b16 %v574
      %v614 = vunpack.c.h.b16 %v574
      %v615 = vunpack.c.l.b16 %v575
      %v616 = vunpack.c.h.b16 %v575
      %v617 = vunpack.c.l.b16 %v576
      %v618 = vunpack.c.h.b16 %v576
      %v619 = vunpack.c.l.b16 %v577
      %v620 = vunpack.c.h.b16 %v577
      %v621 = vunpack.c.l.b16 %v578
      %v622 = vunpack.c.h.b16 %v578
      %v623 = vunpack.c.l.b16 %v579
      %v624 = vunpack.c.h.b16 %v579
      %v625 = vunpack.c.l.b16 %v580
      %v626 = vunpack.c.h.b16 %v580
      %v627 = vunpack.c.l.b16 %v581
      %v628 = vunpack.c.h.b16 %v581
      %v629 = vunpack.c.l.b16 %v582
      %v630 = vunpack.c.h.b16 %v582
      %v631 = vpack.c.b16 %v599, %v599
      %v632 = vpack.c.b16 %v600, %v600
      %v633 = vpack.c.b16 %v601, %v601
      %v634 = vpack.c.b16 %v602, %v602
      %v635 = vpack.c.b16 %v603, %v603
      %v636 = vpack.c.b16 %v604, %v604
      %v637 = vpack.c.b16 %v605, %v605
      %v638 = vpack.c.b16 %v606, %v606
      %v639 = vpack.c.b16 %v607, %v607
      %v640 = vpack.c.b16 %v608, %v608
      %v641 = vpack.c.b16 %v609, %v609
      %v642 = vpack.c.b16 %v610, %v610
      %v643 = vpack.c.b16 %v611, %v611
      %v644 = vpack.c.b16 %v612, %v612
      %v645 = vpack.c.b16 %v613, %v613
      %v646 = vpack.c.b16 %v614, %v614
      %v647 = vpack.c.b16 %v615, %v615
      %v648 = vpack.c.b16 %v616, %v616
      %v649 = vpack.c.b16 %v617, %v617
      %v650 = vpack.c.b16 %v618, %v618
      %v651 = vpack.c.b16 %v619, %v619
      %v652 = vpack.c.b16 %v620, %v620
      %v653 = vpack.c.b16 %v621, %v621
      %v654 = vpack.c.b16 %v622, %v622
      %v655 = vpack.c.b16 %v623, %v623
      %v656 = vpack.c.b16 %v624, %v624
      %v657 = vpack.c.b16 %v625, %v625
      %v658 = vpack.c.b16 %v626, %v626
      %v659 = vpack.c.b16 %v627, %v627
      %v660 = vpack.c.b16 %v628, %v628
      %v661 = vpack.c.b16 %v629, %v629
      %v662 = vpack.c.b16 %v630, %v630
      %695 = vst [vmem:[%s172] sm:$0xf] %v631
      %696 = vst [vmem:[%s172 + $0x4] sm:$0xf] %v632
      %697 = vst [vmem:[%s172 + $0x8] sm:$0xf] %v633
      %698 = vst [vmem:[%s172 + $0xc] sm:$0xf] %v634
      %699 = vst [vmem:[%s172 + $0x10] sm:$0xf] %v635
      %700 = vst [vmem:[%s172 + $0x14] sm:$0xf] %v636
      %701 = vst [vmem:[%s172 + $0x18] sm:$0xf] %v637
      %702 = vst [vmem:[%s172 + $0x1c] sm:$0xf] %v638
      %703 = vst [vmem:[%s172 + $0x20] sm:$0xf] %v639
      %704 = vst [vmem:[%s172 + $0x24] sm:$0xf] %v640
      %705 = vst [vmem:[%s172 + $0x28] sm:$0xf] %v641
      %706 = vst [vmem:[%s172 + $0x2c] sm:$0xf] %v642
      %707 = vst [vmem:[%s172 + $0x30] sm:$0xf] %v643
      %708 = vst [vmem:[%s172 + $0x34] sm:$0xf] %v644
      %709 = vst [vmem:[%s172 + $0x38] sm:$0xf] %v645
      %710 = vst [vmem:[%s172 + $0x3c] sm:$0xf] %v646
      %711 = vst [vmem:[%s172 + $0x40] sm:$0xf] %v647
      %712 = vst [vmem:[%s172 + $0x44] sm:$0xf] %v648
      %713 = vst [vmem:[%s172 + $0x48] sm:$0xf] %v649
      %714 = vst [vmem:[%s172 + $0x4c] sm:$0xf] %v650
      %715 = vst [vmem:[%s172 + $0x50] sm:$0xf] %v651
      %716 = vst [vmem:[%s172 + $0x54] sm:$0xf] %v652
      %717 = vst [vmem:[%s172 + $0x58] sm:$0xf] %v653
      %718 = vst [vmem:[%s172 + $0x5c] sm:$0xf] %v654
      %719 = vst [vmem:[%s172 + $0x60] sm:$0xf] %v655
      %720 = vst [vmem:[%s172 + $0x64] sm:$0xf] %v656
      %721 = vst [vmem:[%s172 + $0x68] sm:$0xf] %v657
      %722 = vst [vmem:[%s172 + $0x6c] sm:$0xf] %v658
      %723 = vst [vmem:[%s172 + $0x70] sm:$0xf] %v659
      %724 = vst [vmem:[%s172 + $0x74] sm:$0xf] %v660
      %725 = vst [vmem:[%s172 + $0x78] sm:$0xf] %v661
      %726 = vst [vmem:[%s172 + $0x7c] sm:$0xf] %v662
      %s727 = smul.u32 32, %s14
      %p728 = scmp.lt.s32.totalorder %s727, 63
      %s729 = scalar_select %p728, %s727, 63
      %s730 = smul.addr %s729, 4
      %s731 = scalar_lea.vmem %s3, %s730
      // Predicated region
      $region33: #{_forward_impl.17} parent=31 // pred_check
        %p732 = pneg %p100
      $region34: #{_forward_impl.17} parent=31 // pred_check_branch
        %734 = sbr.rel (%p732) target = $region36
      $region35: #{_forward_impl.17} parent=31 // pred_region
        %s735 = smul.u32 32, %s14
      $region36: #{_forward_impl.17} parent=31 // pred_fallthru
        _
    $region32: #{_forward_impl.17} parent=5 // pred_fallthru
      _
    %p736 = scmp.le.s32.totalorder 2, %s9
    // Predicated region
    $region37: #{_forward_impl.17} parent=5 // pred_check
      %p737 = pneg %p736
    $region38: #{_forward_impl.17} parent=5 // pred_check_branch
      %739 = sbr.rel (%p737) target = $region40
    $region39: #{_forward_impl.17} parent=5 // pred_region
      %s740 = ssub.s32 %s9, 2
      // Predicated region
      $region41: #{_forward_impl.17} parent=39 // pred_check
        %p741 = pneg %p106
      $region42: #{_forward_impl.17} parent=39 // pred_check_branch
        %743 = sbr.rel (%p741) target = $region44
      $region43: #{_forward_impl.17} parent=39 // pred_region
        %s744 = smul.u32 32, %s15
        %p745 = scmp.lt.s32.totalorder %s744, 63
        %s746 = scalar_select %p745, %s744, 63
        %s747 = smul.addr %s746, 4
        %s748 = scalar_lea.vmem %s3, %s747
      $region44: #{_forward_impl.17} parent=39 // pred_fallthru
        _
    $region40: #{_forward_impl.17} parent=5 // pred_fallthru
      _
  $region6: #{_forward_impl.17} parent=0 // loop_footer
    %s13 = sadd.s32 1, %s9
  $region7: #{_forward_impl.17} parent=0 // loop_footer_branch
    %8 = sbr.rel target = $region3
  $region8: #{_forward_impl.17} parent=0 // loop_exit
    _

// kernel: _forward_impl.18
$region0: #{_forward_impl.18}
  #allocation0 [shape = 'u32[]', space=smem, size = 0x4, offset = 0x4, fixed_abs, tag = 'smem constant byte address 0x4 - core index']
  #allocation1 [shape = 'u32[144,128]{1,0:T(1,128)}', space=vmem, size = 0x12000, scoped, tag = 'internal scratch']
  %s0 = inlined_call_operand.vmem [shape: bf16[512,256], index: 0, kind: input, shape index: {}]
  %s1 = inlined_call_operand.vmem [shape: bf16[256,128], index: 1, kind: input, shape index: {}]
  %s2 = inlined_call_operand.vmem [shape: f32[1,128], index: 2, kind: input, shape index: {}]
  %s3 = inlined_call_operand.vmem [shape: bf16[512,128], index: 3, kind: output, shape index: {}]
  %s4 = sld [smem:[#allocation0]]
  $region45: #{_forward_impl.18} parent=0
    _
  %s6 = ssub.s32 1, %s4
  %s7 = scalar_select 0, %s6, %s4
  loop: start=0, step=1, limit=4
  $region2: #{_forward_impl.18} parent=0 // loop_pre_header
    _
  $region3: #{_forward_impl.18} parent=0 // loop_header
    %s9 = sphi 0, %s13
    %p10 = scmp.ge.s32.totalorder %s9, 4
    %s19 = sphi 0, %s21
    %s22 = sphi 0, %s19
    %s23 = sphi 0, %s22
    %s39 = sphi 0, %s23
    %s43 = sphi 0, %s43
    %s45 = sphi 0, %s43
    %s46 = sphi 0, %s45
    %s60 = sphi 0, %s46
    %s64 = sphi 0, %s64
    %s66 = sphi 0, %s64
    %s67 = sphi 0, %s66
    %s81 = sphi 0, %s67
    %s87 = sphi 0, %s89
    %s90 = sphi 0, %s87
    %s91 = sphi 0, %s90
    %s107 = sphi 0, %s91
  $region4: #{_forward_impl.18} parent=0 // loop_header_branch
    %12 = sbr.rel (%p10) target = $region8
  $region5: #{_forward_impl.18} parent=0 // loop_body
    %s14 = ssub.s32 %s9, 1
    %s15 = ssub.s32 %s9, 2
    %s16 = sadd.s32 %s9, 1
    %s17 = ssub.s32 %s9, %s16
    %p18 = scmp.eq.s32.totalorder %s17, 0
    %s20 = sadd.s32 %s19, 1
    %s21 = scalar_select %p18, %s19, %s20
    %p24 = pneg %p18
    %p25 = scmp.eq.s32.totalorder %s9, 1
    %p26 = por %p24, %p25
    %p27 = scmp.ne.s32.totalorder %s19, %s22
    %p28 = scmp.eq.s32.totalorder %s9, 0
    %p29 = por %p27, %p28
    %p30 = scmp.ne.s32.totalorder %s19, %s22
    %p31 = scmp.eq.s32.totalorder %s14, 1
    %p32 = por %p30, %p31
    %p33 = scmp.ne.s32.totalorder %s22, %s23
    %p34 = scmp.eq.s32.totalorder %s14, 0
    %p35 = por %p33, %p34
    %p36 = scmp.ne.s32.totalorder %s22, %s23
    %p37 = scmp.eq.s32.totalorder %s15, 1
    %p38 = por %p36, %p37
    %p40 = scmp.ne.s32.totalorder %s23, %s39
    %p41 = scmp.eq.s32.totalorder %s15, 0
    %p42 = por %p40, %p41
    %s44 = sadd.s32 %s43, 1
    %p47 = scmp.eq.s32.totalorder %s9, 1
    %p48 = scmp.ne.s32.totalorder %s43, %s45
    %p49 = scmp.eq.s32.totalorder %s9, 0
    %p50 = por %p48, %p49
    %p51 = scmp.ne.s32.totalorder %s43, %s45
    %p52 = scmp.eq.s32.totalorder %s14, 1
    %p53 = por %p51, %p52
    %p54 = scmp.ne.s32.totalorder %s45, %s46
    %p55 = scmp.eq.s32.totalorder %s14, 0
    %p56 = por %p54, %p55
    %p57 = scmp.ne.s32.totalorder %s45, %s46
    %p58 = scmp.eq.s32.totalorder %s15, 1
    %p59 = por %p57, %p58
    %p61 = scmp.ne.s32.totalorder %s46, %s60
    %p62 = scmp.eq.s32.totalorder %s15, 0
    %p63 = por %p61, %p62
    %s65 = sadd.s32 %s64, 1
    %p68 = scmp.eq.s32.totalorder %s9, 1
    %p69 = scmp.ne.s32.totalorder %s64, %s66
    %p70 = scmp.eq.s32.totalorder %s9, 0
    %p71 = por %p69, %p70
    %p72 = scmp.ne.s32.totalorder %s64, %s66
    %p73 = scmp.eq.s32.totalorder %s14, 1
    %p74 = por %p72, %p73
    %p75 = scmp.ne.s32.totalorder %s66, %s67
    %p76 = scmp.eq.s32.totalorder %s14, 0
    %p77 = por %p75, %p76
    %p78 = scmp.ne.s32.totalorder %s66, %s67
    %p79 = scmp.eq.s32.totalorder %s15, 1
    %p80 = por %p78, %p79
    %p82 = scmp.ne.s32.totalorder %s67, %s81
    %p83 = scmp.eq.s32.totalorder %s15, 0
    %p84 = por %p82, %p83
    %s85 = ssub.s32 %s9, %s16
    %p86 = scmp.eq.s32.totalorder %s85, 0
    %s88 = sadd.s32 %s87, 1
    %s89 = scalar_select %p86, %s87, %s88
    %p92 = pneg %p86
    %p93 = scmp.eq.s32.totalorder %s9, 1
    %p94 = por %p92, %p93
    %p95 = scmp.ne.s32.totalorder %s87, %s90
    %p96 = scmp.eq.s32.totalorder %s9, 0
    %p97 = por %p95, %p96
    %p98 = scmp.ne.s32.totalorder %s87, %s90
    %p99 = scmp.eq.s32.totalorder %s14, 1
    %p100 = por %p98, %p99
    %p101 = scmp.ne.s32.totalorder %s90, %s91
    %p102 = scmp.eq.s32.totalorder %s14, 0
    %p103 = por %p101, %p102
    %p104 = scmp.ne.s32.totalorder %s90, %s91
    %p105 = scmp.eq.s32.totalorder %s15, 1
    %p106 = por %p104, %p105
    %p108 = scmp.ne.s32.totalorder %s91, %s107
    %p109 = scmp.eq.s32.totalorder %s15, 0
    %p110 = por %p108, %p109
    %p111 = scmp.le.s32.totalorder 1, %s9
    %p112 = scmp.lt.s32.totalorder %s9, 3
    %p113 = pnand %p111, %p112
    %p114 = pneg %p113
    // Predicated region
    $region9: #{_forward_impl.18} parent=5 // pred_check
      _
    $region10: #{_forward_impl.18} parent=5 // pred_check_branch
      %116 = sbr.rel (%p113) target = $region12
    $region11: #{_forward_impl.18} parent=5 // pred_region
      %s117 = ssub.s32 %s9, 1
      // Predicated region
      $region13: #{_forward_impl.18} parent=11 // pred_check
        %p118 = pneg %p56
      $region14: #{_forward_impl.18} parent=11 // pred_check_branch
        %120 = sbr.rel (%p118) target = $region16
      $region15: #{_forward_impl.18} parent=11 // pred_region
        _
      $region16: #{_forward_impl.18} parent=11 // pred_fallthru
        _
      // Predicated region
      $region17: #{_forward_impl.18} parent=11 // pred_check
        %p121 = pneg %p77
      $region18: #{_forward_impl.18} parent=11 // pred_check_branch
        %123 = sbr.rel (%p121) target = $region20
      $region19: #{_forward_impl.18} parent=11 // pred_region
        _
      $region20: #{_forward_impl.18} parent=11 // pred_fallthru
        _
    $region12: #{_forward_impl.18} parent=5 // pred_fallthru
      _
    %p124 = scmp.lt.s32.totalorder %s9, 2
    // Predicated region
    $region21: #{_forward_impl.18} parent=5 // pred_check
      %p125 = pneg %p124
    $region22: #{_forward_impl.18} parent=5 // pred_check_branch
      %127 = sbr.rel (%p125) target = $region24
    $region23: #{_forward_impl.18} parent=5 // pred_region
      // Predicated region
      $region25: #{_forward_impl.18} parent=23 // pred_check
        %p128 = pneg %p29
      $region26: #{_forward_impl.18} parent=23 // pred_check_branch
        %130 = sbr.rel (%p128) target = $region28
      $region27: #{_forward_impl.18} parent=23 // pred_region
        %s131 = smul.u32 32, %s9
        %p132 = scmp.lt.s32.totalorder %s131, 63
        %s133 = scalar_select %p132, %s131, 63
        %s134 = smul.addr %s133, 2
        %s135 = smul.addr %s134, 4
        %s136 = scalar_lea.vmem %s0, %s135
        %s137 = smul.u32 32, %s9
      $region28: #{_forward_impl.18} parent=23 // pred_fallthru
        _
    $region24: #{_forward_impl.18} parent=5 // pred_fallthru
      _
    %p138 = scmp.le.s32.totalorder 1, %s9
    %p139 = scmp.lt.s32.totalorder %s9, 3
    %p140 = pnand %p138, %p139
    %p141 = pneg %p140
    // Predicated region
    $region29: #{_forward_impl.18} parent=5 // pred_check
      _
    $region30: #{_forward_impl.18} parent=5 // pred_check_branch
      %143 = sbr.rel (%p140) target = $region32
    $region31: #{_forward_impl.18} parent=5 // pred_region
      %s144 = ssub.s32 %s9, 1
      %s145 = smul.u32 32, %s14
      %p146 = scmp.lt.s32.totalorder %s145, 63
      %s147 = scalar_select %p146, %s145, 63
      %s148 = smul.addr %s147, 2
      %s149 = smul.addr %s148, 4
      %s150 = scalar_lea.vmem %s0, %s149
      %p151 = pneg %p35
      %p152 = pneg %p32
      %p153 = pneg %p56
      %p154 = pneg %p53
      %p155 = pneg %p77
      %p156 = pneg %p74
      %p157 = pneg %p103
      %p158 = pneg %p100
      %s159 = smul.u32 32, %s14
      %p160 = scmp.lt.s32.totalorder %s159, 63
      %s161 = scalar_select %p160, %s159, 63
      %s162 = smul.addr %s161, 4
      %s163 = scalar_lea.vmem %s3, %s162
      %s164 = smul.u32 32, %s14
      %p165 = scmp.lt.s32.totalorder %s164, 63
      %s166 = scalar_select %p165, %s164, 63
      %s167 = smul.addr %s166, 2
      %s168 = smul.addr %s167, 4
      %s169 = scalar_lea.vmem %s0, %s168
      %s170 = smul.u32 32, %s14
      %s171 = smul.u32 32, %s14
      %p172 = scmp.lt.s32.totalorder %s171, 63
      %s173 = scalar_select %p172, %s171, 63
      %s174 = smul.addr %s173, 4
      %s175 = scalar_lea.vmem %s3, %s174
      %s176 = smul.u32 32, %s14
      %v178 = vld [vmem:[%s169] sm:$0xff]
      %v179 = vld [vmem:[%s169 + $0x8] sm:$0xff]
      %v180 = vld [vmem:[%s169 + $0x10] sm:$0xff]
      %v181 = vld [vmem:[%s169 + $0x18] sm:$0xff]
      %v182 = vld [vmem:[%s169 + $0x20] sm:$0xff]
      %v183 = vld [vmem:[%s169 + $0x28] sm:$0xff]
      %v184 = vld [vmem:[%s169 + $0x30] sm:$0xff]
      %v185 = vld [vmem:[%s169 + $0x38] sm:$0xff]
      %v186 = vld [vmem:[%s169 + $0x40] sm:$0xff]
      %v187 = vld [vmem:[%s169 + $0x48] sm:$0xff]
      %v188 = vld [vmem:[%s169 + $0x50] sm:$0xff]
      %v189 = vld [vmem:[%s169 + $0x58] sm:$0xff]
      %v190 = vld [vmem:[%s169 + $0x60] sm:$0xff]
      %v191 = vld [vmem:[%s169 + $0x68] sm:$0xff]
      %v192 = vld [vmem:[%s169 + $0x70] sm:$0xff]
      %v193 = vld [vmem:[%s169 + $0x78] sm:$0xff]
      %v194 = vld [vmem:[%s169 + $0x80] sm:$0xff]
      %v195 = vld [vmem:[%s169 + $0x88] sm:$0xff]
      %v196 = vld [vmem:[%s169 + $0x90] sm:$0xff]
      %v197 = vld [vmem:[%s169 + $0x98] sm:$0xff]
      %v198 = vld [vmem:[%s169 + $0xa0] sm:$0xff]
      %v199 = vld [vmem:[%s169 + $0xa8] sm:$0xff]
      %v200 = vld [vmem:[%s169 + $0xb0] sm:$0xff]
      %v201 = vld [vmem:[%s169 + $0xb8] sm:$0xff]
      %v202 = vld [vmem:[%s169 + $0xc0] sm:$0xff]
      %v203 = vld [vmem:[%s169 + $0xc8] sm:$0xff]
      %v204 = vld [vmem:[%s169 + $0xd0] sm:$0xff]
      %v205 = vld [vmem:[%s169 + $0xd8] sm:$0xff]
      %v206 = vld [vmem:[%s169 + $0xe0] sm:$0xff]
      %v207 = vld [vmem:[%s169 + $0xe8] sm:$0xff]
      %v208 = vld [vmem:[%s169 + $0xf0] sm:$0xff]
      %v209 = vld [vmem:[%s169 + $0xf8] sm:$0xff]
      %v210 = vld [vmem:[%s1] sm:$0xf]
      %v211 = vld [vmem:[%s1 + $0x4] sm:$0xf]
      %v212 = vld [vmem:[%s1 + $0x8] sm:$0xf]
      %v213 = vld [vmem:[%s1 + $0xc] sm:$0xf]
      %v214 = vld [vmem:[%s1 + $0x10] sm:$0xf]
      %v215 = vld [vmem:[%s1 + $0x14] sm:$0xf]
      %v216 = vld [vmem:[%s1 + $0x18] sm:$0xf]
      %v217 = vld [vmem:[%s1 + $0x1c] sm:$0xf]
      %v218 = vld [vmem:[%s1 + $0x20] sm:$0xf]
      %v219 = vld [vmem:[%s1 + $0x24] sm:$0xf]
      %v220 = vld [vmem:[%s1 + $0x28] sm:$0xf]
      %v221 = vld [vmem:[%s1 + $0x2c] sm:$0xf]
      %v222 = vld [vmem:[%s1 + $0x30] sm:$0xf]
      %v223 = vld [vmem:[%s1 + $0x34] sm:$0xf]
      %v224 = vld [vmem:[%s1 + $0x38] sm:$0xf]
      %v225 = vld [vmem:[%s1 + $0x3c] sm:$0xf]
      %v226 = vld [vmem:[%s1 + $0x40] sm:$0xf]
      %v227 = vld [vmem:[%s1 + $0x44] sm:$0xf]
      %v228 = vld [vmem:[%s1 + $0x48] sm:$0xf]
      %v229 = vld [vmem:[%s1 + $0x4c] sm:$0xf]
      %v230 = vld [vmem:[%s1 + $0x50] sm:$0xf]
      %v231 = vld [vmem:[%s1 + $0x54] sm:$0xf]
      %v232 = vld [vmem:[%s1 + $0x58] sm:$0xf]
      %v233 = vld [vmem:[%s1 + $0x5c] sm:$0xf]
      %v234 = vld [vmem:[%s1 + $0x60] sm:$0xf]
      %v235 = vld [vmem:[%s1 + $0x64] sm:$0xf]
      %v236 = vld [vmem:[%s1 + $0x68] sm:$0xf]
      %v237 = vld [vmem:[%s1 + $0x6c] sm:$0xf]
      %v238 = vld [vmem:[%s1 + $0x70] sm:$0xf]
      %v239 = vld [vmem:[%s1 + $0x74] sm:$0xf]
      %v240 = vld [vmem:[%s1 + $0x78] sm:$0xf]
      %v241 = vld [vmem:[%s1 + $0x7c] sm:$0xf]
      %v242 = vld [vmem:[%s2] sm:$0x1]
      %v244 = vlaneseq
      %v245 = vshrl.u32 %v244, 7
      %v246 = vsub.s32 0, %v245
      %v247 = vrot.slane %v242, %v246
      %v281 = vunpack.c.l.b16 %v178
      %v282 = vunpack.c.h.b16 %v178
      %v283 = vunpack.c.l.b16 %v179
      %v284 = vunpack.c.h.b16 %v179
      %v285 = vunpack.c.l.b16 %v180
      %v286 = vunpack.c.h.b16 %v180
      %v287 = vunpack.c.l.b16 %v181
      %v288 = vunpack.c.h.b16 %v181
      %v289 = vunpack.c.l.b16 %v182
      %v290 = vunpack.c.h.b16 %v182
      %v291 = vunpack.c.l.b16 %v183
      %v292 = vunpack.c.h.b16 %v183
      %v293 = vunpack.c.l.b16 %v184
      %v294 = vunpack.c.h.b16 %v184
      %v295 = vunpack.c.l.b16 %v185
      %v296 = vunpack.c.h.b16 %v185
      %v297 = vunpack.c.l.b16 %v186
      %v298 = vunpack.c.h.b16 %v186
      %v299 = vunpack.c.l.b16 %v187
      %v300 = vunpack.c.h.b16 %v187
      %v301 = vunpack.c.l.b16 %v188
      %v302 = vunpack.c.h.b16 %v188
      %v303 = vunpack.c.l.b16 %v189
      %v304 = vunpack.c.h.b16 %v189
      %v305 = vunpack.c.l.b16 %v190
      %v306 = vunpack.c.h.b16 %v190
      %v307 = vunpack.c.l.b16 %v191
      %v308 = vunpack.c.h.b16 %v191
      %v309 = vunpack.c.l.b16 %v192
      %v310 = vunpack.c.h.b16 %v192
      %v311 = vunpack.c.l.b16 %v193
      %v312 = vunpack.c.h.b16 %v193
      %v313 = vunpack.c.l.b16 %v194
      %v314 = vunpack.c.h.b16 %v194
      %v315 = vunpack.c.l.b16 %v195
      %v316 = vunpack.c.h.b16 %v195
      %v317 = vunpack.c.l.b16 %v196
      %v318 = vunpack.c.h.b16 %v196
      %v319 = vunpack.c.l.b16 %v197
      %v320 = vunpack.c.h.b16 %v197
      %v321 = vunpack.c.l.b16 %v198
      %v322 = vunpack.c.h.b16 %v198
      %v323 = vunpack.c.l.b16 %v199
      %v324 = vunpack.c.h.b16 %v199
      %v325 = vunpack.c.l.b16 %v200
      %v326 = vunpack.c.h.b16 %v200
      %v327 = vunpack.c.l.b16 %v201
      %v328 = vunpack.c.h.b16 %v201
      %v329 = vunpack.c.l.b16 %v202
      %v330 = vunpack.c.h.b16 %v202
      %v331 = vunpack.c.l.b16 %v203
      %v332 = vunpack.c.h.b16 %v203
      %v333 = vunpack.c.l.b16 %v204
      %v334 = vunpack.c.h.b16 %v204
      %v335 = vunpack.c.l.b16 %v205
      %v336 = vunpack.c.h.b16 %v205
      %v337 = vunpack.c.l.b16 %v206
      %v338 = vunpack.c.h.b16 %v206
      %v339 = vunpack.c.l.b16 %v207
      %v340 = vunpack.c.h.b16 %v207
      %v341 = vunpack.c.l.b16 %v208
      %v342 = vunpack.c.h.b16 %v208
      %v343 = vunpack.c.l.b16 %v209
      %v344 = vunpack.c.h.b16 %v209
      %v345 = vpack.c.b16 %v283, %v281
      %v346 = vpack.c.b16 %v284, %v282
      %v347 = vpack.c.b16 %v287, %v285
      %v348 = vpack.c.b16 %v288, %v286
      %v349 = vpack.c.b16 %v291, %v289
      %v350 = vpack.c.b16 %v292, %v290
      %v351 = vpack.c.b16 %v295, %v293
      %v352 = vpack.c.b16 %v296, %v294
      %v353 = vpack.c.b16 %v299, %v297
      %v354 = vpack.c.b16 %v300, %v298
      %v355 = vpack.c.b16 %v303, %v301
      %v356 = vpack.c.b16 %v304, %v302
      %v357 = vpack.c.b16 %v307, %v305
      %v358 = vpack.c.b16 %v308, %v306
      %v359 = vpack.c.b16 %v311, %v309
      %v360 = vpack.c.b16 %v312, %v310
      %v361 = vpack.c.b16 %v315, %v313
      %v362 = vpack.c.b16 %v316, %v314
      %v363 = vpack.c.b16 %v319, %v317
      %v364 = vpack.c.b16 %v320, %v318
      %v365 = vpack.c.b16 %v323, %v321
      %v366 = vpack.c.b16 %v324, %v322
      %v367 = vpack.c.b16 %v327, %v325
      %v368 = vpack.c.b16 %v328, %v326
      %v369 = vpack.c.b16 %v331, %v329
      %v370 = vpack.c.b16 %v332, %v330
      %v371 = vpack.c.b16 %v335, %v333
      %v372 = vpack.c.b16 %v336, %v334
      %v373 = vpack.c.b16 %v339, %v337
      %v374 = vpack.c.b16 %v340, %v338
      %v375 = vpack.c.b16 %v343, %v341
      %v376 = vpack.c.b16 %v344, %v342
      %v441 = vunpack.c.l.b16 %v210
      %v442 = vunpack.c.l.b16 %v211
      %v443 = vunpack.c.l.b16 %v212
      %v444 = vunpack.c.l.b16 %v213
      %v445 = vunpack.c.l.b16 %v214
      %v446 = vunpack.c.l.b16 %v215
      %v447 = vunpack.c.l.b16 %v216
      %v448 = vunpack.c.l.b16 %v217
      %v449 = vunpack.c.l.b16 %v218
      %v450 = vunpack.c.l.b16 %v219
      %v451 = vunpack.c.l.b16 %v220
      %v452 = vunpack.c.l.b16 %v221
      %v453 = vunpack.c.l.b16 %v222
      %v454 = vunpack.c.l.b16 %v223
      %v455 = vunpack.c.l.b16 %v224
      %v456 = vunpack.c.l.b16 %v225
      %v457 = vunpack.c.l.b16 %v226
      %v458 = vunpack.c.l.b16 %v227
      %v459 = vunpack.c.l.b16 %v228
      %v460 = vunpack.c.l.b16 %v229
      %v461 = vunpack.c.l.b16 %v230
      %v462 = vunpack.c.l.b16 %v231
      %v463 = vunpack.c.l.b16 %v232
      %v464 = vunpack.c.l.b16 %v233
      %v465 = vunpack.c.l.b16 %v234
      %v466 = vunpack.c.l.b16 %v235
      %v467 = vunpack.c.l.b16 %v236
      %v468 = vunpack.c.l.b16 %v237
      %v469 = vunpack.c.l.b16 %v238
      %v470 = vunpack.c.l.b16 %v239
      %v471 = vunpack.c.l.b16 %v240
      %v472 = vunpack.c.l.b16 %v241
      %v473 = vpack.c.b16 %v442, %v441
      %v474 = vpack.c.b16 %v444, %v443
      %v475 = vpack.c.b16 %v446, %v445
      %v476 = vpack.c.b16 %v448, %v447
      %v477 = vpack.c.b16 %v450, %v449
      %v478 = vpack.c.b16 %v452, %v451
      %v479 = vpack.c.b16 %v454, %v453
      %v480 = vpack.c.b16 %v456, %v455
      %v481 = vpack.c.b16 %v458, %v457
      %v482 = vpack.c.b16 %v460, %v459
      %v483 = vpack.c.b16 %v462, %v461
      %v484 = vpack.c.b16 %v464, %v463
      %v485 = vpack.c.b16 %v466, %v465
      %v486 = vpack.c.b16 %v468, %v467
      %v487 = vpack.c.b16 %v470, %v469
      %v488 = vpack.c.b16 %v472, %v471
      %505 = vmatprep.subr.bf16.mxu0 0
      %506 = vmatpush1.bf16.msra.mxu0 %v480
      %507 = vmatprep.subr.bf16.mxu0 0
      %508 = vmatpush1.bf16.msra.mxu0 %v479
      %509 = vmatprep.subr.bf16.mxu0 0
      %510 = vmatpush1.bf16.msra.mxu0 %v478
      %511 = vmatprep.subr.bf16.mxu0 0
      %512 = vmatpush1.bf16.msra.mxu0 %v477
      %513 = vmatprep.subr.bf16.mxu0 0
      %514 = vmatpush1.bf16.msra.mxu0 %v476
      %515 = vmatprep.subr.bf16.mxu0 0
      %516 = vmatpush1.bf16.msra.mxu0 %v475
      %517 = vmatprep.subr.bf16.mxu0 0
      %518 = vmatpush1.bf16.msra.mxu0 %v474
      %519 = vmatprep.subr.bf16.mxu0 0
      %520 = vmatpush1.bf16.msra.mxu0 %v473
      %521 = vmatprep.subr.bf16.mxu0 0
      %522 = vmatpush2.bf16.msra.mxu0 %v488
      %523 = vmatprep.subr.bf16.mxu0 0
      %524 = vmatpush2.bf16.msra.mxu0 %v487
      %525 = vmatprep.subr.bf16.mxu0 0
      %526 = vmatpush2.bf16.msra.mxu0 %v486
      %527 = vmatprep.subr.bf16.mxu0 0
      %528 = vmatpush2.bf16.msra.mxu0 %v485
      %529 = vmatprep.subr.bf16.mxu0 0
      %530 = vmatpush2.bf16.msra.mxu0 %v484
      %531 = vmatprep.subr.bf16.mxu0 0
      %532 = vmatpush2.bf16.msra.mxu0 %v483
      %533 = vmatprep.subr.bf16.mxu0 0
      %534 = vmatpush2.bf16.msra.mxu0 %v482
      %535 = vmatprep.subr.bf16.mxu0 0
      %536 = vmatpush2.bf16.msra.mxu0 %v481
      %537 = vmatprep.mubr.bf16.mxu0 %v346
      %538 = vmatmul.mubr.bf16.gmra.mxu0 %v345
      %v539 = vpop.f32.mrf.mxu0
      %v540 = vadd.f32 %v247, %v539
      %v541 = vpop.f32.mrf.mxu0
      %v542 = vpop.f32.mrf.mxu0
      %v543 = vadd.f32 %v247, %v542
      %v544 = vpop.f32.mrf.mxu0
      %545 = vmatprep.mubr.bf16.mxu0 %v348
      %546 = vmatmul.mubr.bf16.gmra.mxu0 %v347
      %v547 = vpop.f32.mrf.mxu0
      %v548 = vadd.f32 %v247, %v547
      %v549 = vpop.f32.mrf.mxu0
      %v550 = vpop.f32.mrf.mxu0
      %v551 = vadd.f32 %v247, %v550
      %v552 = vpop.f32.mrf.mxu0
      %553 = vmatprep.mubr.bf16.mxu0 %v350
      %554 = vmatmul.mubr.bf16.gmra.mxu0 %v349
      %v555 = vpop.f32.mrf.mxu0
      %v556 = vadd.f32 %v247, %v555
      %v557 = vpop.f32.mrf.mxu0
      %v558 = vpop.f32.mrf.mxu0
      %v559 = vadd.f32 %v247, %v558
      %v560 = vpop.f32.mrf.mxu0
      %561 = vmatprep.mubr.bf16.mxu0 %v352
      %562 = vmatmul.mubr.bf16.gmra.mxu0 %v351
      %v563 = vpop.f32.mrf.mxu0
      %v564 = vadd.f32 %v247, %v563
      %v565 = vpop.f32.mrf.mxu0
      %v566 = vpop.f32.mrf.mxu0
      %v567 = vadd.f32 %v247, %v566
      %v568 = vpop.f32.mrf.mxu0
      %569 = vmatprep.mubr.bf16.mxu0 %v354
      %570 = vmatmul.mubr.bf16.gmra.mxu0 %v353
      %v571 = vpop.f32.mrf.mxu0
      %v572 = vadd.f32 %v247, %v571
      %v573 = vpop.f32.mrf.mxu0
      %v574 = vpop.f32.mrf.mxu0
      %v575 = vadd.f32 %v247, %v574
      %v576 = vpop.f32.mrf.mxu0
      %577 = vmatprep.mubr.bf16.mxu0 %v356
      %578 = vmatmul.mubr.bf16.gmra.mxu0 %v355
      %v579 = vpop.f32.mrf.mxu0
      %v580 = vadd.f32 %v247, %v579
      %v581 = vpop.f32.mrf.mxu0
      %v582 = vpop.f32.mrf.mxu0
      %v583 = vadd.f32 %v247, %v582
      %v584 = vpop.f32.mrf.mxu0
      %585 = vmatprep.mubr.bf16.mxu0 %v358
      %586 = vmatmul.mubr.bf16.gmra.mxu0 %v357
      %v587 = vpop.f32.mrf.mxu0
      %v588 = vadd.f32 %v247, %v587
      %v589 = vpop.f32.mrf.mxu0
      %v590 = vpop.f32.mrf.mxu0
      %v591 = vadd.f32 %v247, %v590
      %v592 = vpop.f32.mrf.mxu0
      %593 = vmatprep.mubr.bf16.mxu0 %v360
      %594 = vmatmul.mubr.bf16.gmra.mxu0 %v359
      %v595 = vpop.f32.mrf.mxu0
      %v596 = vadd.f32 %v247, %v595
      %v597 = vpop.f32.mrf.mxu0
      %v598 = vpop.f32.mrf.mxu0
      %v599 = vadd.f32 %v247, %v598
      %v600 = vpop.f32.mrf.mxu0
      %601 = vmatprep.mubr.bf16.mxu0 %v362
      %602 = vmatmul.mubr.bf16.gmra.mxu0 %v361
      %v603 = vpop.f32.mrf.mxu0
      %v604 = vadd.f32 %v247, %v603
      %v605 = vpop.f32.mrf.mxu0
      %v606 = vpop.f32.mrf.mxu0
      %v607 = vadd.f32 %v247, %v606
      %v608 = vpop.f32.mrf.mxu0
      %609 = vmatprep.mubr.bf16.mxu0 %v364
      %610 = vmatmul.mubr.bf16.gmra.mxu0 %v363
      %v611 = vpop.f32.mrf.mxu0
      %v612 = vadd.f32 %v247, %v611
      %v613 = vpop.f32.mrf.mxu0
      %v614 = vpop.f32.mrf.mxu0
      %v615 = vadd.f32 %v247, %v614
      %v616 = vpop.f32.mrf.mxu0
      %617 = vmatprep.mubr.bf16.mxu0 %v366
      %618 = vmatmul.mubr.bf16.gmra.mxu0 %v365
      %v619 = vpop.f32.mrf.mxu0
      %v620 = vadd.f32 %v247, %v619
      %v621 = vpop.f32.mrf.mxu0
      %v622 = vpop.f32.mrf.mxu0
      %v623 = vadd.f32 %v247, %v622
      %v624 = vpop.f32.mrf.mxu0
      %625 = vmatprep.mubr.bf16.mxu0 %v368
      %626 = vmatmul.mubr.bf16.gmra.mxu0 %v367
      %v627 = vpop.f32.mrf.mxu0
      %v628 = vadd.f32 %v247, %v627
      %v629 = vpop.f32.mrf.mxu0
      %v630 = vpop.f32.mrf.mxu0
      %v631 = vadd.f32 %v247, %v630
      %v632 = vpop.f32.mrf.mxu0
      %633 = vmatprep.mubr.bf16.mxu0 %v370
      %634 = vmatmul.mubr.bf16.gmra.mxu0 %v369
      %v635 = vpop.f32.mrf.mxu0
      %v636 = vadd.f32 %v247, %v635
      %v637 = vpop.f32.mrf.mxu0
      %v638 = vpop.f32.mrf.mxu0
      %v639 = vadd.f32 %v247, %v638
      %v640 = vpop.f32.mrf.mxu0
      %641 = vmatprep.mubr.bf16.mxu0 %v372
      %642 = vmatmul.mubr.bf16.gmra.mxu0 %v371
      %v643 = vpop.f32.mrf.mxu0
      %v644 = vadd.f32 %v247, %v643
      %v645 = vpop.f32.mrf.mxu0
      %v646 = vpop.f32.mrf.mxu0
      %v647 = vadd.f32 %v247, %v646
      %v648 = vpop.f32.mrf.mxu0
      %649 = vmatprep.mubr.bf16.mxu0 %v374
      %650 = vmatmul.mubr.bf16.gmra.mxu0 %v373
      %v651 = vpop.f32.mrf.mxu0
      %v652 = vadd.f32 %v247, %v651
      %v653 = vpop.f32.mrf.mxu0
      %v654 = vpop.f32.mrf.mxu0
      %v655 = vadd.f32 %v247, %v654
      %v656 = vpop.f32.mrf.mxu0
      %657 = vmatprep.mubr.bf16.mxu0 %v376
      %658 = vmatmul.mubr.bf16.gmra.mxu0 %v375
      %v659 = vpop.f32.mrf.mxu0
      %v660 = vadd.f32 %v247, %v659
      %v661 = vpop.f32.mrf.mxu0
      %v662 = vpop.f32.mrf.mxu0
      %v663 = vadd.f32 %v247, %v662
      %v664 = vpop.f32.mrf.mxu0
      %665 = vdwg.mxu0
      %v666 = vmax.f32 %v540, 0.0
      %v667 = vmax.f32 %v543, 0.0
      %v668 = vmax.f32 %v548, 0.0
      %v669 = vmax.f32 %v551, 0.0
      %v670 = vmax.f32 %v556, 0.0
      %v671 = vmax.f32 %v559, 0.0
      %v672 = vmax.f32 %v564, 0.0
      %v673 = vmax.f32 %v567, 0.0
      %v674 = vmax.f32 %v572, 0.0
      %v675 = vmax.f32 %v575, 0.0
      %v676 = vmax.f32 %v580, 0.0
      %v677 = vmax.f32 %v583, 0.0
      %v678 = vmax.f32 %v588, 0.0
      %v679 = vmax.f32 %v591, 0.0
      %v680 = vmax.f32 %v596, 0.0
      %v681 = vmax.f32 %v599, 0.0
      %v682 = vmax.f32 %v604, 0.0
      %v683 = vmax.f32 %v607, 0.0
      %v684 = vmax.f32 %v612, 0.0
      %v685 = vmax.f32 %v615, 0.0
      %v686 = vmax.f32 %v620, 0.0
      %v687 = vmax.f32 %v623, 0.0
      %v688 = vmax.f32 %v628, 0.0
      %v689 = vmax.f32 %v631, 0.0
      %v690 = vmax.f32 %v636, 0.0
      %v691 = vmax.f32 %v639, 0.0
      %v692 = vmax.f32 %v644, 0.0
      %v693 = vmax.f32 %v647, 0.0
      %v694 = vmax.f32 %v652, 0.0
      %v695 = vmax.f32 %v655, 0.0
      %v696 = vmax.f32 %v660, 0.0
      %v697 = vmax.f32 %v663, 0.0
      %v698 = vpack.c.bf16 %v667, %v666
      %v699 = vpack.c.bf16 %v669, %v668
      %v700 = vpack.c.bf16 %v671, %v670
      %v701 = vpack.c.bf16 %v673, %v672
      %v702 = vpack.c.bf16 %v675, %v674
      %v703 = vpack.c.bf16 %v677, %v676
      %v704 = vpack.c.bf16 %v679, %v678
      %v705 = vpack.c.bf16 %v681, %v680
      %v706 = vpack.c.bf16 %v683, %v682
      %v707 = vpack.c.bf16 %v685, %v684
      %v708 = vpack.c.bf16 %v687, %v686
      %v709 = vpack.c.bf16 %v689, %v688
      %v710 = vpack.c.bf16 %v691, %v690
      %v711 = vpack.c.bf16 %v693, %v692
      %v712 = vpack.c.bf16 %v695, %v694
      %v713 = vpack.c.bf16 %v697, %v696
      %v730 = vunpack.c.l.b16 %v698
      %v731 = vunpack.c.h.b16 %v698
      %v732 = vunpack.c.l.b16 %v699
      %v733 = vunpack.c.h.b16 %v699
      %v734 = vunpack.c.l.b16 %v700
      %v735 = vunpack.c.h.b16 %v700
      %v736 = vunpack.c.l.b16 %v701
      %v737 = vunpack.c.h.b16 %v701
      %v738 = vunpack.c.l.b16 %v702
      %v739 = vunpack.c.h.b16 %v702
      %v740 = vunpack.c.l.b16 %v703
      %v741 = vunpack.c.h.b16 %v703
      %v742 = vunpack.c.l.b16 %v704
      %v743 = vunpack.c.h.b16 %v704
      %v744 = vunpack.c.l.b16 %v705
      %v745 = vunpack.c.h.b16 %v705
      %v746 = vunpack.c.l.b16 %v706
      %v747 = vunpack.c.h.b16 %v706
      %v748 = vunpack.c.l.b16 %v707
      %v749 = vunpack.c.h.b16 %v707
      %v750 = vunpack.c.l.b16 %v708
      %v751 = vunpack.c.h.b16 %v708
      %v752 = vunpack.c.l.b16 %v709
      %v753 = vunpack.c.h.b16 %v709
      %v754 = vunpack.c.l.b16 %v710
      %v755 = vunpack.c.h.b16 %v710
      %v756 = vunpack.c.l.b16 %v711
      %v757 = vunpack.c.h.b16 %v711
      %v758 = vunpack.c.l.b16 %v712
      %v759 = vunpack.c.h.b16 %v712
      %v760 = vunpack.c.l.b16 %v713
      %v761 = vunpack.c.h.b16 %v713
      %v762 = vpack.c.b16 %v730, %v730
      %v763 = vpack.c.b16 %v731, %v731
      %v764 = vpack.c.b16 %v732, %v732
      %v765 = vpack.c.b16 %v733, %v733
      %v766 = vpack.c.b16 %v734, %v734
      %v767 = vpack.c.b16 %v735, %v735
      %v768 = vpack.c.b16 %v736, %v736
      %v769 = vpack.c.b16 %v737, %v737
      %v770 = vpack.c.b16 %v738, %v738
      %v771 = vpack.c.b16 %v739, %v739
      %v772 = vpack.c.b16 %v740, %v740
      %v773 = vpack.c.b16 %v741, %v741
      %v774 = vpack.c.b16 %v742, %v742
      %v775 = vpack.c.b16 %v743, %v743
      %v776 = vpack.c.b16 %v744, %v744
      %v777 = vpack.c.b16 %v745, %v745
      %v778 = vpack.c.b16 %v746, %v746
      %v779 = vpack.c.b16 %v747, %v747
      %v780 = vpack.c.b16 %v748, %v748
      %v781 = vpack.c.b16 %v749, %v749
      %v782 = vpack.c.b16 %v750, %v750
      %v783 = vpack.c.b16 %v751, %v751
      %v784 = vpack.c.b16 %v752, %v752
      %v785 = vpack.c.b16 %v753, %v753
      %v786 = vpack.c.b16 %v754, %v754
      %v787 = vpack.c.b16 %v755, %v755
      %v788 = vpack.c.b16 %v756, %v756
      %v789 = vpack.c.b16 %v757, %v757
      %v790 = vpack.c.b16 %v758, %v758
      %v791 = vpack.c.b16 %v759, %v759
      %v792 = vpack.c.b16 %v760, %v760
      %v793 = vpack.c.b16 %v761, %v761
      %826 = vst [vmem:[%s175] sm:$0xf] %v762
      %827 = vst [vmem:[%s175 + $0x4] sm:$0xf] %v763
      %828 = vst [vmem:[%s175 + $0x8] sm:$0xf] %v764
      %829 = vst [vmem:[%s175 + $0xc] sm:$0xf] %v765
      %830 = vst [vmem:[%s175 + $0x10] sm:$0xf] %v766
      %831 = vst [vmem:[%s175 + $0x14] sm:$0xf] %v767
      %832 = vst [vmem:[%s175 + $0x18] sm:$0xf] %v768
      %833 = vst [vmem:[%s175 + $0x1c] sm:$0xf] %v769
      %834 = vst [vmem:[%s175 + $0x20] sm:$0xf] %v770
      %835 = vst [vmem:[%s175 + $0x24] sm:$0xf] %v771
      %836 = vst [vmem:[%s175 + $0x28] sm:$0xf] %v772
      %837 = vst [vmem:[%s175 + $0x2c] sm:$0xf] %v773
      %838 = vst [vmem:[%s175 + $0x30] sm:$0xf] %v774
      %839 = vst [vmem:[%s175 + $0x34] sm:$0xf] %v775
      %840 = vst [vmem:[%s175 + $0x38] sm:$0xf] %v776
      %841 = vst [vmem:[%s175 + $0x3c] sm:$0xf] %v777
      %842 = vst [vmem:[%s175 + $0x40] sm:$0xf] %v778
      %843 = vst [vmem:[%s175 + $0x44] sm:$0xf] %v779
      %844 = vst [vmem:[%s175 + $0x48] sm:$0xf] %v780
      %845 = vst [vmem:[%s175 + $0x4c] sm:$0xf] %v781
      %846 = vst [vmem:[%s175 + $0x50] sm:$0xf] %v782
      %847 = vst [vmem:[%s175 + $0x54] sm:$0xf] %v783
      %848 = vst [vmem:[%s175 + $0x58] sm:$0xf] %v784
      %849 = vst [vmem:[%s175 + $0x5c] sm:$0xf] %v785
      %850 = vst [vmem:[%s175 + $0x60] sm:$0xf] %v786
      %851 = vst [vmem:[%s175 + $0x64] sm:$0xf] %v787
      %852 = vst [vmem:[%s175 + $0x68] sm:$0xf] %v788
      %853 = vst [vmem:[%s175 + $0x6c] sm:$0xf] %v789
      %854 = vst [vmem:[%s175 + $0x70] sm:$0xf] %v790
      %855 = vst [vmem:[%s175 + $0x74] sm:$0xf] %v791
      %856 = vst [vmem:[%s175 + $0x78] sm:$0xf] %v792
      %857 = vst [vmem:[%s175 + $0x7c] sm:$0xf] %v793
      %s858 = smul.u32 32, %s14
      %p859 = scmp.lt.s32.totalorder %s858, 63
      %s860 = scalar_select %p859, %s858, 63
      %s861 = smul.addr %s860, 4
      %s862 = scalar_lea.vmem %s3, %s861
      // Predicated region
      $region33: #{_forward_impl.18} parent=31 // pred_check
        %p863 = pneg %p100
      $region34: #{_forward_impl.18} parent=31 // pred_check_branch
        %865 = sbr.rel (%p863) target = $region36
      $region35: #{_forward_impl.18} parent=31 // pred_region
        %s866 = smul.u32 32, %s14
      $region36: #{_forward_impl.18} parent=31 // pred_fallthru
        _
    $region32: #{_forward_impl.18} parent=5 // pred_fallthru
      _
    %p867 = scmp.le.s32.totalorder 2, %s9
    // Predicated region
    $region37: #{_forward_impl.18} parent=5 // pred_check
      %p868 = pneg %p867
    $region38: #{_forward_impl.18} parent=5 // pred_check_branch
      %870 = sbr.rel (%p868) target = $region40
    $region39: #{_forward_impl.18} parent=5 // pred_region
      %s871 = ssub.s32 %s9, 2
      // Predicated region
      $region41: #{_forward_impl.18} parent=39 // pred_check
        %p872 = pneg %p106
      $region42: #{_forward_impl.18} parent=39 // pred_check_branch
        %874 = sbr.rel (%p872) target = $region44
      $region43: #{_forward_impl.18} parent=39 // pred_region
        %s875 = smul.u32 32, %s15
        %p876 = scmp.lt.s32.totalorder %s875, 63
        %s877 = scalar_select %p876, %s875, 63
        %s878 = smul.addr %s877, 4
        %s879 = scalar_lea.vmem %s3, %s878
      $region44: #{_forward_impl.18} parent=39 // pred_fallthru
        _
    $region40: #{_forward_impl.18} parent=5 // pred_fallthru
      _
  $region6: #{_forward_impl.18} parent=0 // loop_footer
    %s13 = sadd.s32 1, %s9
  $region7: #{_forward_impl.18} parent=0 // loop_footer_branch
    %8 = sbr.rel target = $region3
  $region8: #{_forward_impl.18} parent=0 // loop_exit
    _

// kernel: _forward_impl.19
$region0: #{_forward_impl.19}
  #allocation0 [shape = 'u32[]', space=smem, size = 0x4, offset = 0x4, fixed_abs, tag = 'smem constant byte address 0x4 - core index']
  #allocation1 [shape = 'u32[144,128]{1,0:T(1,128)}', space=vmem, size = 0x12000, scoped, tag = 'internal scratch']
  %s0 = inlined_call_operand.vmem [shape: bf16[128,256], index: 0, kind: input, shape index: {}]
  %s1 = inlined_call_operand.vmem [shape: bf16[256,128], index: 1, kind: input, shape index: {}]
  %s2 = inlined_call_operand.vmem [shape: f32[1,128], index: 2, kind: input, shape index: {}]
  %s3 = inlined_call_operand.vmem [shape: bf16[128,128], index: 3, kind: output, shape index: {}]
  %s4 = sld [smem:[#allocation0]]
  $region22: #{_forward_impl.19} parent=0
    _
  %s6 = ssub.s32 1, %s4
  %s7 = scalar_select 0, %s6, %s4
  // Predicated region
  $region2: #{_forward_impl.19} parent=0 // pred_check
    _
  $region3: #{_forward_impl.19} parent=0 // pred_check_branch
    %9 = sbr.rel (0) target = $region5
  $region4: #{_forward_impl.19} parent=0 // pred_region
    _
  $region5: #{_forward_impl.19} parent=0 // pred_fallthru
    _
  // Predicated region
  $region6: #{_forward_impl.19} parent=0 // pred_check
    _
  $region7: #{_forward_impl.19} parent=0 // pred_check_branch
    %11 = sbr.rel (0) target = $region9
  $region8: #{_forward_impl.19} parent=0 // pred_region
    _
  $region9: #{_forward_impl.19} parent=0 // pred_fallthru
    _
  // Predicated region
  $region10: #{_forward_impl.19} parent=0 // pred_check
    _
  $region11: #{_forward_impl.19} parent=0 // pred_check_branch
    %13 = sbr.rel (0) target = $region13
  $region12: #{_forward_impl.19} parent=0 // pred_region
    _
  $region13: #{_forward_impl.19} parent=0 // pred_fallthru
    _
  %v15 = vld [vmem:[%s0] sm:$0xff]
  %v16 = vld [vmem:[%s0 + $0x8] sm:$0xff]
  %v17 = vld [vmem:[%s0 + $0x10] sm:$0xff]
  %v18 = vld [vmem:[%s0 + $0x18] sm:$0xff]
  %v19 = vld [vmem:[%s0 + $0x20] sm:$0xff]
  %v20 = vld [vmem:[%s0 + $0x28] sm:$0xff]
  %v21 = vld [vmem:[%s0 + $0x30] sm:$0xff]
  %v22 = vld [vmem:[%s0 + $0x38] sm:$0xff]
  %v23 = vld [vmem:[%s0 + $0x40] sm:$0xff]
  %v24 = vld [vmem:[%s0 + $0x48] sm:$0xff]
  %v25 = vld [vmem:[%s0 + $0x50] sm:$0xff]
  %v26 = vld [vmem:[%s0 + $0x58] sm:$0xff]
  %v27 = vld [vmem:[%s0 + $0x60] sm:$0xff]
  %v28 = vld [vmem:[%s0 + $0x68] sm:$0xff]
  %v29 = vld [vmem:[%s0 + $0x70] sm:$0xff]
  %v30 = vld [vmem:[%s0 + $0x78] sm:$0xff]
  %v31 = vld [vmem:[%s1] sm:$0xf]
  %v32 = vld [vmem:[%s1 + $0x4] sm:$0xf]
  %v33 = vld [vmem:[%s1 + $0x8] sm:$0xf]
  %v34 = vld [vmem:[%s1 + $0xc] sm:$0xf]
  %v35 = vld [vmem:[%s1 + $0x10] sm:$0xf]
  %v36 = vld [vmem:[%s1 + $0x14] sm:$0xf]
  %v37 = vld [vmem:[%s1 + $0x18] sm:$0xf]
  %v38 = vld [vmem:[%s1 + $0x1c] sm:$0xf]
  %v39 = vld [vmem:[%s1 + $0x20] sm:$0xf]
  %v40 = vld [vmem:[%s1 + $0x24] sm:$0xf]
  %v41 = vld [vmem:[%s1 + $0x28] sm:$0xf]
  %v42 = vld [vmem:[%s1 + $0x2c] sm:$0xf]
  %v43 = vld [vmem:[%s1 + $0x30] sm:$0xf]
  %v44 = vld [vmem:[%s1 + $0x34] sm:$0xf]
  %v45 = vld [vmem:[%s1 + $0x38] sm:$0xf]
  %v46 = vld [vmem:[%s1 + $0x3c] sm:$0xf]
  %v47 = vld [vmem:[%s1 + $0x40] sm:$0xf]
  %v48 = vld [vmem:[%s1 + $0x44] sm:$0xf]
  %v49 = vld [vmem:[%s1 + $0x48] sm:$0xf]
  %v50 = vld [vmem:[%s1 + $0x4c] sm:$0xf]
  %v51 = vld [vmem:[%s1 + $0x50] sm:$0xf]
  %v52 = vld [vmem:[%s1 + $0x54] sm:$0xf]
  %v53 = vld [vmem:[%s1 + $0x58] sm:$0xf]
  %v54 = vld [vmem:[%s1 + $0x5c] sm:$0xf]
  %v55 = vld [vmem:[%s1 + $0x60] sm:$0xf]
  %v56 = vld [vmem:[%s1 + $0x64] sm:$0xf]
  %v57 = vld [vmem:[%s1 + $0x68] sm:$0xf]
  %v58 = vld [vmem:[%s1 + $0x6c] sm:$0xf]
  %v59 = vld [vmem:[%s1 + $0x70] sm:$0xf]
  %v60 = vld [vmem:[%s1 + $0x74] sm:$0xf]
  %v61 = vld [vmem:[%s1 + $0x78] sm:$0xf]
  %v62 = vld [vmem:[%s1 + $0x7c] sm:$0xf]
  %v63 = vld [vmem:[%s2] sm:$0x1]
  %v65 = vlaneseq
  %v66 = vshrl.u32 %v65, 7
  %v67 = vsub.s32 0, %v66
  %v68 = vrot.slane %v63, %v67
  %v86 = vunpack.c.l.b16 %v15
  %v87 = vunpack.c.h.b16 %v15
  %v88 = vunpack.c.l.b16 %v16
  %v89 = vunpack.c.h.b16 %v16
  %v90 = vunpack.c.l.b16 %v17
  %v91 = vunpack.c.h.b16 %v17
  %v92 = vunpack.c.l.b16 %v18
  %v93 = vunpack.c.h.b16 %v18
  %v94 = vunpack.c.l.b16 %v19
  %v95 = vunpack.c.h.b16 %v19
  %v96 = vunpack.c.l.b16 %v20
  %v97 = vunpack.c.h.b16 %v20
  %v98 = vunpack.c.l.b16 %v21
  %v99 = vunpack.c.h.b16 %v21
  %v100 = vunpack.c.l.b16 %v22
  %v101 = vunpack.c.h.b16 %v22
  %v102 = vunpack.c.l.b16 %v23
  %v103 = vunpack.c.h.b16 %v23
  %v104 = vunpack.c.l.b16 %v24
  %v105 = vunpack.c.h.b16 %v24
  %v106 = vunpack.c.l.b16 %v25
  %v107 = vunpack.c.h.b16 %v25
  %v108 = vunpack.c.l.b16 %v26
  %v109 = vunpack.c.h.b16 %v26
  %v110 = vunpack.c.l.b16 %v27
  %v111 = vunpack.c.h.b16 %v27
  %v112 = vunpack.c.l.b16 %v28
  %v113 = vunpack.c.h.b16 %v28
  %v114 = vunpack.c.l.b16 %v29
  %v115 = vunpack.c.h.b16 %v29
  %v116 = vunpack.c.l.b16 %v30
  %v117 = vunpack.c.h.b16 %v30
  %v118 = vpack.c.b16 %v88, %v86
  %v119 = vpack.c.b16 %v89, %v87
  %v120 = vpack.c.b16 %v92, %v90
  %v121 = vpack.c.b16 %v93, %v91
  %v122 = vpack.c.b16 %v96, %v94
  %v123 = vpack.c.b16 %v97, %v95
  %v124 = vpack.c.b16 %v100, %v98
  %v125 = vpack.c.b16 %v101, %v99
  %v126 = vpack.c.b16 %v104, %v102
  %v127 = vpack.c.b16 %v105, %v103
  %v128 = vpack.c.b16 %v108, %v106
  %v129 = vpack.c.b16 %v109, %v107
  %v130 = vpack.c.b16 %v112, %v110
  %v131 = vpack.c.b16 %v113, %v111
  %v132 = vpack.c.b16 %v116, %v114
  %v133 = vpack.c.b16 %v117, %v115
  %v182 = vunpack.c.l.b16 %v31
  %v183 = vunpack.c.l.b16 %v32
  %v184 = vunpack.c.l.b16 %v33
  %v185 = vunpack.c.l.b16 %v34
  %v186 = vunpack.c.l.b16 %v35
  %v187 = vunpack.c.l.b16 %v36
  %v188 = vunpack.c.l.b16 %v37
  %v189 = vunpack.c.l.b16 %v38
  %v190 = vunpack.c.l.b16 %v39
  %v191 = vunpack.c.l.b16 %v40
  %v192 = vunpack.c.l.b16 %v41
  %v193 = vunpack.c.l.b16 %v42
  %v194 = vunpack.c.l.b16 %v43
  %v195 = vunpack.c.l.b16 %v44
  %v196 = vunpack.c.l.b16 %v45
  %v197 = vunpack.c.l.b16 %v46
  %v198 = vunpack.c.l.b16 %v47
  %v199 = vunpack.c.l.b16 %v48
  %v200 = vunpack.c.l.b16 %v49
  %v201 = vunpack.c.l.b16 %v50
  %v202 = vunpack.c.l.b16 %v51
  %v203 = vunpack.c.l.b16 %v52
  %v204 = vunpack.c.l.b16 %v53
  %v205 = vunpack.c.l.b16 %v54
  %v206 = vunpack.c.l.b16 %v55
  %v207 = vunpack.c.l.b16 %v56
  %v208 = vunpack.c.l.b16 %v57
  %v209 = vunpack.c.l.b16 %v58
  %v210 = vunpack.c.l.b16 %v59
  %v211 = vunpack.c.l.b16 %v60
  %v212 = vunpack.c.l.b16 %v61
  %v213 = vunpack.c.l.b16 %v62
  %v214 = vpack.c.b16 %v183, %v182
  %v215 = vpack.c.b16 %v185, %v184
  %v216 = vpack.c.b16 %v187, %v186
  %v217 = vpack.c.b16 %v189, %v188
  %v218 = vpack.c.b16 %v191, %v190
  %v219 = vpack.c.b16 %v193, %v192
  %v220 = vpack.c.b16 %v195, %v194
  %v221 = vpack.c.b16 %v197, %v196
  %v222 = vpack.c.b16 %v199, %v198
  %v223 = vpack.c.b16 %v201, %v200
  %v224 = vpack.c.b16 %v203, %v202
  %v225 = vpack.c.b16 %v205, %v204
  %v226 = vpack.c.b16 %v207, %v206
  %v227 = vpack.c.b16 %v209, %v208
  %v228 = vpack.c.b16 %v211, %v210
  %v229 = vpack.c.b16 %v213, %v212
  %246 = vmatprep.subr.bf16.mxu0 0
  %247 = vmatpush1.bf16.msra.mxu0 %v221
  %248 = vmatprep.subr.bf16.mxu0 0
  %249 = vmatpush1.bf16.msra.mxu0 %v220
  %250 = vmatprep.subr.bf16.mxu0 0
  %251 = vmatpush1.bf16.msra.mxu0 %v219
  %252 = vmatprep.subr.bf16.mxu0 0
  %253 = vmatpush1.bf16.msra.mxu0 %v218
  %254 = vmatprep.subr.bf16.mxu0 0
  %255 = vmatpush1.bf16.msra.mxu0 %v217
  %256 = vmatprep.subr.bf16.mxu0 0
  %257 = vmatpush1.bf16.msra.mxu0 %v216
  %258 = vmatprep.subr.bf16.mxu0 0
  %259 = vmatpush1.bf16.msra.mxu0 %v215
  %260 = vmatprep.subr.bf16.mxu0 0
  %261 = vmatpush1.bf16.msra.mxu0 %v214
  %262 = vmatprep.subr.bf16.mxu0 0
  %263 = vmatpush2.bf16.msra.mxu0 %v229
  %264 = vmatprep.subr.bf16.mxu0 0
  %265 = vmatpush2.bf16.msra.mxu0 %v228
  %266 = vmatprep.subr.bf16.mxu0 0
  %267 = vmatpush2.bf16.msra.mxu0 %v227
  %268 = vmatprep.subr.bf16.mxu0 0
  %269 = vmatpush2.bf16.msra.mxu0 %v226
  %270 = vmatprep.subr.bf16.mxu0 0
  %271 = vmatpush2.bf16.msra.mxu0 %v225
  %272 = vmatprep.subr.bf16.mxu0 0
  %273 = vmatpush2.bf16.msra.mxu0 %v224
  %274 = vmatprep.subr.bf16.mxu0 0
  %275 = vmatpush2.bf16.msra.mxu0 %v223
  %276 = vmatprep.subr.bf16.mxu0 0
  %277 = vmatpush2.bf16.msra.mxu0 %v222
  %278 = vmatprep.mubr.bf16.mxu0 %v119
  %279 = vmatmul.mubr.bf16.gmra.mxu0 %v118
  %v280 = vpop.f32.mrf.mxu0
  %v281 = vadd.f32 %v68, %v280
  %v282 = vpop.f32.mrf.mxu0
  %v283 = vpop.f32.mrf.mxu0
  %v284 = vadd.f32 %v68, %v283
  %v285 = vpop.f32.mrf.mxu0
  %286 = vmatprep.mubr.bf16.mxu0 %v121
  %287 = vmatmul.mubr.bf16.gmra.mxu0 %v120
  %v288 = vpop.f32.mrf.mxu0
  %v289 = vadd.f32 %v68, %v288
  %v290 = vpop.f32.mrf.mxu0
  %v291 = vpop.f32.mrf.mxu0
  %v292 = vadd.f32 %v68, %v291
  %v293 = vpop.f32.mrf.mxu0
  %294 = vmatprep.mubr.bf16.mxu0 %v123
  %295 = vmatmul.mubr.bf16.gmra.mxu0 %v122
  %v296 = vpop.f32.mrf.mxu0
  %v297 = vadd.f32 %v68, %v296
  %v298 = vpop.f32.mrf.mxu0
  %v299 = vpop.f32.mrf.mxu0
  %v300 = vadd.f32 %v68, %v299
  %v301 = vpop.f32.mrf.mxu0
  %302 = vmatprep.mubr.bf16.mxu0 %v125
  %303 = vmatmul.mubr.bf16.gmra.mxu0 %v124
  %v304 = vpop.f32.mrf.mxu0
  %v305 = vadd.f32 %v68, %v304
  %v306 = vpop.f32.mrf.mxu0
  %v307 = vpop.f32.mrf.mxu0
  %v308 = vadd.f32 %v68, %v307
  %v309 = vpop.f32.mrf.mxu0
  %310 = vmatprep.mubr.bf16.mxu0 %v127
  %311 = vmatmul.mubr.bf16.gmra.mxu0 %v126
  %v312 = vpop.f32.mrf.mxu0
  %v313 = vadd.f32 %v68, %v312
  %v314 = vpop.f32.mrf.mxu0
  %v315 = vpop.f32.mrf.mxu0
  %v316 = vadd.f32 %v68, %v315
  %v317 = vpop.f32.mrf.mxu0
  %318 = vmatprep.mubr.bf16.mxu0 %v129
  %319 = vmatmul.mubr.bf16.gmra.mxu0 %v128
  %v320 = vpop.f32.mrf.mxu0
  %v321 = vadd.f32 %v68, %v320
  %v322 = vpop.f32.mrf.mxu0
  %v323 = vpop.f32.mrf.mxu0
  %v324 = vadd.f32 %v68, %v323
  %v325 = vpop.f32.mrf.mxu0
  %326 = vmatprep.mubr.bf16.mxu0 %v131
  %327 = vmatmul.mubr.bf16.gmra.mxu0 %v130
  %v328 = vpop.f32.mrf.mxu0
  %v329 = vadd.f32 %v68, %v328
  %v330 = vpop.f32.mrf.mxu0
  %v331 = vpop.f32.mrf.mxu0
  %v332 = vadd.f32 %v68, %v331
  %v333 = vpop.f32.mrf.mxu0
  %334 = vmatprep.mubr.bf16.mxu0 %v133
  %335 = vmatmul.mubr.bf16.gmra.mxu0 %v132
  %v336 = vpop.f32.mrf.mxu0
  %v337 = vadd.f32 %v68, %v336
  %v338 = vpop.f32.mrf.mxu0
  %v339 = vpop.f32.mrf.mxu0
  %v340 = vadd.f32 %v68, %v339
  %v341 = vpop.f32.mrf.mxu0
  %342 = vdwg.mxu0
  %v343 = vmax.f32 %v281, 0.0
  %v344 = vmax.f32 %v284, 0.0
  %v345 = vmax.f32 %v289, 0.0
  %v346 = vmax.f32 %v292, 0.0
  %v347 = vmax.f32 %v297, 0.0
  %v348 = vmax.f32 %v300, 0.0
  %v349 = vmax.f32 %v305, 0.0
  %v350 = vmax.f32 %v308, 0.0
  %v351 = vmax.f32 %v313, 0.0
  %v352 = vmax.f32 %v316, 0.0
  %v353 = vmax.f32 %v321, 0.0
  %v354 = vmax.f32 %v324, 0.0
  %v355 = vmax.f32 %v329, 0.0
  %v356 = vmax.f32 %v332, 0.0
  %v357 = vmax.f32 %v337, 0.0
  %v358 = vmax.f32 %v340, 0.0
  %v359 = vpack.c.bf16 %v344, %v343
  %v360 = vpack.c.bf16 %v346, %v345
  %v361 = vpack.c.bf16 %v348, %v347
  %v362 = vpack.c.bf16 %v350, %v349
  %v363 = vpack.c.bf16 %v352, %v351
  %v364 = vpack.c.bf16 %v354, %v353
  %v365 = vpack.c.bf16 %v356, %v355
  %v366 = vpack.c.bf16 %v358, %v357
  %v375 = vunpack.c.l.b16 %v359
  %v376 = vunpack.c.h.b16 %v359
  %v377 = vunpack.c.l.b16 %v360
  %v378 = vunpack.c.h.b16 %v360
  %v379 = vunpack.c.l.b16 %v361
  %v380 = vunpack.c.h.b16 %v361
  %v381 = vunpack.c.l.b16 %v362
  %v382 = vunpack.c.h.b16 %v362
  %v383 = vunpack.c.l.b16 %v363
  %v384 = vunpack.c.h.b16 %v363
  %v385 = vunpack.c.l.b16 %v364
  %v386 = vunpack.c.h.b16 %v364
  %v387 = vunpack.c.l.b16 %v365
  %v388 = vunpack.c.h.b16 %v365
  %v389 = vunpack.c.l.b16 %v366
  %v390 = vunpack.c.h.b16 %v366
  %v391 = vpack.c.b16 %v375, %v375
  %v392 = vpack.c.b16 %v376, %v376
  %v393 = vpack.c.b16 %v377, %v377
  %v394 = vpack.c.b16 %v378, %v378
  %v395 = vpack.c.b16 %v379, %v379
  %v396 = vpack.c.b16 %v380, %v380
  %v397 = vpack.c.b16 %v381, %v381
  %v398 = vpack.c.b16 %v382, %v382
  %v399 = vpack.c.b16 %v383, %v383
  %v400 = vpack.c.b16 %v384, %v384
  %v401 = vpack.c.b16 %v385, %v385
  %v402 = vpack.c.b16 %v386, %v386
  %v403 = vpack.c.b16 %v387, %v387
  %v404 = vpack.c.b16 %v388, %v388
  %v405 = vpack.c.b16 %v389, %v389
  %v406 = vpack.c.b16 %v390, %v390
  %423 = vst [vmem:[%s3] sm:$0xf] %v391
  %424 = vst [vmem:[%s3 + $0x4] sm:$0xf] %v392
  %425 = vst [vmem:[%s3 + $0x8] sm:$0xf] %v393
  %426 = vst [vmem:[%s3 + $0xc] sm:$0xf] %v394
  %427 = vst [vmem:[%s3 + $0x10] sm:$0xf] %v395
  %428 = vst [vmem:[%s3 + $0x14] sm:$0xf] %v396
  %429 = vst [vmem:[%s3 + $0x18] sm:$0xf] %v397
  %430 = vst [vmem:[%s3 + $0x1c] sm:$0xf] %v398
  %431 = vst [vmem:[%s3 + $0x20] sm:$0xf] %v399
  %432 = vst [vmem:[%s3 + $0x24] sm:$0xf] %v400
  %433 = vst [vmem:[%s3 + $0x28] sm:$0xf] %v401
  %434 = vst [vmem:[%s3 + $0x2c] sm:$0xf] %v402
  %435 = vst [vmem:[%s3 + $0x30] sm:$0xf] %v403
  %436 = vst [vmem:[%s3 + $0x34] sm:$0xf] %v404
  %437 = vst [vmem:[%s3 + $0x38] sm:$0xf] %v405
  %438 = vst [vmem:[%s3 + $0x3c] sm:$0xf] %v406
  // Predicated region
  $region14: #{_forward_impl.19} parent=0 // pred_check
    _
  $region15: #{_forward_impl.19} parent=0 // pred_check_branch
    %440 = sbr.rel (0) target = $region17
  $region16: #{_forward_impl.19} parent=0 // pred_region
    _
  $region17: #{_forward_impl.19} parent=0 // pred_fallthru
    _
  // Predicated region
  $region18: #{_forward_impl.19} parent=0 // pred_check
    _
  $region19: #{_forward_impl.19} parent=0 // pred_check_branch
    %442 = sbr.rel (0) target = $region21
  $region20: #{_forward_impl.19} parent=0 // pred_region
    _
  $region21: #{_forward_impl.19} parent=0 // pred_fallthru
    _

// kernel: _forward_impl.20
$region0: #{_forward_impl.20}
  #allocation0 [shape = 'u32[]', space=smem, size = 0x4, offset = 0x4, fixed_abs, tag = 'smem constant byte address 0x4 - core index']
  #allocation1 [shape = 'u32[144,128]{1,0:T(1,128)}', space=vmem, size = 0x12000, scoped, tag = 'internal scratch']
  %s0 = inlined_call_operand.vmem [shape: bf16[128,384], index: 0, kind: input, shape index: {}]
  %s1 = inlined_call_operand.vmem [shape: bf16[384,128], index: 1, kind: input, shape index: {}]
  %s2 = inlined_call_operand.vmem [shape: f32[1,128], index: 2, kind: input, shape index: {}]
  %s3 = inlined_call_operand.vmem [shape: bf16[128,128], index: 3, kind: output, shape index: {}]
  %s4 = sld [smem:[#allocation0]]
  $region22: #{_forward_impl.20} parent=0
    _
  %s6 = ssub.s32 1, %s4
  %s7 = scalar_select 0, %s6, %s4
  // Predicated region
  $region2: #{_forward_impl.20} parent=0 // pred_check
    _
  $region3: #{_forward_impl.20} parent=0 // pred_check_branch
    %9 = sbr.rel (0) target = $region5
  $region4: #{_forward_impl.20} parent=0 // pred_region
    _
  $region5: #{_forward_impl.20} parent=0 // pred_fallthru
    _
  // Predicated region
  $region6: #{_forward_impl.20} parent=0 // pred_check
    _
  $region7: #{_forward_impl.20} parent=0 // pred_check_branch
    %11 = sbr.rel (0) target = $region9
  $region8: #{_forward_impl.20} parent=0 // pred_region
    _
  $region9: #{_forward_impl.20} parent=0 // pred_fallthru
    _
  // Predicated region
  $region10: #{_forward_impl.20} parent=0 // pred_check
    _
  $region11: #{_forward_impl.20} parent=0 // pred_check_branch
    %13 = sbr.rel (0) target = $region13
  $region12: #{_forward_impl.20} parent=0 // pred_region
    _
  $region13: #{_forward_impl.20} parent=0 // pred_fallthru
    _
  %v15 = vld [vmem:[%s0] sm:$0xff]
  %v16 = vld [vmem:[%s0 + $0x8] sm:$0xf]
  %v17 = vld [vmem:[%s0 + $0xc] sm:$0xff]
  %v18 = vld [vmem:[%s0 + $0x14] sm:$0xf]
  %v19 = vld [vmem:[%s0 + $0x18] sm:$0xff]
  %v20 = vld [vmem:[%s0 + $0x20] sm:$0xf]
  %v21 = vld [vmem:[%s0 + $0x24] sm:$0xff]
  %v22 = vld [vmem:[%s0 + $0x2c] sm:$0xf]
  %v23 = vld [vmem:[%s0 + $0x30] sm:$0xff]
  %v24 = vld [vmem:[%s0 + $0x38] sm:$0xf]
  %v25 = vld [vmem:[%s0 + $0x3c] sm:$0xff]
  %v26 = vld [vmem:[%s0 + $0x44] sm:$0xf]
  %v27 = vld [vmem:[%s0 + $0x48] sm:$0xff]
  %v28 = vld [vmem:[%s0 + $0x50] sm:$0xf]
  %v29 = vld [vmem:[%s0 + $0x54] sm:$0xff]
  %v30 = vld [vmem:[%s0 + $0x5c] sm:$0xf]
  %v31 = vld [vmem:[%s0 + $0x60] sm:$0xff]
  %v32 = vld [vmem:[%s0 + $0x68] sm:$0xf]
  %v33 = vld [vmem:[%s0 + $0x6c] sm:$0xff]
  %v34 = vld [vmem:[%s0 + $0x74] sm:$0xf]
  %v35 = vld [vmem:[%s0 + $0x78] sm:$0xff]
  %v36 = vld [vmem:[%s0 + $0x80] sm:$0xf]
  %v37 = vld [vmem:[%s0 + $0x84] sm:$0xff]
  %v38 = vld [vmem:[%s0 + $0x8c] sm:$0xf]
  %v39 = vld [vmem:[%s0 + $0x90] sm:$0xff]
  %v40 = vld [vmem:[%s0 + $0x98] sm:$0xf]
  %v41 = vld [vmem:[%s0 + $0x9c] sm:$0xff]
  %v42 = vld [vmem:[%s0 + $0xa4] sm:$0xf]
  %v43 = vld [vmem:[%s0 + $0xa8] sm:$0xff]
  %v44 = vld [vmem:[%s0 + $0xb0] sm:$0xf]
  %v45 = vld [vmem:[%s0 + $0xb4] sm:$0xff]
  %v46 = vld [vmem:[%s0 + $0xbc] sm:$0xf]
  %v47 = vld [vmem:[%s1] sm:$0xf]
  %v48 = vld [vmem:[%s1 + $0x4] sm:$0xf]
  %v49 = vld [vmem:[%s1 + $0x8] sm:$0xf]
  %v50 = vld [vmem:[%s1 + $0xc] sm:$0xf]
  %v51 = vld [vmem:[%s1 + $0x10] sm:$0xf]
  %v52 = vld [vmem:[%s1 + $0x14] sm:$0xf]
  %v53 = vld [vmem:[%s1 + $0x18] sm:$0xf]
  %v54 = vld [vmem:[%s1 + $0x1c] sm:$0xf]
  %v55 = vld [vmem:[%s1 + $0x20] sm:$0xf]
  %v56 = vld [vmem:[%s1 + $0x24] sm:$0xf]
  %v57 = vld [vmem:[%s1 + $0x28] sm:$0xf]
  %v58 = vld [vmem:[%s1 + $0x2c] sm:$0xf]
  %v59 = vld [vmem:[%s1 + $0x30] sm:$0xf]
  %v60 = vld [vmem:[%s1 + $0x34] sm:$0xf]
  %v61 = vld [vmem:[%s1 + $0x38] sm:$0xf]
  %v62 = vld [vmem:[%s1 + $0x3c] sm:$0xf]
  %v63 = vld [vmem:[%s1 + $0x40] sm:$0xf]
  %v64 = vld [vmem:[%s1 + $0x44] sm:$0xf]
  %v65 = vld [vmem:[%s1 + $0x48] sm:$0xf]
  %v66 = vld [vmem:[%s1 + $0x4c] sm:$0xf]
  %v67 = vld [vmem:[%s1 + $0x50] sm:$0xf]
  %v68 = vld [vmem:[%s1 + $0x54] sm:$0xf]
  %v69 = vld [vmem:[%s1 + $0x58] sm:$0xf]
  %v70 = vld [vmem:[%s1 + $0x5c] sm:$0xf]
  %v71 = vld [vmem:[%s1 + $0x60] sm:$0xf]
  %v72 = vld [vmem:[%s1 + $0x64] sm:$0xf]
  %v73 = vld [vmem:[%s1 + $0x68] sm:$0xf]
  %v74 = vld [vmem:[%s1 + $0x6c] sm:$0xf]
  %v75 = vld [vmem:[%s1 + $0x70] sm:$0xf]
  %v76 = vld [vmem:[%s1 + $0x74] sm:$0xf]
  %v77 = vld [vmem:[%s1 + $0x78] sm:$0xf]
  %v78 = vld [vmem:[%s1 + $0x7c] sm:$0xf]
  %v79 = vld [vmem:[%s1 + $0x80] sm:$0xf]
  %v80 = vld [vmem:[%s1 + $0x84] sm:$0xf]
  %v81 = vld [vmem:[%s1 + $0x88] sm:$0xf]
  %v82 = vld [vmem:[%s1 + $0x8c] sm:$0xf]
  %v83 = vld [vmem:[%s1 + $0x90] sm:$0xf]
  %v84 = vld [vmem:[%s1 + $0x94] sm:$0xf]
  %v85 = vld [vmem:[%s1 + $0x98] sm:$0xf]
  %v86 = vld [vmem:[%s1 + $0x9c] sm:$0xf]
  %v87 = vld [vmem:[%s1 + $0xa0] sm:$0xf]
  %v88 = vld [vmem:[%s1 + $0xa4] sm:$0xf]
  %v89 = vld [vmem:[%s1 + $0xa8] sm:$0xf]
  %v90 = vld [vmem:[%s1 + $0xac] sm:$0xf]
  %v91 = vld [vmem:[%s1 + $0xb0] sm:$0xf]
  %v92 = vld [vmem:[%s1 + $0xb4] sm:$0xf]
  %v93 = vld [vmem:[%s1 + $0xb8] sm:$0xf]
  %v94 = vld [vmem:[%s1 + $0xbc] sm:$0xf]
  %v95 = vld [vmem:[%s2] sm:$0x1]
  %v97 = vlaneseq
  %v98 = vshrl.u32 %v97, 7
  %v99 = vsub.s32 0, %v98
  %v100 = vrot.slane %v95, %v99
  %v134 = vunpack.c.l.b16 %v15
  %v135 = vunpack.c.h.b16 %v15
  %v136 = vunpack.c.l.b16 %v16
  %v137 = vunpack.c.l.b16 %v17
  %v138 = vunpack.c.h.b16 %v17
  %v139 = vunpack.c.l.b16 %v18
  %v140 = vunpack.c.l.b16 %v19
  %v141 = vunpack.c.h.b16 %v19
  %v142 = vunpack.c.l.b16 %v20
  %v143 = vunpack.c.l.b16 %v21
  %v144 = vunpack.c.h.b16 %v21
  %v145 = vunpack.c.l.b16 %v22
  %v146 = vunpack.c.l.b16 %v23
  %v147 = vunpack.c.h.b16 %v23
  %v148 = vunpack.c.l.b16 %v24
  %v149 = vunpack.c.l.b16 %v25
  %v150 = vunpack.c.h.b16 %v25
  %v151 = vunpack.c.l.b16 %v26
  %v152 = vunpack.c.l.b16 %v27
  %v153 = vunpack.c.h.b16 %v27
  %v154 = vunpack.c.l.b16 %v28
  %v155 = vunpack.c.l.b16 %v29
  %v156 = vunpack.c.h.b16 %v29
  %v157 = vunpack.c.l.b16 %v30
  %v158 = vunpack.c.l.b16 %v31
  %v159 = vunpack.c.h.b16 %v31
  %v160 = vunpack.c.l.b16 %v32
  %v161 = vunpack.c.l.b16 %v33
  %v162 = vunpack.c.h.b16 %v33
  %v163 = vunpack.c.l.b16 %v34
  %v164 = vunpack.c.l.b16 %v35
  %v165 = vunpack.c.h.b16 %v35
  %v166 = vunpack.c.l.b16 %v36
  %v167 = vunpack.c.l.b16 %v37
  %v168 = vunpack.c.h.b16 %v37
  %v169 = vunpack.c.l.b16 %v38
  %v170 = vunpack.c.l.b16 %v39
  %v171 = vunpack.c.h.b16 %v39
  %v172 = vunpack.c.l.b16 %v40
  %v173 = vunpack.c.l.b16 %v41
  %v174 = vunpack.c.h.b16 %v41
  %v175 = vunpack.c.l.b16 %v42
  %v176 = vunpack.c.l.b16 %v43
  %v177 = vunpack.c.h.b16 %v43
  %v178 = vunpack.c.l.b16 %v44
  %v179 = vunpack.c.l.b16 %v45
  %v180 = vunpack.c.h.b16 %v45
  %v181 = vunpack.c.l.b16 %v46
  %v182 = vpack.c.b16 %v137, %v134
  %v183 = vpack.c.b16 %v138, %v135
  %v184 = vpack.c.b16 %v139, %v136
  %v185 = vpack.c.b16 %v143, %v140
  %v186 = vpack.c.b16 %v144, %v141
  %v187 = vpack.c.b16 %v145, %v142
  %v188 = vpack.c.b16 %v149, %v146
  %v189 = vpack.c.b16 %v150, %v147
  %v190 = vpack.c.b16 %v151, %v148
  %v191 = vpack.c.b16 %v155, %v152
  %v192 = vpack.c.b16 %v156, %v153
  %v193 = vpack.c.b16 %v157, %v154
  %v194 = vpack.c.b16 %v161, %v158
  %v195 = vpack.c.b16 %v162, %v159
  %v196 = vpack.c.b16 %v163, %v160
  %v197 = vpack.c.b16 %v167, %v164
  %v198 = vpack.c.b16 %v168, %v165
  %v199 = vpack.c.b16 %v169, %v166
  %v200 = vpack.c.b16 %v173, %v170
  %v201 = vpack.c.b16 %v174, %v171
  %v202 = vpack.c.b16 %v175, %v172
  %v203 = vpack.c.b16 %v179, %v176
  %v204 = vpack.c.b16 %v180, %v177
  %v205 = vpack.c.b16 %v181, %v178
  %v278 = vunpack.c.l.b16 %v47
  %v279 = vunpack.c.l.b16 %v48
  %v280 = vunpack.c.l.b16 %v49
  %v281 = vunpack.c.l.b16 %v50
  %v282 = vunpack.c.l.b16 %v51
  %v283 = vunpack.c.l.b16 %v52
  %v284 = vunpack.c.l.b16 %v53
  %v285 = vunpack.c.l.b16 %v54
  %v286 = vunpack.c.l.b16 %v55
  %v287 = vunpack.c.l.b16 %v56
  %v288 = vunpack.c.l.b16 %v57
  %v289 = vunpack.c.l.b16 %v58
  %v290 = vunpack.c.l.b16 %v59
  %v291 = vunpack.c.l.b16 %v60
  %v292 = vunpack.c.l.b16 %v61
  %v293 = vunpack.c.l.b16 %v62
  %v294 = vunpack.c.l.b16 %v63
  %v295 = vunpack.c.l.b16 %v64
  %v296 = vunpack.c.l.b16 %v65
  %v297 = vunpack.c.l.b16 %v66
  %v298 = vunpack.c.l.b16 %v67
  %v299 = vunpack.c.l.b16 %v68
  %v300 = vunpack.c.l.b16 %v69
  %v301 = vunpack.c.l.b16 %v70
  %v302 = vunpack.c.l.b16 %v71
  %v303 = vunpack.c.l.b16 %v72
  %v304 = vunpack.c.l.b16 %v73
  %v305 = vunpack.c.l.b16 %v74
  %v306 = vunpack.c.l.b16 %v75
  %v307 = vunpack.c.l.b16 %v76
  %v308 = vunpack.c.l.b16 %v77
  %v309 = vunpack.c.l.b16 %v78
  %v310 = vunpack.c.l.b16 %v79
  %v311 = vunpack.c.l.b16 %v80
  %v312 = vunpack.c.l.b16 %v81
  %v313 = vunpack.c.l.b16 %v82
  %v314 = vunpack.c.l.b16 %v83
  %v315 = vunpack.c.l.b16 %v84
  %v316 = vunpack.c.l.b16 %v85
  %v317 = vunpack.c.l.b16 %v86
  %v318 = vunpack.c.l.b16 %v87
  %v319 = vunpack.c.l.b16 %v88
  %v320 = vunpack.c.l.b16 %v89
  %v321 = vunpack.c.l.b16 %v90
  %v322 = vunpack.c.l.b16 %v91
  %v323 = vunpack.c.l.b16 %v92
  %v324 = vunpack.c.l.b16 %v93
  %v325 = vunpack.c.l.b16 %v94
  %v326 = vpack.c.b16 %v279, %v278
  %v327 = vpack.c.b16 %v281, %v280
  %v328 = vpack.c.b16 %v283, %v282
  %v329 = vpack.c.b16 %v285, %v284
  %v330 = vpack.c.b16 %v287, %v286
  %v331 = vpack.c.b16 %v289, %v288
  %v332 = vpack.c.b16 %v291, %v290
  %v333 = vpack.c.b16 %v293, %v292
  %v334 = vpack.c.b16 %v295, %v294
  %v335 = vpack.c.b16 %v297, %v296
  %v336 = vpack.c.b16 %v299, %v298
  %v337 = vpack.c.b16 %v301, %v300
  %v338 = vpack.c.b16 %v303, %v302
  %v339 = vpack.c.b16 %v305, %v304
  %v340 = vpack.c.b16 %v307, %v306
  %v341 = vpack.c.b16 %v309, %v308
  %v342 = vpack.c.b16 %v311, %v310
  %v343 = vpack.c.b16 %v313, %v312
  %v344 = vpack.c.b16 %v315, %v314
  %v345 = vpack.c.b16 %v317, %v316
  %v346 = vpack.c.b16 %v319, %v318
  %v347 = vpack.c.b16 %v321, %v320
  %v348 = vpack.c.b16 %v323, %v322
  %v349 = vpack.c.b16 %v325, %v324
  %374 = vmatprep.subr.bf16.mxu0 0
  %375 = vmatpush1.bf16.msra.mxu0 %v333
  %376 = vmatprep.subr.bf16.mxu0 0
  %377 = vmatpush1.bf16.msra.mxu0 %v332
  %378 = vmatprep.subr.bf16.mxu0 0
  %379 = vmatpush1.bf16.msra.mxu0 %v331
  %380 = vmatprep.subr.bf16.mxu0 0
  %381 = vmatpush1.bf16.msra.mxu0 %v330
  %382 = vmatprep.subr.bf16.mxu0 0
  %383 = vmatpush1.bf16.msra.mxu0 %v329
  %384 = vmatprep.subr.bf16.mxu0 0
  %385 = vmatpush1.bf16.msra.mxu0 %v328
  %386 = vmatprep.subr.bf16.mxu0 0
  %387 = vmatpush1.bf16.msra.mxu0 %v327
  %388 = vmatprep.subr.bf16.mxu0 0
  %389 = vmatpush1.bf16.msra.mxu0 %v326
  %390 = vmatprep.subr.bf16.mxu0 0
  %391 = vmatpush2.bf16.msra.mxu0 %v341
  %392 = vmatprep.subr.bf16.mxu0 0
  %393 = vmatpush2.bf16.msra.mxu0 %v340
  %394 = vmatprep.subr.bf16.mxu0 0
  %395 = vmatpush2.bf16.msra.mxu0 %v339
  %396 = vmatprep.subr.bf16.mxu0 0
  %397 = vmatpush2.bf16.msra.mxu0 %v338
  %398 = vmatprep.subr.bf16.mxu0 0
  %399 = vmatpush2.bf16.msra.mxu0 %v337
  %400 = vmatprep.subr.bf16.mxu0 0
  %401 = vmatpush2.bf16.msra.mxu0 %v336
  %402 = vmatprep.subr.bf16.mxu0 0
  %403 = vmatpush2.bf16.msra.mxu0 %v335
  %404 = vmatprep.subr.bf16.mxu0 0
  %405 = vmatpush2.bf16.msra.mxu0 %v334
  %406 = vmatprep.mubr.bf16.mxu0 %v183
  %407 = vmatmul.mubr.bf16.gmra.mxu0 %v182
  %v408 = vpop.f32.mrf.mxu0
  %v409 = vadd.f32 %v100, %v408
  %v410 = vpop.f32.mrf.mxu0
  %v411 = vpop.f32.mrf.mxu0
  %v412 = vadd.f32 %v100, %v411
  %v413 = vpop.f32.mrf.mxu0
  %414 = vmatprep.mubr.bf16.mxu0 %v186
  %415 = vmatmul.mubr.bf16.gmra.mxu0 %v185
  %v416 = vpop.f32.mrf.mxu0
  %v417 = vadd.f32 %v100, %v416
  %v418 = vpop.f32.mrf.mxu0
  %v419 = vpop.f32.mrf.mxu0
  %v420 = vadd.f32 %v100, %v419
  %v421 = vpop.f32.mrf.mxu0
  %422 = vmatprep.mubr.bf16.mxu0 %v189
  %423 = vmatmul.mubr.bf16.gmra.mxu0 %v188
  %v424 = vpop.f32.mrf.mxu0
  %v425 = vadd.f32 %v100, %v424
  %v426 = vpop.f32.mrf.mxu0
  %v427 = vpop.f32.mrf.mxu0
  %v428 = vadd.f32 %v100, %v427
  %v429 = vpop.f32.mrf.mxu0
  %430 = vmatprep.mubr.bf16.mxu0 %v192
  %431 = vmatmul.mubr.bf16.gmra.mxu0 %v191
  %v432 = vpop.f32.mrf.mxu0
  %v433 = vadd.f32 %v100, %v432
  %v434 = vpop.f32.mrf.mxu0
  %v435 = vpop.f32.mrf.mxu0
  %v436 = vadd.f32 %v100, %v435
  %v437 = vpop.f32.mrf.mxu0
  %438 = vmatprep.mubr.bf16.mxu0 %v195
  %439 = vmatmul.mubr.bf16.gmra.mxu0 %v194
  %v440 = vpop.f32.mrf.mxu0
  %v441 = vadd.f32 %v100, %v440
  %v442 = vpop.f32.mrf.mxu0
  %v443 = vpop.f32.mrf.mxu0
  %v444 = vadd.f32 %v100, %v443
  %v445 = vpop.f32.mrf.mxu0
  %446 = vmatprep.mubr.bf16.mxu0 %v198
  %447 = vmatmul.mubr.bf16.gmra.mxu0 %v197
  %v448 = vpop.f32.mrf.mxu0
  %v449 = vadd.f32 %v100, %v448
  %v450 = vpop.f32.mrf.mxu0
  %v451 = vpop.f32.mrf.mxu0
  %v452 = vadd.f32 %v100, %v451
  %v453 = vpop.f32.mrf.mxu0
  %454 = vmatprep.mubr.bf16.mxu0 %v201
  %455 = vmatmul.mubr.bf16.gmra.mxu0 %v200
  %v456 = vpop.f32.mrf.mxu0
  %v457 = vadd.f32 %v100, %v456
  %v458 = vpop.f32.mrf.mxu0
  %v459 = vpop.f32.mrf.mxu0
  %v460 = vadd.f32 %v100, %v459
  %v461 = vpop.f32.mrf.mxu0
  %462 = vmatprep.mubr.bf16.mxu0 %v204
  %463 = vmatmul.mubr.bf16.gmra.mxu0 %v203
  %v464 = vpop.f32.mrf.mxu0
  %v465 = vadd.f32 %v100, %v464
  %v466 = vpop.f32.mrf.mxu0
  %v467 = vpop.f32.mrf.mxu0
  %v468 = vadd.f32 %v100, %v467
  %v469 = vpop.f32.mrf.mxu0
  %470 = vdwg.mxu0
  %471 = vmatprep.subr.bf16.mxu0 0
  %472 = vmatpush1.bf16.msra.mxu0 %v349
  %473 = vmatprep.subr.bf16.mxu0 0
  %474 = vmatpush1.bf16.msra.mxu0 %v348
  %475 = vmatprep.subr.bf16.mxu0 0
  %476 = vmatpush1.bf16.msra.mxu0 %v347
  %477 = vmatprep.subr.bf16.mxu0 0
  %478 = vmatpush1.bf16.msra.mxu0 %v346
  %479 = vmatprep.subr.bf16.mxu0 0
  %480 = vmatpush1.bf16.msra.mxu0 %v345
  %481 = vmatprep.subr.bf16.mxu0 0
  %482 = vmatpush1.bf16.msra.mxu0 %v344
  %483 = vmatprep.subr.bf16.mxu0 0
  %484 = vmatpush1.bf16.msra.mxu0 %v343
  %485 = vmatprep.subr.bf16.mxu0 0
  %486 = vmatpush1.bf16.msra.mxu0 %v342
  %487 = vmatprep.subr.bf16.mxu0 0
  %488 = vmatpush2.bf16.msra.mxu0 0
  %489 = vmatprep.subr.bf16.mxu0 0
  %490 = vmatpush2.bf16.msra.mxu0 0
  %491 = vmatprep.subr.bf16.mxu0 0
  %492 = vmatpush2.bf16.msra.mxu0 0
  %493 = vmatprep.subr.bf16.mxu0 0
  %494 = vmatpush2.bf16.msra.mxu0 0
  %495 = vmatprep.subr.bf16.mxu0 0
  %496 = vmatpush2.bf16.msra.mxu0 0
  %497 = vmatprep.subr.bf16.mxu0 0
  %498 = vmatpush2.bf16.msra.mxu0 0
  %499 = vmatprep.subr.bf16.mxu0 0
  %500 = vmatpush2.bf16.msra.mxu0 0
  %501 = vmatprep.subr.bf16.mxu0 0
  %502 = vmatpush2.bf16.msra.mxu0 0
  %503 = vmatprep.mubr.bf16.mxu0 0
  %504 = vmatmul.mubr.bf16.gmra.mxu0 %v184
  %v505 = vpop.f32.mrf.mxu0
  %v506 = vadd.f32 %v409, %v505
  %v507 = vpop.f32.mrf.mxu0
  %v508 = vpop.f32.mrf.mxu0
  %v509 = vadd.f32 %v412, %v508
  %v510 = vpop.f32.mrf.mxu0
  %511 = vmatprep.mubr.bf16.mxu0 0
  %512 = vmatmul.mubr.bf16.gmra.mxu0 %v187
  %v513 = vpop.f32.mrf.mxu0
  %v514 = vadd.f32 %v417, %v513
  %v515 = vpop.f32.mrf.mxu0
  %v516 = vpop.f32.mrf.mxu0
  %v517 = vadd.f32 %v420, %v516
  %v518 = vpop.f32.mrf.mxu0
  %519 = vmatprep.mubr.bf16.mxu0 0
  %520 = vmatmul.mubr.bf16.gmra.mxu0 %v190
  %v521 = vpop.f32.mrf.mxu0
  %v522 = vadd.f32 %v425, %v521
  %v523 = vpop.f32.mrf.mxu0
  %v524 = vpop.f32.mrf.mxu0
  %v525 = vadd.f32 %v428, %v524
  %v526 = vpop.f32.mrf.mxu0
  %527 = vmatprep.mubr.bf16.mxu0 0
  %528 = vmatmul.mubr.bf16.gmra.mxu0 %v193
  %v529 = vpop.f32.mrf.mxu0
  %v530 = vadd.f32 %v433, %v529
  %v531 = vpop.f32.mrf.mxu0
  %v532 = vpop.f32.mrf.mxu0
  %v533 = vadd.f32 %v436, %v532
  %v534 = vpop.f32.mrf.mxu0
  %535 = vmatprep.mubr.bf16.mxu0 0
  %536 = vmatmul.mubr.bf16.gmra.mxu0 %v196
  %v537 = vpop.f32.mrf.mxu0
  %v538 = vadd.f32 %v441, %v537
  %v539 = vpop.f32.mrf.mxu0
  %v540 = vpop.f32.mrf.mxu0
  %v541 = vadd.f32 %v444, %v540
  %v542 = vpop.f32.mrf.mxu0
  %543 = vmatprep.mubr.bf16.mxu0 0
  %544 = vmatmul.mubr.bf16.gmra.mxu0 %v199
  %v545 = vpop.f32.mrf.mxu0
  %v546 = vadd.f32 %v449, %v545
  %v547 = vpop.f32.mrf.mxu0
  %v548 = vpop.f32.mrf.mxu0
  %v549 = vadd.f32 %v452, %v548
  %v550 = vpop.f32.mrf.mxu0
  %551 = vmatprep.mubr.bf16.mxu0 0
  %552 = vmatmul.mubr.bf16.gmra.mxu0 %v202
  %v553 = vpop.f32.mrf.mxu0
  %v554 = vadd.f32 %v457, %v553
  %v555 = vpop.f32.mrf.mxu0
  %v556 = vpop.f32.mrf.mxu0
  %v557 = vadd.f32 %v460, %v556
  %v558 = vpop.f32.mrf.mxu0
  %559 = vmatprep.mubr.bf16.mxu0 0
  %560 = vmatmul.mubr.bf16.gmra.mxu0 %v205
  %v561 = vpop.f32.mrf.mxu0
  %v562 = vadd.f32 %v465, %v561
  %v563 = vpop.f32.mrf.mxu0
  %v564 = vpop.f32.mrf.mxu0
  %v565 = vadd.f32 %v468, %v564
  %v566 = vpop.f32.mrf.mxu0
  %567 = vdwg.mxu0
  %v568 = vmax.f32 %v506, 0.0
  %v569 = vmax.f32 %v509, 0.0
  %v570 = vmax.f32 %v514, 0.0
  %v571 = vmax.f32 %v517, 0.0
  %v572 = vmax.f32 %v522, 0.0
  %v573 = vmax.f32 %v525, 0.0
  %v574 = vmax.f32 %v530, 0.0
  %v575 = vmax.f32 %v533, 0.0
  %v576 = vmax.f32 %v538, 0.0
  %v577 = vmax.f32 %v541, 0.0
  %v578 = vmax.f32 %v546, 0.0
  %v579 = vmax.f32 %v549, 0.0
  %v580 = vmax.f32 %v554, 0.0
  %v581 = vmax.f32 %v557, 0.0
  %v582 = vmax.f32 %v562, 0.0
  %v583 = vmax.f32 %v565, 0.0
  %v584 = vpack.c.bf16 %v569, %v568
  %v585 = vpack.c.bf16 %v571, %v570
  %v586 = vpack.c.bf16 %v573, %v572
  %v587 = vpack.c.bf16 %v575, %v574
  %v588 = vpack.c.bf16 %v577, %v576
  %v589 = vpack.c.bf16 %v579, %v578
  %v590 = vpack.c.bf16 %v581, %v580
  %v591 = vpack.c.bf16 %v583, %v582
  %v600 = vunpack.c.l.b16 %v584
  %v601 = vunpack.c.h.b16 %v584
  %v602 = vunpack.c.l.b16 %v585
  %v603 = vunpack.c.h.b16 %v585
  %v604 = vunpack.c.l.b16 %v586
  %v605 = vunpack.c.h.b16 %v586
  %v606 = vunpack.c.l.b16 %v587
  %v607 = vunpack.c.h.b16 %v587
  %v608 = vunpack.c.l.b16 %v588
  %v609 = vunpack.c.h.b16 %v588
  %v610 = vunpack.c.l.b16 %v589
  %v611 = vunpack.c.h.b16 %v589
  %v612 = vunpack.c.l.b16 %v590
  %v613 = vunpack.c.h.b16 %v590
  %v614 = vunpack.c.l.b16 %v591
  %v615 = vunpack.c.h.b16 %v591
  %v616 = vpack.c.b16 %v600, %v600
  %v617 = vpack.c.b16 %v601, %v601
  %v618 = vpack.c.b16 %v602, %v602
  %v619 = vpack.c.b16 %v603, %v603
  %v620 = vpack.c.b16 %v604, %v604
  %v621 = vpack.c.b16 %v605, %v605
  %v622 = vpack.c.b16 %v606, %v606
  %v623 = vpack.c.b16 %v607, %v607
  %v624 = vpack.c.b16 %v608, %v608
  %v625 = vpack.c.b16 %v609, %v609
  %v626 = vpack.c.b16 %v610, %v610
  %v627 = vpack.c.b16 %v611, %v611
  %v628 = vpack.c.b16 %v612, %v612
  %v629 = vpack.c.b16 %v613, %v613
  %v630 = vpack.c.b16 %v614, %v614
  %v631 = vpack.c.b16 %v615, %v615
  %648 = vst [vmem:[%s3] sm:$0xf] %v616
  %649 = vst [vmem:[%s3 + $0x4] sm:$0xf] %v617
  %650 = vst [vmem:[%s3 + $0x8] sm:$0xf] %v618
  %651 = vst [vmem:[%s3 + $0xc] sm:$0xf] %v619
  %652 = vst [vmem:[%s3 + $0x10] sm:$0xf] %v620
  %653 = vst [vmem:[%s3 + $0x14] sm:$0xf] %v621
  %654 = vst [vmem:[%s3 + $0x18] sm:$0xf] %v622
  %655 = vst [vmem:[%s3 + $0x1c] sm:$0xf] %v623
  %656 = vst [vmem:[%s3 + $0x20] sm:$0xf] %v624
  %657 = vst [vmem:[%s3 + $0x24] sm:$0xf] %v625
  %658 = vst [vmem:[%s3 + $0x28] sm:$0xf] %v626
  %659 = vst [vmem:[%s3 + $0x2c] sm:$0xf] %v627
  %660 = vst [vmem:[%s3 + $0x30] sm:$0xf] %v628
  %661 = vst [vmem:[%s3 + $0x34] sm:$0xf] %v629
  %662 = vst [vmem:[%s3 + $0x38] sm:$0xf] %v630
  %663 = vst [vmem:[%s3 + $0x3c] sm:$0xf] %v631
  // Predicated region
  $region14: #{_forward_impl.20} parent=0 // pred_check
    _
  $region15: #{_forward_impl.20} parent=0 // pred_check_branch
    %665 = sbr.rel (0) target = $region17
  $region16: #{_forward_impl.20} parent=0 // pred_region
    _
  $region17: #{_forward_impl.20} parent=0 // pred_fallthru
    _
  // Predicated region
  $region18: #{_forward_impl.20} parent=0 // pred_check
    _
  $region19: #{_forward_impl.20} parent=0 // pred_check_branch
    %667 = sbr.rel (0) target = $region21
  $region20: #{_forward_impl.20} parent=0 // pred_region
    _
  $region21: #{_forward_impl.20} parent=0 // pred_fallthru
    _

// kernel: _forward_impl.23
$region0: #{_forward_impl.23}
  #allocation0 [shape = 'u32[]', space=smem, size = 0x4, offset = 0x4, fixed_abs, tag = 'smem constant byte address 0x4 - core index']
  #allocation1 [shape = 'u32[144,128]{1,0:T(1,128)}', space=vmem, size = 0x12000, scoped, tag = 'internal scratch']
  %s0 = inlined_call_operand.vmem [shape: bf16[128,640], index: 0, kind: input, shape index: {}]
  %s1 = inlined_call_operand.vmem [shape: bf16[640,128], index: 1, kind: input, shape index: {}]
  %s2 = inlined_call_operand.vmem [shape: f32[1,128], index: 2, kind: input, shape index: {}]
  %s3 = inlined_call_operand.vmem [shape: bf16[128,128], index: 3, kind: output, shape index: {}]
  %s4 = sld [smem:[#allocation0]]
  $region22: #{_forward_impl.23} parent=0
    _
  %s6 = ssub.s32 1, %s4
  %s7 = scalar_select 0, %s6, %s4
  // Predicated region
  $region2: #{_forward_impl.23} parent=0 // pred_check
    _
  $region3: #{_forward_impl.23} parent=0 // pred_check_branch
    %9 = sbr.rel (0) target = $region5
  $region4: #{_forward_impl.23} parent=0 // pred_region
    _
  $region5: #{_forward_impl.23} parent=0 // pred_fallthru
    _
  // Predicated region
  $region6: #{_forward_impl.23} parent=0 // pred_check
    _
  $region7: #{_forward_impl.23} parent=0 // pred_check_branch
    %11 = sbr.rel (0) target = $region9
  $region8: #{_forward_impl.23} parent=0 // pred_region
    _
  $region9: #{_forward_impl.23} parent=0 // pred_fallthru
    _
  // Predicated region
  $region10: #{_forward_impl.23} parent=0 // pred_check
    _
  $region11: #{_forward_impl.23} parent=0 // pred_check_branch
    %13 = sbr.rel (0) target = $region13
  $region12: #{_forward_impl.23} parent=0 // pred_region
    _
  $region13: #{_forward_impl.23} parent=0 // pred_fallthru
    _
  %v15 = vld [vmem:[%s0] sm:$0xff]
  %v16 = vld [vmem:[%s0 + $0x8] sm:$0xff]
  %v17 = vld [vmem:[%s0 + $0x10] sm:$0xf]
  %v18 = vld [vmem:[%s0 + $0x14] sm:$0xff]
  %v19 = vld [vmem:[%s0 + $0x1c] sm:$0xff]
  %v20 = vld [vmem:[%s0 + $0x24] sm:$0xf]
  %v21 = vld [vmem:[%s0 + $0x28] sm:$0xff]
  %v22 = vld [vmem:[%s0 + $0x30] sm:$0xff]
  %v23 = vld [vmem:[%s0 + $0x38] sm:$0xf]
  %v24 = vld [vmem:[%s0 + $0x3c] sm:$0xff]
  %v25 = vld [vmem:[%s0 + $0x44] sm:$0xff]
  %v26 = vld [vmem:[%s0 + $0x4c] sm:$0xf]
  %v27 = vld [vmem:[%s0 + $0x50] sm:$0xff]
  %v28 = vld [vmem:[%s0 + $0x58] sm:$0xff]
  %v29 = vld [vmem:[%s0 + $0x60] sm:$0xf]
  %v30 = vld [vmem:[%s0 + $0x64] sm:$0xff]
  %v31 = vld [vmem:[%s0 + $0x6c] sm:$0xff]
  %v32 = vld [vmem:[%s0 + $0x74] sm:$0xf]
  %v33 = vld [vmem:[%s0 + $0x78] sm:$0xff]
  %v34 = vld [vmem:[%s0 + $0x80] sm:$0xff]
  %v35 = vld [vmem:[%s0 + $0x88] sm:$0xf]
  %v36 = vld [vmem:[%s0 + $0x8c] sm:$0xff]
  %v37 = vld [vmem:[%s0 + $0x94] sm:$0xff]
  %v38 = vld [vmem:[%s0 + $0x9c] sm:$0xf]
  %v39 = vld [vmem:[%s0 + $0xa0] sm:$0xff]
  %v40 = vld [vmem:[%s0 + $0xa8] sm:$0xff]
  %v41 = vld [vmem:[%s0 + $0xb0] sm:$0xf]
  %v42 = vld [vmem:[%s0 + $0xb4] sm:$0xff]
  %v43 = vld [vmem:[%s0 + $0xbc] sm:$0xff]
  %v44 = vld [vmem:[%s0 + $0xc4] sm:$0xf]
  %v45 = vld [vmem:[%s0 + $0xc8] sm:$0xff]
  %v46 = vld [vmem:[%s0 + $0xd0] sm:$0xff]
  %v47 = vld [vmem:[%s0 + $0xd8] sm:$0xf]
  %v48 = vld [vmem:[%s0 + $0xdc] sm:$0xff]
  %v49 = vld [vmem:[%s0 + $0xe4] sm:$0xff]
  %v50 = vld [vmem:[%s0 + $0xec] sm:$0xf]
  %v51 = vld [vmem:[%s0 + $0xf0] sm:$0xff]
  %v52 = vld [vmem:[%s0 + $0xf8] sm:$0xff]
  %v53 = vld [vmem:[%s0 + $0x100] sm:$0xf]
  %v54 = vld [vmem:[%s0 + $0x104] sm:$0xff]
  %v55 = vld [vmem:[%s0 + $0x10c] sm:$0xff]
  %v56 = vld [vmem:[%s0 + $0x114] sm:$0xf]
  %v57 = vld [vmem:[%s0 + $0x118] sm:$0xff]
  %v58 = vld [vmem:[%s0 + $0x120] sm:$0xff]
  %v59 = vld [vmem:[%s0 + $0x128] sm:$0xf]
  %v60 = vld [vmem:[%s0 + $0x12c] sm:$0xff]
  %v61 = vld [vmem:[%s0 + $0x134] sm:$0xff]
  %v62 = vld [vmem:[%s0 + $0x13c] sm:$0xf]
  %v63 = vld [vmem:[%s1] sm:$0xf]
  %v64 = vld [vmem:[%s1 + $0x4] sm:$0xf]
  %v65 = vld [vmem:[%s1 + $0x8] sm:$0xf]
  %v66 = vld [vmem:[%s1 + $0xc] sm:$0xf]
  %v67 = vld [vmem:[%s1 + $0x10] sm:$0xf]
  %v68 = vld [vmem:[%s1 + $0x14] sm:$0xf]
  %v69 = vld [vmem:[%s1 + $0x18] sm:$0xf]
  %v70 = vld [vmem:[%s1 + $0x1c] sm:$0xf]
  %v71 = vld [vmem:[%s1 + $0x20] sm:$0xf]
  %v72 = vld [vmem:[%s1 + $0x24] sm:$0xf]
  %v73 = vld [vmem:[%s1 + $0x28] sm:$0xf]
  %v74 = vld [vmem:[%s1 + $0x2c] sm:$0xf]
  %v75 = vld [vmem:[%s1 + $0x30] sm:$0xf]
  %v76 = vld [vmem:[%s1 + $0x34] sm:$0xf]
  %v77 = vld [vmem:[%s1 + $0x38] sm:$0xf]
  %v78 = vld [vmem:[%s1 + $0x3c] sm:$0xf]
  %v79 = vld [vmem:[%s1 + $0x40] sm:$0xf]
  %v80 = vld [vmem:[%s1 + $0x44] sm:$0xf]
  %v81 = vld [vmem:[%s1 + $0x48] sm:$0xf]
  %v82 = vld [vmem:[%s1 + $0x4c] sm:$0xf]
  %v83 = vld [vmem:[%s1 + $0x50] sm:$0xf]
  %v84 = vld [vmem:[%s1 + $0x54] sm:$0xf]
  %v85 = vld [vmem:[%s1 + $0x58] sm:$0xf]
  %v86 = vld [vmem:[%s1 + $0x5c] sm:$0xf]
  %v87 = vld [vmem:[%s1 + $0x60] sm:$0xf]
  %v88 = vld [vmem:[%s1 + $0x64] sm:$0xf]
  %v89 = vld [vmem:[%s1 + $0x68] sm:$0xf]
  %v90 = vld [vmem:[%s1 + $0x6c] sm:$0xf]
  %v91 = vld [vmem:[%s1 + $0x70] sm:$0xf]
  %v92 = vld [vmem:[%s1 + $0x74] sm:$0xf]
  %v93 = vld [vmem:[%s1 + $0x78] sm:$0xf]
  %v94 = vld [vmem:[%s1 + $0x7c] sm:$0xf]
  %v95 = vld [vmem:[%s1 + $0x80] sm:$0xf]
  %v96 = vld [vmem:[%s1 + $0x84] sm:$0xf]
  %v97 = vld [vmem:[%s1 + $0x88] sm:$0xf]
  %v98 = vld [vmem:[%s1 + $0x8c] sm:$0xf]
  %v99 = vld [vmem:[%s1 + $0x90] sm:$0xf]
  %v100 = vld [vmem:[%s1 + $0x94] sm:$0xf]
  %v101 = vld [vmem:[%s1 + $0x98] sm:$0xf]
  %v102 = vld [vmem:[%s1 + $0x9c] sm:$0xf]
  %v103 = vld [vmem:[%s1 + $0xa0] sm:$0xf]
  %v104 = vld [vmem:[%s1 + $0xa4] sm:$0xf]
  %v105 = vld [vmem:[%s1 + $0xa8] sm:$0xf]
  %v106 = vld [vmem:[%s1 + $0xac] sm:$0xf]
  %v107 = vld [vmem:[%s1 + $0xb0] sm:$0xf]
  %v108 = vld [vmem:[%s1 + $0xb4] sm:$0xf]
  %v109 = vld [vmem:[%s1 + $0xb8] sm:$0xf]
  %v110 = vld [vmem:[%s1 + $0xbc] sm:$0xf]
  %v111 = vld [vmem:[%s1 + $0xc0] sm:$0xf]
  %v112 = vld [vmem:[%s1 + $0xc4] sm:$0xf]
  %v113 = vld [vmem:[%s1 + $0xc8] sm:$0xf]
  %v114 = vld [vmem:[%s1 + $0xcc] sm:$0xf]
  %v115 = vld [vmem:[%s1 + $0xd0] sm:$0xf]
  %v116 = vld [vmem:[%s1 + $0xd4] sm:$0xf]
  %v117 = vld [vmem:[%s1 + $0xd8] sm:$0xf]
  %v118 = vld [vmem:[%s1 + $0xdc] sm:$0xf]
  %v119 = vld [vmem:[%s1 + $0xe0] sm:$0xf]
  %v120 = vld [vmem:[%s1 + $0xe4] sm:$0xf]
  %v121 = vld [vmem:[%s1 + $0xe8] sm:$0xf]
  %v122 = vld [vmem:[%s1 + $0xec] sm:$0xf]
  %v123 = vld [vmem:[%s1 + $0xf0] sm:$0xf]
  %v124 = vld [vmem:[%s1 + $0xf4] sm:$0xf]
  %v125 = vld [vmem:[%s1 + $0xf8] sm:$0xf]
  %v126 = vld [vmem:[%s1 + $0xfc] sm:$0xf]
  %v127 = vld [vmem:[%s1 + $0x100] sm:$0xf]
  %v128 = vld [vmem:[%s1 + $0x104] sm:$0xf]
  %v129 = vld [vmem:[%s1 + $0x108] sm:$0xf]
  %v130 = vld [vmem:[%s1 + $0x10c] sm:$0xf]
  %v131 = vld [vmem:[%s1 + $0x110] sm:$0xf]
  %v132 = vld [vmem:[%s1 + $0x114] sm:$0xf]
  %v133 = vld [vmem:[%s1 + $0x118] sm:$0xf]
  %v134 = vld [vmem:[%s1 + $0x11c] sm:$0xf]
  %v135 = vld [vmem:[%s1 + $0x120] sm:$0xf]
  %v136 = vld [vmem:[%s1 + $0x124] sm:$0xf]
  %v137 = vld [vmem:[%s1 + $0x128] sm:$0xf]
  %v138 = vld [vmem:[%s1 + $0x12c] sm:$0xf]
  %v139 = vld [vmem:[%s1 + $0x130] sm:$0xf]
  %v140 = vld [vmem:[%s1 + $0x134] sm:$0xf]
  %v141 = vld [vmem:[%s1 + $0x138] sm:$0xf]
  %v142 = vld [vmem:[%s1 + $0x13c] sm:$0xf]
  %v143 = vld [vmem:[%s2] sm:$0x1]
  %v145 = vlaneseq
  %v146 = vshrl.u32 %v145, 7
  %v147 = vsub.s32 0, %v146
  %v148 = vrot.slane %v143, %v147
  %v198 = vunpack.c.l.b16 %v15
  %v199 = vunpack.c.h.b16 %v15
  %v200 = vunpack.c.l.b16 %v16
  %v201 = vunpack.c.h.b16 %v16
  %v202 = vunpack.c.l.b16 %v17
  %v203 = vunpack.c.l.b16 %v18
  %v204 = vunpack.c.h.b16 %v18
  %v205 = vunpack.c.l.b16 %v19
  %v206 = vunpack.c.h.b16 %v19
  %v207 = vunpack.c.l.b16 %v20
  %v208 = vunpack.c.l.b16 %v21
  %v209 = vunpack.c.h.b16 %v21
  %v210 = vunpack.c.l.b16 %v22
  %v211 = vunpack.c.h.b16 %v22
  %v212 = vunpack.c.l.b16 %v23
  %v213 = vunpack.c.l.b16 %v24
  %v214 = vunpack.c.h.b16 %v24
  %v215 = vunpack.c.l.b16 %v25
  %v216 = vunpack.c.h.b16 %v25
  %v217 = vunpack.c.l.b16 %v26
  %v218 = vunpack.c.l.b16 %v27
  %v219 = vunpack.c.h.b16 %v27
  %v220 = vunpack.c.l.b16 %v28
  %v221 = vunpack.c.h.b16 %v28
  %v222 = vunpack.c.l.b16 %v29
  %v223 = vunpack.c.l.b16 %v30
  %v224 = vunpack.c.h.b16 %v30
  %v225 = vunpack.c.l.b16 %v31
  %v226 = vunpack.c.h.b16 %v31
  %v227 = vunpack.c.l.b16 %v32
  %v228 = vunpack.c.l.b16 %v33
  %v229 = vunpack.c.h.b16 %v33
  %v230 = vunpack.c.l.b16 %v34
  %v231 = vunpack.c.h.b16 %v34
  %v232 = vunpack.c.l.b16 %v35
  %v233 = vunpack.c.l.b16 %v36
  %v234 = vunpack.c.h.b16 %v36
  %v235 = vunpack.c.l.b16 %v37
  %v236 = vunpack.c.h.b16 %v37
  %v237 = vunpack.c.l.b16 %v38
  %v238 = vunpack.c.l.b16 %v39
  %v239 = vunpack.c.h.b16 %v39
  %v240 = vunpack.c.l.b16 %v40
  %v241 = vunpack.c.h.b16 %v40
  %v242 = vunpack.c.l.b16 %v41
  %v243 = vunpack.c.l.b16 %v42
  %v244 = vunpack.c.h.b16 %v42
  %v245 = vunpack.c.l.b16 %v43
  %v246 = vunpack.c.h.b16 %v43
  %v247 = vunpack.c.l.b16 %v44
  %v248 = vunpack.c.l.b16 %v45
  %v249 = vunpack.c.h.b16 %v45
  %v250 = vunpack.c.l.b16 %v46
  %v251 = vunpack.c.h.b16 %v46
  %v252 = vunpack.c.l.b16 %v47
  %v253 = vunpack.c.l.b16 %v48
  %v254 = vunpack.c.h.b16 %v48
  %v255 = vunpack.c.l.b16 %v49
  %v256 = vunpack.c.h.b16 %v49
  %v257 = vunpack.c.l.b16 %v50
  %v258 = vunpack.c.l.b16 %v51
  %v259 = vunpack.c.h.b16 %v51
  %v260 = vunpack.c.l.b16 %v52
  %v261 = vunpack.c.h.b16 %v52
  %v262 = vunpack.c.l.b16 %v53
  %v263 = vunpack.c.l.b16 %v54
  %v264 = vunpack.c.h.b16 %v54
  %v265 = vunpack.c.l.b16 %v55
  %v266 = vunpack.c.h.b16 %v55
  %v267 = vunpack.c.l.b16 %v56
  %v268 = vunpack.c.l.b16 %v57
  %v269 = vunpack.c.h.b16 %v57
  %v270 = vunpack.c.l.b16 %v58
  %v271 = vunpack.c.h.b16 %v58
  %v272 = vunpack.c.l.b16 %v59
  %v273 = vunpack.c.l.b16 %v60
  %v274 = vunpack.c.h.b16 %v60
  %v275 = vunpack.c.l.b16 %v61
  %v276 = vunpack.c.h.b16 %v61
  %v277 = vunpack.c.l.b16 %v62
  %v278 = vpack.c.b16 %v203, %v198
  %v279 = vpack.c.b16 %v204, %v199
  %v280 = vpack.c.b16 %v205, %v200
  %v281 = vpack.c.b16 %v206, %v201
  %v282 = vpack.c.b16 %v207, %v202
  %v283 = vpack.c.b16 %v213, %v208
  %v284 = vpack.c.b16 %v214, %v209
  %v285 = vpack.c.b16 %v215, %v210
  %v286 = vpack.c.b16 %v216, %v211
  %v287 = vpack.c.b16 %v217, %v212
  %v288 = vpack.c.b16 %v223, %v218
  %v289 = vpack.c.b16 %v224, %v219
  %v290 = vpack.c.b16 %v225, %v220
  %v291 = vpack.c.b16 %v226, %v221
  %v292 = vpack.c.b16 %v227, %v222
  %v293 = vpack.c.b16 %v233, %v228
  %v294 = vpack.c.b16 %v234, %v229
  %v295 = vpack.c.b16 %v235, %v230
  %v296 = vpack.c.b16 %v236, %v231
  %v297 = vpack.c.b16 %v237, %v232
  %v298 = vpack.c.b16 %v243, %v238
  %v299 = vpack.c.b16 %v244, %v239
  %v300 = vpack.c.b16 %v245, %v240
  %v301 = vpack.c.b16 %v246, %v241
  %v302 = vpack.c.b16 %v247, %v242
  %v303 = vpack.c.b16 %v253, %v248
  %v304 = vpack.c.b16 %v254, %v249
  %v305 = vpack.c.b16 %v255, %v250
  %v306 = vpack.c.b16 %v256, %v251
  %v307 = vpack.c.b16 %v257, %v252
  %v308 = vpack.c.b16 %v263, %v258
  %v309 = vpack.c.b16 %v264, %v259
  %v310 = vpack.c.b16 %v265, %v260
  %v311 = vpack.c.b16 %v266, %v261
  %v312 = vpack.c.b16 %v267, %v262
  %v313 = vpack.c.b16 %v273, %v268
  %v314 = vpack.c.b16 %v274, %v269
  %v315 = vpack.c.b16 %v275, %v270
  %v316 = vpack.c.b16 %v276, %v271
  %v317 = vpack.c.b16 %v277, %v272
  %v438 = vunpack.c.l.b16 %v63
  %v439 = vunpack.c.l.b16 %v64
  %v440 = vunpack.c.l.b16 %v65
  %v441 = vunpack.c.l.b16 %v66
  %v442 = vunpack.c.l.b16 %v67
  %v443 = vunpack.c.l.b16 %v68
  %v444 = vunpack.c.l.b16 %v69
  %v445 = vunpack.c.l.b16 %v70
  %v446 = vunpack.c.l.b16 %v71
  %v447 = vunpack.c.l.b16 %v72
  %v448 = vunpack.c.l.b16 %v73
  %v449 = vunpack.c.l.b16 %v74
  %v450 = vunpack.c.l.b16 %v75
  %v451 = vunpack.c.l.b16 %v76
  %v452 = vunpack.c.l.b16 %v77
  %v453 = vunpack.c.l.b16 %v78
  %v454 = vunpack.c.l.b16 %v79
  %v455 = vunpack.c.l.b16 %v80
  %v456 = vunpack.c.l.b16 %v81
  %v457 = vunpack.c.l.b16 %v82
  %v458 = vunpack.c.l.b16 %v83
  %v459 = vunpack.c.l.b16 %v84
  %v460 = vunpack.c.l.b16 %v85
  %v461 = vunpack.c.l.b16 %v86
  %v462 = vunpack.c.l.b16 %v87
  %v463 = vunpack.c.l.b16 %v88
  %v464 = vunpack.c.l.b16 %v89
  %v465 = vunpack.c.l.b16 %v90
  %v466 = vunpack.c.l.b16 %v91
  %v467 = vunpack.c.l.b16 %v92
  %v468 = vunpack.c.l.b16 %v93
  %v469 = vunpack.c.l.b16 %v94
  %v470 = vunpack.c.l.b16 %v95
  %v471 = vunpack.c.l.b16 %v96
  %v472 = vunpack.c.l.b16 %v97
  %v473 = vunpack.c.l.b16 %v98
  %v474 = vunpack.c.l.b16 %v99
  %v475 = vunpack.c.l.b16 %v100
  %v476 = vunpack.c.l.b16 %v101
  %v477 = vunpack.c.l.b16 %v102
  %v478 = vunpack.c.l.b16 %v103
  %v479 = vunpack.c.l.b16 %v104
  %v480 = vunpack.c.l.b16 %v105
  %v481 = vunpack.c.l.b16 %v106
  %v482 = vunpack.c.l.b16 %v107
  %v483 = vunpack.c.l.b16 %v108
  %v484 = vunpack.c.l.b16 %v109
  %v485 = vunpack.c.l.b16 %v110
  %v486 = vunpack.c.l.b16 %v111
  %v487 = vunpack.c.l.b16 %v112
  %v488 = vunpack.c.l.b16 %v113
  %v489 = vunpack.c.l.b16 %v114
  %v490 = vunpack.c.l.b16 %v115
  %v491 = vunpack.c.l.b16 %v116
  %v492 = vunpack.c.l.b16 %v117
  %v493 = vunpack.c.l.b16 %v118
  %v494 = vunpack.c.l.b16 %v119
  %v495 = vunpack.c.l.b16 %v120
  %v496 = vunpack.c.l.b16 %v121
  %v497 = vunpack.c.l.b16 %v122
  %v498 = vunpack.c.l.b16 %v123
  %v499 = vunpack.c.l.b16 %v124
  %v500 = vunpack.c.l.b16 %v125
  %v501 = vunpack.c.l.b16 %v126
  %v502 = vunpack.c.l.b16 %v127
  %v503 = vunpack.c.l.b16 %v128
  %v504 = vunpack.c.l.b16 %v129
  %v505 = vunpack.c.l.b16 %v130
  %v506 = vunpack.c.l.b16 %v131
  %v507 = vunpack.c.l.b16 %v132
  %v508 = vunpack.c.l.b16 %v133
  %v509 = vunpack.c.l.b16 %v134
  %v510 = vunpack.c.l.b16 %v135
  %v511 = vunpack.c.l.b16 %v136
  %v512 = vunpack.c.l.b16 %v137
  %v513 = vunpack.c.l.b16 %v138
  %v514 = vunpack.c.l.b16 %v139
  %v515 = vunpack.c.l.b16 %v140
  %v516 = vunpack.c.l.b16 %v141
  %v517 = vunpack.c.l.b16 %v142
  %v518 = vpack.c.b16 %v439, %v438
  %v519 = vpack.c.b16 %v441, %v440
  %v520 = vpack.c.b16 %v443, %v442
  %v521 = vpack.c.b16 %v445, %v444
  %v522 = vpack.c.b16 %v447, %v446
  %v523 = vpack.c.b16 %v449, %v448
  %v524 = vpack.c.b16 %v451, %v450
  %v525 = vpack.c.b16 %v453, %v452
  %v526 = vpack.c.b16 %v455, %v454
  %v527 = vpack.c.b16 %v457, %v456
  %v528 = vpack.c.b16 %v459, %v458
  %v529 = vpack.c.b16 %v461, %v460
  %v530 = vpack.c.b16 %v463, %v462
  %v531 = vpack.c.b16 %v465, %v464
  %v532 = vpack.c.b16 %v467, %v466
  %v533 = vpack.c.b16 %v469, %v468
  %v534 = vpack.c.b16 %v471, %v470
  %v535 = vpack.c.b16 %v473, %v472
  %v536 = vpack.c.b16 %v475, %v474
  %v537 = vpack.c.b16 %v477, %v476
  %v538 = vpack.c.b16 %v479, %v478
  %v539 = vpack.c.b16 %v481, %v480
  %v540 = vpack.c.b16 %v483, %v482
  %v541 = vpack.c.b16 %v485, %v484
  %v542 = vpack.c.b16 %v487, %v486
  %v543 = vpack.c.b16 %v489, %v488
  %v544 = vpack.c.b16 %v491, %v490
  %v545 = vpack.c.b16 %v493, %v492
  %v546 = vpack.c.b16 %v495, %v494
  %v547 = vpack.c.b16 %v497, %v496
  %v548 = vpack.c.b16 %v499, %v498
  %v549 = vpack.c.b16 %v501, %v500
  %v550 = vpack.c.b16 %v503, %v502
  %v551 = vpack.c.b16 %v505, %v504
  %v552 = vpack.c.b16 %v507, %v506
  %v553 = vpack.c.b16 %v509, %v508
  %v554 = vpack.c.b16 %v511, %v510
  %v555 = vpack.c.b16 %v513, %v512
  %v556 = vpack.c.b16 %v515, %v514
  %v557 = vpack.c.b16 %v517, %v516
  %598 = vmatprep.subr.bf16.mxu0 0
  %599 = vmatpush1.bf16.msra.mxu0 %v525
  %600 = vmatprep.subr.bf16.mxu0 0
  %601 = vmatpush1.bf16.msra.mxu0 %v524
  %602 = vmatprep.subr.bf16.mxu0 0
  %603 = vmatpush1.bf16.msra.mxu0 %v523
  %604 = vmatprep.subr.bf16.mxu0 0
  %605 = vmatpush1.bf16.msra.mxu0 %v522
  %606 = vmatprep.subr.bf16.mxu0 0
  %607 = vmatpush1.bf16.msra.mxu0 %v521
  %608 = vmatprep.subr.bf16.mxu0 0
  %609 = vmatpush1.bf16.msra.mxu0 %v520
  %610 = vmatprep.subr.bf16.mxu0 0
  %611 = vmatpush1.bf16.msra.mxu0 %v519
  %612 = vmatprep.subr.bf16.mxu0 0
  %613 = vmatpush1.bf16.msra.mxu0 %v518
  %614 = vmatprep.subr.bf16.mxu0 0
  %615 = vmatpush2.bf16.msra.mxu0 %v533
  %616 = vmatprep.subr.bf16.mxu0 0
  %617 = vmatpush2.bf16.msra.mxu0 %v532
  %618 = vmatprep.subr.bf16.mxu0 0
  %619 = vmatpush2.bf16.msra.mxu0 %v531
  %620 = vmatprep.subr.bf16.mxu0 0
  %621 = vmatpush2.bf16.msra.mxu0 %v530
  %622 = vmatprep.subr.bf16.mxu0 0
  %623 = vmatpush2.bf16.msra.mxu0 %v529
  %624 = vmatprep.subr.bf16.mxu0 0
  %625 = vmatpush2.bf16.msra.mxu0 %v528
  %626 = vmatprep.subr.bf16.mxu0 0
  %627 = vmatpush2.bf16.msra.mxu0 %v527
  %628 = vmatprep.subr.bf16.mxu0 0
  %629 = vmatpush2.bf16.msra.mxu0 %v526
  %630 = vmatprep.mubr.bf16.mxu0 %v279
  %631 = vmatmul.mubr.bf16.gmra.mxu0 %v278
  %v632 = vpop.f32.mrf.mxu0
  %v633 = vadd.f32 %v148, %v632
  %v634 = vpop.f32.mrf.mxu0
  %v635 = vpop.f32.mrf.mxu0
  %v636 = vadd.f32 %v148, %v635
  %v637 = vpop.f32.mrf.mxu0
  %638 = vmatprep.mubr.bf16.mxu0 %v284
  %639 = vmatmul.mubr.bf16.gmra.mxu0 %v283
  %v640 = vpop.f32.mrf.mxu0
  %v641 = vadd.f32 %v148, %v640
  %v642 = vpop.f32.mrf.mxu0
  %v643 = vpop.f32.mrf.mxu0
  %v644 = vadd.f32 %v148, %v643
  %v645 = vpop.f32.mrf.mxu0
  %646 = vmatprep.mubr.bf16.mxu0 %v289
  %647 = vmatmul.mubr.bf16.gmra.mxu0 %v288
  %v648 = vpop.f32.mrf.mxu0
  %v649 = vadd.f32 %v148, %v648
  %v650 = vpop.f32.mrf.mxu0
  %v651 = vpop.f32.mrf.mxu0
  %v652 = vadd.f32 %v148, %v651
  %v653 = vpop.f32.mrf.mxu0
  %654 = vmatprep.mubr.bf16.mxu0 %v294
  %655 = vmatmul.mubr.bf16.gmra.mxu0 %v293
  %v656 = vpop.f32.mrf.mxu0
  %v657 = vadd.f32 %v148, %v656
  %v658 = vpop.f32.mrf.mxu0
  %v659 = vpop.f32.mrf.mxu0
  %v660 = vadd.f32 %v148, %v659
  %v661 = vpop.f32.mrf.mxu0
  %662 = vmatprep.mubr.bf16.mxu0 %v299
  %663 = vmatmul.mubr.bf16.gmra.mxu0 %v298
  %v664 = vpop.f32.mrf.mxu0
  %v665 = vadd.f32 %v148, %v664
  %v666 = vpop.f32.mrf.mxu0
  %v667 = vpop.f32.mrf.mxu0
  %v668 = vadd.f32 %v148, %v667
  %v669 = vpop.f32.mrf.mxu0
  %670 = vmatprep.mubr.bf16.mxu0 %v304
  %671 = vmatmul.mubr.bf16.gmra.mxu0 %v303
  %v672 = vpop.f32.mrf.mxu0
  %v673 = vadd.f32 %v148, %v672
  %v674 = vpop.f32.mrf.mxu0
  %v675 = vpop.f32.mrf.mxu0
  %v676 = vadd.f32 %v148, %v675
  %v677 = vpop.f32.mrf.mxu0
  %678 = vmatprep.mubr.bf16.mxu0 %v309
  %679 = vmatmul.mubr.bf16.gmra.mxu0 %v308
  %v680 = vpop.f32.mrf.mxu0
  %v681 = vadd.f32 %v148, %v680
  %v682 = vpop.f32.mrf.mxu0
  %v683 = vpop.f32.mrf.mxu0
  %v684 = vadd.f32 %v148, %v683
  %v685 = vpop.f32.mrf.mxu0
  %686 = vmatprep.mubr.bf16.mxu0 %v314
  %687 = vmatmul.mubr.bf16.gmra.mxu0 %v313
  %v688 = vpop.f32.mrf.mxu0
  %v689 = vadd.f32 %v148, %v688
  %v690 = vpop.f32.mrf.mxu0
  %v691 = vpop.f32.mrf.mxu0
  %v692 = vadd.f32 %v148, %v691
  %v693 = vpop.f32.mrf.mxu0
  %694 = vdwg.mxu0
  %695 = vmatprep.subr.bf16.mxu0 0
  %696 = vmatpush1.bf16.msra.mxu0 %v541
  %697 = vmatprep.subr.bf16.mxu0 0
  %698 = vmatpush1.bf16.msra.mxu0 %v540
  %699 = vmatprep.subr.bf16.mxu0 0
  %700 = vmatpush1.bf16.msra.mxu0 %v539
  %701 = vmatprep.subr.bf16.mxu0 0
  %702 = vmatpush1.bf16.msra.mxu0 %v538
  %703 = vmatprep.subr.bf16.mxu0 0
  %704 = vmatpush1.bf16.msra.mxu0 %v537
  %705 = vmatprep.subr.bf16.mxu0 0
  %706 = vmatpush1.bf16.msra.mxu0 %v536
  %707 = vmatprep.subr.bf16.mxu0 0
  %708 = vmatpush1.bf16.msra.mxu0 %v535
  %709 = vmatprep.subr.bf16.mxu0 0
  %710 = vmatpush1.bf16.msra.mxu0 %v534
  %711 = vmatprep.subr.bf16.mxu0 0
  %712 = vmatpush2.bf16.msra.mxu0 %v549
  %713 = vmatprep.subr.bf16.mxu0 0
  %714 = vmatpush2.bf16.msra.mxu0 %v548
  %715 = vmatprep.subr.bf16.mxu0 0
  %716 = vmatpush2.bf16.msra.mxu0 %v547
  %717 = vmatprep.subr.bf16.mxu0 0
  %718 = vmatpush2.bf16.msra.mxu0 %v546
  %719 = vmatprep.subr.bf16.mxu0 0
  %720 = vmatpush2.bf16.msra.mxu0 %v545
  %721 = vmatprep.subr.bf16.mxu0 0
  %722 = vmatpush2.bf16.msra.mxu0 %v544
  %723 = vmatprep.subr.bf16.mxu0 0
  %724 = vmatpush2.bf16.msra.mxu0 %v543
  %725 = vmatprep.subr.bf16.mxu0 0
  %726 = vmatpush2.bf16.msra.mxu0 %v542
  %727 = vmatprep.mubr.bf16.mxu0 %v281
  %728 = vmatmul.mubr.bf16.gmra.mxu0 %v280
  %v729 = vpop.f32.mrf.mxu0
  %v730 = vadd.f32 %v633, %v729
  %v731 = vpop.f32.mrf.mxu0
  %v732 = vpop.f32.mrf.mxu0
  %v733 = vadd.f32 %v636, %v732
  %v734 = vpop.f32.mrf.mxu0
  %735 = vmatprep.mubr.bf16.mxu0 %v286
  %736 = vmatmul.mubr.bf16.gmra.mxu0 %v285
  %v737 = vpop.f32.mrf.mxu0
  %v738 = vadd.f32 %v641, %v737
  %v739 = vpop.f32.mrf.mxu0
  %v740 = vpop.f32.mrf.mxu0
  %v741 = vadd.f32 %v644, %v740
  %v742 = vpop.f32.mrf.mxu0
  %743 = vmatprep.mubr.bf16.mxu0 %v291
  %744 = vmatmul.mubr.bf16.gmra.mxu0 %v290
  %v745 = vpop.f32.mrf.mxu0
  %v746 = vadd.f32 %v649, %v745
  %v747 = vpop.f32.mrf.mxu0
  %v748 = vpop.f32.mrf.mxu0
  %v749 = vadd.f32 %v652, %v748
  %v750 = vpop.f32.mrf.mxu0
  %751 = vmatprep.mubr.bf16.mxu0 %v296
  %752 = vmatmul.mubr.bf16.gmra.mxu0 %v295
  %v753 = vpop.f32.mrf.mxu0
  %v754 = vadd.f32 %v657, %v753
  %v755 = vpop.f32.mrf.mxu0
  %v756 = vpop.f32.mrf.mxu0
  %v757 = vadd.f32 %v660, %v756
  %v758 = vpop.f32.mrf.mxu0
  %759 = vmatprep.mubr.bf16.mxu0 %v301
  %760 = vmatmul.mubr.bf16.gmra.mxu0 %v300
  %v761 = vpop.f32.mrf.mxu0
  %v762 = vadd.f32 %v665, %v761
  %v763 = vpop.f32.mrf.mxu0
  %v764 = vpop.f32.mrf.mxu0
  %v765 = vadd.f32 %v668, %v764
  %v766 = vpop.f32.mrf.mxu0
  %767 = vmatprep.mubr.bf16.mxu0 %v306
  %768 = vmatmul.mubr.bf16.gmra.mxu0 %v305
  %v769 = vpop.f32.mrf.mxu0
  %v770 = vadd.f32 %v673, %v769
  %v771 = vpop.f32.mrf.mxu0
  %v772 = vpop.f32.mrf.mxu0
  %v773 = vadd.f32 %v676, %v772
  %v774 = vpop.f32.mrf.mxu0
  %775 = vmatprep.mubr.bf16.mxu0 %v311
  %776 = vmatmul.mubr.bf16.gmra.mxu0 %v310
  %v777 = vpop.f32.mrf.mxu0
  %v778 = vadd.f32 %v681, %v777
  %v779 = vpop.f32.mrf.mxu0
  %v780 = vpop.f32.mrf.mxu0
  %v781 = vadd.f32 %v684, %v780
  %v782 = vpop.f32.mrf.mxu0
  %783 = vmatprep.mubr.bf16.mxu0 %v316
  %784 = vmatmul.mubr.bf16.gmra.mxu0 %v315
  %v785 = vpop.f32.mrf.mxu0
  %v786 = vadd.f32 %v689, %v785
  %v787 = vpop.f32.mrf.mxu0
  %v788 = vpop.f32.mrf.mxu0
  %v789 = vadd.f32 %v692, %v788
  %v790 = vpop.f32.mrf.mxu0
  %791 = vdwg.mxu0
  %792 = vmatprep.subr.bf16.mxu0 0
  %793 = vmatpush1.bf16.msra.mxu0 %v557
  %794 = vmatprep.subr.bf16.mxu0 0
  %795 = vmatpush1.bf16.msra.mxu0 %v556
  %796 = vmatprep.subr.bf16.mxu0 0
  %797 = vmatpush1.bf16.msra.mxu0 %v555
  %798 = vmatprep.subr.bf16.mxu0 0
  %799 = vmatpush1.bf16.msra.mxu0 %v554
  %800 = vmatprep.subr.bf16.mxu0 0
  %801 = vmatpush1.bf16.msra.mxu0 %v553
  %802 = vmatprep.subr.bf16.mxu0 0
  %803 = vmatpush1.bf16.msra.mxu0 %v552
  %804 = vmatprep.subr.bf16.mxu0 0
  %805 = vmatpush1.bf16.msra.mxu0 %v551
  %806 = vmatprep.subr.bf16.mxu0 0
  %807 = vmatpush1.bf16.msra.mxu0 %v550
  %808 = vmatprep.subr.bf16.mxu0 0
  %809 = vmatpush2.bf16.msra.mxu0 0
  %810 = vmatprep.subr.bf16.mxu0 0
  %811 = vmatpush2.bf16.msra.mxu0 0
  %812 = vmatprep.subr.bf16.mxu0 0
  %813 = vmatpush2.bf16.msra.mxu0 0
  %814 = vmatprep.subr.bf16.mxu0 0
  %815 = vmatpush2.bf16.msra.mxu0 0
  %816 = vmatprep.subr.bf16.mxu0 0
  %817 = vmatpush2.bf16.msra.mxu0 0
  %818 = vmatprep.subr.bf16.mxu0 0
  %819 = vmatpush2.bf16.msra.mxu0 0
  %820 = vmatprep.subr.bf16.mxu0 0
  %821 = vmatpush2.bf16.msra.mxu0 0
  %822 = vmatprep.subr.bf16.mxu0 0
  %823 = vmatpush2.bf16.msra.mxu0 0
  %824 = vmatprep.mubr.bf16.mxu0 0
  %825 = vmatmul.mubr.bf16.gmra.mxu0 %v282
  %v826 = vpop.f32.mrf.mxu0
  %v827 = vadd.f32 %v730, %v826
  %v828 = vpop.f32.mrf.mxu0
  %v829 = vpop.f32.mrf.mxu0
  %v830 = vadd.f32 %v733, %v829
  %v831 = vpop.f32.mrf.mxu0
  %832 = vmatprep.mubr.bf16.mxu0 0
  %833 = vmatmul.mubr.bf16.gmra.mxu0 %v287
  %v834 = vpop.f32.mrf.mxu0
  %v835 = vadd.f32 %v738, %v834
  %v836 = vpop.f32.mrf.mxu0
  %v837 = vpop.f32.mrf.mxu0
  %v838 = vadd.f32 %v741, %v837
  %v839 = vpop.f32.mrf.mxu0
  %840 = vmatprep.mubr.bf16.mxu0 0
  %841 = vmatmul.mubr.bf16.gmra.mxu0 %v292
  %v842 = vpop.f32.mrf.mxu0
  %v843 = vadd.f32 %v746, %v842
  %v844 = vpop.f32.mrf.mxu0
  %v845 = vpop.f32.mrf.mxu0
  %v846 = vadd.f32 %v749, %v845
  %v847 = vpop.f32.mrf.mxu0
  %848 = vmatprep.mubr.bf16.mxu0 0
  %849 = vmatmul.mubr.bf16.gmra.mxu0 %v297
  %v850 = vpop.f32.mrf.mxu0
  %v851 = vadd.f32 %v754, %v850
  %v852 = vpop.f32.mrf.mxu0
  %v853 = vpop.f32.mrf.mxu0
  %v854 = vadd.f32 %v757, %v853
  %v855 = vpop.f32.mrf.mxu0
  %856 = vmatprep.mubr.bf16.mxu0 0
  %857 = vmatmul.mubr.bf16.gmra.mxu0 %v302
  %v858 = vpop.f32.mrf.mxu0
  %v859 = vadd.f32 %v762, %v858
  %v860 = vpop.f32.mrf.mxu0
  %v861 = vpop.f32.mrf.mxu0
  %v862 = vadd.f32 %v765, %v861
  %v863 = vpop.f32.mrf.mxu0
  %864 = vmatprep.mubr.bf16.mxu0 0
  %865 = vmatmul.mubr.bf16.gmra.mxu0 %v307
  %v866 = vpop.f32.mrf.mxu0
  %v867 = vadd.f32 %v770, %v866
  %v868 = vpop.f32.mrf.mxu0
  %v869 = vpop.f32.mrf.mxu0
  %v870 = vadd.f32 %v773, %v869
  %v871 = vpop.f32.mrf.mxu0
  %872 = vmatprep.mubr.bf16.mxu0 0
  %873 = vmatmul.mubr.bf16.gmra.mxu0 %v312
  %v874 = vpop.f32.mrf.mxu0
  %v875 = vadd.f32 %v778, %v874
  %v876 = vpop.f32.mrf.mxu0
  %v877 = vpop.f32.mrf.mxu0
  %v878 = vadd.f32 %v781, %v877
  %v879 = vpop.f32.mrf.mxu0
  %880 = vmatprep.mubr.bf16.mxu0 0
  %881 = vmatmul.mubr.bf16.gmra.mxu0 %v317
  %v882 = vpop.f32.mrf.mxu0
  %v883 = vadd.f32 %v786, %v882
  %v884 = vpop.f32.mrf.mxu0
  %v885 = vpop.f32.mrf.mxu0
  %v886 = vadd.f32 %v789, %v885
  %v887 = vpop.f32.mrf.mxu0
  %888 = vdwg.mxu0
  %v889 = vmax.f32 %v827, 0.0
  %v890 = vmax.f32 %v830, 0.0
  %v891 = vmax.f32 %v835, 0.0
  %v892 = vmax.f32 %v838, 0.0
  %v893 = vmax.f32 %v843, 0.0
  %v894 = vmax.f32 %v846, 0.0
  %v895 = vmax.f32 %v851, 0.0
  %v896 = vmax.f32 %v854, 0.0
  %v897 = vmax.f32 %v859, 0.0
  %v898 = vmax.f32 %v862, 0.0
  %v899 = vmax.f32 %v867, 0.0
  %v900 = vmax.f32 %v870, 0.0
  %v901 = vmax.f32 %v875, 0.0
  %v902 = vmax.f32 %v878, 0.0
  %v903 = vmax.f32 %v883, 0.0
  %v904 = vmax.f32 %v886, 0.0
  %v905 = vpack.c.bf16 %v890, %v889
  %v906 = vpack.c.bf16 %v892, %v891
  %v907 = vpack.c.bf16 %v894, %v893
  %v908 = vpack.c.bf16 %v896, %v895
  %v909 = vpack.c.bf16 %v898, %v897
  %v910 = vpack.c.bf16 %v900, %v899
  %v911 = vpack.c.bf16 %v902, %v901
  %v912 = vpack.c.bf16 %v904, %v903
  %v921 = vunpack.c.l.b16 %v905
  %v922 = vunpack.c.h.b16 %v905
  %v923 = vunpack.c.l.b16 %v906
  %v924 = vunpack.c.h.b16 %v906
  %v925 = vunpack.c.l.b16 %v907
  %v926 = vunpack.c.h.b16 %v907
  %v927 = vunpack.c.l.b16 %v908
  %v928 = vunpack.c.h.b16 %v908
  %v929 = vunpack.c.l.b16 %v909
  %v930 = vunpack.c.h.b16 %v909
  %v931 = vunpack.c.l.b16 %v910
  %v932 = vunpack.c.h.b16 %v910
  %v933 = vunpack.c.l.b16 %v911
  %v934 = vunpack.c.h.b16 %v911
  %v935 = vunpack.c.l.b16 %v912
  %v936 = vunpack.c.h.b16 %v912
  %v937 = vpack.c.b16 %v921, %v921
  %v938 = vpack.c.b16 %v922, %v922
  %v939 = vpack.c.b16 %v923, %v923
  %v940 = vpack.c.b16 %v924, %v924
  %v941 = vpack.c.b16 %v925, %v925
  %v942 = vpack.c.b16 %v926, %v926
  %v943 = vpack.c.b16 %v927, %v927
  %v944 = vpack.c.b16 %v928, %v928
  %v945 = vpack.c.b16 %v929, %v929
  %v946 = vpack.c.b16 %v930, %v930
  %v947 = vpack.c.b16 %v931, %v931
  %v948 = vpack.c.b16 %v932, %v932
  %v949 = vpack.c.b16 %v933, %v933
  %v950 = vpack.c.b16 %v934, %v934
  %v951 = vpack.c.b16 %v935, %v935
  %v952 = vpack.c.b16 %v936, %v936
  %969 = vst [vmem:[%s3] sm:$0xf] %v937
  %970 = vst [vmem:[%s3 + $0x4] sm:$0xf] %v938
  %971 = vst [vmem:[%s3 + $0x8] sm:$0xf] %v939
  %972 = vst [vmem:[%s3 + $0xc] sm:$0xf] %v940
  %973 = vst [vmem:[%s3 + $0x10] sm:$0xf] %v941
  %974 = vst [vmem:[%s3 + $0x14] sm:$0xf] %v942
  %975 = vst [vmem:[%s3 + $0x18] sm:$0xf] %v943
  %976 = vst [vmem:[%s3 + $0x1c] sm:$0xf] %v944
  %977 = vst [vmem:[%s3 + $0x20] sm:$0xf] %v945
  %978 = vst [vmem:[%s3 + $0x24] sm:$0xf] %v946
  %979 = vst [vmem:[%s3 + $0x28] sm:$0xf] %v947
  %980 = vst [vmem:[%s3 + $0x2c] sm:$0xf] %v948
  %981 = vst [vmem:[%s3 + $0x30] sm:$0xf] %v949
  %982 = vst [vmem:[%s3 + $0x34] sm:$0xf] %v950
  %983 = vst [vmem:[%s3 + $0x38] sm:$0xf] %v951
  %984 = vst [vmem:[%s3 + $0x3c] sm:$0xf] %v952
  // Predicated region
  $region14: #{_forward_impl.23} parent=0 // pred_check
    _
  $region15: #{_forward_impl.23} parent=0 // pred_check_branch
    %986 = sbr.rel (0) target = $region17
  $region16: #{_forward_impl.23} parent=0 // pred_region
    _
  $region17: #{_forward_impl.23} parent=0 // pred_fallthru
    _
  // Predicated region
  $region18: #{_forward_impl.23} parent=0 // pred_check
    _
  $region19: #{_forward_impl.23} parent=0 // pred_check_branch
    %988 = sbr.rel (0) target = $region21
  $region20: #{_forward_impl.23} parent=0 // pred_region
    _
  $region21: #{_forward_impl.23} parent=0 // pred_fallthru
    _

// kernel: _forward_impl.24
$region0: #{_forward_impl.24}
  #allocation0 [shape = 'u32[]', space=smem, size = 0x4, offset = 0x4, fixed_abs, tag = 'smem constant byte address 0x4 - core index']
  #allocation1 [shape = 'u32[144,128]{1,0:T(1,128)}', space=vmem, size = 0x12000, scoped, tag = 'internal scratch']
  %s0 = inlined_call_operand.vmem [shape: bf16[32,640], index: 0, kind: input, shape index: {}]
  %s1 = inlined_call_operand.vmem [shape: bf16[640,128], index: 1, kind: input, shape index: {}]
  %s2 = inlined_call_operand.vmem [shape: f32[1,128], index: 2, kind: input, shape index: {}]
  %s3 = inlined_call_operand.vmem [shape: bf16[32,128], index: 3, kind: output, shape index: {}]
  %s4 = sld [smem:[#allocation0]]
  $region22: #{_forward_impl.24} parent=0
    _
  %s6 = ssub.s32 1, %s4
  %s7 = scalar_select 0, %s6, %s4
  // Predicated region
  $region2: #{_forward_impl.24} parent=0 // pred_check
    _
  $region3: #{_forward_impl.24} parent=0 // pred_check_branch
    %9 = sbr.rel (0) target = $region5
  $region4: #{_forward_impl.24} parent=0 // pred_region
    _
  $region5: #{_forward_impl.24} parent=0 // pred_fallthru
    _
  // Predicated region
  $region6: #{_forward_impl.24} parent=0 // pred_check
    _
  $region7: #{_forward_impl.24} parent=0 // pred_check_branch
    %11 = sbr.rel (0) target = $region9
  $region8: #{_forward_impl.24} parent=0 // pred_region
    _
  $region9: #{_forward_impl.24} parent=0 // pred_fallthru
    _
  // Predicated region
  $region10: #{_forward_impl.24} parent=0 // pred_check
    _
  $region11: #{_forward_impl.24} parent=0 // pred_check_branch
    %13 = sbr.rel (0) target = $region13
  $region12: #{_forward_impl.24} parent=0 // pred_region
    _
  $region13: #{_forward_impl.24} parent=0 // pred_fallthru
    _
  %v15 = vld [vmem:[%s0] sm:$0xff]
  %v16 = vld [vmem:[%s0 + $0x8] sm:$0xff]
  %v17 = vld [vmem:[%s0 + $0x10] sm:$0xf]
  %v18 = vld [vmem:[%s0 + $0x14] sm:$0xff]
  %v19 = vld [vmem:[%s0 + $0x1c] sm:$0xff]
  %v20 = vld [vmem:[%s0 + $0x24] sm:$0xf]
  %v21 = vld [vmem:[%s0 + $0x28] sm:$0xff]
  %v22 = vld [vmem:[%s0 + $0x30] sm:$0xff]
  %v23 = vld [vmem:[%s0 + $0x38] sm:$0xf]
  %v24 = vld [vmem:[%s0 + $0x3c] sm:$0xff]
  %v25 = vld [vmem:[%s0 + $0x44] sm:$0xff]
  %v26 = vld [vmem:[%s0 + $0x4c] sm:$0xf]
  %v27 = vld [vmem:[%s1] sm:$0xf]
  %v28 = vld [vmem:[%s1 + $0x4] sm:$0xf]
  %v29 = vld [vmem:[%s1 + $0x8] sm:$0xf]
  %v30 = vld [vmem:[%s1 + $0xc] sm:$0xf]
  %v31 = vld [vmem:[%s1 + $0x10] sm:$0xf]
  %v32 = vld [vmem:[%s1 + $0x14] sm:$0xf]
  %v33 = vld [vmem:[%s1 + $0x18] sm:$0xf]
  %v34 = vld [vmem:[%s1 + $0x1c] sm:$0xf]
  %v35 = vld [vmem:[%s1 + $0x20] sm:$0xf]
  %v36 = vld [vmem:[%s1 + $0x24] sm:$0xf]
  %v37 = vld [vmem:[%s1 + $0x28] sm:$0xf]
  %v38 = vld [vmem:[%s1 + $0x2c] sm:$0xf]
  %v39 = vld [vmem:[%s1 + $0x30] sm:$0xf]
  %v40 = vld [vmem:[%s1 + $0x34] sm:$0xf]
  %v41 = vld [vmem:[%s1 + $0x38] sm:$0xf]
  %v42 = vld [vmem:[%s1 + $0x3c] sm:$0xf]
  %v43 = vld [vmem:[%s1 + $0x40] sm:$0xf]
  %v44 = vld [vmem:[%s1 + $0x44] sm:$0xf]
  %v45 = vld [vmem:[%s1 + $0x48] sm:$0xf]
  %v46 = vld [vmem:[%s1 + $0x4c] sm:$0xf]
  %v47 = vld [vmem:[%s1 + $0x50] sm:$0xf]
  %v48 = vld [vmem:[%s1 + $0x54] sm:$0xf]
  %v49 = vld [vmem:[%s1 + $0x58] sm:$0xf]
  %v50 = vld [vmem:[%s1 + $0x5c] sm:$0xf]
  %v51 = vld [vmem:[%s1 + $0x60] sm:$0xf]
  %v52 = vld [vmem:[%s1 + $0x64] sm:$0xf]
  %v53 = vld [vmem:[%s1 + $0x68] sm:$0xf]
  %v54 = vld [vmem:[%s1 + $0x6c] sm:$0xf]
  %v55 = vld [vmem:[%s1 + $0x70] sm:$0xf]
  %v56 = vld [vmem:[%s1 + $0x74] sm:$0xf]
  %v57 = vld [vmem:[%s1 + $0x78] sm:$0xf]
  %v58 = vld [vmem:[%s1 + $0x7c] sm:$0xf]
  %v59 = vld [vmem:[%s1 + $0x80] sm:$0xf]
  %v60 = vld [vmem:[%s1 + $0x84] sm:$0xf]
  %v61 = vld [vmem:[%s1 + $0x88] sm:$0xf]
  %v62 = vld [vmem:[%s1 + $0x8c] sm:$0xf]
  %v63 = vld [vmem:[%s1 + $0x90] sm:$0xf]
  %v64 = vld [vmem:[%s1 + $0x94] sm:$0xf]
  %v65 = vld [vmem:[%s1 + $0x98] sm:$0xf]
  %v66 = vld [vmem:[%s1 + $0x9c] sm:$0xf]
  %v67 = vld [vmem:[%s1 + $0xa0] sm:$0xf]
  %v68 = vld [vmem:[%s1 + $0xa4] sm:$0xf]
  %v69 = vld [vmem:[%s1 + $0xa8] sm:$0xf]
  %v70 = vld [vmem:[%s1 + $0xac] sm:$0xf]
  %v71 = vld [vmem:[%s1 + $0xb0] sm:$0xf]
  %v72 = vld [vmem:[%s1 + $0xb4] sm:$0xf]
  %v73 = vld [vmem:[%s1 + $0xb8] sm:$0xf]
  %v74 = vld [vmem:[%s1 + $0xbc] sm:$0xf]
  %v75 = vld [vmem:[%s1 + $0xc0] sm:$0xf]
  %v76 = vld [vmem:[%s1 + $0xc4] sm:$0xf]
  %v77 = vld [vmem:[%s1 + $0xc8] sm:$0xf]
  %v78 = vld [vmem:[%s1 + $0xcc] sm:$0xf]
  %v79 = vld [vmem:[%s1 + $0xd0] sm:$0xf]
  %v80 = vld [vmem:[%s1 + $0xd4] sm:$0xf]
  %v81 = vld [vmem:[%s1 + $0xd8] sm:$0xf]
  %v82 = vld [vmem:[%s1 + $0xdc] sm:$0xf]
  %v83 = vld [vmem:[%s1 + $0xe0] sm:$0xf]
  %v84 = vld [vmem:[%s1 + $0xe4] sm:$0xf]
  %v85 = vld [vmem:[%s1 + $0xe8] sm:$0xf]
  %v86 = vld [vmem:[%s1 + $0xec] sm:$0xf]
  %v87 = vld [vmem:[%s1 + $0xf0] sm:$0xf]
  %v88 = vld [vmem:[%s1 + $0xf4] sm:$0xf]
  %v89 = vld [vmem:[%s1 + $0xf8] sm:$0xf]
  %v90 = vld [vmem:[%s1 + $0xfc] sm:$0xf]
  %v91 = vld [vmem:[%s1 + $0x100] sm:$0xf]
  %v92 = vld [vmem:[%s1 + $0x104] sm:$0xf]
  %v93 = vld [vmem:[%s1 + $0x108] sm:$0xf]
  %v94 = vld [vmem:[%s1 + $0x10c] sm:$0xf]
  %v95 = vld [vmem:[%s1 + $0x110] sm:$0xf]
  %v96 = vld [vmem:[%s1 + $0x114] sm:$0xf]
  %v97 = vld [vmem:[%s1 + $0x118] sm:$0xf]
  %v98 = vld [vmem:[%s1 + $0x11c] sm:$0xf]
  %v99 = vld [vmem:[%s1 + $0x120] sm:$0xf]
  %v100 = vld [vmem:[%s1 + $0x124] sm:$0xf]
  %v101 = vld [vmem:[%s1 + $0x128] sm:$0xf]
  %v102 = vld [vmem:[%s1 + $0x12c] sm:$0xf]
  %v103 = vld [vmem:[%s1 + $0x130] sm:$0xf]
  %v104 = vld [vmem:[%s1 + $0x134] sm:$0xf]
  %v105 = vld [vmem:[%s1 + $0x138] sm:$0xf]
  %v106 = vld [vmem:[%s1 + $0x13c] sm:$0xf]
  %v107 = vld [vmem:[%s2] sm:$0x1]
  %v109 = vlaneseq
  %v110 = vshrl.u32 %v109, 7
  %v111 = vsub.s32 0, %v110
  %v112 = vrot.slane %v107, %v111
  %v126 = vunpack.c.l.b16 %v15
  %v127 = vunpack.c.h.b16 %v15
  %v128 = vunpack.c.l.b16 %v16
  %v129 = vunpack.c.h.b16 %v16
  %v130 = vunpack.c.l.b16 %v17
  %v131 = vunpack.c.l.b16 %v18
  %v132 = vunpack.c.h.b16 %v18
  %v133 = vunpack.c.l.b16 %v19
  %v134 = vunpack.c.h.b16 %v19
  %v135 = vunpack.c.l.b16 %v20
  %v136 = vunpack.c.l.b16 %v21
  %v137 = vunpack.c.h.b16 %v21
  %v138 = vunpack.c.l.b16 %v22
  %v139 = vunpack.c.h.b16 %v22
  %v140 = vunpack.c.l.b16 %v23
  %v141 = vunpack.c.l.b16 %v24
  %v142 = vunpack.c.h.b16 %v24
  %v143 = vunpack.c.l.b16 %v25
  %v144 = vunpack.c.h.b16 %v25
  %v145 = vunpack.c.l.b16 %v26
  %v146 = vpack.c.b16 %v131, %v126
  %v147 = vpack.c.b16 %v132, %v127
  %v148 = vpack.c.b16 %v133, %v128
  %v149 = vpack.c.b16 %v134, %v129
  %v150 = vpack.c.b16 %v135, %v130
  %v151 = vpack.c.b16 %v141, %v136
  %v152 = vpack.c.b16 %v142, %v137
  %v153 = vpack.c.b16 %v143, %v138
  %v154 = vpack.c.b16 %v144, %v139
  %v155 = vpack.c.b16 %v145, %v140
  %v246 = vunpack.c.l.b16 %v27
  %v247 = vunpack.c.l.b16 %v28
  %v248 = vunpack.c.l.b16 %v29
  %v249 = vunpack.c.l.b16 %v30
  %v250 = vunpack.c.l.b16 %v31
  %v251 = vunpack.c.l.b16 %v32
  %v252 = vunpack.c.l.b16 %v33
  %v253 = vunpack.c.l.b16 %v34
  %v254 = vunpack.c.l.b16 %v35
  %v255 = vunpack.c.l.b16 %v36
  %v256 = vunpack.c.l.b16 %v37
  %v257 = vunpack.c.l.b16 %v38
  %v258 = vunpack.c.l.b16 %v39
  %v259 = vunpack.c.l.b16 %v40
  %v260 = vunpack.c.l.b16 %v41
  %v261 = vunpack.c.l.b16 %v42
  %v262 = vunpack.c.l.b16 %v43
  %v263 = vunpack.c.l.b16 %v44
  %v264 = vunpack.c.l.b16 %v45
  %v265 = vunpack.c.l.b16 %v46
  %v266 = vunpack.c.l.b16 %v47
  %v267 = vunpack.c.l.b16 %v48
  %v268 = vunpack.c.l.b16 %v49
  %v269 = vunpack.c.l.b16 %v50
  %v270 = vunpack.c.l.b16 %v51
  %v271 = vunpack.c.l.b16 %v52
  %v272 = vunpack.c.l.b16 %v53
  %v273 = vunpack.c.l.b16 %v54
  %v274 = vunpack.c.l.b16 %v55
  %v275 = vunpack.c.l.b16 %v56
  %v276 = vunpack.c.l.b16 %v57
  %v277 = vunpack.c.l.b16 %v58
  %v278 = vunpack.c.l.b16 %v59
  %v279 = vunpack.c.l.b16 %v60
  %v280 = vunpack.c.l.b16 %v61
  %v281 = vunpack.c.l.b16 %v62
  %v282 = vunpack.c.l.b16 %v63
  %v283 = vunpack.c.l.b16 %v64
  %v284 = vunpack.c.l.b16 %v65
  %v285 = vunpack.c.l.b16 %v66
  %v286 = vunpack.c.l.b16 %v67
  %v287 = vunpack.c.l.b16 %v68
  %v288 = vunpack.c.l.b16 %v69
  %v289 = vunpack.c.l.b16 %v70
  %v290 = vunpack.c.l.b16 %v71
  %v291 = vunpack.c.l.b16 %v72
  %v292 = vunpack.c.l.b16 %v73
  %v293 = vunpack.c.l.b16 %v74
  %v294 = vunpack.c.l.b16 %v75
  %v295 = vunpack.c.l.b16 %v76
  %v296 = vunpack.c.l.b16 %v77
  %v297 = vunpack.c.l.b16 %v78
  %v298 = vunpack.c.l.b16 %v79
  %v299 = vunpack.c.l.b16 %v80
  %v300 = vunpack.c.l.b16 %v81
  %v301 = vunpack.c.l.b16 %v82
  %v302 = vunpack.c.l.b16 %v83
  %v303 = vunpack.c.l.b16 %v84
  %v304 = vunpack.c.l.b16 %v85
  %v305 = vunpack.c.l.b16 %v86
  %v306 = vunpack.c.l.b16 %v87
  %v307 = vunpack.c.l.b16 %v88
  %v308 = vunpack.c.l.b16 %v89
  %v309 = vunpack.c.l.b16 %v90
  %v310 = vunpack.c.l.b16 %v91
  %v311 = vunpack.c.l.b16 %v92
  %v312 = vunpack.c.l.b16 %v93
  %v313 = vunpack.c.l.b16 %v94
  %v314 = vunpack.c.l.b16 %v95
  %v315 = vunpack.c.l.b16 %v96
  %v316 = vunpack.c.l.b16 %v97
  %v317 = vunpack.c.l.b16 %v98
  %v318 = vunpack.c.l.b16 %v99
  %v319 = vunpack.c.l.b16 %v100
  %v320 = vunpack.c.l.b16 %v101
  %v321 = vunpack.c.l.b16 %v102
  %v322 = vunpack.c.l.b16 %v103
  %v323 = vunpack.c.l.b16 %v104
  %v324 = vunpack.c.l.b16 %v105
  %v325 = vunpack.c.l.b16 %v106
  %v326 = vpack.c.b16 %v247, %v246
  %v327 = vpack.c.b16 %v249, %v248
  %v328 = vpack.c.b16 %v251, %v250
  %v329 = vpack.c.b16 %v253, %v252
  %v330 = vpack.c.b16 %v255, %v254
  %v331 = vpack.c.b16 %v257, %v256
  %v332 = vpack.c.b16 %v259, %v258
  %v333 = vpack.c.b16 %v261, %v260
  %v334 = vpack.c.b16 %v263, %v262
  %v335 = vpack.c.b16 %v265, %v264
  %v336 = vpack.c.b16 %v267, %v266
  %v337 = vpack.c.b16 %v269, %v268
  %v338 = vpack.c.b16 %v271, %v270
  %v339 = vpack.c.b16 %v273, %v272
  %v340 = vpack.c.b16 %v275, %v274
  %v341 = vpack.c.b16 %v277, %v276
  %v342 = vpack.c.b16 %v279, %v278
  %v343 = vpack.c.b16 %v281, %v280
  %v344 = vpack.c.b16 %v283, %v282
  %v345 = vpack.c.b16 %v285, %v284
  %v346 = vpack.c.b16 %v287, %v286
  %v347 = vpack.c.b16 %v289, %v288
  %v348 = vpack.c.b16 %v291, %v290
  %v349 = vpack.c.b16 %v293, %v292
  %v350 = vpack.c.b16 %v295, %v294
  %v351 = vpack.c.b16 %v297, %v296
  %v352 = vpack.c.b16 %v299, %v298
  %v353 = vpack.c.b16 %v301, %v300
  %v354 = vpack.c.b16 %v303, %v302
  %v355 = vpack.c.b16 %v305, %v304
  %v356 = vpack.c.b16 %v307, %v306
  %v357 = vpack.c.b16 %v309, %v308
  %v358 = vpack.c.b16 %v311, %v310
  %v359 = vpack.c.b16 %v313, %v312
  %v360 = vpack.c.b16 %v315, %v314
  %v361 = vpack.c.b16 %v317, %v316
  %v362 = vpack.c.b16 %v319, %v318
  %v363 = vpack.c.b16 %v321, %v320
  %v364 = vpack.c.b16 %v323, %v322
  %v365 = vpack.c.b16 %v325, %v324
  %406 = vmatprep.subr.bf16.mxu0 0
  %407 = vmatpush1.bf16.msra.mxu0 %v333
  %408 = vmatprep.subr.bf16.mxu0 0
  %409 = vmatpush1.bf16.msra.mxu0 %v332
  %410 = vmatprep.subr.bf16.mxu0 0
  %411 = vmatpush1.bf16.msra.mxu0 %v331
  %412 = vmatprep.subr.bf16.mxu0 0
  %413 = vmatpush1.bf16.msra.mxu0 %v330
  %414 = vmatprep.subr.bf16.mxu0 0
  %415 = vmatpush1.bf16.msra.mxu0 %v329
  %416 = vmatprep.subr.bf16.mxu0 0
  %417 = vmatpush1.bf16.msra.mxu0 %v328
  %418 = vmatprep.subr.bf16.mxu0 0
  %419 = vmatpush1.bf16.msra.mxu0 %v327
  %420 = vmatprep.subr.bf16.mxu0 0
  %421 = vmatpush1.bf16.msra.mxu0 %v326
  %422 = vmatprep.subr.bf16.mxu0 0
  %423 = vmatpush2.bf16.msra.mxu0 %v341
  %424 = vmatprep.subr.bf16.mxu0 0
  %425 = vmatpush2.bf16.msra.mxu0 %v340
  %426 = vmatprep.subr.bf16.mxu0 0
  %427 = vmatpush2.bf16.msra.mxu0 %v339
  %428 = vmatprep.subr.bf16.mxu0 0
  %429 = vmatpush2.bf16.msra.mxu0 %v338
  %430 = vmatprep.subr.bf16.mxu0 0
  %431 = vmatpush2.bf16.msra.mxu0 %v337
  %432 = vmatprep.subr.bf16.mxu0 0
  %433 = vmatpush2.bf16.msra.mxu0 %v336
  %434 = vmatprep.subr.bf16.mxu0 0
  %435 = vmatpush2.bf16.msra.mxu0 %v335
  %436 = vmatprep.subr.bf16.mxu0 0
  %437 = vmatpush2.bf16.msra.mxu0 %v334
  %438 = vmatprep.mubr.bf16.mxu0 %v147
  %439 = vmatmul.mubr.bf16.gmra.mxu0 %v146
  %v440 = vpop.f32.mrf.mxu0
  %v441 = vadd.f32 %v112, %v440
  %v442 = vpop.f32.mrf.mxu0
  %v443 = vpop.f32.mrf.mxu0
  %v444 = vadd.f32 %v112, %v443
  %v445 = vpop.f32.mrf.mxu0
  %446 = vmatprep.mubr.bf16.mxu0 %v152
  %447 = vmatmul.mubr.bf16.gmra.mxu0 %v151
  %v448 = vpop.f32.mrf.mxu0
  %v449 = vadd.f32 %v112, %v448
  %v450 = vpop.f32.mrf.mxu0
  %v451 = vpop.f32.mrf.mxu0
  %v452 = vadd.f32 %v112, %v451
  %v453 = vpop.f32.mrf.mxu0
  %454 = vdwg.mxu0
  %455 = vmatprep.subr.bf16.mxu0 0
  %456 = vmatpush1.bf16.msra.mxu0 %v349
  %457 = vmatprep.subr.bf16.mxu0 0
  %458 = vmatpush1.bf16.msra.mxu0 %v348
  %459 = vmatprep.subr.bf16.mxu0 0
  %460 = vmatpush1.bf16.msra.mxu0 %v347
  %461 = vmatprep.subr.bf16.mxu0 0
  %462 = vmatpush1.bf16.msra.mxu0 %v346
  %463 = vmatprep.subr.bf16.mxu0 0
  %464 = vmatpush1.bf16.msra.mxu0 %v345
  %465 = vmatprep.subr.bf16.mxu0 0
  %466 = vmatpush1.bf16.msra.mxu0 %v344
  %467 = vmatprep.subr.bf16.mxu0 0
  %468 = vmatpush1.bf16.msra.mxu0 %v343
  %469 = vmatprep.subr.bf16.mxu0 0
  %470 = vmatpush1.bf16.msra.mxu0 %v342
  %471 = vmatprep.subr.bf16.mxu0 0
  %472 = vmatpush2.bf16.msra.mxu0 %v357
  %473 = vmatprep.subr.bf16.mxu0 0
  %474 = vmatpush2.bf16.msra.mxu0 %v356
  %475 = vmatprep.subr.bf16.mxu0 0
  %476 = vmatpush2.bf16.msra.mxu0 %v355
  %477 = vmatprep.subr.bf16.mxu0 0
  %478 = vmatpush2.bf16.msra.mxu0 %v354
  %479 = vmatprep.subr.bf16.mxu0 0
  %480 = vmatpush2.bf16.msra.mxu0 %v353
  %481 = vmatprep.subr.bf16.mxu0 0
  %482 = vmatpush2.bf16.msra.mxu0 %v352
  %483 = vmatprep.subr.bf16.mxu0 0
  %484 = vmatpush2.bf16.msra.mxu0 %v351
  %485 = vmatprep.subr.bf16.mxu0 0
  %486 = vmatpush2.bf16.msra.mxu0 %v350
  %487 = vmatprep.mubr.bf16.mxu0 %v149
  %488 = vmatmul.mubr.bf16.gmra.mxu0 %v148
  %v489 = vpop.f32.mrf.mxu0
  %v490 = vadd.f32 %v441, %v489
  %v491 = vpop.f32.mrf.mxu0
  %v492 = vpop.f32.mrf.mxu0
  %v493 = vadd.f32 %v444, %v492
  %v494 = vpop.f32.mrf.mxu0
  %495 = vmatprep.mubr.bf16.mxu0 %v154
  %496 = vmatmul.mubr.bf16.gmra.mxu0 %v153
  %v497 = vpop.f32.mrf.mxu0
  %v498 = vadd.f32 %v449, %v497
  %v499 = vpop.f32.mrf.mxu0
  %v500 = vpop.f32.mrf.mxu0
  %v501 = vadd.f32 %v452, %v500
  %v502 = vpop.f32.mrf.mxu0
  %503 = vdwg.mxu0
  %504 = vmatprep.subr.bf16.mxu0 0
  %505 = vmatpush1.bf16.msra.mxu0 %v365
  %506 = vmatprep.subr.bf16.mxu0 0
  %507 = vmatpush1.bf16.msra.mxu0 %v364
  %508 = vmatprep.subr.bf16.mxu0 0
  %509 = vmatpush1.bf16.msra.mxu0 %v363
  %510 = vmatprep.subr.bf16.mxu0 0
  %511 = vmatpush1.bf16.msra.mxu0 %v362
  %512 = vmatprep.subr.bf16.mxu0 0
  %513 = vmatpush1.bf16.msra.mxu0 %v361
  %514 = vmatprep.subr.bf16.mxu0 0
  %515 = vmatpush1.bf16.msra.mxu0 %v360
  %516 = vmatprep.subr.bf16.mxu0 0
  %517 = vmatpush1.bf16.msra.mxu0 %v359
  %518 = vmatprep.subr.bf16.mxu0 0
  %519 = vmatpush1.bf16.msra.mxu0 %v358
  %520 = vmatprep.subr.bf16.mxu0 0
  %521 = vmatpush2.bf16.msra.mxu0 0
  %522 = vmatprep.subr.bf16.mxu0 0
  %523 = vmatpush2.bf16.msra.mxu0 0
  %524 = vmatprep.subr.bf16.mxu0 0
  %525 = vmatpush2.bf16.msra.mxu0 0
  %526 = vmatprep.subr.bf16.mxu0 0
  %527 = vmatpush2.bf16.msra.mxu0 0
  %528 = vmatprep.subr.bf16.mxu0 0
  %529 = vmatpush2.bf16.msra.mxu0 0
  %530 = vmatprep.subr.bf16.mxu0 0
  %531 = vmatpush2.bf16.msra.mxu0 0
  %532 = vmatprep.subr.bf16.mxu0 0
  %533 = vmatpush2.bf16.msra.mxu0 0
  %534 = vmatprep.subr.bf16.mxu0 0
  %535 = vmatpush2.bf16.msra.mxu0 0
  %536 = vmatprep.mubr.bf16.mxu0 0
  %537 = vmatmul.mubr.bf16.gmra.mxu0 %v150
  %v538 = vpop.f32.mrf.mxu0
  %v539 = vadd.f32 %v490, %v538
  %v540 = vpop.f32.mrf.mxu0
  %v541 = vpop.f32.mrf.mxu0
  %v542 = vadd.f32 %v493, %v541
  %v543 = vpop.f32.mrf.mxu0
  %544 = vmatprep.mubr.bf16.mxu0 0
  %545 = vmatmul.mubr.bf16.gmra.mxu0 %v155
  %v546 = vpop.f32.mrf.mxu0
  %v547 = vadd.f32 %v498, %v546
  %v548 = vpop.f32.mrf.mxu0
  %v549 = vpop.f32.mrf.mxu0
  %v550 = vadd.f32 %v501, %v549
  %v551 = vpop.f32.mrf.mxu0
  %552 = vdwg.mxu0
  %v553 = vmax.f32 %v539, 0.0
  %v554 = vmax.f32 %v542, 0.0
  %v555 = vmax.f32 %v547, 0.0
  %v556 = vmax.f32 %v550, 0.0
  %v557 = vpack.c.bf16 %v554, %v553
  %v558 = vpack.c.bf16 %v556, %v555
  %v561 = vunpack.c.l.b16 %v557
  %v562 = vunpack.c.h.b16 %v557
  %v563 = vunpack.c.l.b16 %v558
  %v564 = vunpack.c.h.b16 %v558
  %v565 = vpack.c.b16 %v561, %v561
  %v566 = vpack.c.b16 %v562, %v562
  %v567 = vpack.c.b16 %v563, %v563
  %v568 = vpack.c.b16 %v564, %v564
  %573 = vst [vmem:[%s3] sm:$0xf] %v565
  %574 = vst [vmem:[%s3 + $0x4] sm:$0xf] %v566
  %575 = vst [vmem:[%s3 + $0x8] sm:$0xf] %v567
  %576 = vst [vmem:[%s3 + $0xc] sm:$0xf] %v568
  // Predicated region
  $region14: #{_forward_impl.24} parent=0 // pred_check
    _
  $region15: #{_forward_impl.24} parent=0 // pred_check_branch
    %578 = sbr.rel (0) target = $region17
  $region16: #{_forward_impl.24} parent=0 // pred_region
    _
  $region17: #{_forward_impl.24} parent=0 // pred_fallthru
    _
  // Predicated region
  $region18: #{_forward_impl.24} parent=0 // pred_check
    _
  $region19: #{_forward_impl.24} parent=0 // pred_check_branch
    %580 = sbr.rel (0) target = $region21
  $region20: #{_forward_impl.24} parent=0 // pred_region
    _
  $region21: #{_forward_impl.24} parent=0 // pred_fallthru
    _

// kernel: _forward_impl.26
$region0: #{_forward_impl.26}
  #allocation0 [shape = 'u32[]', space=smem, size = 0x4, offset = 0x4, fixed_abs, tag = 'smem constant byte address 0x4 - core index']
  #allocation1 [shape = 'u32[144,128]{1,0:T(1,128)}', space=vmem, size = 0x12000, scoped, tag = 'internal scratch']
  %s0 = inlined_call_operand.vmem [shape: bf16[32,128], index: 0, kind: input, shape index: {}]
  %s1 = inlined_call_operand.vmem [shape: bf16[128,128], index: 1, kind: input, shape index: {}]
  %s2 = inlined_call_operand.vmem [shape: f32[1,128], index: 2, kind: input, shape index: {}]
  %s3 = inlined_call_operand.vmem [shape: bf16[32,128], index: 3, kind: output, shape index: {}]
  %s4 = sld [smem:[#allocation0]]
  $region22: #{_forward_impl.26} parent=0
    _
  %s6 = ssub.s32 1, %s4
  %s7 = scalar_select 0, %s6, %s4
  // Predicated region
  $region2: #{_forward_impl.26} parent=0 // pred_check
    _
  $region3: #{_forward_impl.26} parent=0 // pred_check_branch
    %9 = sbr.rel (0) target = $region5
  $region4: #{_forward_impl.26} parent=0 // pred_region
    _
  $region5: #{_forward_impl.26} parent=0 // pred_fallthru
    _
  // Predicated region
  $region6: #{_forward_impl.26} parent=0 // pred_check
    _
  $region7: #{_forward_impl.26} parent=0 // pred_check_branch
    %11 = sbr.rel (0) target = $region9
  $region8: #{_forward_impl.26} parent=0 // pred_region
    _
  $region9: #{_forward_impl.26} parent=0 // pred_fallthru
    _
  // Predicated region
  $region10: #{_forward_impl.26} parent=0 // pred_check
    _
  $region11: #{_forward_impl.26} parent=0 // pred_check_branch
    %13 = sbr.rel (0) target = $region13
  $region12: #{_forward_impl.26} parent=0 // pred_region
    _
  $region13: #{_forward_impl.26} parent=0 // pred_fallthru
    _
  %v15 = vld [vmem:[%s0] sm:$0xf]
  %v16 = vld [vmem:[%s0 + $0x4] sm:$0xf]
  %v17 = vld [vmem:[%s0 + $0x8] sm:$0xf]
  %v18 = vld [vmem:[%s0 + $0xc] sm:$0xf]
  %v19 = vld [vmem:[%s1] sm:$0xf]
  %v20 = vld [vmem:[%s1 + $0x4] sm:$0xf]
  %v21 = vld [vmem:[%s1 + $0x8] sm:$0xf]
  %v22 = vld [vmem:[%s1 + $0xc] sm:$0xf]
  %v23 = vld [vmem:[%s1 + $0x10] sm:$0xf]
  %v24 = vld [vmem:[%s1 + $0x14] sm:$0xf]
  %v25 = vld [vmem:[%s1 + $0x18] sm:$0xf]
  %v26 = vld [vmem:[%s1 + $0x1c] sm:$0xf]
  %v27 = vld [vmem:[%s1 + $0x20] sm:$0xf]
  %v28 = vld [vmem:[%s1 + $0x24] sm:$0xf]
  %v29 = vld [vmem:[%s1 + $0x28] sm:$0xf]
  %v30 = vld [vmem:[%s1 + $0x2c] sm:$0xf]
  %v31 = vld [vmem:[%s1 + $0x30] sm:$0xf]
  %v32 = vld [vmem:[%s1 + $0x34] sm:$0xf]
  %v33 = vld [vmem:[%s1 + $0x38] sm:$0xf]
  %v34 = vld [vmem:[%s1 + $0x3c] sm:$0xf]
  %v35 = vld [vmem:[%s2] sm:$0x1]
  %v37 = vlaneseq
  %v38 = vshrl.u32 %v37, 7
  %v39 = vsub.s32 0, %v38
  %v40 = vrot.slane %v35, %v39
  %v46 = vunpack.c.l.b16 %v15
  %v47 = vunpack.c.l.b16 %v16
  %v48 = vunpack.c.l.b16 %v17
  %v49 = vunpack.c.l.b16 %v18
  %v50 = vpack.c.b16 %v47, %v46
  %v51 = vpack.c.b16 %v49, %v48
  %v70 = vunpack.c.l.b16 %v19
  %v71 = vunpack.c.l.b16 %v20
  %v72 = vunpack.c.l.b16 %v21
  %v73 = vunpack.c.l.b16 %v22
  %v74 = vunpack.c.l.b16 %v23
  %v75 = vunpack.c.l.b16 %v24
  %v76 = vunpack.c.l.b16 %v25
  %v77 = vunpack.c.l.b16 %v26
  %v78 = vunpack.c.l.b16 %v27
  %v79 = vunpack.c.l.b16 %v28
  %v80 = vunpack.c.l.b16 %v29
  %v81 = vunpack.c.l.b16 %v30
  %v82 = vunpack.c.l.b16 %v31
  %v83 = vunpack.c.l.b16 %v32
  %v84 = vunpack.c.l.b16 %v33
  %v85 = vunpack.c.l.b16 %v34
  %v86 = vpack.c.b16 %v71, %v70
  %v87 = vpack.c.b16 %v73, %v72
  %v88 = vpack.c.b16 %v75, %v74
  %v89 = vpack.c.b16 %v77, %v76
  %v90 = vpack.c.b16 %v79, %v78
  %v91 = vpack.c.b16 %v81, %v80
  %v92 = vpack.c.b16 %v83, %v82
  %v93 = vpack.c.b16 %v85, %v84
  %102 = vmatprep.subr.bf16.mxu0 0
  %103 = vmatpush1.bf16.msra.mxu0 %v93
  %104 = vmatprep.subr.bf16.mxu0 0
  %105 = vmatpush1.bf16.msra.mxu0 %v92
  %106 = vmatprep.subr.bf16.mxu0 0
  %107 = vmatpush1.bf16.msra.mxu0 %v91
  %108 = vmatprep.subr.bf16.mxu0 0
  %109 = vmatpush1.bf16.msra.mxu0 %v90
  %110 = vmatprep.subr.bf16.mxu0 0
  %111 = vmatpush1.bf16.msra.mxu0 %v89
  %112 = vmatprep.subr.bf16.mxu0 0
  %113 = vmatpush1.bf16.msra.mxu0 %v88
  %114 = vmatprep.subr.bf16.mxu0 0
  %115 = vmatpush1.bf16.msra.mxu0 %v87
  %116 = vmatprep.subr.bf16.mxu0 0
  %117 = vmatpush1.bf16.msra.mxu0 %v86
  %118 = vmatprep.subr.bf16.mxu0 0
  %119 = vmatpush2.bf16.msra.mxu0 0
  %120 = vmatprep.subr.bf16.mxu0 0
  %121 = vmatpush2.bf16.msra.mxu0 0
  %122 = vmatprep.subr.bf16.mxu0 0
  %123 = vmatpush2.bf16.msra.mxu0 0
  %124 = vmatprep.subr.bf16.mxu0 0
  %125 = vmatpush2.bf16.msra.mxu0 0
  %126 = vmatprep.subr.bf16.mxu0 0
  %127 = vmatpush2.bf16.msra.mxu0 0
  %128 = vmatprep.subr.bf16.mxu0 0
  %129 = vmatpush2.bf16.msra.mxu0 0
  %130 = vmatprep.subr.bf16.mxu0 0
  %131 = vmatpush2.bf16.msra.mxu0 0
  %132 = vmatprep.subr.bf16.mxu0 0
  %133 = vmatpush2.bf16.msra.mxu0 0
  %134 = vmatprep.mubr.bf16.mxu0 0
  %135 = vmatmul.mubr.bf16.gmra.mxu0 %v50
  %v136 = vpop.f32.mrf.mxu0
  %v137 = vadd.f32 %v40, %v136
  %v138 = vpop.f32.mrf.mxu0
  %v139 = vpop.f32.mrf.mxu0
  %v140 = vadd.f32 %v40, %v139
  %v141 = vpop.f32.mrf.mxu0
  %142 = vmatprep.mubr.bf16.mxu0 0
  %143 = vmatmul.mubr.bf16.gmra.mxu0 %v51
  %v144 = vpop.f32.mrf.mxu0
  %v145 = vadd.f32 %v40, %v144
  %v146 = vpop.f32.mrf.mxu0
  %v147 = vpop.f32.mrf.mxu0
  %v148 = vadd.f32 %v40, %v147
  %v149 = vpop.f32.mrf.mxu0
  %150 = vdwg.mxu0
  %v151 = vmax.f32 %v137, 0.0
  %v152 = vmax.f32 %v140, 0.0
  %v153 = vmax.f32 %v145, 0.0
  %v154 = vmax.f32 %v148, 0.0
  %v155 = vpack.c.bf16 %v152, %v151
  %v156 = vpack.c.bf16 %v154, %v153
  %v159 = vunpack.c.l.b16 %v155
  %v160 = vunpack.c.h.b16 %v155
  %v161 = vunpack.c.l.b16 %v156
  %v162 = vunpack.c.h.b16 %v156
  %v163 = vpack.c.b16 %v159, %v159
  %v164 = vpack.c.b16 %v160, %v160
  %v165 = vpack.c.b16 %v161, %v161
  %v166 = vpack.c.b16 %v162, %v162
  %171 = vst [vmem:[%s3] sm:$0xf] %v163
  %172 = vst [vmem:[%s3 + $0x4] sm:$0xf] %v164
  %173 = vst [vmem:[%s3 + $0x8] sm:$0xf] %v165
  %174 = vst [vmem:[%s3 + $0xc] sm:$0xf] %v166
  // Predicated region
  $region14: #{_forward_impl.26} parent=0 // pred_check
    _
  $region15: #{_forward_impl.26} parent=0 // pred_check_branch
    %176 = sbr.rel (0) target = $region17
  $region16: #{_forward_impl.26} parent=0 // pred_region
    _
  $region17: #{_forward_impl.26} parent=0 // pred_fallthru
    _
  // Predicated region
  $region18: #{_forward_impl.26} parent=0 // pred_check
    _
  $region19: #{_forward_impl.26} parent=0 // pred_check_branch
    %178 = sbr.rel (0) target = $region21
  $region20: #{_forward_impl.26} parent=0 // pred_region
    _
  $region21: #{_forward_impl.26} parent=0 // pred_fallthru
    _

// kernel: _forward_impl.25
$region0: #{_forward_impl.25}
  #allocation0 [shape = 'u32[]', space=smem, size = 0x4, offset = 0x4, fixed_abs, tag = 'smem constant byte address 0x4 - core index']
  #allocation1 [shape = 'u32[144,128]{1,0:T(1,128)}', space=vmem, size = 0x12000, scoped, tag = 'internal scratch']
  %s0 = inlined_call_operand.vmem [shape: bf16[32,1152], index: 0, kind: input, shape index: {}]
  %s1 = inlined_call_operand.vmem [shape: bf16[1152,128], index: 1, kind: input, shape index: {}]
  %s2 = inlined_call_operand.vmem [shape: f32[1,128], index: 2, kind: input, shape index: {}]
  %s3 = inlined_call_operand.vmem [shape: bf16[32,128], index: 3, kind: output, shape index: {}]
  %s4 = sld [smem:[#allocation0]]
  $region22: #{_forward_impl.25} parent=0
    _
  %s6 = ssub.s32 1, %s4
  %s7 = scalar_select 0, %s6, %s4
  // Predicated region
  $region2: #{_forward_impl.25} parent=0 // pred_check
    _
  $region3: #{_forward_impl.25} parent=0 // pred_check_branch
    %9 = sbr.rel (0) target = $region5
  $region4: #{_forward_impl.25} parent=0 // pred_region
    _
  $region5: #{_forward_impl.25} parent=0 // pred_fallthru
    _
  // Predicated region
  $region6: #{_forward_impl.25} parent=0 // pred_check
    _
  $region7: #{_forward_impl.25} parent=0 // pred_check_branch
    %11 = sbr.rel (0) target = $region9
  $region8: #{_forward_impl.25} parent=0 // pred_region
    _
  $region9: #{_forward_impl.25} parent=0 // pred_fallthru
    _
  // Predicated region
  $region10: #{_forward_impl.25} parent=0 // pred_check
    _
  $region11: #{_forward_impl.25} parent=0 // pred_check_branch
    %13 = sbr.rel (0) target = $region13
  $region12: #{_forward_impl.25} parent=0 // pred_region
    _
  $region13: #{_forward_impl.25} parent=0 // pred_fallthru
    _
  %v15 = vld [vmem:[%s0] sm:$0xff]
  %v16 = vld [vmem:[%s0 + $0x8] sm:$0xff]
  %v17 = vld [vmem:[%s0 + $0x10] sm:$0xff]
  %v18 = vld [vmem:[%s0 + $0x18] sm:$0xff]
  %v19 = vld [vmem:[%s0 + $0x20] sm:$0xf]
  %v20 = vld [vmem:[%s0 + $0x24] sm:$0xff]
  %v21 = vld [vmem:[%s0 + $0x2c] sm:$0xff]
  %v22 = vld [vmem:[%s0 + $0x34] sm:$0xff]
  %v23 = vld [vmem:[%s0 + $0x3c] sm:$0xff]
  %v24 = vld [vmem:[%s0 + $0x44] sm:$0xf]
  %v25 = vld [vmem:[%s0 + $0x48] sm:$0xff]
  %v26 = vld [vmem:[%s0 + $0x50] sm:$0xff]
  %v27 = vld [vmem:[%s0 + $0x58] sm:$0xff]
  %v28 = vld [vmem:[%s0 + $0x60] sm:$0xff]
  %v29 = vld [vmem:[%s0 + $0x68] sm:$0xf]
  %v30 = vld [vmem:[%s0 + $0x6c] sm:$0xff]
  %v31 = vld [vmem:[%s0 + $0x74] sm:$0xff]
  %v32 = vld [vmem:[%s0 + $0x7c] sm:$0xff]
  %v33 = vld [vmem:[%s0 + $0x84] sm:$0xff]
  %v34 = vld [vmem:[%s0 + $0x8c] sm:$0xf]
  %v35 = vld [vmem:[%s1] sm:$0xf]
  %v36 = vld [vmem:[%s1 + $0x4] sm:$0xf]
  %v37 = vld [vmem:[%s1 + $0x8] sm:$0xf]
  %v38 = vld [vmem:[%s1 + $0xc] sm:$0xf]
  %v39 = vld [vmem:[%s1 + $0x10] sm:$0xf]
  %v40 = vld [vmem:[%s1 + $0x14] sm:$0xf]
  %v41 = vld [vmem:[%s1 + $0x18] sm:$0xf]
  %v42 = vld [vmem:[%s1 + $0x1c] sm:$0xf]
  %v43 = vld [vmem:[%s1 + $0x20] sm:$0xf]
  %v44 = vld [vmem:[%s1 + $0x24] sm:$0xf]
  %v45 = vld [vmem:[%s1 + $0x28] sm:$0xf]
  %v46 = vld [vmem:[%s1 + $0x2c] sm:$0xf]
  %v47 = vld [vmem:[%s1 + $0x30] sm:$0xf]
  %v48 = vld [vmem:[%s1 + $0x34] sm:$0xf]
  %v49 = vld [vmem:[%s1 + $0x38] sm:$0xf]
  %v50 = vld [vmem:[%s1 + $0x3c] sm:$0xf]
  %v51 = vld [vmem:[%s1 + $0x40] sm:$0xf]
  %v52 = vld [vmem:[%s1 + $0x44] sm:$0xf]
  %v53 = vld [vmem:[%s1 + $0x48] sm:$0xf]
  %v54 = vld [vmem:[%s1 + $0x4c] sm:$0xf]
  %v55 = vld [vmem:[%s1 + $0x50] sm:$0xf]
  %v56 = vld [vmem:[%s1 + $0x54] sm:$0xf]
  %v57 = vld [vmem:[%s1 + $0x58] sm:$0xf]
  %v58 = vld [vmem:[%s1 + $0x5c] sm:$0xf]
  %v59 = vld [vmem:[%s1 + $0x60] sm:$0xf]
  %v60 = vld [vmem:[%s1 + $0x64] sm:$0xf]
  %v61 = vld [vmem:[%s1 + $0x68] sm:$0xf]
  %v62 = vld [vmem:[%s1 + $0x6c] sm:$0xf]
  %v63 = vld [vmem:[%s1 + $0x70] sm:$0xf]
  %v64 = vld [vmem:[%s1 + $0x74] sm:$0xf]
  %v65 = vld [vmem:[%s1 + $0x78] sm:$0xf]
  %v66 = vld [vmem:[%s1 + $0x7c] sm:$0xf]
  %v67 = vld [vmem:[%s1 + $0x80] sm:$0xf]
  %v68 = vld [vmem:[%s1 + $0x84] sm:$0xf]
  %v69 = vld [vmem:[%s1 + $0x88] sm:$0xf]
  %v70 = vld [vmem:[%s1 + $0x8c] sm:$0xf]
  %v71 = vld [vmem:[%s1 + $0x90] sm:$0xf]
  %v72 = vld [vmem:[%s1 + $0x94] sm:$0xf]
  %v73 = vld [vmem:[%s1 + $0x98] sm:$0xf]
  %v74 = vld [vmem:[%s1 + $0x9c] sm:$0xf]
  %v75 = vld [vmem:[%s1 + $0xa0] sm:$0xf]
  %v76 = vld [vmem:[%s1 + $0xa4] sm:$0xf]
  %v77 = vld [vmem:[%s1 + $0xa8] sm:$0xf]
  %v78 = vld [vmem:[%s1 + $0xac] sm:$0xf]
  %v79 = vld [vmem:[%s1 + $0xb0] sm:$0xf]
  %v80 = vld [vmem:[%s1 + $0xb4] sm:$0xf]
  %v81 = vld [vmem:[%s1 + $0xb8] sm:$0xf]
  %v82 = vld [vmem:[%s1 + $0xbc] sm:$0xf]
  %v83 = vld [vmem:[%s1 + $0xc0] sm:$0xf]
  %v84 = vld [vmem:[%s1 + $0xc4] sm:$0xf]
  %v85 = vld [vmem:[%s1 + $0xc8] sm:$0xf]
  %v86 = vld [vmem:[%s1 + $0xcc] sm:$0xf]
  %v87 = vld [vmem:[%s1 + $0xd0] sm:$0xf]
  %v88 = vld [vmem:[%s1 + $0xd4] sm:$0xf]
  %v89 = vld [vmem:[%s1 + $0xd8] sm:$0xf]
  %v90 = vld [vmem:[%s1 + $0xdc] sm:$0xf]
  %v91 = vld [vmem:[%s1 + $0xe0] sm:$0xf]
  %v92 = vld [vmem:[%s1 + $0xe4] sm:$0xf]
  %v93 = vld [vmem:[%s1 + $0xe8] sm:$0xf]
  %v94 = vld [vmem:[%s1 + $0xec] sm:$0xf]
  %v95 = vld [vmem:[%s1 + $0xf0] sm:$0xf]
  %v96 = vld [vmem:[%s1 + $0xf4] sm:$0xf]
  %v97 = vld [vmem:[%s1 + $0xf8] sm:$0xf]
  %v98 = vld [vmem:[%s1 + $0xfc] sm:$0xf]
  %v99 = vld [vmem:[%s1 + $0x100] sm:$0xf]
  %v100 = vld [vmem:[%s1 + $0x104] sm:$0xf]
  %v101 = vld [vmem:[%s1 + $0x108] sm:$0xf]
  %v102 = vld [vmem:[%s1 + $0x10c] sm:$0xf]
  %v103 = vld [vmem:[%s1 + $0x110] sm:$0xf]
  %v104 = vld [vmem:[%s1 + $0x114] sm:$0xf]
  %v105 = vld [vmem:[%s1 + $0x118] sm:$0xf]
  %v106 = vld [vmem:[%s1 + $0x11c] sm:$0xf]
  %v107 = vld [vmem:[%s1 + $0x120] sm:$0xf]
  %v108 = vld [vmem:[%s1 + $0x124] sm:$0xf]
  %v109 = vld [vmem:[%s1 + $0x128] sm:$0xf]
  %v110 = vld [vmem:[%s1 + $0x12c] sm:$0xf]
  %v111 = vld [vmem:[%s1 + $0x130] sm:$0xf]
  %v112 = vld [vmem:[%s1 + $0x134] sm:$0xf]
  %v113 = vld [vmem:[%s1 + $0x138] sm:$0xf]
  %v114 = vld [vmem:[%s1 + $0x13c] sm:$0xf]
  %v115 = vld [vmem:[%s1 + $0x140] sm:$0xf]
  %v116 = vld [vmem:[%s1 + $0x144] sm:$0xf]
  %v117 = vld [vmem:[%s1 + $0x148] sm:$0xf]
  %v118 = vld [vmem:[%s1 + $0x14c] sm:$0xf]
  %v119 = vld [vmem:[%s1 + $0x150] sm:$0xf]
  %v120 = vld [vmem:[%s1 + $0x154] sm:$0xf]
  %v121 = vld [vmem:[%s1 + $0x158] sm:$0xf]
  %v122 = vld [vmem:[%s1 + $0x15c] sm:$0xf]
  %v123 = vld [vmem:[%s1 + $0x160] sm:$0xf]
  %v124 = vld [vmem:[%s1 + $0x164] sm:$0xf]
  %v125 = vld [vmem:[%s1 + $0x168] sm:$0xf]
  %v126 = vld [vmem:[%s1 + $0x16c] sm:$0xf]
  %v127 = vld [vmem:[%s1 + $0x170] sm:$0xf]
  %v128 = vld [vmem:[%s1 + $0x174] sm:$0xf]
  %v129 = vld [vmem:[%s1 + $0x178] sm:$0xf]
  %v130 = vld [vmem:[%s1 + $0x17c] sm:$0xf]
  %v131 = vld [vmem:[%s1 + $0x180] sm:$0xf]
  %v132 = vld [vmem:[%s1 + $0x184] sm:$0xf]
  %v133 = vld [vmem:[%s1 + $0x188] sm:$0xf]
  %v134 = vld [vmem:[%s1 + $0x18c] sm:$0xf]
  %v135 = vld [vmem:[%s1 + $0x190] sm:$0xf]
  %v136 = vld [vmem:[%s1 + $0x194] sm:$0xf]
  %v137 = vld [vmem:[%s1 + $0x198] sm:$0xf]
  %v138 = vld [vmem:[%s1 + $0x19c] sm:$0xf]
  %v139 = vld [vmem:[%s1 + $0x1a0] sm:$0xf]
  %v140 = vld [vmem:[%s1 + $0x1a4] sm:$0xf]
  %v141 = vld [vmem:[%s1 + $0x1a8] sm:$0xf]
  %v142 = vld [vmem:[%s1 + $0x1ac] sm:$0xf]
  %v143 = vld [vmem:[%s1 + $0x1b0] sm:$0xf]
  %v144 = vld [vmem:[%s1 + $0x1b4] sm:$0xf]
  %v145 = vld [vmem:[%s1 + $0x1b8] sm:$0xf]
  %v146 = vld [vmem:[%s1 + $0x1bc] sm:$0xf]
  %v147 = vld [vmem:[%s1 + $0x1c0] sm:$0xf]
  %v148 = vld [vmem:[%s1 + $0x1c4] sm:$0xf]
  %v149 = vld [vmem:[%s1 + $0x1c8] sm:$0xf]
  %v150 = vld [vmem:[%s1 + $0x1cc] sm:$0xf]
  %v151 = vld [vmem:[%s1 + $0x1d0] sm:$0xf]
  %v152 = vld [vmem:[%s1 + $0x1d4] sm:$0xf]
  %v153 = vld [vmem:[%s1 + $0x1d8] sm:$0xf]
  %v154 = vld [vmem:[%s1 + $0x1dc] sm:$0xf]
  %v155 = vld [vmem:[%s1 + $0x1e0] sm:$0xf]
  %v156 = vld [vmem:[%s1 + $0x1e4] sm:$0xf]
  %v157 = vld [vmem:[%s1 + $0x1e8] sm:$0xf]
  %v158 = vld [vmem:[%s1 + $0x1ec] sm:$0xf]
  %v159 = vld [vmem:[%s1 + $0x1f0] sm:$0xf]
  %v160 = vld [vmem:[%s1 + $0x1f4] sm:$0xf]
  %v161 = vld [vmem:[%s1 + $0x1f8] sm:$0xf]
  %v162 = vld [vmem:[%s1 + $0x1fc] sm:$0xf]
  %v163 = vld [vmem:[%s1 + $0x200] sm:$0xf]
  %v164 = vld [vmem:[%s1 + $0x204] sm:$0xf]
  %v165 = vld [vmem:[%s1 + $0x208] sm:$0xf]
  %v166 = vld [vmem:[%s1 + $0x20c] sm:$0xf]
  %v167 = vld [vmem:[%s1 + $0x210] sm:$0xf]
  %v168 = vld [vmem:[%s1 + $0x214] sm:$0xf]
  %v169 = vld [vmem:[%s1 + $0x218] sm:$0xf]
  %v170 = vld [vmem:[%s1 + $0x21c] sm:$0xf]
  %v171 = vld [vmem:[%s1 + $0x220] sm:$0xf]
  %v172 = vld [vmem:[%s1 + $0x224] sm:$0xf]
  %v173 = vld [vmem:[%s1 + $0x228] sm:$0xf]
  %v174 = vld [vmem:[%s1 + $0x22c] sm:$0xf]
  %v175 = vld [vmem:[%s1 + $0x230] sm:$0xf]
  %v176 = vld [vmem:[%s1 + $0x234] sm:$0xf]
  %v177 = vld [vmem:[%s1 + $0x238] sm:$0xf]
  %v178 = vld [vmem:[%s1 + $0x23c] sm:$0xf]
  %v179 = vld [vmem:[%s2] sm:$0x1]
  %v181 = vlaneseq
  %v182 = vshrl.u32 %v181, 7
  %v183 = vsub.s32 0, %v182
  %v184 = vrot.slane %v179, %v183
  %v206 = vunpack.c.l.b16 %v15
  %v207 = vunpack.c.h.b16 %v15
  %v208 = vunpack.c.l.b16 %v16
  %v209 = vunpack.c.h.b16 %v16
  %v210 = vunpack.c.l.b16 %v17
  %v211 = vunpack.c.h.b16 %v17
  %v212 = vunpack.c.l.b16 %v18
  %v213 = vunpack.c.h.b16 %v18
  %v214 = vunpack.c.l.b16 %v19
  %v215 = vunpack.c.l.b16 %v20
  %v216 = vunpack.c.h.b16 %v20
  %v217 = vunpack.c.l.b16 %v21
  %v218 = vunpack.c.h.b16 %v21
  %v219 = vunpack.c.l.b16 %v22
  %v220 = vunpack.c.h.b16 %v22
  %v221 = vunpack.c.l.b16 %v23
  %v222 = vunpack.c.h.b16 %v23
  %v223 = vunpack.c.l.b16 %v24
  %v224 = vunpack.c.l.b16 %v25
  %v225 = vunpack.c.h.b16 %v25
  %v226 = vunpack.c.l.b16 %v26
  %v227 = vunpack.c.h.b16 %v26
  %v228 = vunpack.c.l.b16 %v27
  %v229 = vunpack.c.h.b16 %v27
  %v230 = vunpack.c.l.b16 %v28
  %v231 = vunpack.c.h.b16 %v28
  %v232 = vunpack.c.l.b16 %v29
  %v233 = vunpack.c.l.b16 %v30
  %v234 = vunpack.c.h.b16 %v30
  %v235 = vunpack.c.l.b16 %v31
  %v236 = vunpack.c.h.b16 %v31
  %v237 = vunpack.c.l.b16 %v32
  %v238 = vunpack.c.h.b16 %v32
  %v239 = vunpack.c.l.b16 %v33
  %v240 = vunpack.c.h.b16 %v33
  %v241 = vunpack.c.l.b16 %v34
  %v242 = vpack.c.b16 %v215, %v206
  %v243 = vpack.c.b16 %v216, %v207
  %v244 = vpack.c.b16 %v217, %v208
  %v245 = vpack.c.b16 %v218, %v209
  %v246 = vpack.c.b16 %v219, %v210
  %v247 = vpack.c.b16 %v220, %v211
  %v248 = vpack.c.b16 %v221, %v212
  %v249 = vpack.c.b16 %v222, %v213
  %v250 = vpack.c.b16 %v223, %v214
  %v251 = vpack.c.b16 %v233, %v224
  %v252 = vpack.c.b16 %v234, %v225
  %v253 = vpack.c.b16 %v235, %v226
  %v254 = vpack.c.b16 %v236, %v227
  %v255 = vpack.c.b16 %v237, %v228
  %v256 = vpack.c.b16 %v238, %v229
  %v257 = vpack.c.b16 %v239, %v230
  %v258 = vpack.c.b16 %v240, %v231
  %v259 = vpack.c.b16 %v241, %v232
  %v422 = vunpack.c.l.b16 %v35
  %v423 = vunpack.c.l.b16 %v36
  %v424 = vunpack.c.l.b16 %v37
  %v425 = vunpack.c.l.b16 %v38
  %v426 = vunpack.c.l.b16 %v39
  %v427 = vunpack.c.l.b16 %v40
  %v428 = vunpack.c.l.b16 %v41
  %v429 = vunpack.c.l.b16 %v42
  %v430 = vunpack.c.l.b16 %v43
  %v431 = vunpack.c.l.b16 %v44
  %v432 = vunpack.c.l.b16 %v45
  %v433 = vunpack.c.l.b16 %v46
  %v434 = vunpack.c.l.b16 %v47
  %v435 = vunpack.c.l.b16 %v48
  %v436 = vunpack.c.l.b16 %v49
  %v437 = vunpack.c.l.b16 %v50
  %v438 = vunpack.c.l.b16 %v51
  %v439 = vunpack.c.l.b16 %v52
  %v440 = vunpack.c.l.b16 %v53
  %v441 = vunpack.c.l.b16 %v54
  %v442 = vunpack.c.l.b16 %v55
  %v443 = vunpack.c.l.b16 %v56
  %v444 = vunpack.c.l.b16 %v57
  %v445 = vunpack.c.l.b16 %v58
  %v446 = vunpack.c.l.b16 %v59
  %v447 = vunpack.c.l.b16 %v60
  %v448 = vunpack.c.l.b16 %v61
  %v449 = vunpack.c.l.b16 %v62
  %v450 = vunpack.c.l.b16 %v63
  %v451 = vunpack.c.l.b16 %v64
  %v452 = vunpack.c.l.b16 %v65
  %v453 = vunpack.c.l.b16 %v66
  %v454 = vunpack.c.l.b16 %v67
  %v455 = vunpack.c.l.b16 %v68
  %v456 = vunpack.c.l.b16 %v69
  %v457 = vunpack.c.l.b16 %v70
  %v458 = vunpack.c.l.b16 %v71
  %v459 = vunpack.c.l.b16 %v72
  %v460 = vunpack.c.l.b16 %v73
  %v461 = vunpack.c.l.b16 %v74
  %v462 = vunpack.c.l.b16 %v75
  %v463 = vunpack.c.l.b16 %v76
  %v464 = vunpack.c.l.b16 %v77
  %v465 = vunpack.c.l.b16 %v78
  %v466 = vunpack.c.l.b16 %v79
  %v467 = vunpack.c.l.b16 %v80
  %v468 = vunpack.c.l.b16 %v81
  %v469 = vunpack.c.l.b16 %v82
  %v470 = vunpack.c.l.b16 %v83
  %v471 = vunpack.c.l.b16 %v84
  %v472 = vunpack.c.l.b16 %v85
  %v473 = vunpack.c.l.b16 %v86
  %v474 = vunpack.c.l.b16 %v87
  %v475 = vunpack.c.l.b16 %v88
  %v476 = vunpack.c.l.b16 %v89
  %v477 = vunpack.c.l.b16 %v90
  %v478 = vunpack.c.l.b16 %v91
  %v479 = vunpack.c.l.b16 %v92
  %v480 = vunpack.c.l.b16 %v93
  %v481 = vunpack.c.l.b16 %v94
  %v482 = vunpack.c.l.b16 %v95
  %v483 = vunpack.c.l.b16 %v96
  %v484 = vunpack.c.l.b16 %v97
  %v485 = vunpack.c.l.b16 %v98
  %v486 = vunpack.c.l.b16 %v99
  %v487 = vunpack.c.l.b16 %v100
  %v488 = vunpack.c.l.b16 %v101
  %v489 = vunpack.c.l.b16 %v102
  %v490 = vunpack.c.l.b16 %v103
  %v491 = vunpack.c.l.b16 %v104
  %v492 = vunpack.c.l.b16 %v105
  %v493 = vunpack.c.l.b16 %v106
  %v494 = vunpack.c.l.b16 %v107
  %v495 = vunpack.c.l.b16 %v108
  %v496 = vunpack.c.l.b16 %v109
  %v497 = vunpack.c.l.b16 %v110
  %v498 = vunpack.c.l.b16 %v111
  %v499 = vunpack.c.l.b16 %v112
  %v500 = vunpack.c.l.b16 %v113
  %v501 = vunpack.c.l.b16 %v114
  %v502 = vunpack.c.l.b16 %v115
  %v503 = vunpack.c.l.b16 %v116
  %v504 = vunpack.c.l.b16 %v117
  %v505 = vunpack.c.l.b16 %v118
  %v506 = vunpack.c.l.b16 %v119
  %v507 = vunpack.c.l.b16 %v120
  %v508 = vunpack.c.l.b16 %v121
  %v509 = vunpack.c.l.b16 %v122
  %v510 = vunpack.c.l.b16 %v123
  %v511 = vunpack.c.l.b16 %v124
  %v512 = vunpack.c.l.b16 %v125
  %v513 = vunpack.c.l.b16 %v126
  %v514 = vunpack.c.l.b16 %v127
  %v515 = vunpack.c.l.b16 %v128
  %v516 = vunpack.c.l.b16 %v129
  %v517 = vunpack.c.l.b16 %v130
  %v518 = vunpack.c.l.b16 %v131
  %v519 = vunpack.c.l.b16 %v132
  %v520 = vunpack.c.l.b16 %v133
  %v521 = vunpack.c.l.b16 %v134
  %v522 = vunpack.c.l.b16 %v135
  %v523 = vunpack.c.l.b16 %v136
  %v524 = vunpack.c.l.b16 %v137
  %v525 = vunpack.c.l.b16 %v138
  %v526 = vunpack.c.l.b16 %v139
  %v527 = vunpack.c.l.b16 %v140
  %v528 = vunpack.c.l.b16 %v141
  %v529 = vunpack.c.l.b16 %v142
  %v530 = vunpack.c.l.b16 %v143
  %v531 = vunpack.c.l.b16 %v144
  %v532 = vunpack.c.l.b16 %v145
  %v533 = vunpack.c.l.b16 %v146
  %v534 = vunpack.c.l.b16 %v147
  %v535 = vunpack.c.l.b16 %v148
  %v536 = vunpack.c.l.b16 %v149
  %v537 = vunpack.c.l.b16 %v150
  %v538 = vunpack.c.l.b16 %v151
  %v539 = vunpack.c.l.b16 %v152
  %v540 = vunpack.c.l.b16 %v153
  %v541 = vunpack.c.l.b16 %v154
  %v542 = vunpack.c.l.b16 %v155
  %v543 = vunpack.c.l.b16 %v156
  %v544 = vunpack.c.l.b16 %v157
  %v545 = vunpack.c.l.b16 %v158
  %v546 = vunpack.c.l.b16 %v159
  %v547 = vunpack.c.l.b16 %v160
  %v548 = vunpack.c.l.b16 %v161
  %v549 = vunpack.c.l.b16 %v162
  %v550 = vunpack.c.l.b16 %v163
  %v551 = vunpack.c.l.b16 %v164
  %v552 = vunpack.c.l.b16 %v165
  %v553 = vunpack.c.l.b16 %v166
  %v554 = vunpack.c.l.b16 %v167
  %v555 = vunpack.c.l.b16 %v168
  %v556 = vunpack.c.l.b16 %v169
  %v557 = vunpack.c.l.b16 %v170
  %v558 = vunpack.c.l.b16 %v171
  %v559 = vunpack.c.l.b16 %v172
  %v560 = vunpack.c.l.b16 %v173
  %v561 = vunpack.c.l.b16 %v174
  %v562 = vunpack.c.l.b16 %v175
  %v563 = vunpack.c.l.b16 %v176
  %v564 = vunpack.c.l.b16 %v177
  %v565 = vunpack.c.l.b16 %v178
  %v566 = vpack.c.b16 %v423, %v422
  %v567 = vpack.c.b16 %v425, %v424
  %v568 = vpack.c.b16 %v427, %v426
  %v569 = vpack.c.b16 %v429, %v428
  %v570 = vpack.c.b16 %v431, %v430
  %v571 = vpack.c.b16 %v433, %v432
  %v572 = vpack.c.b16 %v435, %v434
  %v573 = vpack.c.b16 %v437, %v436
  %v574 = vpack.c.b16 %v439, %v438
  %v575 = vpack.c.b16 %v441, %v440
  %v576 = vpack.c.b16 %v443, %v442
  %v577 = vpack.c.b16 %v445, %v444
  %v578 = vpack.c.b16 %v447, %v446
  %v579 = vpack.c.b16 %v449, %v448
  %v580 = vpack.c.b16 %v451, %v450
  %v581 = vpack.c.b16 %v453, %v452
  %v582 = vpack.c.b16 %v455, %v454
  %v583 = vpack.c.b16 %v457, %v456
  %v584 = vpack.c.b16 %v459, %v458
  %v585 = vpack.c.b16 %v461, %v460
  %v586 = vpack.c.b16 %v463, %v462
  %v587 = vpack.c.b16 %v465, %v464
  %v588 = vpack.c.b16 %v467, %v466
  %v589 = vpack.c.b16 %v469, %v468
  %v590 = vpack.c.b16 %v471, %v470
  %v591 = vpack.c.b16 %v473, %v472
  %v592 = vpack.c.b16 %v475, %v474
  %v593 = vpack.c.b16 %v477, %v476
  %v594 = vpack.c.b16 %v479, %v478
  %v595 = vpack.c.b16 %v481, %v480
  %v596 = vpack.c.b16 %v483, %v482
  %v597 = vpack.c.b16 %v485, %v484
  %v598 = vpack.c.b16 %v487, %v486
  %v599 = vpack.c.b16 %v489, %v488
  %v600 = vpack.c.b16 %v491, %v490
  %v601 = vpack.c.b16 %v493, %v492
  %v602 = vpack.c.b16 %v495, %v494
  %v603 = vpack.c.b16 %v497, %v496
  %v604 = vpack.c.b16 %v499, %v498
  %v605 = vpack.c.b16 %v501, %v500
  %v606 = vpack.c.b16 %v503, %v502
  %v607 = vpack.c.b16 %v505, %v504
  %v608 = vpack.c.b16 %v507, %v506
  %v609 = vpack.c.b16 %v509, %v508
  %v610 = vpack.c.b16 %v511, %v510
  %v611 = vpack.c.b16 %v513, %v512
  %v612 = vpack.c.b16 %v515, %v514
  %v613 = vpack.c.b16 %v517, %v516
  %v614 = vpack.c.b16 %v519, %v518
  %v615 = vpack.c.b16 %v521, %v520
  %v616 = vpack.c.b16 %v523, %v522
  %v617 = vpack.c.b16 %v525, %v524
  %v618 = vpack.c.b16 %v527, %v526
  %v619 = vpack.c.b16 %v529, %v528
  %v620 = vpack.c.b16 %v531, %v530
  %v621 = vpack.c.b16 %v533, %v532
  %v622 = vpack.c.b16 %v535, %v534
  %v623 = vpack.c.b16 %v537, %v536
  %v624 = vpack.c.b16 %v539, %v538
  %v625 = vpack.c.b16 %v541, %v540
  %v626 = vpack.c.b16 %v543, %v542
  %v627 = vpack.c.b16 %v545, %v544
  %v628 = vpack.c.b16 %v547, %v546
  %v629 = vpack.c.b16 %v549, %v548
  %v630 = vpack.c.b16 %v551, %v550
  %v631 = vpack.c.b16 %v553, %v552
  %v632 = vpack.c.b16 %v555, %v554
  %v633 = vpack.c.b16 %v557, %v556
  %v634 = vpack.c.b16 %v559, %v558
  %v635 = vpack.c.b16 %v561, %v560
  %v636 = vpack.c.b16 %v563, %v562
  %v637 = vpack.c.b16 %v565, %v564
  %710 = vmatprep.subr.bf16.mxu0 0
  %711 = vmatpush1.bf16.msra.mxu0 %v573
  %712 = vmatprep.subr.bf16.mxu0 0
  %713 = vmatpush1.bf16.msra.mxu0 %v572
  %714 = vmatprep.subr.bf16.mxu0 0
  %715 = vmatpush1.bf16.msra.mxu0 %v571
  %716 = vmatprep.subr.bf16.mxu0 0
  %717 = vmatpush1.bf16.msra.mxu0 %v570
  %718 = vmatprep.subr.bf16.mxu0 0
  %719 = vmatpush1.bf16.msra.mxu0 %v569
  %720 = vmatprep.subr.bf16.mxu0 0
  %721 = vmatpush1.bf16.msra.mxu0 %v568
  %722 = vmatprep.subr.bf16.mxu0 0
  %723 = vmatpush1.bf16.msra.mxu0 %v567
  %724 = vmatprep.subr.bf16.mxu0 0
  %725 = vmatpush1.bf16.msra.mxu0 %v566
  %726 = vmatprep.subr.bf16.mxu0 0
  %727 = vmatpush2.bf16.msra.mxu0 %v581
  %728 = vmatprep.subr.bf16.mxu0 0
  %729 = vmatpush2.bf16.msra.mxu0 %v580
  %730 = vmatprep.subr.bf16.mxu0 0
  %731 = vmatpush2.bf16.msra.mxu0 %v579
  %732 = vmatprep.subr.bf16.mxu0 0
  %733 = vmatpush2.bf16.msra.mxu0 %v578
  %734 = vmatprep.subr.bf16.mxu0 0
  %735 = vmatpush2.bf16.msra.mxu0 %v577
  %736 = vmatprep.subr.bf16.mxu0 0
  %737 = vmatpush2.bf16.msra.mxu0 %v576
  %738 = vmatprep.subr.bf16.mxu0 0
  %739 = vmatpush2.bf16.msra.mxu0 %v575
  %740 = vmatprep.subr.bf16.mxu0 0
  %741 = vmatpush2.bf16.msra.mxu0 %v574
  %742 = vmatprep.mubr.bf16.mxu0 %v243
  %743 = vmatmul.mubr.bf16.gmra.mxu0 %v242
  %v744 = vpop.f32.mrf.mxu0
  %v745 = vadd.f32 %v184, %v744
  %v746 = vpop.f32.mrf.mxu0
  %v747 = vpop.f32.mrf.mxu0
  %v748 = vadd.f32 %v184, %v747
  %v749 = vpop.f32.mrf.mxu0
  %750 = vmatprep.mubr.bf16.mxu0 %v252
  %751 = vmatmul.mubr.bf16.gmra.mxu0 %v251
  %v752 = vpop.f32.mrf.mxu0
  %v753 = vadd.f32 %v184, %v752
  %v754 = vpop.f32.mrf.mxu0
  %v755 = vpop.f32.mrf.mxu0
  %v756 = vadd.f32 %v184, %v755
  %v757 = vpop.f32.mrf.mxu0
  %758 = vdwg.mxu0
  %759 = vmatprep.subr.bf16.mxu0 0
  %760 = vmatpush1.bf16.msra.mxu0 %v589
  %761 = vmatprep.subr.bf16.mxu0 0
  %762 = vmatpush1.bf16.msra.mxu0 %v588
  %763 = vmatprep.subr.bf16.mxu0 0
  %764 = vmatpush1.bf16.msra.mxu0 %v587
  %765 = vmatprep.subr.bf16.mxu0 0
  %766 = vmatpush1.bf16.msra.mxu0 %v586
  %767 = vmatprep.subr.bf16.mxu0 0
  %768 = vmatpush1.bf16.msra.mxu0 %v585
  %769 = vmatprep.subr.bf16.mxu0 0
  %770 = vmatpush1.bf16.msra.mxu0 %v584
  %771 = vmatprep.subr.bf16.mxu0 0
  %772 = vmatpush1.bf16.msra.mxu0 %v583
  %773 = vmatprep.subr.bf16.mxu0 0
  %774 = vmatpush1.bf16.msra.mxu0 %v582
  %775 = vmatprep.subr.bf16.mxu0 0
  %776 = vmatpush2.bf16.msra.mxu0 %v597
  %777 = vmatprep.subr.bf16.mxu0 0
  %778 = vmatpush2.bf16.msra.mxu0 %v596
  %779 = vmatprep.subr.bf16.mxu0 0
  %780 = vmatpush2.bf16.msra.mxu0 %v595
  %781 = vmatprep.subr.bf16.mxu0 0
  %782 = vmatpush2.bf16.msra.mxu0 %v594
  %783 = vmatprep.subr.bf16.mxu0 0
  %784 = vmatpush2.bf16.msra.mxu0 %v593
  %785 = vmatprep.subr.bf16.mxu0 0
  %786 = vmatpush2.bf16.msra.mxu0 %v592
  %787 = vmatprep.subr.bf16.mxu0 0
  %788 = vmatpush2.bf16.msra.mxu0 %v591
  %789 = vmatprep.subr.bf16.mxu0 0
  %790 = vmatpush2.bf16.msra.mxu0 %v590
  %791 = vmatprep.mubr.bf16.mxu0 %v245
  %792 = vmatmul.mubr.bf16.gmra.mxu0 %v244
  %v793 = vpop.f32.mrf.mxu0
  %v794 = vadd.f32 %v745, %v793
  %v795 = vpop.f32.mrf.mxu0
  %v796 = vpop.f32.mrf.mxu0
  %v797 = vadd.f32 %v748, %v796
  %v798 = vpop.f32.mrf.mxu0
  %799 = vmatprep.mubr.bf16.mxu0 %v254
  %800 = vmatmul.mubr.bf16.gmra.mxu0 %v253
  %v801 = vpop.f32.mrf.mxu0
  %v802 = vadd.f32 %v753, %v801
  %v803 = vpop.f32.mrf.mxu0
  %v804 = vpop.f32.mrf.mxu0
  %v805 = vadd.f32 %v756, %v804
  %v806 = vpop.f32.mrf.mxu0
  %807 = vdwg.mxu0
  %808 = vmatprep.subr.bf16.mxu0 0
  %809 = vmatpush1.bf16.msra.mxu0 %v605
  %810 = vmatprep.subr.bf16.mxu0 0
  %811 = vmatpush1.bf16.msra.mxu0 %v604
  %812 = vmatprep.subr.bf16.mxu0 0
  %813 = vmatpush1.bf16.msra.mxu0 %v603
  %814 = vmatprep.subr.bf16.mxu0 0
  %815 = vmatpush1.bf16.msra.mxu0 %v602
  %816 = vmatprep.subr.bf16.mxu0 0
  %817 = vmatpush1.bf16.msra.mxu0 %v601
  %818 = vmatprep.subr.bf16.mxu0 0
  %819 = vmatpush1.bf16.msra.mxu0 %v600
  %820 = vmatprep.subr.bf16.mxu0 0
  %821 = vmatpush1.bf16.msra.mxu0 %v599
  %822 = vmatprep.subr.bf16.mxu0 0
  %823 = vmatpush1.bf16.msra.mxu0 %v598
  %824 = vmatprep.subr.bf16.mxu0 0
  %825 = vmatpush2.bf16.msra.mxu0 %v613
  %826 = vmatprep.subr.bf16.mxu0 0
  %827 = vmatpush2.bf16.msra.mxu0 %v612
  %828 = vmatprep.subr.bf16.mxu0 0
  %829 = vmatpush2.bf16.msra.mxu0 %v611
  %830 = vmatprep.subr.bf16.mxu0 0
  %831 = vmatpush2.bf16.msra.mxu0 %v610
  %832 = vmatprep.subr.bf16.mxu0 0
  %833 = vmatpush2.bf16.msra.mxu0 %v609
  %834 = vmatprep.subr.bf16.mxu0 0
  %835 = vmatpush2.bf16.msra.mxu0 %v608
  %836 = vmatprep.subr.bf16.mxu0 0
  %837 = vmatpush2.bf16.msra.mxu0 %v607
  %838 = vmatprep.subr.bf16.mxu0 0
  %839 = vmatpush2.bf16.msra.mxu0 %v606
  %840 = vmatprep.mubr.bf16.mxu0 %v247
  %841 = vmatmul.mubr.bf16.gmra.mxu0 %v246
  %v842 = vpop.f32.mrf.mxu0
  %v843 = vadd.f32 %v794, %v842
  %v844 = vpop.f32.mrf.mxu0
  %v845 = vpop.f32.mrf.mxu0
  %v846 = vadd.f32 %v797, %v845
  %v847 = vpop.f32.mrf.mxu0
  %848 = vmatprep.mubr.bf16.mxu0 %v256
  %849 = vmatmul.mubr.bf16.gmra.mxu0 %v255
  %v850 = vpop.f32.mrf.mxu0
  %v851 = vadd.f32 %v802, %v850
  %v852 = vpop.f32.mrf.mxu0
  %v853 = vpop.f32.mrf.mxu0
  %v854 = vadd.f32 %v805, %v853
  %v855 = vpop.f32.mrf.mxu0
  %856 = vdwg.mxu0
  %857 = vmatprep.subr.bf16.mxu0 0
  %858 = vmatpush1.bf16.msra.mxu0 %v621
  %859 = vmatprep.subr.bf16.mxu0 0
  %860 = vmatpush1.bf16.msra.mxu0 %v620
  %861 = vmatprep.subr.bf16.mxu0 0
  %862 = vmatpush1.bf16.msra.mxu0 %v619
  %863 = vmatprep.subr.bf16.mxu0 0
  %864 = vmatpush1.bf16.msra.mxu0 %v618
  %865 = vmatprep.subr.bf16.mxu0 0
  %866 = vmatpush1.bf16.msra.mxu0 %v617
  %867 = vmatprep.subr.bf16.mxu0 0
  %868 = vmatpush1.bf16.msra.mxu0 %v616
  %869 = vmatprep.subr.bf16.mxu0 0
  %870 = vmatpush1.bf16.msra.mxu0 %v615
  %871 = vmatprep.subr.bf16.mxu0 0
  %872 = vmatpush1.bf16.msra.mxu0 %v614
  %873 = vmatprep.subr.bf16.mxu0 0
  %874 = vmatpush2.bf16.msra.mxu0 %v629
  %875 = vmatprep.subr.bf16.mxu0 0
  %876 = vmatpush2.bf16.msra.mxu0 %v628
  %877 = vmatprep.subr.bf16.mxu0 0
  %878 = vmatpush2.bf16.msra.mxu0 %v627
  %879 = vmatprep.subr.bf16.mxu0 0
  %880 = vmatpush2.bf16.msra.mxu0 %v626
  %881 = vmatprep.subr.bf16.mxu0 0
  %882 = vmatpush2.bf16.msra.mxu0 %v625
  %883 = vmatprep.subr.bf16.mxu0 0
  %884 = vmatpush2.bf16.msra.mxu0 %v624
  %885 = vmatprep.subr.bf16.mxu0 0
  %886 = vmatpush2.bf16.msra.mxu0 %v623
  %887 = vmatprep.subr.bf16.mxu0 0
  %888 = vmatpush2.bf16.msra.mxu0 %v622
  %889 = vmatprep.mubr.bf16.mxu0 %v249
  %890 = vmatmul.mubr.bf16.gmra.mxu0 %v248
  %v891 = vpop.f32.mrf.mxu0
  %v892 = vadd.f32 %v843, %v891
  %v893 = vpop.f32.mrf.mxu0
  %v894 = vpop.f32.mrf.mxu0
  %v895 = vadd.f32 %v846, %v894
  %v896 = vpop.f32.mrf.mxu0
  %897 = vmatprep.mubr.bf16.mxu0 %v258
  %898 = vmatmul.mubr.bf16.gmra.mxu0 %v257
  %v899 = vpop.f32.mrf.mxu0
  %v900 = vadd.f32 %v851, %v899
  %v901 = vpop.f32.mrf.mxu0
  %v902 = vpop.f32.mrf.mxu0
  %v903 = vadd.f32 %v854, %v902
  %v904 = vpop.f32.mrf.mxu0
  %905 = vdwg.mxu0
  %906 = vmatprep.subr.bf16.mxu0 0
  %907 = vmatpush1.bf16.msra.mxu0 %v637
  %908 = vmatprep.subr.bf16.mxu0 0
  %909 = vmatpush1.bf16.msra.mxu0 %v636
  %910 = vmatprep.subr.bf16.mxu0 0
  %911 = vmatpush1.bf16.msra.mxu0 %v635
  %912 = vmatprep.subr.bf16.mxu0 0
  %913 = vmatpush1.bf16.msra.mxu0 %v634
  %914 = vmatprep.subr.bf16.mxu0 0
  %915 = vmatpush1.bf16.msra.mxu0 %v633
  %916 = vmatprep.subr.bf16.mxu0 0
  %917 = vmatpush1.bf16.msra.mxu0 %v632
  %918 = vmatprep.subr.bf16.mxu0 0
  %919 = vmatpush1.bf16.msra.mxu0 %v631
  %920 = vmatprep.subr.bf16.mxu0 0
  %921 = vmatpush1.bf16.msra.mxu0 %v630
  %922 = vmatprep.subr.bf16.mxu0 0
  %923 = vmatpush2.bf16.msra.mxu0 0
  %924 = vmatprep.subr.bf16.mxu0 0
  %925 = vmatpush2.bf16.msra.mxu0 0
  %926 = vmatprep.subr.bf16.mxu0 0
  %927 = vmatpush2.bf16.msra.mxu0 0
  %928 = vmatprep.subr.bf16.mxu0 0
  %929 = vmatpush2.bf16.msra.mxu0 0
  %930 = vmatprep.subr.bf16.mxu0 0
  %931 = vmatpush2.bf16.msra.mxu0 0
  %932 = vmatprep.subr.bf16.mxu0 0
  %933 = vmatpush2.bf16.msra.mxu0 0
  %934 = vmatprep.subr.bf16.mxu0 0
  %935 = vmatpush2.bf16.msra.mxu0 0
  %936 = vmatprep.subr.bf16.mxu0 0
  %937 = vmatpush2.bf16.msra.mxu0 0
  %938 = vmatprep.mubr.bf16.mxu0 0
  %939 = vmatmul.mubr.bf16.gmra.mxu0 %v250
  %v940 = vpop.f32.mrf.mxu0
  %v941 = vadd.f32 %v892, %v940
  %v942 = vpop.f32.mrf.mxu0
  %v943 = vpop.f32.mrf.mxu0
  %v944 = vadd.f32 %v895, %v943
  %v945 = vpop.f32.mrf.mxu0
  %946 = vmatprep.mubr.bf16.mxu0 0
  %947 = vmatmul.mubr.bf16.gmra.mxu0 %v259
  %v948 = vpop.f32.mrf.mxu0
  %v949 = vadd.f32 %v900, %v948
  %v950 = vpop.f32.mrf.mxu0
  %v951 = vpop.f32.mrf.mxu0
  %v952 = vadd.f32 %v903, %v951
  %v953 = vpop.f32.mrf.mxu0
  %954 = vdwg.mxu0
  %v955 = vmax.f32 %v941, 0.0
  %v956 = vmax.f32 %v944, 0.0
  %v957 = vmax.f32 %v949, 0.0
  %v958 = vmax.f32 %v952, 0.0
  %v959 = vpack.c.bf16 %v956, %v955
  %v960 = vpack.c.bf16 %v958, %v957
  %v963 = vunpack.c.l.b16 %v959
  %v964 = vunpack.c.h.b16 %v959
  %v965 = vunpack.c.l.b16 %v960
  %v966 = vunpack.c.h.b16 %v960
  %v967 = vpack.c.b16 %v963, %v963
  %v968 = vpack.c.b16 %v964, %v964
  %v969 = vpack.c.b16 %v965, %v965
  %v970 = vpack.c.b16 %v966, %v966
  %975 = vst [vmem:[%s3] sm:$0xf] %v967
  %976 = vst [vmem:[%s3 + $0x4] sm:$0xf] %v968
  %977 = vst [vmem:[%s3 + $0x8] sm:$0xf] %v969
  %978 = vst [vmem:[%s3 + $0xc] sm:$0xf] %v970
  // Predicated region
  $region14: #{_forward_impl.25} parent=0 // pred_check
    _
  $region15: #{_forward_impl.25} parent=0 // pred_check_branch
    %980 = sbr.rel (0) target = $region17
  $region16: #{_forward_impl.25} parent=0 // pred_region
    _
  $region17: #{_forward_impl.25} parent=0 // pred_fallthru
    _
  // Predicated region
  $region18: #{_forward_impl.25} parent=0 // pred_check
    _
  $region19: #{_forward_impl.25} parent=0 // pred_check_branch
    %982 = sbr.rel (0) target = $region21
  $region20: #{_forward_impl.25} parent=0 // pred_region
    _
  $region21: #{_forward_impl.25} parent=0 // pred_fallthru
    _

// kernel: _forward_impl.28
$region0: #{_forward_impl.28}
  #allocation0 [shape = 'u32[]', space=smem, size = 0x4, offset = 0x4, fixed_abs, tag = 'smem constant byte address 0x4 - core index']
  #allocation1 [shape = 'u32[144,128]{1,0:T(1,128)}', space=vmem, size = 0x12000, scoped, tag = 'internal scratch']
  %s0 = inlined_call_operand.vmem [shape: bf16[16,128], index: 0, kind: input, shape index: {}]
  %s1 = inlined_call_operand.vmem [shape: bf16[128,128], index: 1, kind: input, shape index: {}]
  %s2 = inlined_call_operand.vmem [shape: f32[1,128], index: 2, kind: input, shape index: {}]
  %s3 = inlined_call_operand.vmem [shape: bf16[16,128], index: 3, kind: output, shape index: {}]
  %s4 = sld [smem:[#allocation0]]
  $region22: #{_forward_impl.28} parent=0
    _
  %s6 = ssub.s32 1, %s4
  %s7 = scalar_select 0, %s6, %s4
  // Predicated region
  $region2: #{_forward_impl.28} parent=0 // pred_check
    _
  $region3: #{_forward_impl.28} parent=0 // pred_check_branch
    %9 = sbr.rel (0) target = $region5
  $region4: #{_forward_impl.28} parent=0 // pred_region
    _
  $region5: #{_forward_impl.28} parent=0 // pred_fallthru
    _
  // Predicated region
  $region6: #{_forward_impl.28} parent=0 // pred_check
    _
  $region7: #{_forward_impl.28} parent=0 // pred_check_branch
    %11 = sbr.rel (0) target = $region9
  $region8: #{_forward_impl.28} parent=0 // pred_region
    _
  $region9: #{_forward_impl.28} parent=0 // pred_fallthru
    _
  // Predicated region
  $region10: #{_forward_impl.28} parent=0 // pred_check
    _
  $region11: #{_forward_impl.28} parent=0 // pred_check_branch
    %13 = sbr.rel (0) target = $region13
  $region12: #{_forward_impl.28} parent=0 // pred_region
    _
  $region13: #{_forward_impl.28} parent=0 // pred_fallthru
    _
  %v15 = vld [vmem:[%s0] sm:$0xf]
  %v16 = vld [vmem:[%s0 + $0x4] sm:$0xf]
  %v17 = vld [vmem:[%s1] sm:$0xf]
  %v18 = vld [vmem:[%s1 + $0x4] sm:$0xf]
  %v19 = vld [vmem:[%s1 + $0x8] sm:$0xf]
  %v20 = vld [vmem:[%s1 + $0xc] sm:$0xf]
  %v21 = vld [vmem:[%s1 + $0x10] sm:$0xf]
  %v22 = vld [vmem:[%s1 + $0x14] sm:$0xf]
  %v23 = vld [vmem:[%s1 + $0x18] sm:$0xf]
  %v24 = vld [vmem:[%s1 + $0x1c] sm:$0xf]
  %v25 = vld [vmem:[%s1 + $0x20] sm:$0xf]
  %v26 = vld [vmem:[%s1 + $0x24] sm:$0xf]
  %v27 = vld [vmem:[%s1 + $0x28] sm:$0xf]
  %v28 = vld [vmem:[%s1 + $0x2c] sm:$0xf]
  %v29 = vld [vmem:[%s1 + $0x30] sm:$0xf]
  %v30 = vld [vmem:[%s1 + $0x34] sm:$0xf]
  %v31 = vld [vmem:[%s1 + $0x38] sm:$0xf]
  %v32 = vld [vmem:[%s1 + $0x3c] sm:$0xf]
  %v33 = vld [vmem:[%s2] sm:$0x1]
  %v35 = vlaneseq
  %v36 = vshrl.u32 %v35, 7
  %v37 = vsub.s32 0, %v36
  %v38 = vrot.slane %v33, %v37
  %v42 = vunpack.c.l.b16 %v15
  %v43 = vunpack.c.l.b16 %v16
  %v44 = vpack.c.b16 %v43, %v42
  %v62 = vunpack.c.l.b16 %v17
  %v63 = vunpack.c.l.b16 %v18
  %v64 = vunpack.c.l.b16 %v19
  %v65 = vunpack.c.l.b16 %v20
  %v66 = vunpack.c.l.b16 %v21
  %v67 = vunpack.c.l.b16 %v22
  %v68 = vunpack.c.l.b16 %v23
  %v69 = vunpack.c.l.b16 %v24
  %v70 = vunpack.c.l.b16 %v25
  %v71 = vunpack.c.l.b16 %v26
  %v72 = vunpack.c.l.b16 %v27
  %v73 = vunpack.c.l.b16 %v28
  %v74 = vunpack.c.l.b16 %v29
  %v75 = vunpack.c.l.b16 %v30
  %v76 = vunpack.c.l.b16 %v31
  %v77 = vunpack.c.l.b16 %v32
  %v78 = vpack.c.b16 %v63, %v62
  %v79 = vpack.c.b16 %v65, %v64
  %v80 = vpack.c.b16 %v67, %v66
  %v81 = vpack.c.b16 %v69, %v68
  %v82 = vpack.c.b16 %v71, %v70
  %v83 = vpack.c.b16 %v73, %v72
  %v84 = vpack.c.b16 %v75, %v74
  %v85 = vpack.c.b16 %v77, %v76
  %94 = vmatprep.subr.bf16.mxu0 0
  %95 = vmatpush1.bf16.msra.mxu0 %v85
  %96 = vmatprep.subr.bf16.mxu0 0
  %97 = vmatpush1.bf16.msra.mxu0 %v84
  %98 = vmatprep.subr.bf16.mxu0 0
  %99 = vmatpush1.bf16.msra.mxu0 %v83
  %100 = vmatprep.subr.bf16.mxu0 0
  %101 = vmatpush1.bf16.msra.mxu0 %v82
  %102 = vmatprep.subr.bf16.mxu0 0
  %103 = vmatpush1.bf16.msra.mxu0 %v81
  %104 = vmatprep.subr.bf16.mxu0 0
  %105 = vmatpush1.bf16.msra.mxu0 %v80
  %106 = vmatprep.subr.bf16.mxu0 0
  %107 = vmatpush1.bf16.msra.mxu0 %v79
  %108 = vmatprep.subr.bf16.mxu0 0
  %109 = vmatpush1.bf16.msra.mxu0 %v78
  %110 = vmatprep.subr.bf16.mxu0 0
  %111 = vmatpush2.bf16.msra.mxu0 0
  %112 = vmatprep.subr.bf16.mxu0 0
  %113 = vmatpush2.bf16.msra.mxu0 0
  %114 = vmatprep.subr.bf16.mxu0 0
  %115 = vmatpush2.bf16.msra.mxu0 0
  %116 = vmatprep.subr.bf16.mxu0 0
  %117 = vmatpush2.bf16.msra.mxu0 0
  %118 = vmatprep.subr.bf16.mxu0 0
  %119 = vmatpush2.bf16.msra.mxu0 0
  %120 = vmatprep.subr.bf16.mxu0 0
  %121 = vmatpush2.bf16.msra.mxu0 0
  %122 = vmatprep.subr.bf16.mxu0 0
  %123 = vmatpush2.bf16.msra.mxu0 0
  %124 = vmatprep.subr.bf16.mxu0 0
  %125 = vmatpush2.bf16.msra.mxu0 0
  %126 = vmatprep.mubr.bf16.mxu0 0
  %127 = vmatmul.mubr.bf16.gmra.mxu0 %v44
  %v128 = vpop.f32.mrf.mxu0
  %v129 = vadd.f32 %v38, %v128
  %v130 = vpop.f32.mrf.mxu0
  %v131 = vpop.f32.mrf.mxu0
  %v132 = vadd.f32 %v38, %v131
  %v133 = vpop.f32.mrf.mxu0
  %134 = vdwg.mxu0
  %v135 = vmax.f32 %v129, 0.0
  %v136 = vmax.f32 %v132, 0.0
  %v137 = vpack.c.bf16 %v136, %v135
  %v139 = vunpack.c.l.b16 %v137
  %v140 = vunpack.c.h.b16 %v137
  %v141 = vpack.c.b16 %v139, %v139
  %v142 = vpack.c.b16 %v140, %v140
  %145 = vst [vmem:[%s3] sm:$0xf] %v141
  %146 = vst [vmem:[%s3 + $0x4] sm:$0xf] %v142
  // Predicated region
  $region14: #{_forward_impl.28} parent=0 // pred_check
    _
  $region15: #{_forward_impl.28} parent=0 // pred_check_branch
    %148 = sbr.rel (0) target = $region17
  $region16: #{_forward_impl.28} parent=0 // pred_region
    _
  $region17: #{_forward_impl.28} parent=0 // pred_fallthru
    _
  // Predicated region
  $region18: #{_forward_impl.28} parent=0 // pred_check
    _
  $region19: #{_forward_impl.28} parent=0 // pred_check_branch
    %150 = sbr.rel (0) target = $region21
  $region20: #{_forward_impl.28} parent=0 // pred_region
    _
  $region21: #{_forward_impl.28} parent=0 // pred_fallthru
    _

// kernel: _forward_impl.27
$region0: #{_forward_impl.27}
  #allocation0 [shape = 'u32[]', space=smem, size = 0x4, offset = 0x4, fixed_abs, tag = 'smem constant byte address 0x4 - core index']
  #allocation1 [shape = 'u32[144,128]{1,0:T(1,128)}', space=vmem, size = 0x12000, scoped, tag = 'internal scratch']
  %s0 = inlined_call_operand.vmem [shape: bf16[16,384], index: 0, kind: input, shape index: {}]
  %s1 = inlined_call_operand.vmem [shape: bf16[384,128], index: 1, kind: input, shape index: {}]
  %s2 = inlined_call_operand.vmem [shape: f32[1,128], index: 2, kind: input, shape index: {}]
  %s3 = inlined_call_operand.vmem [shape: bf16[16,128], index: 3, kind: output, shape index: {}]
  %s4 = sld [smem:[#allocation0]]
  $region22: #{_forward_impl.27} parent=0
    _
  %s6 = ssub.s32 1, %s4
  %s7 = scalar_select 0, %s6, %s4
  // Predicated region
  $region2: #{_forward_impl.27} parent=0 // pred_check
    _
  $region3: #{_forward_impl.27} parent=0 // pred_check_branch
    %9 = sbr.rel (0) target = $region5
  $region4: #{_forward_impl.27} parent=0 // pred_region
    _
  $region5: #{_forward_impl.27} parent=0 // pred_fallthru
    _
  // Predicated region
  $region6: #{_forward_impl.27} parent=0 // pred_check
    _
  $region7: #{_forward_impl.27} parent=0 // pred_check_branch
    %11 = sbr.rel (0) target = $region9
  $region8: #{_forward_impl.27} parent=0 // pred_region
    _
  $region9: #{_forward_impl.27} parent=0 // pred_fallthru
    _
  // Predicated region
  $region10: #{_forward_impl.27} parent=0 // pred_check
    _
  $region11: #{_forward_impl.27} parent=0 // pred_check_branch
    %13 = sbr.rel (0) target = $region13
  $region12: #{_forward_impl.27} parent=0 // pred_region
    _
  $region13: #{_forward_impl.27} parent=0 // pred_fallthru
    _
  %v15 = vld [vmem:[%s0] sm:$0xff]
  %v16 = vld [vmem:[%s0 + $0x8] sm:$0xf]
  %v17 = vld [vmem:[%s0 + $0xc] sm:$0xff]
  %v18 = vld [vmem:[%s0 + $0x14] sm:$0xf]
  %v19 = vld [vmem:[%s1] sm:$0xf]
  %v20 = vld [vmem:[%s1 + $0x4] sm:$0xf]
  %v21 = vld [vmem:[%s1 + $0x8] sm:$0xf]
  %v22 = vld [vmem:[%s1 + $0xc] sm:$0xf]
  %v23 = vld [vmem:[%s1 + $0x10] sm:$0xf]
  %v24 = vld [vmem:[%s1 + $0x14] sm:$0xf]
  %v25 = vld [vmem:[%s1 + $0x18] sm:$0xf]
  %v26 = vld [vmem:[%s1 + $0x1c] sm:$0xf]
  %v27 = vld [vmem:[%s1 + $0x20] sm:$0xf]
  %v28 = vld [vmem:[%s1 + $0x24] sm:$0xf]
  %v29 = vld [vmem:[%s1 + $0x28] sm:$0xf]
  %v30 = vld [vmem:[%s1 + $0x2c] sm:$0xf]
  %v31 = vld [vmem:[%s1 + $0x30] sm:$0xf]
  %v32 = vld [vmem:[%s1 + $0x34] sm:$0xf]
  %v33 = vld [vmem:[%s1 + $0x38] sm:$0xf]
  %v34 = vld [vmem:[%s1 + $0x3c] sm:$0xf]
  %v35 = vld [vmem:[%s1 + $0x40] sm:$0xf]
  %v36 = vld [vmem:[%s1 + $0x44] sm:$0xf]
  %v37 = vld [vmem:[%s1 + $0x48] sm:$0xf]
  %v38 = vld [vmem:[%s1 + $0x4c] sm:$0xf]
  %v39 = vld [vmem:[%s1 + $0x50] sm:$0xf]
  %v40 = vld [vmem:[%s1 + $0x54] sm:$0xf]
  %v41 = vld [vmem:[%s1 + $0x58] sm:$0xf]
  %v42 = vld [vmem:[%s1 + $0x5c] sm:$0xf]
  %v43 = vld [vmem:[%s1 + $0x60] sm:$0xf]
  %v44 = vld [vmem:[%s1 + $0x64] sm:$0xf]
  %v45 = vld [vmem:[%s1 + $0x68] sm:$0xf]
  %v46 = vld [vmem:[%s1 + $0x6c] sm:$0xf]
  %v47 = vld [vmem:[%s1 + $0x70] sm:$0xf]
  %v48 = vld [vmem:[%s1 + $0x74] sm:$0xf]
  %v49 = vld [vmem:[%s1 + $0x78] sm:$0xf]
  %v50 = vld [vmem:[%s1 + $0x7c] sm:$0xf]
  %v51 = vld [vmem:[%s1 + $0x80] sm:$0xf]
  %v52 = vld [vmem:[%s1 + $0x84] sm:$0xf]
  %v53 = vld [vmem:[%s1 + $0x88] sm:$0xf]
  %v54 = vld [vmem:[%s1 + $0x8c] sm:$0xf]
  %v55 = vld [vmem:[%s1 + $0x90] sm:$0xf]
  %v56 = vld [vmem:[%s1 + $0x94] sm:$0xf]
  %v57 = vld [vmem:[%s1 + $0x98] sm:$0xf]
  %v58 = vld [vmem:[%s1 + $0x9c] sm:$0xf]
  %v59 = vld [vmem:[%s1 + $0xa0] sm:$0xf]
  %v60 = vld [vmem:[%s1 + $0xa4] sm:$0xf]
  %v61 = vld [vmem:[%s1 + $0xa8] sm:$0xf]
  %v62 = vld [vmem:[%s1 + $0xac] sm:$0xf]
  %v63 = vld [vmem:[%s1 + $0xb0] sm:$0xf]
  %v64 = vld [vmem:[%s1 + $0xb4] sm:$0xf]
  %v65 = vld [vmem:[%s1 + $0xb8] sm:$0xf]
  %v66 = vld [vmem:[%s1 + $0xbc] sm:$0xf]
  %v67 = vld [vmem:[%s2] sm:$0x1]
  %v69 = vlaneseq
  %v70 = vshrl.u32 %v69, 7
  %v71 = vsub.s32 0, %v70
  %v72 = vrot.slane %v67, %v71
  %v78 = vunpack.c.l.b16 %v15
  %v79 = vunpack.c.h.b16 %v15
  %v80 = vunpack.c.l.b16 %v16
  %v81 = vunpack.c.l.b16 %v17
  %v82 = vunpack.c.h.b16 %v17
  %v83 = vunpack.c.l.b16 %v18
  %v84 = vpack.c.b16 %v81, %v78
  %v85 = vpack.c.b16 %v82, %v79
  %v86 = vpack.c.b16 %v83, %v80
  %v138 = vunpack.c.l.b16 %v19
  %v139 = vunpack.c.l.b16 %v20
  %v140 = vunpack.c.l.b16 %v21
  %v141 = vunpack.c.l.b16 %v22
  %v142 = vunpack.c.l.b16 %v23
  %v143 = vunpack.c.l.b16 %v24
  %v144 = vunpack.c.l.b16 %v25
  %v145 = vunpack.c.l.b16 %v26
  %v146 = vunpack.c.l.b16 %v27
  %v147 = vunpack.c.l.b16 %v28
  %v148 = vunpack.c.l.b16 %v29
  %v149 = vunpack.c.l.b16 %v30
  %v150 = vunpack.c.l.b16 %v31
  %v151 = vunpack.c.l.b16 %v32
  %v152 = vunpack.c.l.b16 %v33
  %v153 = vunpack.c.l.b16 %v34
  %v154 = vunpack.c.l.b16 %v35
  %v155 = vunpack.c.l.b16 %v36
  %v156 = vunpack.c.l.b16 %v37
  %v157 = vunpack.c.l.b16 %v38
  %v158 = vunpack.c.l.b16 %v39
  %v159 = vunpack.c.l.b16 %v40
  %v160 = vunpack.c.l.b16 %v41
  %v161 = vunpack.c.l.b16 %v42
  %v162 = vunpack.c.l.b16 %v43
  %v163 = vunpack.c.l.b16 %v44
  %v164 = vunpack.c.l.b16 %v45
  %v165 = vunpack.c.l.b16 %v46
  %v166 = vunpack.c.l.b16 %v47
  %v167 = vunpack.c.l.b16 %v48
  %v168 = vunpack.c.l.b16 %v49
  %v169 = vunpack.c.l.b16 %v50
  %v170 = vunpack.c.l.b16 %v51
  %v171 = vunpack.c.l.b16 %v52
  %v172 = vunpack.c.l.b16 %v53
  %v173 = vunpack.c.l.b16 %v54
  %v174 = vunpack.c.l.b16 %v55
  %v175 = vunpack.c.l.b16 %v56
  %v176 = vunpack.c.l.b16 %v57
  %v177 = vunpack.c.l.b16 %v58
  %v178 = vunpack.c.l.b16 %v59
  %v179 = vunpack.c.l.b16 %v60
  %v180 = vunpack.c.l.b16 %v61
  %v181 = vunpack.c.l.b16 %v62
  %v182 = vunpack.c.l.b16 %v63
  %v183 = vunpack.c.l.b16 %v64
  %v184 = vunpack.c.l.b16 %v65
  %v185 = vunpack.c.l.b16 %v66
  %v186 = vpack.c.b16 %v139, %v138
  %v187 = vpack.c.b16 %v141, %v140
  %v188 = vpack.c.b16 %v143, %v142
  %v189 = vpack.c.b16 %v145, %v144
  %v190 = vpack.c.b16 %v147, %v146
  %v191 = vpack.c.b16 %v149, %v148
  %v192 = vpack.c.b16 %v151, %v150
  %v193 = vpack.c.b16 %v153, %v152
  %v194 = vpack.c.b16 %v155, %v154
  %v195 = vpack.c.b16 %v157, %v156
  %v196 = vpack.c.b16 %v159, %v158
  %v197 = vpack.c.b16 %v161, %v160
  %v198 = vpack.c.b16 %v163, %v162
  %v199 = vpack.c.b16 %v165, %v164
  %v200 = vpack.c.b16 %v167, %v166
  %v201 = vpack.c.b16 %v169, %v168
  %v202 = vpack.c.b16 %v171, %v170
  %v203 = vpack.c.b16 %v173, %v172
  %v204 = vpack.c.b16 %v175, %v174
  %v205 = vpack.c.b16 %v177, %v176
  %v206 = vpack.c.b16 %v179, %v178
  %v207 = vpack.c.b16 %v181, %v180
  %v208 = vpack.c.b16 %v183, %v182
  %v209 = vpack.c.b16 %v185, %v184
  %234 = vmatprep.subr.bf16.mxu0 0
  %235 = vmatpush1.bf16.msra.mxu0 %v193
  %236 = vmatprep.subr.bf16.mxu0 0
  %237 = vmatpush1.bf16.msra.mxu0 %v192
  %238 = vmatprep.subr.bf16.mxu0 0
  %239 = vmatpush1.bf16.msra.mxu0 %v191
  %240 = vmatprep.subr.bf16.mxu0 0
  %241 = vmatpush1.bf16.msra.mxu0 %v190
  %242 = vmatprep.subr.bf16.mxu0 0
  %243 = vmatpush1.bf16.msra.mxu0 %v189
  %244 = vmatprep.subr.bf16.mxu0 0
  %245 = vmatpush1.bf16.msra.mxu0 %v188
  %246 = vmatprep.subr.bf16.mxu0 0
  %247 = vmatpush1.bf16.msra.mxu0 %v187
  %248 = vmatprep.subr.bf16.mxu0 0
  %249 = vmatpush1.bf16.msra.mxu0 %v186
  %250 = vmatprep.subr.bf16.mxu0 0
  %251 = vmatpush2.bf16.msra.mxu0 %v201
  %252 = vmatprep.subr.bf16.mxu0 0
  %253 = vmatpush2.bf16.msra.mxu0 %v200
  %254 = vmatprep.subr.bf16.mxu0 0
  %255 = vmatpush2.bf16.msra.mxu0 %v199
  %256 = vmatprep.subr.bf16.mxu0 0
  %257 = vmatpush2.bf16.msra.mxu0 %v198
  %258 = vmatprep.subr.bf16.mxu0 0
  %259 = vmatpush2.bf16.msra.mxu0 %v197
  %260 = vmatprep.subr.bf16.mxu0 0
  %261 = vmatpush2.bf16.msra.mxu0 %v196
  %262 = vmatprep.subr.bf16.mxu0 0
  %263 = vmatpush2.bf16.msra.mxu0 %v195
  %264 = vmatprep.subr.bf16.mxu0 0
  %265 = vmatpush2.bf16.msra.mxu0 %v194
  %266 = vmatprep.mubr.bf16.mxu0 %v85
  %267 = vmatmul.mubr.bf16.gmra.mxu0 %v84
  %v268 = vpop.f32.mrf.mxu0
  %v269 = vadd.f32 %v72, %v268
  %v270 = vpop.f32.mrf.mxu0
  %v271 = vpop.f32.mrf.mxu0
  %v272 = vadd.f32 %v72, %v271
  %v273 = vpop.f32.mrf.mxu0
  %274 = vdwg.mxu0
  %275 = vmatprep.subr.bf16.mxu0 0
  %276 = vmatpush1.bf16.msra.mxu0 %v209
  %277 = vmatprep.subr.bf16.mxu0 0
  %278 = vmatpush1.bf16.msra.mxu0 %v208
  %279 = vmatprep.subr.bf16.mxu0 0
  %280 = vmatpush1.bf16.msra.mxu0 %v207
  %281 = vmatprep.subr.bf16.mxu0 0
  %282 = vmatpush1.bf16.msra.mxu0 %v206
  %283 = vmatprep.subr.bf16.mxu0 0
  %284 = vmatpush1.bf16.msra.mxu0 %v205
  %285 = vmatprep.subr.bf16.mxu0 0
  %286 = vmatpush1.bf16.msra.mxu0 %v204
  %287 = vmatprep.subr.bf16.mxu0 0
  %288 = vmatpush1.bf16.msra.mxu0 %v203
  %289 = vmatprep.subr.bf16.mxu0 0
  %290 = vmatpush1.bf16.msra.mxu0 %v202
  %291 = vmatprep.subr.bf16.mxu0 0
  %292 = vmatpush2.bf16.msra.mxu0 0
  %293 = vmatprep.subr.bf16.mxu0 0
  %294 = vmatpush2.bf16.msra.mxu0 0
  %295 = vmatprep.subr.bf16.mxu0 0
  %296 = vmatpush2.bf16.msra.mxu0 0
  %297 = vmatprep.subr.bf16.mxu0 0
  %298 = vmatpush2.bf16.msra.mxu0 0
  %299 = vmatprep.subr.bf16.mxu0 0
  %300 = vmatpush2.bf16.msra.mxu0 0
  %301 = vmatprep.subr.bf16.mxu0 0
  %302 = vmatpush2.bf16.msra.mxu0 0
  %303 = vmatprep.subr.bf16.mxu0 0
  %304 = vmatpush2.bf16.msra.mxu0 0
  %305 = vmatprep.subr.bf16.mxu0 0
  %306 = vmatpush2.bf16.msra.mxu0 0
  %307 = vmatprep.mubr.bf16.mxu0 0
  %308 = vmatmul.mubr.bf16.gmra.mxu0 %v86
  %v309 = vpop.f32.mrf.mxu0
  %v310 = vadd.f32 %v269, %v309
  %v311 = vpop.f32.mrf.mxu0
  %v312 = vpop.f32.mrf.mxu0
  %v313 = vadd.f32 %v272, %v312
  %v314 = vpop.f32.mrf.mxu0
  %315 = vdwg.mxu0
  %v316 = vmax.f32 %v310, 0.0
  %v317 = vmax.f32 %v313, 0.0
  %v318 = vpack.c.bf16 %v317, %v316
  %v320 = vunpack.c.l.b16 %v318
  %v321 = vunpack.c.h.b16 %v318
  %v322 = vpack.c.b16 %v320, %v320
  %v323 = vpack.c.b16 %v321, %v321
  %326 = vst [vmem:[%s3] sm:$0xf] %v322
  %327 = vst [vmem:[%s3 + $0x4] sm:$0xf] %v323
  // Predicated region
  $region14: #{_forward_impl.27} parent=0 // pred_check
    _
  $region15: #{_forward_impl.27} parent=0 // pred_check_branch
    %329 = sbr.rel (0) target = $region17
  $region16: #{_forward_impl.27} parent=0 // pred_region
    _
  $region17: #{_forward_impl.27} parent=0 // pred_fallthru
    _
  // Predicated region
  $region18: #{_forward_impl.27} parent=0 // pred_check
    _
  $region19: #{_forward_impl.27} parent=0 // pred_check_branch
    %331 = sbr.rel (0) target = $region21
  $region20: #{_forward_impl.27} parent=0 // pred_region
    _
  $region21: #{_forward_impl.27} parent=0 // pred_fallthru
    _

// kernel: _forward_impl.33
$region0: #{_forward_impl.33}
  #allocation0 [shape = 'u32[]', space=smem, size = 0x4, offset = 0x4, fixed_abs, tag = 'smem constant byte address 0x4 - core index']
  #allocation1 [shape = 'u32[144,128]{1,0:T(1,128)}', space=vmem, size = 0x12000, scoped, tag = 'internal scratch']
  %s0 = inlined_call_operand.vmem [shape: bf16[16,640], index: 0, kind: input, shape index: {}]
  %s1 = inlined_call_operand.vmem [shape: bf16[640,128], index: 1, kind: input, shape index: {}]
  %s2 = inlined_call_operand.vmem [shape: f32[1,128], index: 2, kind: input, shape index: {}]
  %s3 = inlined_call_operand.vmem [shape: f32[16,128], index: 3, kind: output, shape index: {}]
  %s4 = sld [smem:[#allocation0]]
  $region22: #{_forward_impl.33} parent=0
    _
  %s6 = ssub.s32 1, %s4
  %s7 = scalar_select 0, %s6, %s4
  // Predicated region
  $region2: #{_forward_impl.33} parent=0 // pred_check
    _
  $region3: #{_forward_impl.33} parent=0 // pred_check_branch
    %9 = sbr.rel (0) target = $region5
  $region4: #{_forward_impl.33} parent=0 // pred_region
    _
  $region5: #{_forward_impl.33} parent=0 // pred_fallthru
    _
  // Predicated region
  $region6: #{_forward_impl.33} parent=0 // pred_check
    _
  $region7: #{_forward_impl.33} parent=0 // pred_check_branch
    %11 = sbr.rel (0) target = $region9
  $region8: #{_forward_impl.33} parent=0 // pred_region
    _
  $region9: #{_forward_impl.33} parent=0 // pred_fallthru
    _
  // Predicated region
  $region10: #{_forward_impl.33} parent=0 // pred_check
    _
  $region11: #{_forward_impl.33} parent=0 // pred_check_branch
    %13 = sbr.rel (0) target = $region13
  $region12: #{_forward_impl.33} parent=0 // pred_region
    _
  $region13: #{_forward_impl.33} parent=0 // pred_fallthru
    _
  %v15 = vld [vmem:[%s0] sm:$0xff]
  %v16 = vld [vmem:[%s0 + $0x8] sm:$0xff]
  %v17 = vld [vmem:[%s0 + $0x10] sm:$0xf]
  %v18 = vld [vmem:[%s0 + $0x14] sm:$0xff]
  %v19 = vld [vmem:[%s0 + $0x1c] sm:$0xff]
  %v20 = vld [vmem:[%s0 + $0x24] sm:$0xf]
  %v21 = vld [vmem:[%s1] sm:$0xf]
  %v22 = vld [vmem:[%s1 + $0x4] sm:$0xf]
  %v23 = vld [vmem:[%s1 + $0x8] sm:$0xf]
  %v24 = vld [vmem:[%s1 + $0xc] sm:$0xf]
  %v25 = vld [vmem:[%s1 + $0x10] sm:$0xf]
  %v26 = vld [vmem:[%s1 + $0x14] sm:$0xf]
  %v27 = vld [vmem:[%s1 + $0x18] sm:$0xf]
  %v28 = vld [vmem:[%s1 + $0x1c] sm:$0xf]
  %v29 = vld [vmem:[%s1 + $0x20] sm:$0xf]
  %v30 = vld [vmem:[%s1 + $0x24] sm:$0xf]
  %v31 = vld [vmem:[%s1 + $0x28] sm:$0xf]
  %v32 = vld [vmem:[%s1 + $0x2c] sm:$0xf]
  %v33 = vld [vmem:[%s1 + $0x30] sm:$0xf]
  %v34 = vld [vmem:[%s1 + $0x34] sm:$0xf]
  %v35 = vld [vmem:[%s1 + $0x38] sm:$0xf]
  %v36 = vld [vmem:[%s1 + $0x3c] sm:$0xf]
  %v37 = vld [vmem:[%s1 + $0x40] sm:$0xf]
  %v38 = vld [vmem:[%s1 + $0x44] sm:$0xf]
  %v39 = vld [vmem:[%s1 + $0x48] sm:$0xf]
  %v40 = vld [vmem:[%s1 + $0x4c] sm:$0xf]
  %v41 = vld [vmem:[%s1 + $0x50] sm:$0xf]
  %v42 = vld [vmem:[%s1 + $0x54] sm:$0xf]
  %v43 = vld [vmem:[%s1 + $0x58] sm:$0xf]
  %v44 = vld [vmem:[%s1 + $0x5c] sm:$0xf]
  %v45 = vld [vmem:[%s1 + $0x60] sm:$0xf]
  %v46 = vld [vmem:[%s1 + $0x64] sm:$0xf]
  %v47 = vld [vmem:[%s1 + $0x68] sm:$0xf]
  %v48 = vld [vmem:[%s1 + $0x6c] sm:$0xf]
  %v49 = vld [vmem:[%s1 + $0x70] sm:$0xf]
  %v50 = vld [vmem:[%s1 + $0x74] sm:$0xf]
  %v51 = vld [vmem:[%s1 + $0x78] sm:$0xf]
  %v52 = vld [vmem:[%s1 + $0x7c] sm:$0xf]
  %v53 = vld [vmem:[%s1 + $0x80] sm:$0xf]
  %v54 = vld [vmem:[%s1 + $0x84] sm:$0xf]
  %v55 = vld [vmem:[%s1 + $0x88] sm:$0xf]
  %v56 = vld [vmem:[%s1 + $0x8c] sm:$0xf]
  %v57 = vld [vmem:[%s1 + $0x90] sm:$0xf]
  %v58 = vld [vmem:[%s1 + $0x94] sm:$0xf]
  %v59 = vld [vmem:[%s1 + $0x98] sm:$0xf]
  %v60 = vld [vmem:[%s1 + $0x9c] sm:$0xf]
  %v61 = vld [vmem:[%s1 + $0xa0] sm:$0xf]
  %v62 = vld [vmem:[%s1 + $0xa4] sm:$0xf]
  %v63 = vld [vmem:[%s1 + $0xa8] sm:$0xf]
  %v64 = vld [vmem:[%s1 + $0xac] sm:$0xf]
  %v65 = vld [vmem:[%s1 + $0xb0] sm:$0xf]
  %v66 = vld [vmem:[%s1 + $0xb4] sm:$0xf]
  %v67 = vld [vmem:[%s1 + $0xb8] sm:$0xf]
  %v68 = vld [vmem:[%s1 + $0xbc] sm:$0xf]
  %v69 = vld [vmem:[%s1 + $0xc0] sm:$0xf]
  %v70 = vld [vmem:[%s1 + $0xc4] sm:$0xf]
  %v71 = vld [vmem:[%s1 + $0xc8] sm:$0xf]
  %v72 = vld [vmem:[%s1 + $0xcc] sm:$0xf]
  %v73 = vld [vmem:[%s1 + $0xd0] sm:$0xf]
  %v74 = vld [vmem:[%s1 + $0xd4] sm:$0xf]
  %v75 = vld [vmem:[%s1 + $0xd8] sm:$0xf]
  %v76 = vld [vmem:[%s1 + $0xdc] sm:$0xf]
  %v77 = vld [vmem:[%s1 + $0xe0] sm:$0xf]
  %v78 = vld [vmem:[%s1 + $0xe4] sm:$0xf]
  %v79 = vld [vmem:[%s1 + $0xe8] sm:$0xf]
  %v80 = vld [vmem:[%s1 + $0xec] sm:$0xf]
  %v81 = vld [vmem:[%s1 + $0xf0] sm:$0xf]
  %v82 = vld [vmem:[%s1 + $0xf4] sm:$0xf]
  %v83 = vld [vmem:[%s1 + $0xf8] sm:$0xf]
  %v84 = vld [vmem:[%s1 + $0xfc] sm:$0xf]
  %v85 = vld [vmem:[%s1 + $0x100] sm:$0xf]
  %v86 = vld [vmem:[%s1 + $0x104] sm:$0xf]
  %v87 = vld [vmem:[%s1 + $0x108] sm:$0xf]
  %v88 = vld [vmem:[%s1 + $0x10c] sm:$0xf]
  %v89 = vld [vmem:[%s1 + $0x110] sm:$0xf]
  %v90 = vld [vmem:[%s1 + $0x114] sm:$0xf]
  %v91 = vld [vmem:[%s1 + $0x118] sm:$0xf]
  %v92 = vld [vmem:[%s1 + $0x11c] sm:$0xf]
  %v93 = vld [vmem:[%s1 + $0x120] sm:$0xf]
  %v94 = vld [vmem:[%s1 + $0x124] sm:$0xf]
  %v95 = vld [vmem:[%s1 + $0x128] sm:$0xf]
  %v96 = vld [vmem:[%s1 + $0x12c] sm:$0xf]
  %v97 = vld [vmem:[%s1 + $0x130] sm:$0xf]
  %v98 = vld [vmem:[%s1 + $0x134] sm:$0xf]
  %v99 = vld [vmem:[%s1 + $0x138] sm:$0xf]
  %v100 = vld [vmem:[%s1 + $0x13c] sm:$0xf]
  %v101 = vld [vmem:[%s2] sm:$0x1]
  %v103 = vlaneseq
  %v104 = vshrl.u32 %v103, 7
  %v105 = vsub.s32 0, %v104
  %v106 = vrot.slane %v101, %v105
  %v114 = vunpack.c.l.b16 %v15
  %v115 = vunpack.c.h.b16 %v15
  %v116 = vunpack.c.l.b16 %v16
  %v117 = vunpack.c.h.b16 %v16
  %v118 = vunpack.c.l.b16 %v17
  %v119 = vunpack.c.l.b16 %v18
  %v120 = vunpack.c.h.b16 %v18
  %v121 = vunpack.c.l.b16 %v19
  %v122 = vunpack.c.h.b16 %v19
  %v123 = vunpack.c.l.b16 %v20
  %v124 = vpack.c.b16 %v119, %v114
  %v125 = vpack.c.b16 %v120, %v115
  %v126 = vpack.c.b16 %v121, %v116
  %v127 = vpack.c.b16 %v122, %v117
  %v128 = vpack.c.b16 %v123, %v118
  %v214 = vunpack.c.l.b16 %v21
  %v215 = vunpack.c.l.b16 %v22
  %v216 = vunpack.c.l.b16 %v23
  %v217 = vunpack.c.l.b16 %v24
  %v218 = vunpack.c.l.b16 %v25
  %v219 = vunpack.c.l.b16 %v26
  %v220 = vunpack.c.l.b16 %v27
  %v221 = vunpack.c.l.b16 %v28
  %v222 = vunpack.c.l.b16 %v29
  %v223 = vunpack.c.l.b16 %v30
  %v224 = vunpack.c.l.b16 %v31
  %v225 = vunpack.c.l.b16 %v32
  %v226 = vunpack.c.l.b16 %v33
  %v227 = vunpack.c.l.b16 %v34
  %v228 = vunpack.c.l.b16 %v35
  %v229 = vunpack.c.l.b16 %v36
  %v230 = vunpack.c.l.b16 %v37
  %v231 = vunpack.c.l.b16 %v38
  %v232 = vunpack.c.l.b16 %v39
  %v233 = vunpack.c.l.b16 %v40
  %v234 = vunpack.c.l.b16 %v41
  %v235 = vunpack.c.l.b16 %v42
  %v236 = vunpack.c.l.b16 %v43
  %v237 = vunpack.c.l.b16 %v44
  %v238 = vunpack.c.l.b16 %v45
  %v239 = vunpack.c.l.b16 %v46
  %v240 = vunpack.c.l.b16 %v47
  %v241 = vunpack.c.l.b16 %v48
  %v242 = vunpack.c.l.b16 %v49
  %v243 = vunpack.c.l.b16 %v50
  %v244 = vunpack.c.l.b16 %v51
  %v245 = vunpack.c.l.b16 %v52
  %v246 = vunpack.c.l.b16 %v53
  %v247 = vunpack.c.l.b16 %v54
  %v248 = vunpack.c.l.b16 %v55
  %v249 = vunpack.c.l.b16 %v56
  %v250 = vunpack.c.l.b16 %v57
  %v251 = vunpack.c.l.b16 %v58
  %v252 = vunpack.c.l.b16 %v59
  %v253 = vunpack.c.l.b16 %v60
  %v254 = vunpack.c.l.b16 %v61
  %v255 = vunpack.c.l.b16 %v62
  %v256 = vunpack.c.l.b16 %v63
  %v257 = vunpack.c.l.b16 %v64
  %v258 = vunpack.c.l.b16 %v65
  %v259 = vunpack.c.l.b16 %v66
  %v260 = vunpack.c.l.b16 %v67
  %v261 = vunpack.c.l.b16 %v68
  %v262 = vunpack.c.l.b16 %v69
  %v263 = vunpack.c.l.b16 %v70
  %v264 = vunpack.c.l.b16 %v71
  %v265 = vunpack.c.l.b16 %v72
  %v266 = vunpack.c.l.b16 %v73
  %v267 = vunpack.c.l.b16 %v74
  %v268 = vunpack.c.l.b16 %v75
  %v269 = vunpack.c.l.b16 %v76
  %v270 = vunpack.c.l.b16 %v77
  %v271 = vunpack.c.l.b16 %v78
  %v272 = vunpack.c.l.b16 %v79
  %v273 = vunpack.c.l.b16 %v80
  %v274 = vunpack.c.l.b16 %v81
  %v275 = vunpack.c.l.b16 %v82
  %v276 = vunpack.c.l.b16 %v83
  %v277 = vunpack.c.l.b16 %v84
  %v278 = vunpack.c.l.b16 %v85
  %v279 = vunpack.c.l.b16 %v86
  %v280 = vunpack.c.l.b16 %v87
  %v281 = vunpack.c.l.b16 %v88
  %v282 = vunpack.c.l.b16 %v89
  %v283 = vunpack.c.l.b16 %v90
  %v284 = vunpack.c.l.b16 %v91
  %v285 = vunpack.c.l.b16 %v92
  %v286 = vunpack.c.l.b16 %v93
  %v287 = vunpack.c.l.b16 %v94
  %v288 = vunpack.c.l.b16 %v95
  %v289 = vunpack.c.l.b16 %v96
  %v290 = vunpack.c.l.b16 %v97
  %v291 = vunpack.c.l.b16 %v98
  %v292 = vunpack.c.l.b16 %v99
  %v293 = vunpack.c.l.b16 %v100
  %v294 = vpack.c.b16 %v215, %v214
  %v295 = vpack.c.b16 %v217, %v216
  %v296 = vpack.c.b16 %v219, %v218
  %v297 = vpack.c.b16 %v221, %v220
  %v298 = vpack.c.b16 %v223, %v222
  %v299 = vpack.c.b16 %v225, %v224
  %v300 = vpack.c.b16 %v227, %v226
  %v301 = vpack.c.b16 %v229, %v228
  %v302 = vpack.c.b16 %v231, %v230
  %v303 = vpack.c.b16 %v233, %v232
  %v304 = vpack.c.b16 %v235, %v234
  %v305 = vpack.c.b16 %v237, %v236
  %v306 = vpack.c.b16 %v239, %v238
  %v307 = vpack.c.b16 %v241, %v240
  %v308 = vpack.c.b16 %v243, %v242
  %v309 = vpack.c.b16 %v245, %v244
  %v310 = vpack.c.b16 %v247, %v246
  %v311 = vpack.c.b16 %v249, %v248
  %v312 = vpack.c.b16 %v251, %v250
  %v313 = vpack.c.b16 %v253, %v252
  %v314 = vpack.c.b16 %v255, %v254
  %v315 = vpack.c.b16 %v257, %v256
  %v316 = vpack.c.b16 %v259, %v258
  %v317 = vpack.c.b16 %v261, %v260
  %v318 = vpack.c.b16 %v263, %v262
  %v319 = vpack.c.b16 %v265, %v264
  %v320 = vpack.c.b16 %v267, %v266
  %v321 = vpack.c.b16 %v269, %v268
  %v322 = vpack.c.b16 %v271, %v270
  %v323 = vpack.c.b16 %v273, %v272
  %v324 = vpack.c.b16 %v275, %v274
  %v325 = vpack.c.b16 %v277, %v276
  %v326 = vpack.c.b16 %v279, %v278
  %v327 = vpack.c.b16 %v281, %v280
  %v328 = vpack.c.b16 %v283, %v282
  %v329 = vpack.c.b16 %v285, %v284
  %v330 = vpack.c.b16 %v287, %v286
  %v331 = vpack.c.b16 %v289, %v288
  %v332 = vpack.c.b16 %v291, %v290
  %v333 = vpack.c.b16 %v293, %v292
  %374 = vmatprep.subr.bf16.mxu0 0
  %375 = vmatpush1.bf16.msra.mxu0 %v301
  %376 = vmatprep.subr.bf16.mxu0 0
  %377 = vmatpush1.bf16.msra.mxu0 %v300
  %378 = vmatprep.subr.bf16.mxu0 0
  %379 = vmatpush1.bf16.msra.mxu0 %v299
  %380 = vmatprep.subr.bf16.mxu0 0
  %381 = vmatpush1.bf16.msra.mxu0 %v298
  %382 = vmatprep.subr.bf16.mxu0 0
  %383 = vmatpush1.bf16.msra.mxu0 %v297
  %384 = vmatprep.subr.bf16.mxu0 0
  %385 = vmatpush1.bf16.msra.mxu0 %v296
  %386 = vmatprep.subr.bf16.mxu0 0
  %387 = vmatpush1.bf16.msra.mxu0 %v295
  %388 = vmatprep.subr.bf16.mxu0 0
  %389 = vmatpush1.bf16.msra.mxu0 %v294
  %390 = vmatprep.subr.bf16.mxu0 0
  %391 = vmatpush2.bf16.msra.mxu0 %v309
  %392 = vmatprep.subr.bf16.mxu0 0
  %393 = vmatpush2.bf16.msra.mxu0 %v308
  %394 = vmatprep.subr.bf16.mxu0 0
  %395 = vmatpush2.bf16.msra.mxu0 %v307
  %396 = vmatprep.subr.bf16.mxu0 0
  %397 = vmatpush2.bf16.msra.mxu0 %v306
  %398 = vmatprep.subr.bf16.mxu0 0
  %399 = vmatpush2.bf16.msra.mxu0 %v305
  %400 = vmatprep.subr.bf16.mxu0 0
  %401 = vmatpush2.bf16.msra.mxu0 %v304
  %402 = vmatprep.subr.bf16.mxu0 0
  %403 = vmatpush2.bf16.msra.mxu0 %v303
  %404 = vmatprep.subr.bf16.mxu0 0
  %405 = vmatpush2.bf16.msra.mxu0 %v302
  %406 = vmatprep.mubr.bf16.mxu0 %v125
  %407 = vmatmul.mubr.bf16.gmra.mxu0 %v124
  %v408 = vpop.f32.mrf.mxu0
  %v409 = vadd.f32 %v106, %v408
  %v410 = vpop.f32.mrf.mxu0
  %v411 = vpop.f32.mrf.mxu0
  %v412 = vadd.f32 %v106, %v411
  %v413 = vpop.f32.mrf.mxu0
  %414 = vdwg.mxu0
  %415 = vmatprep.subr.bf16.mxu0 0
  %416 = vmatpush1.bf16.msra.mxu0 %v317
  %417 = vmatprep.subr.bf16.mxu0 0
  %418 = vmatpush1.bf16.msra.mxu0 %v316
  %419 = vmatprep.subr.bf16.mxu0 0
  %420 = vmatpush1.bf16.msra.mxu0 %v315
  %421 = vmatprep.subr.bf16.mxu0 0
  %422 = vmatpush1.bf16.msra.mxu0 %v314
  %423 = vmatprep.subr.bf16.mxu0 0
  %424 = vmatpush1.bf16.msra.mxu0 %v313
  %425 = vmatprep.subr.bf16.mxu0 0
  %426 = vmatpush1.bf16.msra.mxu0 %v312
  %427 = vmatprep.subr.bf16.mxu0 0
  %428 = vmatpush1.bf16.msra.mxu0 %v311
  %429 = vmatprep.subr.bf16.mxu0 0
  %430 = vmatpush1.bf16.msra.mxu0 %v310
  %431 = vmatprep.subr.bf16.mxu0 0
  %432 = vmatpush2.bf16.msra.mxu0 %v325
  %433 = vmatprep.subr.bf16.mxu0 0
  %434 = vmatpush2.bf16.msra.mxu0 %v324
  %435 = vmatprep.subr.bf16.mxu0 0
  %436 = vmatpush2.bf16.msra.mxu0 %v323
  %437 = vmatprep.subr.bf16.mxu0 0
  %438 = vmatpush2.bf16.msra.mxu0 %v322
  %439 = vmatprep.subr.bf16.mxu0 0
  %440 = vmatpush2.bf16.msra.mxu0 %v321
  %441 = vmatprep.subr.bf16.mxu0 0
  %442 = vmatpush2.bf16.msra.mxu0 %v320
  %443 = vmatprep.subr.bf16.mxu0 0
  %444 = vmatpush2.bf16.msra.mxu0 %v319
  %445 = vmatprep.subr.bf16.mxu0 0
  %446 = vmatpush2.bf16.msra.mxu0 %v318
  %447 = vmatprep.mubr.bf16.mxu0 %v127
  %448 = vmatmul.mubr.bf16.gmra.mxu0 %v126
  %v449 = vpop.f32.mrf.mxu0
  %v450 = vadd.f32 %v409, %v449
  %v451 = vpop.f32.mrf.mxu0
  %v452 = vpop.f32.mrf.mxu0
  %v453 = vadd.f32 %v412, %v452
  %v454 = vpop.f32.mrf.mxu0
  %455 = vdwg.mxu0
  %456 = vmatprep.subr.bf16.mxu0 0
  %457 = vmatpush1.bf16.msra.mxu0 %v333
  %458 = vmatprep.subr.bf16.mxu0 0
  %459 = vmatpush1.bf16.msra.mxu0 %v332
  %460 = vmatprep.subr.bf16.mxu0 0
  %461 = vmatpush1.bf16.msra.mxu0 %v331
  %462 = vmatprep.subr.bf16.mxu0 0
  %463 = vmatpush1.bf16.msra.mxu0 %v330
  %464 = vmatprep.subr.bf16.mxu0 0
  %465 = vmatpush1.bf16.msra.mxu0 %v329
  %466 = vmatprep.subr.bf16.mxu0 0
  %467 = vmatpush1.bf16.msra.mxu0 %v328
  %468 = vmatprep.subr.bf16.mxu0 0
  %469 = vmatpush1.bf16.msra.mxu0 %v327
  %470 = vmatprep.subr.bf16.mxu0 0
  %471 = vmatpush1.bf16.msra.mxu0 %v326
  %472 = vmatprep.subr.bf16.mxu0 0
  %473 = vmatpush2.bf16.msra.mxu0 0
  %474 = vmatprep.subr.bf16.mxu0 0
  %475 = vmatpush2.bf16.msra.mxu0 0
  %476 = vmatprep.subr.bf16.mxu0 0
  %477 = vmatpush2.bf16.msra.mxu0 0
  %478 = vmatprep.subr.bf16.mxu0 0
  %479 = vmatpush2.bf16.msra.mxu0 0
  %480 = vmatprep.subr.bf16.mxu0 0
  %481 = vmatpush2.bf16.msra.mxu0 0
  %482 = vmatprep.subr.bf16.mxu0 0
  %483 = vmatpush2.bf16.msra.mxu0 0
  %484 = vmatprep.subr.bf16.mxu0 0
  %485 = vmatpush2.bf16.msra.mxu0 0
  %486 = vmatprep.subr.bf16.mxu0 0
  %487 = vmatpush2.bf16.msra.mxu0 0
  %488 = vmatprep.mubr.bf16.mxu0 0
  %489 = vmatmul.mubr.bf16.gmra.mxu0 %v128
  %v490 = vpop.f32.mrf.mxu0
  %v491 = vadd.f32 %v450, %v490
  %v492 = vpop.f32.mrf.mxu0
  %v493 = vpop.f32.mrf.mxu0
  %v494 = vadd.f32 %v453, %v493
  %v495 = vpop.f32.mrf.mxu0
  %496 = vdwg.mxu0
  %497 = vst [vmem:[%s3] sm:$0xff] %v491
  %498 = vst [vmem:[%s3 + $0x8] sm:$0xff] %v494
  // Predicated region
  $region14: #{_forward_impl.33} parent=0 // pred_check
    _
  $region15: #{_forward_impl.33} parent=0 // pred_check_branch
    %500 = sbr.rel (0) target = $region17
  $region16: #{_forward_impl.33} parent=0 // pred_region
    _
  $region17: #{_forward_impl.33} parent=0 // pred_fallthru
    _
  // Predicated region
  $region18: #{_forward_impl.33} parent=0 // pred_check
    _
  $region19: #{_forward_impl.33} parent=0 // pred_check_branch
    %502 = sbr.rel (0) target = $region21
  $region20: #{_forward_impl.33} parent=0 // pred_region
    _
  $region21: #{_forward_impl.33} parent=0 // pred_fallthru
    _

// kernel: _forward_impl.31
$region0: #{_forward_impl.31}
  #allocation0 [shape = 'u32[]', space=smem, size = 0x4, offset = 0x4, fixed_abs, tag = 'smem constant byte address 0x4 - core index']
  #allocation1 [shape = 'u32[144,128]{1,0:T(1,128)}', space=vmem, size = 0x12000, scoped, tag = 'internal scratch']
  %s0 = inlined_call_operand.vmem [shape: bf16[32,1152], index: 0, kind: input, shape index: {}]
  %s1 = inlined_call_operand.vmem [shape: bf16[1152,128], index: 1, kind: input, shape index: {}]
  %s2 = inlined_call_operand.vmem [shape: f32[1,128], index: 2, kind: input, shape index: {}]
  %s3 = inlined_call_operand.vmem [shape: f32[32,128], index: 3, kind: output, shape index: {}]
  %s4 = sld [smem:[#allocation0]]
  $region22: #{_forward_impl.31} parent=0
    _
  %s6 = ssub.s32 1, %s4
  %s7 = scalar_select 0, %s6, %s4
  // Predicated region
  $region2: #{_forward_impl.31} parent=0 // pred_check
    _
  $region3: #{_forward_impl.31} parent=0 // pred_check_branch
    %9 = sbr.rel (0) target = $region5
  $region4: #{_forward_impl.31} parent=0 // pred_region
    _
  $region5: #{_forward_impl.31} parent=0 // pred_fallthru
    _
  // Predicated region
  $region6: #{_forward_impl.31} parent=0 // pred_check
    _
  $region7: #{_forward_impl.31} parent=0 // pred_check_branch
    %11 = sbr.rel (0) target = $region9
  $region8: #{_forward_impl.31} parent=0 // pred_region
    _
  $region9: #{_forward_impl.31} parent=0 // pred_fallthru
    _
  // Predicated region
  $region10: #{_forward_impl.31} parent=0 // pred_check
    _
  $region11: #{_forward_impl.31} parent=0 // pred_check_branch
    %13 = sbr.rel (0) target = $region13
  $region12: #{_forward_impl.31} parent=0 // pred_region
    _
  $region13: #{_forward_impl.31} parent=0 // pred_fallthru
    _
  %v15 = vld [vmem:[%s0] sm:$0xff]
  %v16 = vld [vmem:[%s0 + $0x8] sm:$0xff]
  %v17 = vld [vmem:[%s0 + $0x10] sm:$0xff]
  %v18 = vld [vmem:[%s0 + $0x18] sm:$0xff]
  %v19 = vld [vmem:[%s0 + $0x20] sm:$0xf]
  %v20 = vld [vmem:[%s0 + $0x24] sm:$0xff]
  %v21 = vld [vmem:[%s0 + $0x2c] sm:$0xff]
  %v22 = vld [vmem:[%s0 + $0x34] sm:$0xff]
  %v23 = vld [vmem:[%s0 + $0x3c] sm:$0xff]
  %v24 = vld [vmem:[%s0 + $0x44] sm:$0xf]
  %v25 = vld [vmem:[%s0 + $0x48] sm:$0xff]
  %v26 = vld [vmem:[%s0 + $0x50] sm:$0xff]
  %v27 = vld [vmem:[%s0 + $0x58] sm:$0xff]
  %v28 = vld [vmem:[%s0 + $0x60] sm:$0xff]
  %v29 = vld [vmem:[%s0 + $0x68] sm:$0xf]
  %v30 = vld [vmem:[%s0 + $0x6c] sm:$0xff]
  %v31 = vld [vmem:[%s0 + $0x74] sm:$0xff]
  %v32 = vld [vmem:[%s0 + $0x7c] sm:$0xff]
  %v33 = vld [vmem:[%s0 + $0x84] sm:$0xff]
  %v34 = vld [vmem:[%s0 + $0x8c] sm:$0xf]
  %v35 = vld [vmem:[%s1] sm:$0xf]
  %v36 = vld [vmem:[%s1 + $0x4] sm:$0xf]
  %v37 = vld [vmem:[%s1 + $0x8] sm:$0xf]
  %v38 = vld [vmem:[%s1 + $0xc] sm:$0xf]
  %v39 = vld [vmem:[%s1 + $0x10] sm:$0xf]
  %v40 = vld [vmem:[%s1 + $0x14] sm:$0xf]
  %v41 = vld [vmem:[%s1 + $0x18] sm:$0xf]
  %v42 = vld [vmem:[%s1 + $0x1c] sm:$0xf]
  %v43 = vld [vmem:[%s1 + $0x20] sm:$0xf]
  %v44 = vld [vmem:[%s1 + $0x24] sm:$0xf]
  %v45 = vld [vmem:[%s1 + $0x28] sm:$0xf]
  %v46 = vld [vmem:[%s1 + $0x2c] sm:$0xf]
  %v47 = vld [vmem:[%s1 + $0x30] sm:$0xf]
  %v48 = vld [vmem:[%s1 + $0x34] sm:$0xf]
  %v49 = vld [vmem:[%s1 + $0x38] sm:$0xf]
  %v50 = vld [vmem:[%s1 + $0x3c] sm:$0xf]
  %v51 = vld [vmem:[%s1 + $0x40] sm:$0xf]
  %v52 = vld [vmem:[%s1 + $0x44] sm:$0xf]
  %v53 = vld [vmem:[%s1 + $0x48] sm:$0xf]
  %v54 = vld [vmem:[%s1 + $0x4c] sm:$0xf]
  %v55 = vld [vmem:[%s1 + $0x50] sm:$0xf]
  %v56 = vld [vmem:[%s1 + $0x54] sm:$0xf]
  %v57 = vld [vmem:[%s1 + $0x58] sm:$0xf]
  %v58 = vld [vmem:[%s1 + $0x5c] sm:$0xf]
  %v59 = vld [vmem:[%s1 + $0x60] sm:$0xf]
  %v60 = vld [vmem:[%s1 + $0x64] sm:$0xf]
  %v61 = vld [vmem:[%s1 + $0x68] sm:$0xf]
  %v62 = vld [vmem:[%s1 + $0x6c] sm:$0xf]
  %v63 = vld [vmem:[%s1 + $0x70] sm:$0xf]
  %v64 = vld [vmem:[%s1 + $0x74] sm:$0xf]
  %v65 = vld [vmem:[%s1 + $0x78] sm:$0xf]
  %v66 = vld [vmem:[%s1 + $0x7c] sm:$0xf]
  %v67 = vld [vmem:[%s1 + $0x80] sm:$0xf]
  %v68 = vld [vmem:[%s1 + $0x84] sm:$0xf]
  %v69 = vld [vmem:[%s1 + $0x88] sm:$0xf]
  %v70 = vld [vmem:[%s1 + $0x8c] sm:$0xf]
  %v71 = vld [vmem:[%s1 + $0x90] sm:$0xf]
  %v72 = vld [vmem:[%s1 + $0x94] sm:$0xf]
  %v73 = vld [vmem:[%s1 + $0x98] sm:$0xf]
  %v74 = vld [vmem:[%s1 + $0x9c] sm:$0xf]
  %v75 = vld [vmem:[%s1 + $0xa0] sm:$0xf]
  %v76 = vld [vmem:[%s1 + $0xa4] sm:$0xf]
  %v77 = vld [vmem:[%s1 + $0xa8] sm:$0xf]
  %v78 = vld [vmem:[%s1 + $0xac] sm:$0xf]
  %v79 = vld [vmem:[%s1 + $0xb0] sm:$0xf]
  %v80 = vld [vmem:[%s1 + $0xb4] sm:$0xf]
  %v81 = vld [vmem:[%s1 + $0xb8] sm:$0xf]
  %v82 = vld [vmem:[%s1 + $0xbc] sm:$0xf]
  %v83 = vld [vmem:[%s1 + $0xc0] sm:$0xf]
  %v84 = vld [vmem:[%s1 + $0xc4] sm:$0xf]
  %v85 = vld [vmem:[%s1 + $0xc8] sm:$0xf]
  %v86 = vld [vmem:[%s1 + $0xcc] sm:$0xf]
  %v87 = vld [vmem:[%s1 + $0xd0] sm:$0xf]
  %v88 = vld [vmem:[%s1 + $0xd4] sm:$0xf]
  %v89 = vld [vmem:[%s1 + $0xd8] sm:$0xf]
  %v90 = vld [vmem:[%s1 + $0xdc] sm:$0xf]
  %v91 = vld [vmem:[%s1 + $0xe0] sm:$0xf]
  %v92 = vld [vmem:[%s1 + $0xe4] sm:$0xf]
  %v93 = vld [vmem:[%s1 + $0xe8] sm:$0xf]
  %v94 = vld [vmem:[%s1 + $0xec] sm:$0xf]
  %v95 = vld [vmem:[%s1 + $0xf0] sm:$0xf]
  %v96 = vld [vmem:[%s1 + $0xf4] sm:$0xf]
  %v97 = vld [vmem:[%s1 + $0xf8] sm:$0xf]
  %v98 = vld [vmem:[%s1 + $0xfc] sm:$0xf]
  %v99 = vld [vmem:[%s1 + $0x100] sm:$0xf]
  %v100 = vld [vmem:[%s1 + $0x104] sm:$0xf]
  %v101 = vld [vmem:[%s1 + $0x108] sm:$0xf]
  %v102 = vld [vmem:[%s1 + $0x10c] sm:$0xf]
  %v103 = vld [vmem:[%s1 + $0x110] sm:$0xf]
  %v104 = vld [vmem:[%s1 + $0x114] sm:$0xf]
  %v105 = vld [vmem:[%s1 + $0x118] sm:$0xf]
  %v106 = vld [vmem:[%s1 + $0x11c] sm:$0xf]
  %v107 = vld [vmem:[%s1 + $0x120] sm:$0xf]
  %v108 = vld [vmem:[%s1 + $0x124] sm:$0xf]
  %v109 = vld [vmem:[%s1 + $0x128] sm:$0xf]
  %v110 = vld [vmem:[%s1 + $0x12c] sm:$0xf]
  %v111 = vld [vmem:[%s1 + $0x130] sm:$0xf]
  %v112 = vld [vmem:[%s1 + $0x134] sm:$0xf]
  %v113 = vld [vmem:[%s1 + $0x138] sm:$0xf]
  %v114 = vld [vmem:[%s1 + $0x13c] sm:$0xf]
  %v115 = vld [vmem:[%s1 + $0x140] sm:$0xf]
  %v116 = vld [vmem:[%s1 + $0x144] sm:$0xf]
  %v117 = vld [vmem:[%s1 + $0x148] sm:$0xf]
  %v118 = vld [vmem:[%s1 + $0x14c] sm:$0xf]
  %v119 = vld [vmem:[%s1 + $0x150] sm:$0xf]
  %v120 = vld [vmem:[%s1 + $0x154] sm:$0xf]
  %v121 = vld [vmem:[%s1 + $0x158] sm:$0xf]
  %v122 = vld [vmem:[%s1 + $0x15c] sm:$0xf]
  %v123 = vld [vmem:[%s1 + $0x160] sm:$0xf]
  %v124 = vld [vmem:[%s1 + $0x164] sm:$0xf]
  %v125 = vld [vmem:[%s1 + $0x168] sm:$0xf]
  %v126 = vld [vmem:[%s1 + $0x16c] sm:$0xf]
  %v127 = vld [vmem:[%s1 + $0x170] sm:$0xf]
  %v128 = vld [vmem:[%s1 + $0x174] sm:$0xf]
  %v129 = vld [vmem:[%s1 + $0x178] sm:$0xf]
  %v130 = vld [vmem:[%s1 + $0x17c] sm:$0xf]
  %v131 = vld [vmem:[%s1 + $0x180] sm:$0xf]
  %v132 = vld [vmem:[%s1 + $0x184] sm:$0xf]
  %v133 = vld [vmem:[%s1 + $0x188] sm:$0xf]
  %v134 = vld [vmem:[%s1 + $0x18c] sm:$0xf]
  %v135 = vld [vmem:[%s1 + $0x190] sm:$0xf]
  %v136 = vld [vmem:[%s1 + $0x194] sm:$0xf]
  %v137 = vld [vmem:[%s1 + $0x198] sm:$0xf]
  %v138 = vld [vmem:[%s1 + $0x19c] sm:$0xf]
  %v139 = vld [vmem:[%s1 + $0x1a0] sm:$0xf]
  %v140 = vld [vmem:[%s1 + $0x1a4] sm:$0xf]
  %v141 = vld [vmem:[%s1 + $0x1a8] sm:$0xf]
  %v142 = vld [vmem:[%s1 + $0x1ac] sm:$0xf]
  %v143 = vld [vmem:[%s1 + $0x1b0] sm:$0xf]
  %v144 = vld [vmem:[%s1 + $0x1b4] sm:$0xf]
  %v145 = vld [vmem:[%s1 + $0x1b8] sm:$0xf]
  %v146 = vld [vmem:[%s1 + $0x1bc] sm:$0xf]
  %v147 = vld [vmem:[%s1 + $0x1c0] sm:$0xf]
  %v148 = vld [vmem:[%s1 + $0x1c4] sm:$0xf]
  %v149 = vld [vmem:[%s1 + $0x1c8] sm:$0xf]
  %v150 = vld [vmem:[%s1 + $0x1cc] sm:$0xf]
  %v151 = vld [vmem:[%s1 + $0x1d0] sm:$0xf]
  %v152 = vld [vmem:[%s1 + $0x1d4] sm:$0xf]
  %v153 = vld [vmem:[%s1 + $0x1d8] sm:$0xf]
  %v154 = vld [vmem:[%s1 + $0x1dc] sm:$0xf]
  %v155 = vld [vmem:[%s1 + $0x1e0] sm:$0xf]
  %v156 = vld [vmem:[%s1 + $0x1e4] sm:$0xf]
  %v157 = vld [vmem:[%s1 + $0x1e8] sm:$0xf]
  %v158 = vld [vmem:[%s1 + $0x1ec] sm:$0xf]
  %v159 = vld [vmem:[%s1 + $0x1f0] sm:$0xf]
  %v160 = vld [vmem:[%s1 + $0x1f4] sm:$0xf]
  %v161 = vld [vmem:[%s1 + $0x1f8] sm:$0xf]
  %v162 = vld [vmem:[%s1 + $0x1fc] sm:$0xf]
  %v163 = vld [vmem:[%s1 + $0x200] sm:$0xf]
  %v164 = vld [vmem:[%s1 + $0x204] sm:$0xf]
  %v165 = vld [vmem:[%s1 + $0x208] sm:$0xf]
  %v166 = vld [vmem:[%s1 + $0x20c] sm:$0xf]
  %v167 = vld [vmem:[%s1 + $0x210] sm:$0xf]
  %v168 = vld [vmem:[%s1 + $0x214] sm:$0xf]
  %v169 = vld [vmem:[%s1 + $0x218] sm:$0xf]
  %v170 = vld [vmem:[%s1 + $0x21c] sm:$0xf]
  %v171 = vld [vmem:[%s1 + $0x220] sm:$0xf]
  %v172 = vld [vmem:[%s1 + $0x224] sm:$0xf]
  %v173 = vld [vmem:[%s1 + $0x228] sm:$0xf]
  %v174 = vld [vmem:[%s1 + $0x22c] sm:$0xf]
  %v175 = vld [vmem:[%s1 + $0x230] sm:$0xf]
  %v176 = vld [vmem:[%s1 + $0x234] sm:$0xf]
  %v177 = vld [vmem:[%s1 + $0x238] sm:$0xf]
  %v178 = vld [vmem:[%s1 + $0x23c] sm:$0xf]
  %v179 = vld [vmem:[%s2] sm:$0x1]
  %v181 = vlaneseq
  %v182 = vshrl.u32 %v181, 7
  %v183 = vsub.s32 0, %v182
  %v184 = vrot.slane %v179, %v183
  %v206 = vunpack.c.l.b16 %v15
  %v207 = vunpack.c.h.b16 %v15
  %v208 = vunpack.c.l.b16 %v16
  %v209 = vunpack.c.h.b16 %v16
  %v210 = vunpack.c.l.b16 %v17
  %v211 = vunpack.c.h.b16 %v17
  %v212 = vunpack.c.l.b16 %v18
  %v213 = vunpack.c.h.b16 %v18
  %v214 = vunpack.c.l.b16 %v19
  %v215 = vunpack.c.l.b16 %v20
  %v216 = vunpack.c.h.b16 %v20
  %v217 = vunpack.c.l.b16 %v21
  %v218 = vunpack.c.h.b16 %v21
  %v219 = vunpack.c.l.b16 %v22
  %v220 = vunpack.c.h.b16 %v22
  %v221 = vunpack.c.l.b16 %v23
  %v222 = vunpack.c.h.b16 %v23
  %v223 = vunpack.c.l.b16 %v24
  %v224 = vunpack.c.l.b16 %v25
  %v225 = vunpack.c.h.b16 %v25
  %v226 = vunpack.c.l.b16 %v26
  %v227 = vunpack.c.h.b16 %v26
  %v228 = vunpack.c.l.b16 %v27
  %v229 = vunpack.c.h.b16 %v27
  %v230 = vunpack.c.l.b16 %v28
  %v231 = vunpack.c.h.b16 %v28
  %v232 = vunpack.c.l.b16 %v29
  %v233 = vunpack.c.l.b16 %v30
  %v234 = vunpack.c.h.b16 %v30
  %v235 = vunpack.c.l.b16 %v31
  %v236 = vunpack.c.h.b16 %v31
  %v237 = vunpack.c.l.b16 %v32
  %v238 = vunpack.c.h.b16 %v32
  %v239 = vunpack.c.l.b16 %v33
  %v240 = vunpack.c.h.b16 %v33
  %v241 = vunpack.c.l.b16 %v34
  %v242 = vpack.c.b16 %v215, %v206
  %v243 = vpack.c.b16 %v216, %v207
  %v244 = vpack.c.b16 %v217, %v208
  %v245 = vpack.c.b16 %v218, %v209
  %v246 = vpack.c.b16 %v219, %v210
  %v247 = vpack.c.b16 %v220, %v211
  %v248 = vpack.c.b16 %v221, %v212
  %v249 = vpack.c.b16 %v222, %v213
  %v250 = vpack.c.b16 %v223, %v214
  %v251 = vpack.c.b16 %v233, %v224
  %v252 = vpack.c.b16 %v234, %v225
  %v253 = vpack.c.b16 %v235, %v226
  %v254 = vpack.c.b16 %v236, %v227
  %v255 = vpack.c.b16 %v237, %v228
  %v256 = vpack.c.b16 %v238, %v229
  %v257 = vpack.c.b16 %v239, %v230
  %v258 = vpack.c.b16 %v240, %v231
  %v259 = vpack.c.b16 %v241, %v232
  %v422 = vunpack.c.l.b16 %v35
  %v423 = vunpack.c.l.b16 %v36
  %v424 = vunpack.c.l.b16 %v37
  %v425 = vunpack.c.l.b16 %v38
  %v426 = vunpack.c.l.b16 %v39
  %v427 = vunpack.c.l.b16 %v40
  %v428 = vunpack.c.l.b16 %v41
  %v429 = vunpack.c.l.b16 %v42
  %v430 = vunpack.c.l.b16 %v43
  %v431 = vunpack.c.l.b16 %v44
  %v432 = vunpack.c.l.b16 %v45
  %v433 = vunpack.c.l.b16 %v46
  %v434 = vunpack.c.l.b16 %v47
  %v435 = vunpack.c.l.b16 %v48
  %v436 = vunpack.c.l.b16 %v49
  %v437 = vunpack.c.l.b16 %v50
  %v438 = vunpack.c.l.b16 %v51
  %v439 = vunpack.c.l.b16 %v52
  %v440 = vunpack.c.l.b16 %v53
  %v441 = vunpack.c.l.b16 %v54
  %v442 = vunpack.c.l.b16 %v55
  %v443 = vunpack.c.l.b16 %v56
  %v444 = vunpack.c.l.b16 %v57
  %v445 = vunpack.c.l.b16 %v58
  %v446 = vunpack.c.l.b16 %v59
  %v447 = vunpack.c.l.b16 %v60
  %v448 = vunpack.c.l.b16 %v61
  %v449 = vunpack.c.l.b16 %v62
  %v450 = vunpack.c.l.b16 %v63
  %v451 = vunpack.c.l.b16 %v64
  %v452 = vunpack.c.l.b16 %v65
  %v453 = vunpack.c.l.b16 %v66
  %v454 = vunpack.c.l.b16 %v67
  %v455 = vunpack.c.l.b16 %v68
  %v456 = vunpack.c.l.b16 %v69
  %v457 = vunpack.c.l.b16 %v70
  %v458 = vunpack.c.l.b16 %v71
  %v459 = vunpack.c.l.b16 %v72
  %v460 = vunpack.c.l.b16 %v73
  %v461 = vunpack.c.l.b16 %v74
  %v462 = vunpack.c.l.b16 %v75
  %v463 = vunpack.c.l.b16 %v76
  %v464 = vunpack.c.l.b16 %v77
  %v465 = vunpack.c.l.b16 %v78
  %v466 = vunpack.c.l.b16 %v79
  %v467 = vunpack.c.l.b16 %v80
  %v468 = vunpack.c.l.b16 %v81
  %v469 = vunpack.c.l.b16 %v82
  %v470 = vunpack.c.l.b16 %v83
  %v471 = vunpack.c.l.b16 %v84
  %v472 = vunpack.c.l.b16 %v85
  %v473 = vunpack.c.l.b16 %v86
  %v474 = vunpack.c.l.b16 %v87
  %v475 = vunpack.c.l.b16 %v88
  %v476 = vunpack.c.l.b16 %v89
  %v477 = vunpack.c.l.b16 %v90
  %v478 = vunpack.c.l.b16 %v91
  %v479 = vunpack.c.l.b16 %v92
  %v480 = vunpack.c.l.b16 %v93
  %v481 = vunpack.c.l.b16 %v94
  %v482 = vunpack.c.l.b16 %v95
  %v483 = vunpack.c.l.b16 %v96
  %v484 = vunpack.c.l.b16 %v97
  %v485 = vunpack.c.l.b16 %v98
  %v486 = vunpack.c.l.b16 %v99
  %v487 = vunpack.c.l.b16 %v100
  %v488 = vunpack.c.l.b16 %v101
  %v489 = vunpack.c.l.b16 %v102
  %v490 = vunpack.c.l.b16 %v103
  %v491 = vunpack.c.l.b16 %v104
  %v492 = vunpack.c.l.b16 %v105
  %v493 = vunpack.c.l.b16 %v106
  %v494 = vunpack.c.l.b16 %v107
  %v495 = vunpack.c.l.b16 %v108
  %v496 = vunpack.c.l.b16 %v109
  %v497 = vunpack.c.l.b16 %v110
  %v498 = vunpack.c.l.b16 %v111
  %v499 = vunpack.c.l.b16 %v112
  %v500 = vunpack.c.l.b16 %v113
  %v501 = vunpack.c.l.b16 %v114
  %v502 = vunpack.c.l.b16 %v115
  %v503 = vunpack.c.l.b16 %v116
  %v504 = vunpack.c.l.b16 %v117
  %v505 = vunpack.c.l.b16 %v118
  %v506 = vunpack.c.l.b16 %v119
  %v507 = vunpack.c.l.b16 %v120
  %v508 = vunpack.c.l.b16 %v121
  %v509 = vunpack.c.l.b16 %v122
  %v510 = vunpack.c.l.b16 %v123
  %v511 = vunpack.c.l.b16 %v124
  %v512 = vunpack.c.l.b16 %v125
  %v513 = vunpack.c.l.b16 %v126
  %v514 = vunpack.c.l.b16 %v127
  %v515 = vunpack.c.l.b16 %v128
  %v516 = vunpack.c.l.b16 %v129
  %v517 = vunpack.c.l.b16 %v130
  %v518 = vunpack.c.l.b16 %v131
  %v519 = vunpack.c.l.b16 %v132
  %v520 = vunpack.c.l.b16 %v133
  %v521 = vunpack.c.l.b16 %v134
  %v522 = vunpack.c.l.b16 %v135
  %v523 = vunpack.c.l.b16 %v136
  %v524 = vunpack.c.l.b16 %v137
  %v525 = vunpack.c.l.b16 %v138
  %v526 = vunpack.c.l.b16 %v139
  %v527 = vunpack.c.l.b16 %v140
  %v528 = vunpack.c.l.b16 %v141
  %v529 = vunpack.c.l.b16 %v142
  %v530 = vunpack.c.l.b16 %v143
  %v531 = vunpack.c.l.b16 %v144
  %v532 = vunpack.c.l.b16 %v145
  %v533 = vunpack.c.l.b16 %v146
  %v534 = vunpack.c.l.b16 %v147
  %v535 = vunpack.c.l.b16 %v148
  %v536 = vunpack.c.l.b16 %v149
  %v537 = vunpack.c.l.b16 %v150
  %v538 = vunpack.c.l.b16 %v151
  %v539 = vunpack.c.l.b16 %v152
  %v540 = vunpack.c.l.b16 %v153
  %v541 = vunpack.c.l.b16 %v154
  %v542 = vunpack.c.l.b16 %v155
  %v543 = vunpack.c.l.b16 %v156
  %v544 = vunpack.c.l.b16 %v157
  %v545 = vunpack.c.l.b16 %v158
  %v546 = vunpack.c.l.b16 %v159
  %v547 = vunpack.c.l.b16 %v160
  %v548 = vunpack.c.l.b16 %v161
  %v549 = vunpack.c.l.b16 %v162
  %v550 = vunpack.c.l.b16 %v163
  %v551 = vunpack.c.l.b16 %v164
  %v552 = vunpack.c.l.b16 %v165
  %v553 = vunpack.c.l.b16 %v166
  %v554 = vunpack.c.l.b16 %v167
  %v555 = vunpack.c.l.b16 %v168
  %v556 = vunpack.c.l.b16 %v169
  %v557 = vunpack.c.l.b16 %v170
  %v558 = vunpack.c.l.b16 %v171
  %v559 = vunpack.c.l.b16 %v172
  %v560 = vunpack.c.l.b16 %v173
  %v561 = vunpack.c.l.b16 %v174
  %v562 = vunpack.c.l.b16 %v175
  %v563 = vunpack.c.l.b16 %v176
  %v564 = vunpack.c.l.b16 %v177
  %v565 = vunpack.c.l.b16 %v178
  %v566 = vpack.c.b16 %v423, %v422
  %v567 = vpack.c.b16 %v425, %v424
  %v568 = vpack.c.b16 %v427, %v426
  %v569 = vpack.c.b16 %v429, %v428
  %v570 = vpack.c.b16 %v431, %v430
  %v571 = vpack.c.b16 %v433, %v432
  %v572 = vpack.c.b16 %v435, %v434
  %v573 = vpack.c.b16 %v437, %v436
  %v574 = vpack.c.b16 %v439, %v438
  %v575 = vpack.c.b16 %v441, %v440
  %v576 = vpack.c.b16 %v443, %v442
  %v577 = vpack.c.b16 %v445, %v444
  %v578 = vpack.c.b16 %v447, %v446
  %v579 = vpack.c.b16 %v449, %v448
  %v580 = vpack.c.b16 %v451, %v450
  %v581 = vpack.c.b16 %v453, %v452
  %v582 = vpack.c.b16 %v455, %v454
  %v583 = vpack.c.b16 %v457, %v456
  %v584 = vpack.c.b16 %v459, %v458
  %v585 = vpack.c.b16 %v461, %v460
  %v586 = vpack.c.b16 %v463, %v462
  %v587 = vpack.c.b16 %v465, %v464
  %v588 = vpack.c.b16 %v467, %v466
  %v589 = vpack.c.b16 %v469, %v468
  %v590 = vpack.c.b16 %v471, %v470
  %v591 = vpack.c.b16 %v473, %v472
  %v592 = vpack.c.b16 %v475, %v474
  %v593 = vpack.c.b16 %v477, %v476
  %v594 = vpack.c.b16 %v479, %v478
  %v595 = vpack.c.b16 %v481, %v480
  %v596 = vpack.c.b16 %v483, %v482
  %v597 = vpack.c.b16 %v485, %v484
  %v598 = vpack.c.b16 %v487, %v486
  %v599 = vpack.c.b16 %v489, %v488
  %v600 = vpack.c.b16 %v491, %v490
  %v601 = vpack.c.b16 %v493, %v492
  %v602 = vpack.c.b16 %v495, %v494
  %v603 = vpack.c.b16 %v497, %v496
  %v604 = vpack.c.b16 %v499, %v498
  %v605 = vpack.c.b16 %v501, %v500
  %v606 = vpack.c.b16 %v503, %v502
  %v607 = vpack.c.b16 %v505, %v504
  %v608 = vpack.c.b16 %v507, %v506
  %v609 = vpack.c.b16 %v509, %v508
  %v610 = vpack.c.b16 %v511, %v510
  %v611 = vpack.c.b16 %v513, %v512
  %v612 = vpack.c.b16 %v515, %v514
  %v613 = vpack.c.b16 %v517, %v516
  %v614 = vpack.c.b16 %v519, %v518
  %v615 = vpack.c.b16 %v521, %v520
  %v616 = vpack.c.b16 %v523, %v522
  %v617 = vpack.c.b16 %v525, %v524
  %v618 = vpack.c.b16 %v527, %v526
  %v619 = vpack.c.b16 %v529, %v528
  %v620 = vpack.c.b16 %v531, %v530
  %v621 = vpack.c.b16 %v533, %v532
  %v622 = vpack.c.b16 %v535, %v534
  %v623 = vpack.c.b16 %v537, %v536
  %v624 = vpack.c.b16 %v539, %v538
  %v625 = vpack.c.b16 %v541, %v540
  %v626 = vpack.c.b16 %v543, %v542
  %v627 = vpack.c.b16 %v545, %v544
  %v628 = vpack.c.b16 %v547, %v546
  %v629 = vpack.c.b16 %v549, %v548
  %v630 = vpack.c.b16 %v551, %v550
  %v631 = vpack.c.b16 %v553, %v552
  %v632 = vpack.c.b16 %v555, %v554
  %v633 = vpack.c.b16 %v557, %v556
  %v634 = vpack.c.b16 %v559, %v558
  %v635 = vpack.c.b16 %v561, %v560
  %v636 = vpack.c.b16 %v563, %v562
  %v637 = vpack.c.b16 %v565, %v564
  %710 = vmatprep.subr.bf16.mxu0 0
  %711 = vmatpush1.bf16.msra.mxu0 %v573
  %712 = vmatprep.subr.bf16.mxu0 0
  %713 = vmatpush1.bf16.msra.mxu0 %v572
  %714 = vmatprep.subr.bf16.mxu0 0
  %715 = vmatpush1.bf16.msra.mxu0 %v571
  %716 = vmatprep.subr.bf16.mxu0 0
  %717 = vmatpush1.bf16.msra.mxu0 %v570
  %718 = vmatprep.subr.bf16.mxu0 0
  %719 = vmatpush1.bf16.msra.mxu0 %v569
  %720 = vmatprep.subr.bf16.mxu0 0
  %721 = vmatpush1.bf16.msra.mxu0 %v568
  %722 = vmatprep.subr.bf16.mxu0 0
  %723 = vmatpush1.bf16.msra.mxu0 %v567
  %724 = vmatprep.subr.bf16.mxu0 0
  %725 = vmatpush1.bf16.msra.mxu0 %v566
  %726 = vmatprep.subr.bf16.mxu0 0
  %727 = vmatpush2.bf16.msra.mxu0 %v581
  %728 = vmatprep.subr.bf16.mxu0 0
  %729 = vmatpush2.bf16.msra.mxu0 %v580
  %730 = vmatprep.subr.bf16.mxu0 0
  %731 = vmatpush2.bf16.msra.mxu0 %v579
  %732 = vmatprep.subr.bf16.mxu0 0
  %733 = vmatpush2.bf16.msra.mxu0 %v578
  %734 = vmatprep.subr.bf16.mxu0 0
  %735 = vmatpush2.bf16.msra.mxu0 %v577
  %736 = vmatprep.subr.bf16.mxu0 0
  %737 = vmatpush2.bf16.msra.mxu0 %v576
  %738 = vmatprep.subr.bf16.mxu0 0
  %739 = vmatpush2.bf16.msra.mxu0 %v575
  %740 = vmatprep.subr.bf16.mxu0 0
  %741 = vmatpush2.bf16.msra.mxu0 %v574
  %742 = vmatprep.mubr.bf16.mxu0 %v243
  %743 = vmatmul.mubr.bf16.gmra.mxu0 %v242
  %v744 = vpop.f32.mrf.mxu0
  %v745 = vadd.f32 %v184, %v744
  %v746 = vpop.f32.mrf.mxu0
  %v747 = vpop.f32.mrf.mxu0
  %v748 = vadd.f32 %v184, %v747
  %v749 = vpop.f32.mrf.mxu0
  %750 = vmatprep.mubr.bf16.mxu0 %v252
  %751 = vmatmul.mubr.bf16.gmra.mxu0 %v251
  %v752 = vpop.f32.mrf.mxu0
  %v753 = vadd.f32 %v184, %v752
  %v754 = vpop.f32.mrf.mxu0
  %v755 = vpop.f32.mrf.mxu0
  %v756 = vadd.f32 %v184, %v755
  %v757 = vpop.f32.mrf.mxu0
  %758 = vdwg.mxu0
  %759 = vmatprep.subr.bf16.mxu0 0
  %760 = vmatpush1.bf16.msra.mxu0 %v589
  %761 = vmatprep.subr.bf16.mxu0 0
  %762 = vmatpush1.bf16.msra.mxu0 %v588
  %763 = vmatprep.subr.bf16.mxu0 0
  %764 = vmatpush1.bf16.msra.mxu0 %v587
  %765 = vmatprep.subr.bf16.mxu0 0
  %766 = vmatpush1.bf16.msra.mxu0 %v586
  %767 = vmatprep.subr.bf16.mxu0 0
  %768 = vmatpush1.bf16.msra.mxu0 %v585
  %769 = vmatprep.subr.bf16.mxu0 0
  %770 = vmatpush1.bf16.msra.mxu0 %v584
  %771 = vmatprep.subr.bf16.mxu0 0
  %772 = vmatpush1.bf16.msra.mxu0 %v583
  %773 = vmatprep.subr.bf16.mxu0 0
  %774 = vmatpush1.bf16.msra.mxu0 %v582
  %775 = vmatprep.subr.bf16.mxu0 0
  %776 = vmatpush2.bf16.msra.mxu0 %v597
  %777 = vmatprep.subr.bf16.mxu0 0
  %778 = vmatpush2.bf16.msra.mxu0 %v596
  %779 = vmatprep.subr.bf16.mxu0 0
  %780 = vmatpush2.bf16.msra.mxu0 %v595
  %781 = vmatprep.subr.bf16.mxu0 0
  %782 = vmatpush2.bf16.msra.mxu0 %v594
  %783 = vmatprep.subr.bf16.mxu0 0
  %784 = vmatpush2.bf16.msra.mxu0 %v593
  %785 = vmatprep.subr.bf16.mxu0 0
  %786 = vmatpush2.bf16.msra.mxu0 %v592
  %787 = vmatprep.subr.bf16.mxu0 0
  %788 = vmatpush2.bf16.msra.mxu0 %v591
  %789 = vmatprep.subr.bf16.mxu0 0
  %790 = vmatpush2.bf16.msra.mxu0 %v590
  %791 = vmatprep.mubr.bf16.mxu0 %v245
  %792 = vmatmul.mubr.bf16.gmra.mxu0 %v244
  %v793 = vpop.f32.mrf.mxu0
  %v794 = vadd.f32 %v745, %v793
  %v795 = vpop.f32.mrf.mxu0
  %v796 = vpop.f32.mrf.mxu0
  %v797 = vadd.f32 %v748, %v796
  %v798 = vpop.f32.mrf.mxu0
  %799 = vmatprep.mubr.bf16.mxu0 %v254
  %800 = vmatmul.mubr.bf16.gmra.mxu0 %v253
  %v801 = vpop.f32.mrf.mxu0
  %v802 = vadd.f32 %v753, %v801
  %v803 = vpop.f32.mrf.mxu0
  %v804 = vpop.f32.mrf.mxu0
  %v805 = vadd.f32 %v756, %v804
  %v806 = vpop.f32.mrf.mxu0
  %807 = vdwg.mxu0
  %808 = vmatprep.subr.bf16.mxu0 0
  %809 = vmatpush1.bf16.msra.mxu0 %v605
  %810 = vmatprep.subr.bf16.mxu0 0
  %811 = vmatpush1.bf16.msra.mxu0 %v604
  %812 = vmatprep.subr.bf16.mxu0 0
  %813 = vmatpush1.bf16.msra.mxu0 %v603
  %814 = vmatprep.subr.bf16.mxu0 0
  %815 = vmatpush1.bf16.msra.mxu0 %v602
  %816 = vmatprep.subr.bf16.mxu0 0
  %817 = vmatpush1.bf16.msra.mxu0 %v601
  %818 = vmatprep.subr.bf16.mxu0 0
  %819 = vmatpush1.bf16.msra.mxu0 %v600
  %820 = vmatprep.subr.bf16.mxu0 0
  %821 = vmatpush1.bf16.msra.mxu0 %v599
  %822 = vmatprep.subr.bf16.mxu0 0
  %823 = vmatpush1.bf16.msra.mxu0 %v598
  %824 = vmatprep.subr.bf16.mxu0 0
  %825 = vmatpush2.bf16.msra.mxu0 %v613
  %826 = vmatprep.subr.bf16.mxu0 0
  %827 = vmatpush2.bf16.msra.mxu0 %v612
  %828 = vmatprep.subr.bf16.mxu0 0
  %829 = vmatpush2.bf16.msra.mxu0 %v611
  %830 = vmatprep.subr.bf16.mxu0 0
  %831 = vmatpush2.bf16.msra.mxu0 %v610
  %832 = vmatprep.subr.bf16.mxu0 0
  %833 = vmatpush2.bf16.msra.mxu0 %v609
  %834 = vmatprep.subr.bf16.mxu0 0
  %835 = vmatpush2.bf16.msra.mxu0 %v608
  %836 = vmatprep.subr.bf16.mxu0 0
  %837 = vmatpush2.bf16.msra.mxu0 %v607
  %838 = vmatprep.subr.bf16.mxu0 0
  %839 = vmatpush2.bf16.msra.mxu0 %v606
  %840 = vmatprep.mubr.bf16.mxu0 %v247
  %841 = vmatmul.mubr.bf16.gmra.mxu0 %v246
  %v842 = vpop.f32.mrf.mxu0
  %v843 = vadd.f32 %v794, %v842
  %v844 = vpop.f32.mrf.mxu0
  %v845 = vpop.f32.mrf.mxu0
  %v846 = vadd.f32 %v797, %v845
  %v847 = vpop.f32.mrf.mxu0
  %848 = vmatprep.mubr.bf16.mxu0 %v256
  %849 = vmatmul.mubr.bf16.gmra.mxu0 %v255
  %v850 = vpop.f32.mrf.mxu0
  %v851 = vadd.f32 %v802, %v850
  %v852 = vpop.f32.mrf.mxu0
  %v853 = vpop.f32.mrf.mxu0
  %v854 = vadd.f32 %v805, %v853
  %v855 = vpop.f32.mrf.mxu0
  %856 = vdwg.mxu0
  %857 = vmatprep.subr.bf16.mxu0 0
  %858 = vmatpush1.bf16.msra.mxu0 %v621
  %859 = vmatprep.subr.bf16.mxu0 0
  %860 = vmatpush1.bf16.msra.mxu0 %v620
  %861 = vmatprep.subr.bf16.mxu0 0
  %862 = vmatpush1.bf16.msra.mxu0 %v619
  %863 = vmatprep.subr.bf16.mxu0 0
  %864 = vmatpush1.bf16.msra.mxu0 %v618
  %865 = vmatprep.subr.bf16.mxu0 0
  %866 = vmatpush1.bf16.msra.mxu0 %v617
  %867 = vmatprep.subr.bf16.mxu0 0
  %868 = vmatpush1.bf16.msra.mxu0 %v616
  %869 = vmatprep.subr.bf16.mxu0 0
  %870 = vmatpush1.bf16.msra.mxu0 %v615
  %871 = vmatprep.subr.bf16.mxu0 0
  %872 = vmatpush1.bf16.msra.mxu0 %v614
  %873 = vmatprep.subr.bf16.mxu0 0
  %874 = vmatpush2.bf16.msra.mxu0 %v629
  %875 = vmatprep.subr.bf16.mxu0 0
  %876 = vmatpush2.bf16.msra.mxu0 %v628
  %877 = vmatprep.subr.bf16.mxu0 0
  %878 = vmatpush2.bf16.msra.mxu0 %v627
  %879 = vmatprep.subr.bf16.mxu0 0
  %880 = vmatpush2.bf16.msra.mxu0 %v626
  %881 = vmatprep.subr.bf16.mxu0 0
  %882 = vmatpush2.bf16.msra.mxu0 %v625
  %883 = vmatprep.subr.bf16.mxu0 0
  %884 = vmatpush2.bf16.msra.mxu0 %v624
  %885 = vmatprep.subr.bf16.mxu0 0
  %886 = vmatpush2.bf16.msra.mxu0 %v623
  %887 = vmatprep.subr.bf16.mxu0 0
  %888 = vmatpush2.bf16.msra.mxu0 %v622
  %889 = vmatprep.mubr.bf16.mxu0 %v249
  %890 = vmatmul.mubr.bf16.gmra.mxu0 %v248
  %v891 = vpop.f32.mrf.mxu0
  %v892 = vadd.f32 %v843, %v891
  %v893 = vpop.f32.mrf.mxu0
  %v894 = vpop.f32.mrf.mxu0
  %v895 = vadd.f32 %v846, %v894
  %v896 = vpop.f32.mrf.mxu0
  %897 = vmatprep.mubr.bf16.mxu0 %v258
  %898 = vmatmul.mubr.bf16.gmra.mxu0 %v257
  %v899 = vpop.f32.mrf.mxu0
  %v900 = vadd.f32 %v851, %v899
  %v901 = vpop.f32.mrf.mxu0
  %v902 = vpop.f32.mrf.mxu0
  %v903 = vadd.f32 %v854, %v902
  %v904 = vpop.f32.mrf.mxu0
  %905 = vdwg.mxu0
  %906 = vmatprep.subr.bf16.mxu0 0
  %907 = vmatpush1.bf16.msra.mxu0 %v637
  %908 = vmatprep.subr.bf16.mxu0 0
  %909 = vmatpush1.bf16.msra.mxu0 %v636
  %910 = vmatprep.subr.bf16.mxu0 0
  %911 = vmatpush1.bf16.msra.mxu0 %v635
  %912 = vmatprep.subr.bf16.mxu0 0
  %913 = vmatpush1.bf16.msra.mxu0 %v634
  %914 = vmatprep.subr.bf16.mxu0 0
  %915 = vmatpush1.bf16.msra.mxu0 %v633
  %916 = vmatprep.subr.bf16.mxu0 0
  %917 = vmatpush1.bf16.msra.mxu0 %v632
  %918 = vmatprep.subr.bf16.mxu0 0
  %919 = vmatpush1.bf16.msra.mxu0 %v631
  %920 = vmatprep.subr.bf16.mxu0 0
  %921 = vmatpush1.bf16.msra.mxu0 %v630
  %922 = vmatprep.subr.bf16.mxu0 0
  %923 = vmatpush2.bf16.msra.mxu0 0
  %924 = vmatprep.subr.bf16.mxu0 0
  %925 = vmatpush2.bf16.msra.mxu0 0
  %926 = vmatprep.subr.bf16.mxu0 0
  %927 = vmatpush2.bf16.msra.mxu0 0
  %928 = vmatprep.subr.bf16.mxu0 0
  %929 = vmatpush2.bf16.msra.mxu0 0
  %930 = vmatprep.subr.bf16.mxu0 0
  %931 = vmatpush2.bf16.msra.mxu0 0
  %932 = vmatprep.subr.bf16.mxu0 0
  %933 = vmatpush2.bf16.msra.mxu0 0
  %934 = vmatprep.subr.bf16.mxu0 0
  %935 = vmatpush2.bf16.msra.mxu0 0
  %936 = vmatprep.subr.bf16.mxu0 0
  %937 = vmatpush2.bf16.msra.mxu0 0
  %938 = vmatprep.mubr.bf16.mxu0 0
  %939 = vmatmul.mubr.bf16.gmra.mxu0 %v250
  %v940 = vpop.f32.mrf.mxu0
  %v941 = vadd.f32 %v892, %v940
  %v942 = vpop.f32.mrf.mxu0
  %v943 = vpop.f32.mrf.mxu0
  %v944 = vadd.f32 %v895, %v943
  %v945 = vpop.f32.mrf.mxu0
  %946 = vmatprep.mubr.bf16.mxu0 0
  %947 = vmatmul.mubr.bf16.gmra.mxu0 %v259
  %v948 = vpop.f32.mrf.mxu0
  %v949 = vadd.f32 %v900, %v948
  %v950 = vpop.f32.mrf.mxu0
  %v951 = vpop.f32.mrf.mxu0
  %v952 = vadd.f32 %v903, %v951
  %v953 = vpop.f32.mrf.mxu0
  %954 = vdwg.mxu0
  %955 = vst [vmem:[%s3] sm:$0xff] %v941
  %956 = vst [vmem:[%s3 + $0x8] sm:$0xff] %v944
  %957 = vst [vmem:[%s3 + $0x10] sm:$0xff] %v949
  %958 = vst [vmem:[%s3 + $0x18] sm:$0xff] %v952
  // Predicated region
  $region14: #{_forward_impl.31} parent=0 // pred_check
    _
  $region15: #{_forward_impl.31} parent=0 // pred_check_branch
    %960 = sbr.rel (0) target = $region17
  $region16: #{_forward_impl.31} parent=0 // pred_region
    _
  $region17: #{_forward_impl.31} parent=0 // pred_fallthru
    _
  // Predicated region
  $region18: #{_forward_impl.31} parent=0 // pred_check
    _
  $region19: #{_forward_impl.31} parent=0 // pred_check_branch
    %962 = sbr.rel (0) target = $region21
  $region20: #{_forward_impl.31} parent=0 // pred_region
    _
  $region21: #{_forward_impl.31} parent=0 // pred_fallthru
    _

// kernel: _forward_impl.30
$region0: #{_forward_impl.30}
  #allocation0 [shape = 'u32[]', space=smem, size = 0x4, offset = 0x4, fixed_abs, tag = 'smem constant byte address 0x4 - core index']
  #allocation1 [shape = 'u32[144,128]{1,0:T(1,128)}', space=vmem, size = 0x12000, scoped, tag = 'internal scratch']
  %s0 = inlined_call_operand.vmem [shape: bf16[128,640], index: 0, kind: input, shape index: {}]
  %s1 = inlined_call_operand.vmem [shape: bf16[640,128], index: 1, kind: input, shape index: {}]
  %s2 = inlined_call_operand.vmem [shape: f32[1,128], index: 2, kind: input, shape index: {}]
  %s3 = inlined_call_operand.vmem [shape: f32[128,128], index: 3, kind: output, shape index: {}]
  %s4 = sld [smem:[#allocation0]]
  $region22: #{_forward_impl.30} parent=0
    _
  %s6 = ssub.s32 1, %s4
  %s7 = scalar_select 0, %s6, %s4
  // Predicated region
  $region2: #{_forward_impl.30} parent=0 // pred_check
    _
  $region3: #{_forward_impl.30} parent=0 // pred_check_branch
    %9 = sbr.rel (0) target = $region5
  $region4: #{_forward_impl.30} parent=0 // pred_region
    _
  $region5: #{_forward_impl.30} parent=0 // pred_fallthru
    _
  // Predicated region
  $region6: #{_forward_impl.30} parent=0 // pred_check
    _
  $region7: #{_forward_impl.30} parent=0 // pred_check_branch
    %11 = sbr.rel (0) target = $region9
  $region8: #{_forward_impl.30} parent=0 // pred_region
    _
  $region9: #{_forward_impl.30} parent=0 // pred_fallthru
    _
  // Predicated region
  $region10: #{_forward_impl.30} parent=0 // pred_check
    _
  $region11: #{_forward_impl.30} parent=0 // pred_check_branch
    %13 = sbr.rel (0) target = $region13
  $region12: #{_forward_impl.30} parent=0 // pred_region
    _
  $region13: #{_forward_impl.30} parent=0 // pred_fallthru
    _
  %v15 = vld [vmem:[%s0] sm:$0xff]
  %v16 = vld [vmem:[%s0 + $0x8] sm:$0xff]
  %v17 = vld [vmem:[%s0 + $0x10] sm:$0xf]
  %v18 = vld [vmem:[%s0 + $0x14] sm:$0xff]
  %v19 = vld [vmem:[%s0 + $0x1c] sm:$0xff]
  %v20 = vld [vmem:[%s0 + $0x24] sm:$0xf]
  %v21 = vld [vmem:[%s0 + $0x28] sm:$0xff]
  %v22 = vld [vmem:[%s0 + $0x30] sm:$0xff]
  %v23 = vld [vmem:[%s0 + $0x38] sm:$0xf]
  %v24 = vld [vmem:[%s0 + $0x3c] sm:$0xff]
  %v25 = vld [vmem:[%s0 + $0x44] sm:$0xff]
  %v26 = vld [vmem:[%s0 + $0x4c] sm:$0xf]
  %v27 = vld [vmem:[%s0 + $0x50] sm:$0xff]
  %v28 = vld [vmem:[%s0 + $0x58] sm:$0xff]
  %v29 = vld [vmem:[%s0 + $0x60] sm:$0xf]
  %v30 = vld [vmem:[%s0 + $0x64] sm:$0xff]
  %v31 = vld [vmem:[%s0 + $0x6c] sm:$0xff]
  %v32 = vld [vmem:[%s0 + $0x74] sm:$0xf]
  %v33 = vld [vmem:[%s0 + $0x78] sm:$0xff]
  %v34 = vld [vmem:[%s0 + $0x80] sm:$0xff]
  %v35 = vld [vmem:[%s0 + $0x88] sm:$0xf]
  %v36 = vld [vmem:[%s0 + $0x8c] sm:$0xff]
  %v37 = vld [vmem:[%s0 + $0x94] sm:$0xff]
  %v38 = vld [vmem:[%s0 + $0x9c] sm:$0xf]
  %v39 = vld [vmem:[%s0 + $0xa0] sm:$0xff]
  %v40 = vld [vmem:[%s0 + $0xa8] sm:$0xff]
  %v41 = vld [vmem:[%s0 + $0xb0] sm:$0xf]
  %v42 = vld [vmem:[%s0 + $0xb4] sm:$0xff]
  %v43 = vld [vmem:[%s0 + $0xbc] sm:$0xff]
  %v44 = vld [vmem:[%s0 + $0xc4] sm:$0xf]
  %v45 = vld [vmem:[%s0 + $0xc8] sm:$0xff]
  %v46 = vld [vmem:[%s0 + $0xd0] sm:$0xff]
  %v47 = vld [vmem:[%s0 + $0xd8] sm:$0xf]
  %v48 = vld [vmem:[%s0 + $0xdc] sm:$0xff]
  %v49 = vld [vmem:[%s0 + $0xe4] sm:$0xff]
  %v50 = vld [vmem:[%s0 + $0xec] sm:$0xf]
  %v51 = vld [vmem:[%s0 + $0xf0] sm:$0xff]
  %v52 = vld [vmem:[%s0 + $0xf8] sm:$0xff]
  %v53 = vld [vmem:[%s0 + $0x100] sm:$0xf]
  %v54 = vld [vmem:[%s0 + $0x104] sm:$0xff]
  %v55 = vld [vmem:[%s0 + $0x10c] sm:$0xff]
  %v56 = vld [vmem:[%s0 + $0x114] sm:$0xf]
  %v57 = vld [vmem:[%s0 + $0x118] sm:$0xff]
  %v58 = vld [vmem:[%s0 + $0x120] sm:$0xff]
  %v59 = vld [vmem:[%s0 + $0x128] sm:$0xf]
  %v60 = vld [vmem:[%s0 + $0x12c] sm:$0xff]
  %v61 = vld [vmem:[%s0 + $0x134] sm:$0xff]
  %v62 = vld [vmem:[%s0 + $0x13c] sm:$0xf]
  %v63 = vld [vmem:[%s1] sm:$0xf]
  %v64 = vld [vmem:[%s1 + $0x4] sm:$0xf]
  %v65 = vld [vmem:[%s1 + $0x8] sm:$0xf]
  %v66 = vld [vmem:[%s1 + $0xc] sm:$0xf]
  %v67 = vld [vmem:[%s1 + $0x10] sm:$0xf]
  %v68 = vld [vmem:[%s1 + $0x14] sm:$0xf]
  %v69 = vld [vmem:[%s1 + $0x18] sm:$0xf]
  %v70 = vld [vmem:[%s1 + $0x1c] sm:$0xf]
  %v71 = vld [vmem:[%s1 + $0x20] sm:$0xf]
  %v72 = vld [vmem:[%s1 + $0x24] sm:$0xf]
  %v73 = vld [vmem:[%s1 + $0x28] sm:$0xf]
  %v74 = vld [vmem:[%s1 + $0x2c] sm:$0xf]
  %v75 = vld [vmem:[%s1 + $0x30] sm:$0xf]
  %v76 = vld [vmem:[%s1 + $0x34] sm:$0xf]
  %v77 = vld [vmem:[%s1 + $0x38] sm:$0xf]
  %v78 = vld [vmem:[%s1 + $0x3c] sm:$0xf]
  %v79 = vld [vmem:[%s1 + $0x40] sm:$0xf]
  %v80 = vld [vmem:[%s1 + $0x44] sm:$0xf]
  %v81 = vld [vmem:[%s1 + $0x48] sm:$0xf]
  %v82 = vld [vmem:[%s1 + $0x4c] sm:$0xf]
  %v83 = vld [vmem:[%s1 + $0x50] sm:$0xf]
  %v84 = vld [vmem:[%s1 + $0x54] sm:$0xf]
  %v85 = vld [vmem:[%s1 + $0x58] sm:$0xf]
  %v86 = vld [vmem:[%s1 + $0x5c] sm:$0xf]
  %v87 = vld [vmem:[%s1 + $0x60] sm:$0xf]
  %v88 = vld [vmem:[%s1 + $0x64] sm:$0xf]
  %v89 = vld [vmem:[%s1 + $0x68] sm:$0xf]
  %v90 = vld [vmem:[%s1 + $0x6c] sm:$0xf]
  %v91 = vld [vmem:[%s1 + $0x70] sm:$0xf]
  %v92 = vld [vmem:[%s1 + $0x74] sm:$0xf]
  %v93 = vld [vmem:[%s1 + $0x78] sm:$0xf]
  %v94 = vld [vmem:[%s1 + $0x7c] sm:$0xf]
  %v95 = vld [vmem:[%s1 + $0x80] sm:$0xf]
  %v96 = vld [vmem:[%s1 + $0x84] sm:$0xf]
  %v97 = vld [vmem:[%s1 + $0x88] sm:$0xf]
  %v98 = vld [vmem:[%s1 + $0x8c] sm:$0xf]
  %v99 = vld [vmem:[%s1 + $0x90] sm:$0xf]
  %v100 = vld [vmem:[%s1 + $0x94] sm:$0xf]
  %v101 = vld [vmem:[%s1 + $0x98] sm:$0xf]
  %v102 = vld [vmem:[%s1 + $0x9c] sm:$0xf]
  %v103 = vld [vmem:[%s1 + $0xa0] sm:$0xf]
  %v104 = vld [vmem:[%s1 + $0xa4] sm:$0xf]
  %v105 = vld [vmem:[%s1 + $0xa8] sm:$0xf]
  %v106 = vld [vmem:[%s1 + $0xac] sm:$0xf]
  %v107 = vld [vmem:[%s1 + $0xb0] sm:$0xf]
  %v108 = vld [vmem:[%s1 + $0xb4] sm:$0xf]
  %v109 = vld [vmem:[%s1 + $0xb8] sm:$0xf]
  %v110 = vld [vmem:[%s1 + $0xbc] sm:$0xf]
  %v111 = vld [vmem:[%s1 + $0xc0] sm:$0xf]
  %v112 = vld [vmem:[%s1 + $0xc4] sm:$0xf]
  %v113 = vld [vmem:[%s1 + $0xc8] sm:$0xf]
  %v114 = vld [vmem:[%s1 + $0xcc] sm:$0xf]
  %v115 = vld [vmem:[%s1 + $0xd0] sm:$0xf]
  %v116 = vld [vmem:[%s1 + $0xd4] sm:$0xf]
  %v117 = vld [vmem:[%s1 + $0xd8] sm:$0xf]
  %v118 = vld [vmem:[%s1 + $0xdc] sm:$0xf]
  %v119 = vld [vmem:[%s1 + $0xe0] sm:$0xf]
  %v120 = vld [vmem:[%s1 + $0xe4] sm:$0xf]
  %v121 = vld [vmem:[%s1 + $0xe8] sm:$0xf]
  %v122 = vld [vmem:[%s1 + $0xec] sm:$0xf]
  %v123 = vld [vmem:[%s1 + $0xf0] sm:$0xf]
  %v124 = vld [vmem:[%s1 + $0xf4] sm:$0xf]
  %v125 = vld [vmem:[%s1 + $0xf8] sm:$0xf]
  %v126 = vld [vmem:[%s1 + $0xfc] sm:$0xf]
  %v127 = vld [vmem:[%s1 + $0x100] sm:$0xf]
  %v128 = vld [vmem:[%s1 + $0x104] sm:$0xf]
  %v129 = vld [vmem:[%s1 + $0x108] sm:$0xf]
  %v130 = vld [vmem:[%s1 + $0x10c] sm:$0xf]
  %v131 = vld [vmem:[%s1 + $0x110] sm:$0xf]
  %v132 = vld [vmem:[%s1 + $0x114] sm:$0xf]
  %v133 = vld [vmem:[%s1 + $0x118] sm:$0xf]
  %v134 = vld [vmem:[%s1 + $0x11c] sm:$0xf]
  %v135 = vld [vmem:[%s1 + $0x120] sm:$0xf]
  %v136 = vld [vmem:[%s1 + $0x124] sm:$0xf]
  %v137 = vld [vmem:[%s1 + $0x128] sm:$0xf]
  %v138 = vld [vmem:[%s1 + $0x12c] sm:$0xf]
  %v139 = vld [vmem:[%s1 + $0x130] sm:$0xf]
  %v140 = vld [vmem:[%s1 + $0x134] sm:$0xf]
  %v141 = vld [vmem:[%s1 + $0x138] sm:$0xf]
  %v142 = vld [vmem:[%s1 + $0x13c] sm:$0xf]
  %v143 = vld [vmem:[%s2] sm:$0x1]
  %v145 = vlaneseq
  %v146 = vshrl.u32 %v145, 7
  %v147 = vsub.s32 0, %v146
  %v148 = vrot.slane %v143, %v147
  %v198 = vunpack.c.l.b16 %v15
  %v199 = vunpack.c.h.b16 %v15
  %v200 = vunpack.c.l.b16 %v16
  %v201 = vunpack.c.h.b16 %v16
  %v202 = vunpack.c.l.b16 %v17
  %v203 = vunpack.c.l.b16 %v18
  %v204 = vunpack.c.h.b16 %v18
  %v205 = vunpack.c.l.b16 %v19
  %v206 = vunpack.c.h.b16 %v19
  %v207 = vunpack.c.l.b16 %v20
  %v208 = vunpack.c.l.b16 %v21
  %v209 = vunpack.c.h.b16 %v21
  %v210 = vunpack.c.l.b16 %v22
  %v211 = vunpack.c.h.b16 %v22
  %v212 = vunpack.c.l.b16 %v23
  %v213 = vunpack.c.l.b16 %v24
  %v214 = vunpack.c.h.b16 %v24
  %v215 = vunpack.c.l.b16 %v25
  %v216 = vunpack.c.h.b16 %v25
  %v217 = vunpack.c.l.b16 %v26
  %v218 = vunpack.c.l.b16 %v27
  %v219 = vunpack.c.h.b16 %v27
  %v220 = vunpack.c.l.b16 %v28
  %v221 = vunpack.c.h.b16 %v28
  %v222 = vunpack.c.l.b16 %v29
  %v223 = vunpack.c.l.b16 %v30
  %v224 = vunpack.c.h.b16 %v30
  %v225 = vunpack.c.l.b16 %v31
  %v226 = vunpack.c.h.b16 %v31
  %v227 = vunpack.c.l.b16 %v32
  %v228 = vunpack.c.l.b16 %v33
  %v229 = vunpack.c.h.b16 %v33
  %v230 = vunpack.c.l.b16 %v34
  %v231 = vunpack.c.h.b16 %v34
  %v232 = vunpack.c.l.b16 %v35
  %v233 = vunpack.c.l.b16 %v36
  %v234 = vunpack.c.h.b16 %v36
  %v235 = vunpack.c.l.b16 %v37
  %v236 = vunpack.c.h.b16 %v37
  %v237 = vunpack.c.l.b16 %v38
  %v238 = vunpack.c.l.b16 %v39
  %v239 = vunpack.c.h.b16 %v39
  %v240 = vunpack.c.l.b16 %v40
  %v241 = vunpack.c.h.b16 %v40
  %v242 = vunpack.c.l.b16 %v41
  %v243 = vunpack.c.l.b16 %v42
  %v244 = vunpack.c.h.b16 %v42
  %v245 = vunpack.c.l.b16 %v43
  %v246 = vunpack.c.h.b16 %v43
  %v247 = vunpack.c.l.b16 %v44
  %v248 = vunpack.c.l.b16 %v45
  %v249 = vunpack.c.h.b16 %v45
  %v250 = vunpack.c.l.b16 %v46
  %v251 = vunpack.c.h.b16 %v46
  %v252 = vunpack.c.l.b16 %v47
  %v253 = vunpack.c.l.b16 %v48
  %v254 = vunpack.c.h.b16 %v48
  %v255 = vunpack.c.l.b16 %v49
  %v256 = vunpack.c.h.b16 %v49
  %v257 = vunpack.c.l.b16 %v50
  %v258 = vunpack.c.l.b16 %v51
  %v259 = vunpack.c.h.b16 %v51
  %v260 = vunpack.c.l.b16 %v52
  %v261 = vunpack.c.h.b16 %v52
  %v262 = vunpack.c.l.b16 %v53
  %v263 = vunpack.c.l.b16 %v54
  %v264 = vunpack.c.h.b16 %v54
  %v265 = vunpack.c.l.b16 %v55
  %v266 = vunpack.c.h.b16 %v55
  %v267 = vunpack.c.l.b16 %v56
  %v268 = vunpack.c.l.b16 %v57
  %v269 = vunpack.c.h.b16 %v57
  %v270 = vunpack.c.l.b16 %v58
  %v271 = vunpack.c.h.b16 %v58
  %v272 = vunpack.c.l.b16 %v59
  %v273 = vunpack.c.l.b16 %v60
  %v274 = vunpack.c.h.b16 %v60
  %v275 = vunpack.c.l.b16 %v61
  %v276 = vunpack.c.h.b16 %v61
  %v277 = vunpack.c.l.b16 %v62
  %v278 = vpack.c.b16 %v203, %v198
  %v279 = vpack.c.b16 %v204, %v199
  %v280 = vpack.c.b16 %v205, %v200
  %v281 = vpack.c.b16 %v206, %v201
  %v282 = vpack.c.b16 %v207, %v202
  %v283 = vpack.c.b16 %v213, %v208
  %v284 = vpack.c.b16 %v214, %v209
  %v285 = vpack.c.b16 %v215, %v210
  %v286 = vpack.c.b16 %v216, %v211
  %v287 = vpack.c.b16 %v217, %v212
  %v288 = vpack.c.b16 %v223, %v218
  %v289 = vpack.c.b16 %v224, %v219
  %v290 = vpack.c.b16 %v225, %v220
  %v291 = vpack.c.b16 %v226, %v221
  %v292 = vpack.c.b16 %v227, %v222
  %v293 = vpack.c.b16 %v233, %v228
  %v294 = vpack.c.b16 %v234, %v229
  %v295 = vpack.c.b16 %v235, %v230
  %v296 = vpack.c.b16 %v236, %v231
  %v297 = vpack.c.b16 %v237, %v232
  %v298 = vpack.c.b16 %v243, %v238
  %v299 = vpack.c.b16 %v244, %v239
  %v300 = vpack.c.b16 %v245, %v240
  %v301 = vpack.c.b16 %v246, %v241
  %v302 = vpack.c.b16 %v247, %v242
  %v303 = vpack.c.b16 %v253, %v248
  %v304 = vpack.c.b16 %v254, %v249
  %v305 = vpack.c.b16 %v255, %v250
  %v306 = vpack.c.b16 %v256, %v251
  %v307 = vpack.c.b16 %v257, %v252
  %v308 = vpack.c.b16 %v263, %v258
  %v309 = vpack.c.b16 %v264, %v259
  %v310 = vpack.c.b16 %v265, %v260
  %v311 = vpack.c.b16 %v266, %v261
  %v312 = vpack.c.b16 %v267, %v262
  %v313 = vpack.c.b16 %v273, %v268
  %v314 = vpack.c.b16 %v274, %v269
  %v315 = vpack.c.b16 %v275, %v270
  %v316 = vpack.c.b16 %v276, %v271
  %v317 = vpack.c.b16 %v277, %v272
  %v438 = vunpack.c.l.b16 %v63
  %v439 = vunpack.c.l.b16 %v64
  %v440 = vunpack.c.l.b16 %v65
  %v441 = vunpack.c.l.b16 %v66
  %v442 = vunpack.c.l.b16 %v67
  %v443 = vunpack.c.l.b16 %v68
  %v444 = vunpack.c.l.b16 %v69
  %v445 = vunpack.c.l.b16 %v70
  %v446 = vunpack.c.l.b16 %v71
  %v447 = vunpack.c.l.b16 %v72
  %v448 = vunpack.c.l.b16 %v73
  %v449 = vunpack.c.l.b16 %v74
  %v450 = vunpack.c.l.b16 %v75
  %v451 = vunpack.c.l.b16 %v76
  %v452 = vunpack.c.l.b16 %v77
  %v453 = vunpack.c.l.b16 %v78
  %v454 = vunpack.c.l.b16 %v79
  %v455 = vunpack.c.l.b16 %v80
  %v456 = vunpack.c.l.b16 %v81
  %v457 = vunpack.c.l.b16 %v82
  %v458 = vunpack.c.l.b16 %v83
  %v459 = vunpack.c.l.b16 %v84
  %v460 = vunpack.c.l.b16 %v85
  %v461 = vunpack.c.l.b16 %v86
  %v462 = vunpack.c.l.b16 %v87
  %v463 = vunpack.c.l.b16 %v88
  %v464 = vunpack.c.l.b16 %v89
  %v465 = vunpack.c.l.b16 %v90
  %v466 = vunpack.c.l.b16 %v91
  %v467 = vunpack.c.l.b16 %v92
  %v468 = vunpack.c.l.b16 %v93
  %v469 = vunpack.c.l.b16 %v94
  %v470 = vunpack.c.l.b16 %v95
  %v471 = vunpack.c.l.b16 %v96
  %v472 = vunpack.c.l.b16 %v97
  %v473 = vunpack.c.l.b16 %v98
  %v474 = vunpack.c.l.b16 %v99
  %v475 = vunpack.c.l.b16 %v100
  %v476 = vunpack.c.l.b16 %v101
  %v477 = vunpack.c.l.b16 %v102
  %v478 = vunpack.c.l.b16 %v103
  %v479 = vunpack.c.l.b16 %v104
  %v480 = vunpack.c.l.b16 %v105
  %v481 = vunpack.c.l.b16 %v106
  %v482 = vunpack.c.l.b16 %v107
  %v483 = vunpack.c.l.b16 %v108
  %v484 = vunpack.c.l.b16 %v109
  %v485 = vunpack.c.l.b16 %v110
  %v486 = vunpack.c.l.b16 %v111
  %v487 = vunpack.c.l.b16 %v112
  %v488 = vunpack.c.l.b16 %v113
  %v489 = vunpack.c.l.b16 %v114
  %v490 = vunpack.c.l.b16 %v115
  %v491 = vunpack.c.l.b16 %v116
  %v492 = vunpack.c.l.b16 %v117
  %v493 = vunpack.c.l.b16 %v118
  %v494 = vunpack.c.l.b16 %v119
  %v495 = vunpack.c.l.b16 %v120
  %v496 = vunpack.c.l.b16 %v121
  %v497 = vunpack.c.l.b16 %v122
  %v498 = vunpack.c.l.b16 %v123
  %v499 = vunpack.c.l.b16 %v124
  %v500 = vunpack.c.l.b16 %v125
  %v501 = vunpack.c.l.b16 %v126
  %v502 = vunpack.c.l.b16 %v127
  %v503 = vunpack.c.l.b16 %v128
  %v504 = vunpack.c.l.b16 %v129
  %v505 = vunpack.c.l.b16 %v130
  %v506 = vunpack.c.l.b16 %v131
  %v507 = vunpack.c.l.b16 %v132
  %v508 = vunpack.c.l.b16 %v133
  %v509 = vunpack.c.l.b16 %v134
  %v510 = vunpack.c.l.b16 %v135
  %v511 = vunpack.c.l.b16 %v136
  %v512 = vunpack.c.l.b16 %v137
  %v513 = vunpack.c.l.b16 %v138
  %v514 = vunpack.c.l.b16 %v139
  %v515 = vunpack.c.l.b16 %v140
  %v516 = vunpack.c.l.b16 %v141
  %v517 = vunpack.c.l.b16 %v142
  %v518 = vpack.c.b16 %v439, %v438
  %v519 = vpack.c.b16 %v441, %v440
  %v520 = vpack.c.b16 %v443, %v442
  %v521 = vpack.c.b16 %v445, %v444
  %v522 = vpack.c.b16 %v447, %v446
  %v523 = vpack.c.b16 %v449, %v448
  %v524 = vpack.c.b16 %v451, %v450
  %v525 = vpack.c.b16 %v453, %v452
  %v526 = vpack.c.b16 %v455, %v454
  %v527 = vpack.c.b16 %v457, %v456
  %v528 = vpack.c.b16 %v459, %v458
  %v529 = vpack.c.b16 %v461, %v460
  %v530 = vpack.c.b16 %v463, %v462
  %v531 = vpack.c.b16 %v465, %v464
  %v532 = vpack.c.b16 %v467, %v466
  %v533 = vpack.c.b16 %v469, %v468
  %v534 = vpack.c.b16 %v471, %v470
  %v535 = vpack.c.b16 %v473, %v472
  %v536 = vpack.c.b16 %v475, %v474
  %v537 = vpack.c.b16 %v477, %v476
  %v538 = vpack.c.b16 %v479, %v478
  %v539 = vpack.c.b16 %v481, %v480
  %v540 = vpack.c.b16 %v483, %v482
  %v541 = vpack.c.b16 %v485, %v484
  %v542 = vpack.c.b16 %v487, %v486
  %v543 = vpack.c.b16 %v489, %v488
  %v544 = vpack.c.b16 %v491, %v490
  %v545 = vpack.c.b16 %v493, %v492
  %v546 = vpack.c.b16 %v495, %v494
  %v547 = vpack.c.b16 %v497, %v496
  %v548 = vpack.c.b16 %v499, %v498
  %v549 = vpack.c.b16 %v501, %v500
  %v550 = vpack.c.b16 %v503, %v502
  %v551 = vpack.c.b16 %v505, %v504
  %v552 = vpack.c.b16 %v507, %v506
  %v553 = vpack.c.b16 %v509, %v508
  %v554 = vpack.c.b16 %v511, %v510
  %v555 = vpack.c.b16 %v513, %v512
  %v556 = vpack.c.b16 %v515, %v514
  %v557 = vpack.c.b16 %v517, %v516
  %598 = vmatprep.subr.bf16.mxu0 0
  %599 = vmatpush1.bf16.msra.mxu0 %v525
  %600 = vmatprep.subr.bf16.mxu0 0
  %601 = vmatpush1.bf16.msra.mxu0 %v524
  %602 = vmatprep.subr.bf16.mxu0 0
  %603 = vmatpush1.bf16.msra.mxu0 %v523
  %604 = vmatprep.subr.bf16.mxu0 0
  %605 = vmatpush1.bf16.msra.mxu0 %v522
  %606 = vmatprep.subr.bf16.mxu0 0
  %607 = vmatpush1.bf16.msra.mxu0 %v521
  %608 = vmatprep.subr.bf16.mxu0 0
  %609 = vmatpush1.bf16.msra.mxu0 %v520
  %610 = vmatprep.subr.bf16.mxu0 0
  %611 = vmatpush1.bf16.msra.mxu0 %v519
  %612 = vmatprep.subr.bf16.mxu0 0
  %613 = vmatpush1.bf16.msra.mxu0 %v518
  %614 = vmatprep.subr.bf16.mxu0 0
  %615 = vmatpush2.bf16.msra.mxu0 %v533
  %616 = vmatprep.subr.bf16.mxu0 0
  %617 = vmatpush2.bf16.msra.mxu0 %v532
  %618 = vmatprep.subr.bf16.mxu0 0
  %619 = vmatpush2.bf16.msra.mxu0 %v531
  %620 = vmatprep.subr.bf16.mxu0 0
  %621 = vmatpush2.bf16.msra.mxu0 %v530
  %622 = vmatprep.subr.bf16.mxu0 0
  %623 = vmatpush2.bf16.msra.mxu0 %v529
  %624 = vmatprep.subr.bf16.mxu0 0
  %625 = vmatpush2.bf16.msra.mxu0 %v528
  %626 = vmatprep.subr.bf16.mxu0 0
  %627 = vmatpush2.bf16.msra.mxu0 %v527
  %628 = vmatprep.subr.bf16.mxu0 0
  %629 = vmatpush2.bf16.msra.mxu0 %v526
  %630 = vmatprep.mubr.bf16.mxu0 %v279
  %631 = vmatmul.mubr.bf16.gmra.mxu0 %v278
  %v632 = vpop.f32.mrf.mxu0
  %v633 = vadd.f32 %v148, %v632
  %v634 = vpop.f32.mrf.mxu0
  %v635 = vpop.f32.mrf.mxu0
  %v636 = vadd.f32 %v148, %v635
  %v637 = vpop.f32.mrf.mxu0
  %638 = vmatprep.mubr.bf16.mxu0 %v284
  %639 = vmatmul.mubr.bf16.gmra.mxu0 %v283
  %v640 = vpop.f32.mrf.mxu0
  %v641 = vadd.f32 %v148, %v640
  %v642 = vpop.f32.mrf.mxu0
  %v643 = vpop.f32.mrf.mxu0
  %v644 = vadd.f32 %v148, %v643
  %v645 = vpop.f32.mrf.mxu0
  %646 = vmatprep.mubr.bf16.mxu0 %v289
  %647 = vmatmul.mubr.bf16.gmra.mxu0 %v288
  %v648 = vpop.f32.mrf.mxu0
  %v649 = vadd.f32 %v148, %v648
  %v650 = vpop.f32.mrf.mxu0
  %v651 = vpop.f32.mrf.mxu0
  %v652 = vadd.f32 %v148, %v651
  %v653 = vpop.f32.mrf.mxu0
  %654 = vmatprep.mubr.bf16.mxu0 %v294
  %655 = vmatmul.mubr.bf16.gmra.mxu0 %v293
  %v656 = vpop.f32.mrf.mxu0
  %v657 = vadd.f32 %v148, %v656
  %v658 = vpop.f32.mrf.mxu0
  %v659 = vpop.f32.mrf.mxu0
  %v660 = vadd.f32 %v148, %v659
  %v661 = vpop.f32.mrf.mxu0
  %662 = vmatprep.mubr.bf16.mxu0 %v299
  %663 = vmatmul.mubr.bf16.gmra.mxu0 %v298
  %v664 = vpop.f32.mrf.mxu0
  %v665 = vadd.f32 %v148, %v664
  %v666 = vpop.f32.mrf.mxu0
  %v667 = vpop.f32.mrf.mxu0
  %v668 = vadd.f32 %v148, %v667
  %v669 = vpop.f32.mrf.mxu0
  %670 = vmatprep.mubr.bf16.mxu0 %v304
  %671 = vmatmul.mubr.bf16.gmra.mxu0 %v303
  %v672 = vpop.f32.mrf.mxu0
  %v673 = vadd.f32 %v148, %v672
  %v674 = vpop.f32.mrf.mxu0
  %v675 = vpop.f32.mrf.mxu0
  %v676 = vadd.f32 %v148, %v675
  %v677 = vpop.f32.mrf.mxu0
  %678 = vmatprep.mubr.bf16.mxu0 %v309
  %679 = vmatmul.mubr.bf16.gmra.mxu0 %v308
  %v680 = vpop.f32.mrf.mxu0
  %v681 = vadd.f32 %v148, %v680
  %v682 = vpop.f32.mrf.mxu0
  %v683 = vpop.f32.mrf.mxu0
  %v684 = vadd.f32 %v148, %v683
  %v685 = vpop.f32.mrf.mxu0
  %686 = vmatprep.mubr.bf16.mxu0 %v314
  %687 = vmatmul.mubr.bf16.gmra.mxu0 %v313
  %v688 = vpop.f32.mrf.mxu0
  %v689 = vadd.f32 %v148, %v688
  %v690 = vpop.f32.mrf.mxu0
  %v691 = vpop.f32.mrf.mxu0
  %v692 = vadd.f32 %v148, %v691
  %v693 = vpop.f32.mrf.mxu0
  %694 = vdwg.mxu0
  %695 = vmatprep.subr.bf16.mxu0 0
  %696 = vmatpush1.bf16.msra.mxu0 %v541
  %697 = vmatprep.subr.bf16.mxu0 0
  %698 = vmatpush1.bf16.msra.mxu0 %v540
  %699 = vmatprep.subr.bf16.mxu0 0
  %700 = vmatpush1.bf16.msra.mxu0 %v539
  %701 = vmatprep.subr.bf16.mxu0 0
  %702 = vmatpush1.bf16.msra.mxu0 %v538
  %703 = vmatprep.subr.bf16.mxu0 0
  %704 = vmatpush1.bf16.msra.mxu0 %v537
  %705 = vmatprep.subr.bf16.mxu0 0
  %706 = vmatpush1.bf16.msra.mxu0 %v536
  %707 = vmatprep.subr.bf16.mxu0 0
  %708 = vmatpush1.bf16.msra.mxu0 %v535
  %709 = vmatprep.subr.bf16.mxu0 0
  %710 = vmatpush1.bf16.msra.mxu0 %v534
  %711 = vmatprep.subr.bf16.mxu0 0
  %712 = vmatpush2.bf16.msra.mxu0 %v549
  %713 = vmatprep.subr.bf16.mxu0 0
  %714 = vmatpush2.bf16.msra.mxu0 %v548
  %715 = vmatprep.subr.bf16.mxu0 0
  %716 = vmatpush2.bf16.msra.mxu0 %v547
  %717 = vmatprep.subr.bf16.mxu0 0
  %718 = vmatpush2.bf16.msra.mxu0 %v546
  %719 = vmatprep.subr.bf16.mxu0 0
  %720 = vmatpush2.bf16.msra.mxu0 %v545
  %721 = vmatprep.subr.bf16.mxu0 0
  %722 = vmatpush2.bf16.msra.mxu0 %v544
  %723 = vmatprep.subr.bf16.mxu0 0
  %724 = vmatpush2.bf16.msra.mxu0 %v543
  %725 = vmatprep.subr.bf16.mxu0 0
  %726 = vmatpush2.bf16.msra.mxu0 %v542
  %727 = vmatprep.mubr.bf16.mxu0 %v281
  %728 = vmatmul.mubr.bf16.gmra.mxu0 %v280
  %v729 = vpop.f32.mrf.mxu0
  %v730 = vadd.f32 %v633, %v729
  %v731 = vpop.f32.mrf.mxu0
  %v732 = vpop.f32.mrf.mxu0
  %v733 = vadd.f32 %v636, %v732
  %v734 = vpop.f32.mrf.mxu0
  %735 = vmatprep.mubr.bf16.mxu0 %v286
  %736 = vmatmul.mubr.bf16.gmra.mxu0 %v285
  %v737 = vpop.f32.mrf.mxu0
  %v738 = vadd.f32 %v641, %v737
  %v739 = vpop.f32.mrf.mxu0
  %v740 = vpop.f32.mrf.mxu0
  %v741 = vadd.f32 %v644, %v740
  %v742 = vpop.f32.mrf.mxu0
  %743 = vmatprep.mubr.bf16.mxu0 %v291
  %744 = vmatmul.mubr.bf16.gmra.mxu0 %v290
  %v745 = vpop.f32.mrf.mxu0
  %v746 = vadd.f32 %v649, %v745
  %v747 = vpop.f32.mrf.mxu0
  %v748 = vpop.f32.mrf.mxu0
  %v749 = vadd.f32 %v652, %v748
  %v750 = vpop.f32.mrf.mxu0
  %751 = vmatprep.mubr.bf16.mxu0 %v296
  %752 = vmatmul.mubr.bf16.gmra.mxu0 %v295
  %v753 = vpop.f32.mrf.mxu0
  %v754 = vadd.f32 %v657, %v753
  %v755 = vpop.f32.mrf.mxu0
  %v756 = vpop.f32.mrf.mxu0
  %v757 = vadd.f32 %v660, %v756
  %v758 = vpop.f32.mrf.mxu0
  %759 = vmatprep.mubr.bf16.mxu0 %v301
  %760 = vmatmul.mubr.bf16.gmra.mxu0 %v300
  %v761 = vpop.f32.mrf.mxu0
  %v762 = vadd.f32 %v665, %v761
  %v763 = vpop.f32.mrf.mxu0
  %v764 = vpop.f32.mrf.mxu0
  %v765 = vadd.f32 %v668, %v764
  %v766 = vpop.f32.mrf.mxu0
  %767 = vmatprep.mubr.bf16.mxu0 %v306
  %768 = vmatmul.mubr.bf16.gmra.mxu0 %v305
  %v769 = vpop.f32.mrf.mxu0
  %v770 = vadd.f32 %v673, %v769
  %v771 = vpop.f32.mrf.mxu0
  %v772 = vpop.f32.mrf.mxu0
  %v773 = vadd.f32 %v676, %v772
  %v774 = vpop.f32.mrf.mxu0
  %775 = vmatprep.mubr.bf16.mxu0 %v311
  %776 = vmatmul.mubr.bf16.gmra.mxu0 %v310
  %v777 = vpop.f32.mrf.mxu0
  %v778 = vadd.f32 %v681, %v777
  %v779 = vpop.f32.mrf.mxu0
  %v780 = vpop.f32.mrf.mxu0
  %v781 = vadd.f32 %v684, %v780
  %v782 = vpop.f32.mrf.mxu0
  %783 = vmatprep.mubr.bf16.mxu0 %v316
  %784 = vmatmul.mubr.bf16.gmra.mxu0 %v315
  %v785 = vpop.f32.mrf.mxu0
  %v786 = vadd.f32 %v689, %v785
  %v787 = vpop.f32.mrf.mxu0
  %v788 = vpop.f32.mrf.mxu0
  %v789 = vadd.f32 %v692, %v788
  %v790 = vpop.f32.mrf.mxu0
  %791 = vdwg.mxu0
  %792 = vmatprep.subr.bf16.mxu0 0
  %793 = vmatpush1.bf16.msra.mxu0 %v557
  %794 = vmatprep.subr.bf16.mxu0 0
  %795 = vmatpush1.bf16.msra.mxu0 %v556
  %796 = vmatprep.subr.bf16.mxu0 0
  %797 = vmatpush1.bf16.msra.mxu0 %v555
  %798 = vmatprep.subr.bf16.mxu0 0
  %799 = vmatpush1.bf16.msra.mxu0 %v554
  %800 = vmatprep.subr.bf16.mxu0 0
  %801 = vmatpush1.bf16.msra.mxu0 %v553
  %802 = vmatprep.subr.bf16.mxu0 0
  %803 = vmatpush1.bf16.msra.mxu0 %v552
  %804 = vmatprep.subr.bf16.mxu0 0
  %805 = vmatpush1.bf16.msra.mxu0 %v551
  %806 = vmatprep.subr.bf16.mxu0 0
  %807 = vmatpush1.bf16.msra.mxu0 %v550
  %808 = vmatprep.subr.bf16.mxu0 0
  %809 = vmatpush2.bf16.msra.mxu0 0
  %810 = vmatprep.subr.bf16.mxu0 0
  %811 = vmatpush2.bf16.msra.mxu0 0
  %812 = vmatprep.subr.bf16.mxu0 0
  %813 = vmatpush2.bf16.msra.mxu0 0
  %814 = vmatprep.subr.bf16.mxu0 0
  %815 = vmatpush2.bf16.msra.mxu0 0
  %816 = vmatprep.subr.bf16.mxu0 0
  %817 = vmatpush2.bf16.msra.mxu0 0
  %818 = vmatprep.subr.bf16.mxu0 0
  %819 = vmatpush2.bf16.msra.mxu0 0
  %820 = vmatprep.subr.bf16.mxu0 0
  %821 = vmatpush2.bf16.msra.mxu0 0
  %822 = vmatprep.subr.bf16.mxu0 0
  %823 = vmatpush2.bf16.msra.mxu0 0
  %824 = vmatprep.mubr.bf16.mxu0 0
  %825 = vmatmul.mubr.bf16.gmra.mxu0 %v282
  %v826 = vpop.f32.mrf.mxu0
  %v827 = vadd.f32 %v730, %v826
  %v828 = vpop.f32.mrf.mxu0
  %v829 = vpop.f32.mrf.mxu0
  %v830 = vadd.f32 %v733, %v829
  %v831 = vpop.f32.mrf.mxu0
  %832 = vmatprep.mubr.bf16.mxu0 0
  %833 = vmatmul.mubr.bf16.gmra.mxu0 %v287
  %v834 = vpop.f32.mrf.mxu0
  %v835 = vadd.f32 %v738, %v834
  %v836 = vpop.f32.mrf.mxu0
  %v837 = vpop.f32.mrf.mxu0
  %v838 = vadd.f32 %v741, %v837
  %v839 = vpop.f32.mrf.mxu0
  %840 = vmatprep.mubr.bf16.mxu0 0
  %841 = vmatmul.mubr.bf16.gmra.mxu0 %v292
  %v842 = vpop.f32.mrf.mxu0
  %v843 = vadd.f32 %v746, %v842
  %v844 = vpop.f32.mrf.mxu0
  %v845 = vpop.f32.mrf.mxu0
  %v846 = vadd.f32 %v749, %v845
  %v847 = vpop.f32.mrf.mxu0
  %848 = vmatprep.mubr.bf16.mxu0 0
  %849 = vmatmul.mubr.bf16.gmra.mxu0 %v297
  %v850 = vpop.f32.mrf.mxu0
  %v851 = vadd.f32 %v754, %v850
  %v852 = vpop.f32.mrf.mxu0
  %v853 = vpop.f32.mrf.mxu0
  %v854 = vadd.f32 %v757, %v853
  %v855 = vpop.f32.mrf.mxu0
  %856 = vmatprep.mubr.bf16.mxu0 0
  %857 = vmatmul.mubr.bf16.gmra.mxu0 %v302
  %v858 = vpop.f32.mrf.mxu0
  %v859 = vadd.f32 %v762, %v858
  %v860 = vpop.f32.mrf.mxu0
  %v861 = vpop.f32.mrf.mxu0
  %v862 = vadd.f32 %v765, %v861
  %v863 = vpop.f32.mrf.mxu0
  %864 = vmatprep.mubr.bf16.mxu0 0
  %865 = vmatmul.mubr.bf16.gmra.mxu0 %v307
  %v866 = vpop.f32.mrf.mxu0
  %v867 = vadd.f32 %v770, %v866
  %v868 = vpop.f32.mrf.mxu0
  %v869 = vpop.f32.mrf.mxu0
  %v870 = vadd.f32 %v773, %v869
  %v871 = vpop.f32.mrf.mxu0
  %872 = vmatprep.mubr.bf16.mxu0 0
  %873 = vmatmul.mubr.bf16.gmra.mxu0 %v312
  %v874 = vpop.f32.mrf.mxu0
  %v875 = vadd.f32 %v778, %v874
  %v876 = vpop.f32.mrf.mxu0
  %v877 = vpop.f32.mrf.mxu0
  %v878 = vadd.f32 %v781, %v877
  %v879 = vpop.f32.mrf.mxu0
  %880 = vmatprep.mubr.bf16.mxu0 0
  %881 = vmatmul.mubr.bf16.gmra.mxu0 %v317
  %v882 = vpop.f32.mrf.mxu0
  %v883 = vadd.f32 %v786, %v882
  %v884 = vpop.f32.mrf.mxu0
  %v885 = vpop.f32.mrf.mxu0
  %v886 = vadd.f32 %v789, %v885
  %v887 = vpop.f32.mrf.mxu0
  %888 = vdwg.mxu0
  %889 = vst [vmem:[%s3] sm:$0xff] %v827
  %890 = vst [vmem:[%s3 + $0x8] sm:$0xff] %v830
  %891 = vst [vmem:[%s3 + $0x10] sm:$0xff] %v835
  %892 = vst [vmem:[%s3 + $0x18] sm:$0xff] %v838
  %893 = vst [vmem:[%s3 + $0x20] sm:$0xff] %v843
  %894 = vst [vmem:[%s3 + $0x28] sm:$0xff] %v846
  %895 = vst [vmem:[%s3 + $0x30] sm:$0xff] %v851
  %896 = vst [vmem:[%s3 + $0x38] sm:$0xff] %v854
  %897 = vst [vmem:[%s3 + $0x40] sm:$0xff] %v859
  %898 = vst [vmem:[%s3 + $0x48] sm:$0xff] %v862
  %899 = vst [vmem:[%s3 + $0x50] sm:$0xff] %v867
  %900 = vst [vmem:[%s3 + $0x58] sm:$0xff] %v870
  %901 = vst [vmem:[%s3 + $0x60] sm:$0xff] %v875
  %902 = vst [vmem:[%s3 + $0x68] sm:$0xff] %v878
  %903 = vst [vmem:[%s3 + $0x70] sm:$0xff] %v883
  %904 = vst [vmem:[%s3 + $0x78] sm:$0xff] %v886
  // Predicated region
  $region14: #{_forward_impl.30} parent=0 // pred_check
    _
  $region15: #{_forward_impl.30} parent=0 // pred_check_branch
    %906 = sbr.rel (0) target = $region17
  $region16: #{_forward_impl.30} parent=0 // pred_region
    _
  $region17: #{_forward_impl.30} parent=0 // pred_fallthru
    _
  // Predicated region
  $region18: #{_forward_impl.30} parent=0 // pred_check
    _
  $region19: #{_forward_impl.30} parent=0 // pred_check_branch
    %908 = sbr.rel (0) target = $region21
  $region20: #{_forward_impl.30} parent=0 // pred_region
    _
  $region21: #{_forward_impl.30} parent=0 // pred_fallthru
    _

</llo_original>
